<compile_context>
chip_gen: v5e
topology: v5e:2x2
jax: 0.10.0
libtpu: 0.0.40
codegen_flags: <defaults>
</compile_context>

<pallas_src>
import jax
import jax.numpy as jnp
from jax import lax
from jax.experimental import pallas as pl
from jax.experimental.pallas import tpu as pltpu

KSIZE = 3
PAD = 1


def _zero_pad_hw(v):
    """Zero-pad a (H, W, C) value by 1 pixel on H and W (in-kernel, via concat)."""
    H, W, C = v.shape
    zrow = jnp.zeros((PAD, W, C), v.dtype)
    v = jnp.concatenate([zrow, v, zrow], axis=0)
    zcol = jnp.zeros((H + 2 * PAD, PAD, C), v.dtype)
    return jnp.concatenate([zcol, v, zcol], axis=1)


def _sumpool2(v):
    """2x2 SUM pool, stride 2, on a (H, W, C) value (0.25 is folded into weights)."""
    H, W, C = v.shape
    v = v.reshape(H, W // 2, 2, C)
    v = v[:, :, 0, :] + v[:, :, 1, :]            # pool along W
    v = v.reshape(H // 2, 2, W // 2, C)
    return v[:, 0, :, :] + v[:, 1, :, :]         # pool along H


def _disblock_kernel(x_ref, w1_ref, b1_ref, wB_ref, bB_ref, out_ref):
    _, H, W, Cin = x_ref.shape
    _, Ho, Wo, Cout = out_ref.shape
    K2 = KSIZE * KSIZE

    x = x_ref[0]                                              # (H, W, Cin) f32

    # ---- conv1: 3x3 pad=1 -> ReLU.  im2col slab built once, one MXU matmul,
    #      bf16 operands / f32 accumulation. ----
    xp = _zero_pad_hw(x)                                      # (H+2, W+2, Cin)
    taps1 = [xp[ki:ki + H, kj:kj + W, :]
             for ki in range(KSIZE) for kj in range(KSIZE)]
    col1 = jnp.concatenate(taps1, axis=-1).reshape(H * W, K2 * Cin)
    h1 = jnp.dot(col1.astype(jnp.bfloat16), w1_ref[...],
                 preferred_element_type=jnp.float32)
    h1 = jnp.maximum(h1 + b1_ref[...], 0.0).reshape(H, W, Cout)   # ReLU (f32)

    # ---- fused stage 2: (conv2 3x3 -> AvgPool2) + (AvgPool2 -> conv1x1),
    #      single matmul.  Pool each conv2 tap first (pool & conv commute),
    #      append the pooled shortcut input as extra K-columns. ----
    hp = _zero_pad_hw(h1)                                     # (H+2, W+2, Cout)
    taps2 = [_sumpool2(hp[ki:ki + H, kj:kj + W, :])
             for ki in range(KSIZE) for kj in range(KSIZE)]   # 9 x (Ho, Wo, Cout)
    taps2.append(_sumpool2(x))                                # shortcut (Ho, Wo, Cin)
    col2 = jnp.concatenate(taps2, axis=-1).reshape(Ho * Wo, K2 * Cout + Cin)
    y = jnp.dot(col2.astype(jnp.bfloat16), wB_ref[...],
                preferred_element_type=jnp.float32) + bB_ref[...]

    out_ref[0] = y.reshape(Ho, Wo, Cout).astype(out_ref.dtype)


def optimized_dis_block(x_nhwc, params):
    """x_nhwc: (B, H, W, Cin) f32.  Returns (B, H/2, W/2, Cout) f32."""
    w1, b1, w2, b2, wsc, bsc = params
    B, H, W, Cin = x_nhwc.shape
    Cout = w1.shape[-1]
    assert H % 2 == 0 and W % 2 == 0, "AvgPool2d(2) requires even H, W"
    Ho, Wo = H // 2, W // 2
    K2 = KSIZE * KSIZE

    # One-time weight prep: im2col reshape, AvgPool 0.25 folded in, bf16 cast.
    w1c = w1.reshape(K2 * Cin, Cout).astype(jnp.bfloat16)
    w2c = (0.25 * w2).reshape(K2 * Cout, Cout)
    wB = jnp.concatenate([w2c, 0.25 * wsc], axis=0).astype(jnp.bfloat16)
    b1r = b1.reshape(1, Cout).astype(jnp.float32)
    bB = (b2 + bsc).reshape(1, Cout).astype(jnp.float32)

    flops = (2 * B * H * W * (K2 * Cin) * Cout
             + 2 * B * Ho * Wo * (K2 * Cout + Cin) * Cout)
    bytes_accessed = (x_nhwc.size * 4 + B * Ho * Wo * Cout * 4
                      + w1c.size * 2 + wB.size * 2 + (b1r.size + bB.size) * 4)

    grid_spec = pltpu.PrefetchScalarGridSpec(
        num_scalar_prefetch=0,
        grid=(B,),
        in_specs=[
            pl.BlockSpec((1, H, W, Cin), lambda b: (b, 0, 0, 0)),
            pl.BlockSpec((K2 * Cin, Cout), lambda b: (0, 0)),
            pl.BlockSpec((1, Cout), lambda b: (0, 0)),
            pl.BlockSpec((K2 * Cout + Cin, Cout), lambda b: (0, 0)),
            pl.BlockSpec((1, Cout), lambda b: (0, 0)),
        ],
        out_specs=pl.BlockSpec((1, Ho, Wo, Cout), lambda b: (b, 0, 0, 0)),
    )

    return pl.pallas_call(
        _disblock_kernel,
        out_shape=jax.ShapeDtypeStruct((B, Ho, Wo, Cout), jnp.float32),
        grid_spec=grid_spec,
        compiler_params=pltpu.CompilerParams(
            dimension_semantics=("parallel",),
            vmem_limit_bytes=32 * 1024 * 1024),
        cost_estimate=pl.CostEstimate(
            flops=flops, transcendentals=0, bytes_accessed=bytes_accessed),
    )(x_nhwc, w1c, b1r, wB, bB)


# ------------------------- pure-JAX f32 reference (correctness check) --------
def _ref_avgpool2(v):
    B, H, W, C = v.shape
    return v.reshape(B, H // 2, 2, W // 2, 2, C).mean(axis=(2, 4))


def ref_forward(x_nhwc, params):
    w1, b1, w2, b2, wsc, bsc = params
    dn = ('NHWC', 'HWIO', 'NHWC')
    h = lax.conv_general_dilated(x_nhwc, w1, (1, 1), 'SAME',
                                 dimension_numbers=dn) + b1
    h = jnp.maximum(h, 0.0)
    h = lax.conv_general_dilated(h, w2, (1, 1), 'SAME',
                                 dimension_numbers=dn) + b2
    h = _ref_avgpool2(h)
    s = _ref_avgpool2(x_nhwc)
    s = lax.conv_general_dilated(s, wsc.reshape(1, 1, *wsc.shape), (1, 1),
                                 'VALID', dimension_numbers=dn) + bsc
    return h + s


if __name__ == "__main__":
    B, Cin, Cout, H, W = 2, 4, 8, 16, 16
    key = jax.random.PRNGKey(0)
    keys = jax.random.split(key, 7)

    def uinit(k, shape, fan_in):
        bound = float(fan_in) ** -0.5          # PyTorch conv default-ish init
        return jax.random.uniform(k, shape, jnp.float32, -bound, bound)

    w1 = uinit(keys[0], (KSIZE, KSIZE, Cin, Cout), KSIZE * KSIZE * Cin)
    b1 = uinit(keys[1], (Cout,), KSIZE * KSIZE * Cin)
    w2 = uinit(keys[2], (KSIZE, KSIZE, Cout, Cout), KSIZE * KSIZE * Cout)
    b2 = uinit(keys[3], (Cout,), KSIZE * KSIZE * Cout)
    wsc = uinit(keys[4], (Cin, Cout), Cin)
    bsc = uinit(keys[5], (Cout,), Cin)
    params = (w1, b1, w2, b2, wsc, bsc)

    x_nchw = jax.random.normal(keys[6], (B, Cin, H, W), jnp.float32)  # PyTorch layout
    x_nhwc = jnp.transpose(x_nchw, (0, 2, 3, 1))                      # kernel layout

    out = jax.block_until_ready(optimized_dis_block(x_nhwc, params))
    ref = ref_forward(x_nhwc, params)

    assert out.shape == (B, H // 2, W // 2, Cout), out.shape
    # bf16 MXU operands (f32 accumulation) vs f32 reference => loosened tolerance.
    assert jnp.allclose(out, ref, atol=5e-2, rtol=5e-2), \
        float(jnp.max(jnp.abs(out - ref)))
    print("KERNEL_OK")
</pallas_src>

<mosaic_0001>
module attributes {stable_mosaic.version = 11 : i64} {
  func.func @_disblock_kernel(%arg0: i32, %arg1: memref<1x16x16x4xf32, #tpu.memory_space<vmem>>, %arg2: memref<36x8xbf16, #tpu.memory_space<vmem>>, %arg3: memref<1x8xf32, #tpu.memory_space<vmem>>, %arg4: memref<76x8xbf16, #tpu.memory_space<vmem>>, %arg5: memref<1x8xf32, #tpu.memory_space<vmem>>, %arg6: memref<1x8x8x8xf32, #tpu.memory_space<vmem>>) attributes {dimension_semantics = [#tpu.dimension_semantics<parallel>], iteration_bounds = array<i64: 2>, scalar_prefetch = 0 : i64, scratch_operands = 0 : i64, tpu.core_type = #tpu.core_type<tc>, window_params = [{transform_indices = @transform_0, window_bounds = array<i64: 1, 16, 16, 4>}, {pipeline_mode = #tpu.pipeline_mode<synchronous>, transform_indices = @transform_1, window_bounds = array<i64: 36, 8>}, {pipeline_mode = #tpu.pipeline_mode<synchronous>, transform_indices = @transform_2, window_bounds = array<i64: 1, 8>}, {pipeline_mode = #tpu.pipeline_mode<synchronous>, transform_indices = @transform_3, window_bounds = array<i64: 76, 8>}, {pipeline_mode = #tpu.pipeline_mode<synchronous>, transform_indices = @transform_4, window_bounds = array<i64: 1, 8>}, {transform_indices = @transform_5, window_bounds = array<i64: 1, 8, 8, 8>}]} {
    %c0 = arith.constant 0 : index
    %c0_0 = arith.constant 0 : index
    %c0_1 = arith.constant 0 : index
    %c0_2 = arith.constant 0 : index
    %0 = vector.load %arg1[%c0, %c0_0, %c0_1, %c0_2] : memref<1x16x16x4xf32, #tpu.memory_space<vmem>>, vector<1x16x16x4xf32>
    %1 = vector.shape_cast %0 : vector<1x16x16x4xf32> to vector<16x16x4xf32>
    %cst = arith.constant 0.000000e+00 : f32
    %2 = vector.broadcast %cst : f32 to vector<1x16x4xf32>
    %3 = tpu.concatenate %2, %1, %2 in 0 : vector<1x16x4xf32>, vector<16x16x4xf32>, vector<1x16x4xf32> -> vector<18x16x4xf32>
    %cst_3 = arith.constant 0.000000e+00 : f32
    %4 = vector.broadcast %cst_3 : f32 to vector<18x1x4xf32>
    %5 = tpu.concatenate %4, %3, %4 in 1 : vector<18x1x4xf32>, vector<18x16x4xf32>, vector<18x1x4xf32> -> vector<18x18x4xf32>
    %6 = vector.extract_strided_slice %5 {offsets = [0, 0, 0], sizes = [16, 16, 4], strides = [1, 1, 1]} : vector<18x18x4xf32> to vector<16x16x4xf32>
    %7 = vector.extract_strided_slice %5 {offsets = [0, 1, 0], sizes = [16, 16, 4], strides = [1, 1, 1]} : vector<18x18x4xf32> to vector<16x16x4xf32>
    %8 = vector.extract_strided_slice %5 {offsets = [0, 2, 0], sizes = [16, 16, 4], strides = [1, 1, 1]} : vector<18x18x4xf32> to vector<16x16x4xf32>
    %9 = vector.extract_strided_slice %5 {offsets = [1, 0, 0], sizes = [16, 16, 4], strides = [1, 1, 1]} : vector<18x18x4xf32> to vector<16x16x4xf32>
    %10 = vector.extract_strided_slice %5 {offsets = [1, 1, 0], sizes = [16, 16, 4], strides = [1, 1, 1]} : vector<18x18x4xf32> to vector<16x16x4xf32>
    %11 = vector.extract_strided_slice %5 {offsets = [1, 2, 0], sizes = [16, 16, 4], strides = [1, 1, 1]} : vector<18x18x4xf32> to vector<16x16x4xf32>
    %12 = vector.extract_strided_slice %5 {offsets = [2, 0, 0], sizes = [16, 16, 4], strides = [1, 1, 1]} : vector<18x18x4xf32> to vector<16x16x4xf32>
    %13 = vector.extract_strided_slice %5 {offsets = [2, 1, 0], sizes = [16, 16, 4], strides = [1, 1, 1]} : vector<18x18x4xf32> to vector<16x16x4xf32>
    %14 = vector.extract_strided_slice %5 {offsets = [2, 2, 0], sizes = [16, 16, 4], strides = [1, 1, 1]} : vector<18x18x4xf32> to vector<16x16x4xf32>
    %15 = tpu.concatenate %6, %7, %8, %9, %10, %11, %12, %13, %14 in 2 : vector<16x16x4xf32>, vector<16x16x4xf32>, vector<16x16x4xf32>, vector<16x16x4xf32>, vector<16x16x4xf32>, vector<16x16x4xf32>, vector<16x16x4xf32>, vector<16x16x4xf32>, vector<16x16x4xf32> -> vector<16x16x36xf32>
    %16 = vector.shape_cast %15 : vector<16x16x36xf32> to vector<256x36xf32>
    %17 = arith.truncf %16 : vector<256x36xf32> to vector<256x36xbf16>
    %c0_4 = arith.constant 0 : index
    %c0_5 = arith.constant 0 : index
    %18 = vector.load %arg2[%c0_4, %c0_5] : memref<36x8xbf16, #tpu.memory_space<vmem>>, vector<36x8xbf16>
    %cst_6 = arith.constant dense<0.000000e+00> : vector<256x8xf32>
    %19 = tpu.matmul %17, %18, %cst_6 {dimension_numbers = #tpu.dot_dimension_numbers<[1], [0], [0], [1], [0, 0, 1, 1], [], []>} : vector<256x36xbf16>, vector<36x8xbf16>, vector<256x8xf32> -> vector<256x8xf32>
    %c0_7 = arith.constant 0 : index
    %c0_8 = arith.constant 0 : index
    %20 = vector.load %arg3[%c0_7, %c0_8] : memref<1x8xf32, #tpu.memory_space<vmem>>, vector<1x8xf32>
    %21 = vector.broadcast %20 : vector<1x8xf32> to vector<256x8xf32>
    %22 = arith.addf %19, %21 : vector<256x8xf32>
    %cst_9 = arith.constant 0.000000e+00 : f32
    %23 = vector.broadcast %cst_9 : f32 to vector<256x8xf32>
    %24 = arith.maximumf %22, %23 : vector<256x8xf32>
    %25 = vector.shape_cast %24 : vector<256x8xf32> to vector<16x16x8xf32>
    %cst_10 = arith.constant 0.000000e+00 : f32
    %26 = vector.broadcast %cst_10 : f32 to vector<1x16x8xf32>
    %27 = tpu.concatenate %26, %25, %26 in 0 : vector<1x16x8xf32>, vector<16x16x8xf32>, vector<1x16x8xf32> -> vector<18x16x8xf32>
    %cst_11 = arith.constant 0.000000e+00 : f32
    %28 = vector.broadcast %cst_11 : f32 to vector<18x1x8xf32>
    %29 = tpu.concatenate %28, %27, %28 in 1 : vector<18x1x8xf32>, vector<18x16x8xf32>, vector<18x1x8xf32> -> vector<18x18x8xf32>
    %30 = vector.extract_strided_slice %29 {offsets = [0, 0, 0], sizes = [16, 16, 8], strides = [1, 1, 1]} : vector<18x18x8xf32> to vector<16x16x8xf32>
    %31 = vector.shape_cast %30 : vector<16x16x8xf32> to vector<16x8x2x8xf32>
    %32 = vector.extract_strided_slice %31 {offsets = [0, 0, 0, 0], sizes = [16, 8, 1, 8], strides = [1, 1, 1, 1]} : vector<16x8x2x8xf32> to vector<16x8x1x8xf32>
    %33 = vector.shape_cast %32 : vector<16x8x1x8xf32> to vector<16x8x8xf32>
    %34 = vector.extract_strided_slice %31 {offsets = [0, 0, 1, 0], sizes = [16, 8, 1, 8], strides = [1, 1, 1, 1]} : vector<16x8x2x8xf32> to vector<16x8x1x8xf32>
    %35 = vector.shape_cast %34 : vector<16x8x1x8xf32> to vector<16x8x8xf32>
    %36 = arith.addf %33, %35 : vector<16x8x8xf32>
    %37 = vector.shape_cast %36 : vector<16x8x8xf32> to vector<8x2x8x8xf32>
    %38 = vector.extract_strided_slice %37 {offsets = [0, 0, 0, 0], sizes = [8, 1, 8, 8], strides = [1, 1, 1, 1]} : vector<8x2x8x8xf32> to vector<8x1x8x8xf32>
    %39 = vector.shape_cast %38 : vector<8x1x8x8xf32> to vector<8x8x8xf32>
    %40 = vector.extract_strided_slice %37 {offsets = [0, 1, 0, 0], sizes = [8, 1, 8, 8], strides = [1, 1, 1, 1]} : vector<8x2x8x8xf32> to vector<8x1x8x8xf32>
    %41 = vector.shape_cast %40 : vector<8x1x8x8xf32> to vector<8x8x8xf32>
    %42 = arith.addf %39, %41 : vector<8x8x8xf32>
    %43 = vector.extract_strided_slice %29 {offsets = [0, 1, 0], sizes = [16, 16, 8], strides = [1, 1, 1]} : vector<18x18x8xf32> to vector<16x16x8xf32>
    %44 = vector.shape_cast %43 : vector<16x16x8xf32> to vector<16x8x2x8xf32>
    %45 = vector.extract_strided_slice %44 {offsets = [0, 0, 0, 0], sizes = [16, 8, 1, 8], strides = [1, 1, 1, 1]} : vector<16x8x2x8xf32> to vector<16x8x1x8xf32>
    %46 = vector.shape_cast %45 : vector<16x8x1x8xf32> to vector<16x8x8xf32>
    %47 = vector.extract_strided_slice %44 {offsets = [0, 0, 1, 0], sizes = [16, 8, 1, 8], strides = [1, 1, 1, 1]} : vector<16x8x2x8xf32> to vector<16x8x1x8xf32>
    %48 = vector.shape_cast %47 : vector<16x8x1x8xf32> to vector<16x8x8xf32>
    %49 = arith.addf %46, %48 : vector<16x8x8xf32>
    %50 = vector.shape_cast %49 : vector<16x8x8xf32> to vector<8x2x8x8xf32>
    %51 = vector.extract_strided_slice %50 {offsets = [0, 0, 0, 0], sizes = [8, 1, 8, 8], strides = [1, 1, 1, 1]} : vector<8x2x8x8xf32> to vector<8x1x8x8xf32>
    %52 = vector.shape_cast %51 : vector<8x1x8x8xf32> to vector<8x8x8xf32>
    %53 = vector.extract_strided_slice %50 {offsets = [0, 1, 0, 0], sizes = [8, 1, 8, 8], strides = [1, 1, 1, 1]} : vector<8x2x8x8xf32> to vector<8x1x8x8xf32>
    %54 = vector.shape_cast %53 : vector<8x1x8x8xf32> to vector<8x8x8xf32>
    %55 = arith.addf %52, %54 : vector<8x8x8xf32>
    %56 = vector.extract_strided_slice %29 {offsets = [0, 2, 0], sizes = [16, 16, 8], strides = [1, 1, 1]} : vector<18x18x8xf32> to vector<16x16x8xf32>
    %57 = vector.shape_cast %56 : vector<16x16x8xf32> to vector<16x8x2x8xf32>
    %58 = vector.extract_strided_slice %57 {offsets = [0, 0, 0, 0], sizes = [16, 8, 1, 8], strides = [1, 1, 1, 1]} : vector<16x8x2x8xf32> to vector<16x8x1x8xf32>
    %59 = vector.shape_cast %58 : vector<16x8x1x8xf32> to vector<16x8x8xf32>
    %60 = vector.extract_strided_slice %57 {offsets = [0, 0, 1, 0], sizes = [16, 8, 1, 8], strides = [1, 1, 1, 1]} : vector<16x8x2x8xf32> to vector<16x8x1x8xf32>
    %61 = vector.shape_cast %60 : vector<16x8x1x8xf32> to vector<16x8x8xf32>
    %62 = arith.addf %59, %61 : vector<16x8x8xf32>
    %63 = vector.shape_cast %62 : vector<16x8x8xf32> to vector<8x2x8x8xf32>
    %64 = vector.extract_strided_slice %63 {offsets = [0, 0, 0, 0], sizes = [8, 1, 8, 8], strides = [1, 1, 1, 1]} : vector<8x2x8x8xf32> to vector<8x1x8x8xf32>
    %65 = vector.shape_cast %64 : vector<8x1x8x8xf32> to vector<8x8x8xf32>
    %66 = vector.extract_strided_slice %63 {offsets = [0, 1, 0, 0], sizes = [8, 1, 8, 8], strides = [1, 1, 1, 1]} : vector<8x2x8x8xf32> to vector<8x1x8x8xf32>
    %67 = vector.shape_cast %66 : vector<8x1x8x8xf32> to vector<8x8x8xf32>
    %68 = arith.addf %65, %67 : vector<8x8x8xf32>
    %69 = vector.extract_strided_slice %29 {offsets = [1, 0, 0], sizes = [16, 16, 8], strides = [1, 1, 1]} : vector<18x18x8xf32> to vector<16x16x8xf32>
    %70 = vector.shape_cast %69 : vector<16x16x8xf32> to vector<16x8x2x8xf32>
    %71 = vector.extract_strided_slice %70 {offsets = [0, 0, 0, 0], sizes = [16, 8, 1, 8], strides = [1, 1, 1, 1]} : vector<16x8x2x8xf32> to vector<16x8x1x8xf32>
    %72 = vector.shape_cast %71 : vector<16x8x1x8xf32> to vector<16x8x8xf32>
    %73 = vector.extract_strided_slice %70 {offsets = [0, 0, 1, 0], sizes = [16, 8, 1, 8], strides = [1, 1, 1, 1]} : vector<16x8x2x8xf32> to vector<16x8x1x8xf32>
    %74 = vector.shape_cast %73 : vector<16x8x1x8xf32> to vector<16x8x8xf32>
    %75 = arith.addf %72, %74 : vector<16x8x8xf32>
    %76 = vector.shape_cast %75 : vector<16x8x8xf32> to vector<8x2x8x8xf32>
    %77 = vector.extract_strided_slice %76 {offsets = [0, 0, 0, 0], sizes = [8, 1, 8, 8], strides = [1, 1, 1, 1]} : vector<8x2x8x8xf32> to vector<8x1x8x8xf32>
    %78 = vector.shape_cast %77 : vector<8x1x8x8xf32> to vector<8x8x8xf32>
    %79 = vector.extract_strided_slice %76 {offsets = [0, 1, 0, 0], sizes = [8, 1, 8, 8], strides = [1, 1, 1, 1]} : vector<8x2x8x8xf32> to vector<8x1x8x8xf32>
    %80 = vector.shape_cast %79 : vector<8x1x8x8xf32> to vector<8x8x8xf32>
    %81 = arith.addf %78, %80 : vector<8x8x8xf32>
    %82 = vector.extract_strided_slice %29 {offsets = [1, 1, 0], sizes = [16, 16, 8], strides = [1, 1, 1]} : vector<18x18x8xf32> to vector<16x16x8xf32>
    %83 = vector.shape_cast %82 : vector<16x16x8xf32> to vector<16x8x2x8xf32>
    %84 = vector.extract_strided_slice %83 {offsets = [0, 0, 0, 0], sizes = [16, 8, 1, 8], strides = [1, 1, 1, 1]} : vector<16x8x2x8xf32> to vector<16x8x1x8xf32>
    %85 = vector.shape_cast %84 : vector<16x8x1x8xf32> to vector<16x8x8xf32>
    %86 = vector.extract_strided_slice %83 {offsets = [0, 0, 1, 0], sizes = [16, 8, 1, 8], strides = [1, 1, 1, 1]} : vector<16x8x2x8xf32> to vector<16x8x1x8xf32>
    %87 = vector.shape_cast %86 : vector<16x8x1x8xf32> to vector<16x8x8xf32>
    %88 = arith.addf %85, %87 : vector<16x8x8xf32>
    %89 = vector.shape_cast %88 : vector<16x8x8xf32> to vector<8x2x8x8xf32>
    %90 = vector.extract_strided_slice %89 {offsets = [0, 0, 0, 0], sizes = [8, 1, 8, 8], strides = [1, 1, 1, 1]} : vector<8x2x8x8xf32> to vector<8x1x8x8xf32>
    %91 = vector.shape_cast %90 : vector<8x1x8x8xf32> to vector<8x8x8xf32>
    %92 = vector.extract_strided_slice %89 {offsets = [0, 1, 0, 0], sizes = [8, 1, 8, 8], strides = [1, 1, 1, 1]} : vector<8x2x8x8xf32> to vector<8x1x8x8xf32>
    %93 = vector.shape_cast %92 : vector<8x1x8x8xf32> to vector<8x8x8xf32>
    %94 = arith.addf %91, %93 : vector<8x8x8xf32>
    %95 = vector.extract_strided_slice %29 {offsets = [1, 2, 0], sizes = [16, 16, 8], strides = [1, 1, 1]} : vector<18x18x8xf32> to vector<16x16x8xf32>
    %96 = vector.shape_cast %95 : vector<16x16x8xf32> to vector<16x8x2x8xf32>
    %97 = vector.extract_strided_slice %96 {offsets = [0, 0, 0, 0], sizes = [16, 8, 1, 8], strides = [1, 1, 1, 1]} : vector<16x8x2x8xf32> to vector<16x8x1x8xf32>
    %98 = vector.shape_cast %97 : vector<16x8x1x8xf32> to vector<16x8x8xf32>
    %99 = vector.extract_strided_slice %96 {offsets = [0, 0, 1, 0], sizes = [16, 8, 1, 8], strides = [1, 1, 1, 1]} : vector<16x8x2x8xf32> to vector<16x8x1x8xf32>
    %100 = vector.shape_cast %99 : vector<16x8x1x8xf32> to vector<16x8x8xf32>
    %101 = arith.addf %98, %100 : vector<16x8x8xf32>
    %102 = vector.shape_cast %101 : vector<16x8x8xf32> to vector<8x2x8x8xf32>
    %103 = vector.extract_strided_slice %102 {offsets = [0, 0, 0, 0], sizes = [8, 1, 8, 8], strides = [1, 1, 1, 1]} : vector<8x2x8x8xf32> to vector<8x1x8x8xf32>
    %104 = vector.shape_cast %103 : vector<8x1x8x8xf32> to vector<8x8x8xf32>
    %105 = vector.extract_strided_slice %102 {offsets = [0, 1, 0, 0], sizes = [8, 1, 8, 8], strides = [1, 1, 1, 1]} : vector<8x2x8x8xf32> to vector<8x1x8x8xf32>
    %106 = vector.shape_cast %105 : vector<8x1x8x8xf32> to vector<8x8x8xf32>
    %107 = arith.addf %104, %106 : vector<8x8x8xf32>
    %108 = vector.extract_strided_slice %29 {offsets = [2, 0, 0], sizes = [16, 16, 8], strides = [1, 1, 1]} : vector<18x18x8xf32> to vector<16x16x8xf32>
    %109 = vector.shape_cast %108 : vector<16x16x8xf32> to vector<16x8x2x8xf32>
    %110 = vector.extract_strided_slice %109 {offsets = [0, 0, 0, 0], sizes = [16, 8, 1, 8], strides = [1, 1, 1, 1]} : vector<16x8x2x8xf32> to vector<16x8x1x8xf32>
    %111 = vector.shape_cast %110 : vector<16x8x1x8xf32> to vector<16x8x8xf32>
    %112 = vector.extract_strided_slice %109 {offsets = [0, 0, 1, 0], sizes = [16, 8, 1, 8], strides = [1, 1, 1, 1]} : vector<16x8x2x8xf32> to vector<16x8x1x8xf32>
    %113 = vector.shape_cast %112 : vector<16x8x1x8xf32> to vector<16x8x8xf32>
    %114 = arith.addf %111, %113 : vector<16x8x8xf32>
    %115 = vector.shape_cast %114 : vector<16x8x8xf32> to vector<8x2x8x8xf32>
    %116 = vector.extract_strided_slice %115 {offsets = [0, 0, 0, 0], sizes = [8, 1, 8, 8], strides = [1, 1, 1, 1]} : vector<8x2x8x8xf32> to vector<8x1x8x8xf32>
    %117 = vector.shape_cast %116 : vector<8x1x8x8xf32> to vector<8x8x8xf32>
    %118 = vector.extract_strided_slice %115 {offsets = [0, 1, 0, 0], sizes = [8, 1, 8, 8], strides = [1, 1, 1, 1]} : vector<8x2x8x8xf32> to vector<8x1x8x8xf32>
    %119 = vector.shape_cast %118 : vector<8x1x8x8xf32> to vector<8x8x8xf32>
    %120 = arith.addf %117, %119 : vector<8x8x8xf32>
    %121 = vector.extract_strided_slice %29 {offsets = [2, 1, 0], sizes = [16, 16, 8], strides = [1, 1, 1]} : vector<18x18x8xf32> to vector<16x16x8xf32>
    %122 = vector.shape_cast %121 : vector<16x16x8xf32> to vector<16x8x2x8xf32>
    %123 = vector.extract_strided_slice %122 {offsets = [0, 0, 0, 0], sizes = [16, 8, 1, 8], strides = [1, 1, 1, 1]} : vector<16x8x2x8xf32> to vector<16x8x1x8xf32>
    %124 = vector.shape_cast %123 : vector<16x8x1x8xf32> to vector<16x8x8xf32>
    %125 = vector.extract_strided_slice %122 {offsets = [0, 0, 1, 0], sizes = [16, 8, 1, 8], strides = [1, 1, 1, 1]} : vector<16x8x2x8xf32> to vector<16x8x1x8xf32>
    %126 = vector.shape_cast %125 : vector<16x8x1x8xf32> to vector<16x8x8xf32>
    %127 = arith.addf %124, %126 : vector<16x8x8xf32>
    %128 = vector.shape_cast %127 : vector<16x8x8xf32> to vector<8x2x8x8xf32>
    %129 = vector.extract_strided_slice %128 {offsets = [0, 0, 0, 0], sizes = [8, 1, 8, 8], strides = [1, 1, 1, 1]} : vector<8x2x8x8xf32> to vector<8x1x8x8xf32>
    %130 = vector.shape_cast %129 : vector<8x1x8x8xf32> to vector<8x8x8xf32>
    %131 = vector.extract_strided_slice %128 {offsets = [0, 1, 0, 0], sizes = [8, 1, 8, 8], strides = [1, 1, 1, 1]} : vector<8x2x8x8xf32> to vector<8x1x8x8xf32>
    %132 = vector.shape_cast %131 : vector<8x1x8x8xf32> to vector<8x8x8xf32>
    %133 = arith.addf %130, %132 : vector<8x8x8xf32>
    %134 = vector.extract_strided_slice %29 {offsets = [2, 2, 0], sizes = [16, 16, 8], strides = [1, 1, 1]} : vector<18x18x8xf32> to vector<16x16x8xf32>
    %135 = vector.shape_cast %134 : vector<16x16x8xf32> to vector<16x8x2x8xf32>
    %136 = vector.extract_strided_slice %135 {offsets = [0, 0, 0, 0], sizes = [16, 8, 1, 8], strides = [1, 1, 1, 1]} : vector<16x8x2x8xf32> to vector<16x8x1x8xf32>
    %137 = vector.shape_cast %136 : vector<16x8x1x8xf32> to vector<16x8x8xf32>
    %138 = vector.extract_strided_slice %135 {offsets = [0, 0, 1, 0], sizes = [16, 8, 1, 8], strides = [1, 1, 1, 1]} : vector<16x8x2x8xf32> to vector<16x8x1x8xf32>
    %139 = vector.shape_cast %138 : vector<16x8x1x8xf32> to vector<16x8x8xf32>
    %140 = arith.addf %137, %139 : vector<16x8x8xf32>
    %141 = vector.shape_cast %140 : vector<16x8x8xf32> to vector<8x2x8x8xf32>
    %142 = vector.extract_strided_slice %141 {offsets = [0, 0, 0, 0], sizes = [8, 1, 8, 8], strides = [1, 1, 1, 1]} : vector<8x2x8x8xf32> to vector<8x1x8x8xf32>
    %143 = vector.shape_cast %142 : vector<8x1x8x8xf32> to vector<8x8x8xf32>
    %144 = vector.extract_strided_slice %141 {offsets = [0, 1, 0, 0], sizes = [8, 1, 8, 8], strides = [1, 1, 1, 1]} : vector<8x2x8x8xf32> to vector<8x1x8x8xf32>
    %145 = vector.shape_cast %144 : vector<8x1x8x8xf32> to vector<8x8x8xf32>
    %146 = arith.addf %143, %145 : vector<8x8x8xf32>
    %147 = vector.shape_cast %1 : vector<16x16x4xf32> to vector<16x8x2x4xf32>
    %148 = vector.extract_strided_slice %147 {offsets = [0, 0, 0, 0], sizes = [16, 8, 1, 4], strides = [1, 1, 1, 1]} : vector<16x8x2x4xf32> to vector<16x8x1x4xf32>
    %149 = vector.shape_cast %148 : vector<16x8x1x4xf32> to vector<16x8x4xf32>
    %150 = vector.extract_strided_slice %147 {offsets = [0, 0, 1, 0], sizes = [16, 8, 1, 4], strides = [1, 1, 1, 1]} : vector<16x8x2x4xf32> to vector<16x8x1x4xf32>
    %151 = vector.shape_cast %150 : vector<16x8x1x4xf32> to vector<16x8x4xf32>
    %152 = arith.addf %149, %151 : vector<16x8x4xf32>
    %153 = vector.shape_cast %152 : vector<16x8x4xf32> to vector<8x2x8x4xf32>
    %154 = vector.extract_strided_slice %153 {offsets = [0, 0, 0, 0], sizes = [8, 1, 8, 4], strides = [1, 1, 1, 1]} : vector<8x2x8x4xf32> to vector<8x1x8x4xf32>
    %155 = vector.shape_cast %154 : vector<8x1x8x4xf32> to vector<8x8x4xf32>
    %156 = vector.extract_strided_slice %153 {offsets = [0, 1, 0, 0], sizes = [8, 1, 8, 4], strides = [1, 1, 1, 1]} : vector<8x2x8x4xf32> to vector<8x1x8x4xf32>
    %157 = vector.shape_cast %156 : vector<8x1x8x4xf32> to vector<8x8x4xf32>
    %158 = arith.addf %155, %157 : vector<8x8x4xf32>
    %159 = tpu.concatenate %42, %55, %68, %81, %94, %107, %120, %133, %146, %158 in 2 : vector<8x8x8xf32>, vector<8x8x8xf32>, vector<8x8x8xf32>, vector<8x8x8xf32>, vector<8x8x8xf32>, vector<8x8x8xf32>, vector<8x8x8xf32>, vector<8x8x8xf32>, vector<8x8x8xf32>, vector<8x8x4xf32> -> vector<8x8x76xf32>
    %160 = vector.shape_cast %159 : vector<8x8x76xf32> to vector<64x76xf32>
    %161 = arith.truncf %160 : vector<64x76xf32> to vector<64x76xbf16>
    %c0_12 = arith.constant 0 : index
    %c0_13 = arith.constant 0 : index
    %162 = vector.load %arg4[%c0_12, %c0_13] : memref<76x8xbf16, #tpu.memory_space<vmem>>, vector<76x8xbf16>
    %cst_14 = arith.constant dense<0.000000e+00> : vector<64x8xf32>
    %163 = tpu.matmul %161, %162, %cst_14 {dimension_numbers = #tpu.dot_dimension_numbers<[1], [0], [0], [1], [0, 0, 1, 1], [], []>} : vector<64x76xbf16>, vector<76x8xbf16>, vector<64x8xf32> -> vector<64x8xf32>
    %c0_15 = arith.constant 0 : index
    %c0_16 = arith.constant 0 : index
    %164 = vector.load %arg5[%c0_15, %c0_16] : memref<1x8xf32, #tpu.memory_space<vmem>>, vector<1x8xf32>
    %165 = vector.broadcast %164 : vector<1x8xf32> to vector<64x8xf32>
    %166 = arith.addf %163, %165 : vector<64x8xf32>
    %167 = vector.shape_cast %166 : vector<64x8xf32> to vector<8x8x8xf32>
    %c0_17 = arith.constant 0 : index
    %c0_18 = arith.constant 0 : index
    %c0_19 = arith.constant 0 : index
    %c0_20 = arith.constant 0 : index
    %168 = vector.load %arg6[%c0_17, %c0_18, %c0_19, %c0_20] : memref<1x8x8x8xf32, #tpu.memory_space<vmem>>, vector<1x8x8x8xf32>
    %169 = vector.shape_cast %168 : vector<1x8x8x8xf32> to vector<8x8x8xf32>
    %170 = vector.shape_cast %167 : vector<8x8x8xf32> to vector<1x8x8x8xf32>
    tpu.vector_store %arg6[%c0_17, %c0_18, %c0_19, %c0_20], %170 {strides = array<i32>} : memref<1x8x8x8xf32, #tpu.memory_space<vmem>>, vector<1x8x8x8xf32>,
    return
  }
  func.func @transform_0(%arg0: i32) -> (i32, i32, i32, i32) {
    %c0_i32 = arith.constant 0 : i32
    %c0_i32_0 = arith.constant 0 : i32
    %c0_i32_1 = arith.constant 0 : i32
    %c0_i32_2 = arith.constant 0 : i32
    return %arg0, %c0_i32, %c0_i32_0, %c0_i32_1 : i32, i32, i32, i32
  }
  func.func @transform_1(%arg0: i32) -> (i32, i32) {
    %c0_i32 = arith.constant 0 : i32
    %c0_i32_0 = arith.constant 0 : i32
    %c0_i32_1 = arith.constant 0 : i32
    return %c0_i32, %c0_i32_0 : i32, i32
  }
  func.func @transform_2(%arg0: i32) -> (i32, i32) {
    %c0_i32 = arith.constant 0 : i32
    %c0_i32_0 = arith.constant 0 : i32
    %c0_i32_1 = arith.constant 0 : i32
    return %c0_i32, %c0_i32_0 : i32, i32
  }
  func.func @transform_3(%arg0: i32) -> (i32, i32) {
    %c0_i32 = arith.constant 0 : i32
    %c0_i32_0 = arith.constant 0 : i32
    %c0_i32_1 = arith.constant 0 : i32
    return %c0_i32, %c0_i32_0 : i32, i32
  }
  func.func @transform_4(%arg0: i32) -> (i32, i32) {
    %c0_i32 = arith.constant 0 : i32
    %c0_i32_0 = arith.constant 0 : i32
    %c0_i32_1 = arith.constant 0 : i32
    return %c0_i32, %c0_i32_0 : i32, i32
  }
  func.func @transform_5(%arg0: i32) -> (i32, i32, i32, i32) {
    %c0_i32 = arith.constant 0 : i32
    %c0_i32_0 = arith.constant 0 : i32
    %c0_i32_1 = arith.constant 0 : i32
    %c0_i32_2 = arith.constant 0 : i32
    return %arg0, %c0_i32, %c0_i32_0, %c0_i32_1 : i32, i32, i32, i32
  }
}

</mosaic_0001>

<llo_original>
// kernel: tpu_custom_call.1
$region0: #{tpu_custom_call.1}
  #allocation0 [shape = 'u32[]', space=smem, size = 0x4, offset = 0x4, fixed_abs, tag = 'smem constant byte address 0x4 - core index']
  #allocation1 [shape = 'u32[72,128]{1,0:T(1,128)}', space=vmem, size = 0x9000, scoped, tag = 'internal scratch']
  %s0 = inlined_call_operand.vmem [shape: f32[2,16,16,4], index: 0, kind: input, shape index: {}]
  %s1 = inlined_call_operand.vmem [shape: bf16[36,8], index: 1, kind: input, shape index: {}]
  %s2 = inlined_call_operand.vmem [shape: f32[1,8], index: 2, kind: input, shape index: {}]
  %s3 = inlined_call_operand.vmem [shape: bf16[76,8], index: 3, kind: input, shape index: {}]
  %s4 = inlined_call_operand.vmem [shape: f32[1,8], index: 4, kind: input, shape index: {}]
  %s5 = inlined_call_operand.hbm [shape: f32[2,8,8,8], index: 5, kind: output, shape index: {}]
  %s6 = sld [smem:[#allocation0]]
  $region53: #{tpu_custom_call.1} parent=0
    _
  %s8 = ssub.s32 1, %s6
  %s9 = scalar_select 0, %s8, %s6
  $region1: #{tpu_custom_call.1} parent=0
    #allocation2 [shape = 'u8[65536]{0}', space=vmem, size = 0x10000, scoped, tag = 'output window, operand 0']
    #allocation3 [shape = 's32[2]{0}', space=sflag, size = 0x8, scoped, tag = 'scoped memory for tpu_custom_call.1']
    %10 = vsyncpa [#allocation3], 0
    %s11 = scalar_lea.sflag [#allocation3], 1
    %12 = vsyncpa %s11, 0
    loop: start=0, step=1, limit=4
    $region2: #{tpu_custom_call.1} parent=1 // loop_pre_header
      _
    $region3: #{tpu_custom_call.1} parent=1 // loop_header
      %s14 = sphi 0, %s18
      %p15 = scmp.ge.s32.totalorder %s14, 4
      %s24 = sphi 0, %s26
      %s27 = sphi 0, %s24
      %s28 = sphi 0, %s27
      %s44 = sphi 0, %s28
      %s48 = sphi 0, %s48
      %s50 = sphi 0, %s48
      %s51 = sphi 0, %s50
      %s65 = sphi 0, %s51
      %s69 = sphi 0, %s69
      %s71 = sphi 0, %s69
      %s72 = sphi 0, %s71
      %s86 = sphi 0, %s72
      %s90 = sphi 0, %s90
      %s92 = sphi 0, %s90
      %s93 = sphi 0, %s92
      %s107 = sphi 0, %s93
      %s111 = sphi 0, %s111
      %s113 = sphi 0, %s111
      %s114 = sphi 0, %s113
      %s128 = sphi 0, %s114
      %s134 = sphi 0, %s136
      %s137 = sphi 0, %s134
      %s138 = sphi 0, %s137
      %s154 = sphi 0, %s138
    $region4: #{tpu_custom_call.1} parent=1 // loop_header_branch
      %17 = sbr.rel (%p15) target = $region8
    $region5: #{tpu_custom_call.1} parent=1 // loop_body
      %s19 = ssub.s32 %s14, 1
      %s20 = ssub.s32 %s14, 2
      %s21 = sadd.s32 %s14, 1
      %s22 = ssub.s32 %s14, %s21
      %p23 = scmp.eq.s32.totalorder %s22, 0
      %s25 = sadd.s32 %s24, 1
      %s26 = scalar_select %p23, %s24, %s25
      %p29 = pneg %p23
      %p30 = scmp.eq.s32.totalorder %s14, 1
      %p31 = por %p29, %p30
      %p32 = scmp.ne.s32.totalorder %s24, %s27
      %p33 = scmp.eq.s32.totalorder %s14, 0
      %p34 = por %p32, %p33
      %p35 = scmp.ne.s32.totalorder %s24, %s27
      %p36 = scmp.eq.s32.totalorder %s19, 1
      %p37 = por %p35, %p36
      %p38 = scmp.ne.s32.totalorder %s27, %s28
      %p39 = scmp.eq.s32.totalorder %s19, 0
      %p40 = por %p38, %p39
      %p41 = scmp.ne.s32.totalorder %s27, %s28
      %p42 = scmp.eq.s32.totalorder %s20, 1
      %p43 = por %p41, %p42
      %p45 = scmp.ne.s32.totalorder %s28, %s44
      %p46 = scmp.eq.s32.totalorder %s20, 0
      %p47 = por %p45, %p46
      %s49 = sadd.s32 %s48, 1
      %p52 = scmp.eq.s32.totalorder %s14, 1
      %p53 = scmp.ne.s32.totalorder %s48, %s50
      %p54 = scmp.eq.s32.totalorder %s14, 0
      %p55 = por %p53, %p54
      %p56 = scmp.ne.s32.totalorder %s48, %s50
      %p57 = scmp.eq.s32.totalorder %s19, 1
      %p58 = por %p56, %p57
      %p59 = scmp.ne.s32.totalorder %s50, %s51
      %p60 = scmp.eq.s32.totalorder %s19, 0
      %p61 = por %p59, %p60
      %p62 = scmp.ne.s32.totalorder %s50, %s51
      %p63 = scmp.eq.s32.totalorder %s20, 1
      %p64 = por %p62, %p63
      %p66 = scmp.ne.s32.totalorder %s51, %s65
      %p67 = scmp.eq.s32.totalorder %s20, 0
      %p68 = por %p66, %p67
      %s70 = sadd.s32 %s69, 1
      %p73 = scmp.eq.s32.totalorder %s14, 1
      %p74 = scmp.ne.s32.totalorder %s69, %s71
      %p75 = scmp.eq.s32.totalorder %s14, 0
      %p76 = por %p74, %p75
      %p77 = scmp.ne.s32.totalorder %s69, %s71
      %p78 = scmp.eq.s32.totalorder %s19, 1
      %p79 = por %p77, %p78
      %p80 = scmp.ne.s32.totalorder %s71, %s72
      %p81 = scmp.eq.s32.totalorder %s19, 0
      %p82 = por %p80, %p81
      %p83 = scmp.ne.s32.totalorder %s71, %s72
      %p84 = scmp.eq.s32.totalorder %s20, 1
      %p85 = por %p83, %p84
      %p87 = scmp.ne.s32.totalorder %s72, %s86
      %p88 = scmp.eq.s32.totalorder %s20, 0
      %p89 = por %p87, %p88
      %s91 = sadd.s32 %s90, 1
      %p94 = scmp.eq.s32.totalorder %s14, 1
      %p95 = scmp.ne.s32.totalorder %s90, %s92
      %p96 = scmp.eq.s32.totalorder %s14, 0
      %p97 = por %p95, %p96
      %p98 = scmp.ne.s32.totalorder %s90, %s92
      %p99 = scmp.eq.s32.totalorder %s19, 1
      %p100 = por %p98, %p99
      %p101 = scmp.ne.s32.totalorder %s92, %s93
      %p102 = scmp.eq.s32.totalorder %s19, 0
      %p103 = por %p101, %p102
      %p104 = scmp.ne.s32.totalorder %s92, %s93
      %p105 = scmp.eq.s32.totalorder %s20, 1
      %p106 = por %p104, %p105
      %p108 = scmp.ne.s32.totalorder %s93, %s107
      %p109 = scmp.eq.s32.totalorder %s20, 0
      %p110 = por %p108, %p109
      %s112 = sadd.s32 %s111, 1
      %p115 = scmp.eq.s32.totalorder %s14, 1
      %p116 = scmp.ne.s32.totalorder %s111, %s113
      %p117 = scmp.eq.s32.totalorder %s14, 0
      %p118 = por %p116, %p117
      %p119 = scmp.ne.s32.totalorder %s111, %s113
      %p120 = scmp.eq.s32.totalorder %s19, 1
      %p121 = por %p119, %p120
      %p122 = scmp.ne.s32.totalorder %s113, %s114
      %p123 = scmp.eq.s32.totalorder %s19, 0
      %p124 = por %p122, %p123
      %p125 = scmp.ne.s32.totalorder %s113, %s114
      %p126 = scmp.eq.s32.totalorder %s20, 1
      %p127 = por %p125, %p126
      %p129 = scmp.ne.s32.totalorder %s114, %s128
      %p130 = scmp.eq.s32.totalorder %s20, 0
      %p131 = por %p129, %p130
      %s132 = ssub.s32 %s14, %s21
      %p133 = scmp.eq.s32.totalorder %s132, 0
      %s135 = sadd.s32 %s134, 1
      %s136 = scalar_select %p133, %s134, %s135
      %p139 = pneg %p133
      %p140 = scmp.eq.s32.totalorder %s14, 1
      %p141 = por %p139, %p140
      %p142 = scmp.ne.s32.totalorder %s134, %s137
      %p143 = scmp.eq.s32.totalorder %s14, 0
      %p144 = por %p142, %p143
      %p145 = scmp.ne.s32.totalorder %s134, %s137
      %p146 = scmp.eq.s32.totalorder %s19, 1
      %p147 = por %p145, %p146
      %p148 = scmp.ne.s32.totalorder %s137, %s138
      %p149 = scmp.eq.s32.totalorder %s19, 0
      %p150 = por %p148, %p149
      %p151 = scmp.ne.s32.totalorder %s137, %s138
      %p152 = scmp.eq.s32.totalorder %s20, 1
      %p153 = por %p151, %p152
      %p155 = scmp.ne.s32.totalorder %s138, %s154
      %p156 = scmp.eq.s32.totalorder %s20, 0
      %p157 = por %p155, %p156
      %p158 = scmp.le.s32.totalorder 1, %s14
      %p159 = scmp.lt.s32.totalorder %s14, 3
      %p160 = pnand %p158, %p159
      %p161 = pneg %p160
      // Predicated region
      $region9: #{tpu_custom_call.1} parent=5 // pred_check
        _
      $region10: #{tpu_custom_call.1} parent=5 // pred_check_branch
        %163 = sbr.rel (%p160) target = $region12
      $region11: #{tpu_custom_call.1} parent=5 // pred_region
        %s164 = ssub.s32 %s14, 1
        // Predicated region
        $region13: #{tpu_custom_call.1} parent=11 // pred_check
          %p165 = pneg %p61
        $region14: #{tpu_custom_call.1} parent=11 // pred_check_branch
          %167 = sbr.rel (%p165) target = $region16
        $region15: #{tpu_custom_call.1} parent=11 // pred_region
          _
        $region16: #{tpu_custom_call.1} parent=11 // pred_fallthru
          _
        // Predicated region
        $region17: #{tpu_custom_call.1} parent=11 // pred_check
          %p168 = pneg %p82
        $region18: #{tpu_custom_call.1} parent=11 // pred_check_branch
          %170 = sbr.rel (%p168) target = $region20
        $region19: #{tpu_custom_call.1} parent=11 // pred_region
          _
        $region20: #{tpu_custom_call.1} parent=11 // pred_fallthru
          _
        // Predicated region
        $region21: #{tpu_custom_call.1} parent=11 // pred_check
          %p171 = pneg %p103
        $region22: #{tpu_custom_call.1} parent=11 // pred_check_branch
          %173 = sbr.rel (%p171) target = $region24
        $region23: #{tpu_custom_call.1} parent=11 // pred_region
          _
        $region24: #{tpu_custom_call.1} parent=11 // pred_fallthru
          _
        // Predicated region
        $region25: #{tpu_custom_call.1} parent=11 // pred_check
          %p174 = pneg %p124
        $region26: #{tpu_custom_call.1} parent=11 // pred_check_branch
          %176 = sbr.rel (%p174) target = $region28
        $region27: #{tpu_custom_call.1} parent=11 // pred_region
          _
        $region28: #{tpu_custom_call.1} parent=11 // pred_fallthru
          _
      $region12: #{tpu_custom_call.1} parent=5 // pred_fallthru
        _
      %p177 = scmp.lt.s32.totalorder %s14, 2
      // Predicated region
      $region29: #{tpu_custom_call.1} parent=5 // pred_check
        %p178 = pneg %p177
      $region30: #{tpu_custom_call.1} parent=5 // pred_check_branch
        %180 = sbr.rel (%p178) target = $region32
      $region31: #{tpu_custom_call.1} parent=5 // pred_region
        // Predicated region
        $region33: #{tpu_custom_call.1} parent=31 // pred_check
          %p181 = pneg %p34
        $region34: #{tpu_custom_call.1} parent=31 // pred_check_branch
          %183 = sbr.rel (%p181) target = $region36
        $region35: #{tpu_custom_call.1} parent=31 // pred_region
          %p184 = scmp.lt.s32.totalorder %s14, 1
          %s185 = scalar_select %p184, %s14, 1
          %s186 = smul.addr %s185, 32
          %s187 = smul.addr %s186, 8
          %s188 = scalar_lea.vmem %s0, %s187
        $region36: #{tpu_custom_call.1} parent=31 // pred_fallthru
          _
      $region32: #{tpu_custom_call.1} parent=5 // pred_fallthru
        _
      %p189 = scmp.le.s32.totalorder 1, %s14
      %p190 = scmp.lt.s32.totalorder %s14, 3
      %p191 = pnand %p189, %p190
      %p192 = pneg %p191
      // Predicated region
      $region37: #{tpu_custom_call.1} parent=5 // pred_check
        _
      $region38: #{tpu_custom_call.1} parent=5 // pred_check_branch
        %194 = sbr.rel (%p191) target = $region40
      $region39: #{tpu_custom_call.1} parent=5 // pred_region
        %s195 = ssub.s32 %s14, 1
        %p196 = scmp.lt.s32.totalorder %s19, 1
        %s197 = scalar_select %p196, %s19, 1
        %s198 = smul.addr %s197, 32
        %s199 = smul.addr %s198, 8
        %s200 = scalar_lea.vmem %s0, %s199
        %p201 = pneg %p40
        %p202 = pneg %p37
        %p203 = pneg %p61
        %p204 = pneg %p58
        %p205 = pneg %p82
        %p206 = pneg %p79
        %p207 = pneg %p103
        %p208 = pneg %p100
        %p209 = pneg %p124
        %p210 = pneg %p121
        %p211 = pneg %p150
        %p212 = pneg %p147
        %s213 = sand.u32 %s137, 1
        %s214 = scalar_lea.sflag [#allocation3], %s213
        %s215 = sand.u32 %s137, 1
        %s216 = smul.addr %s215, 64
        %s217 = scalar_lea.vmem [#allocation2], %s216
        %p218 = scmp.lt.s32.totalorder %s19, 1
        %s219 = scalar_select %p218, %s19, 1
        %s220 = smul.addr %s219, 32
        %s221 = smul.addr %s220, 8
        %s222 = scalar_lea.vmem %s0, %s221
        %v224 = vld [vmem:[%s222] sm:$0xff]
        %v225 = vld [vmem:[%s222 + $0x8] sm:$0xff]
        %v226 = vld [vmem:[%s222 + $0x10] sm:$0xff]
        %v227 = vld [vmem:[%s222 + $0x18] sm:$0xff]
        %v228 = vld [vmem:[%s222 + $0x20] sm:$0xff]
        %v229 = vld [vmem:[%s222 + $0x28] sm:$0xff]
        %v230 = vld [vmem:[%s222 + $0x30] sm:$0xff]
        %v231 = vld [vmem:[%s222 + $0x38] sm:$0xff]
        %v232 = vld [vmem:[%s222 + $0x40] sm:$0xff]
        %v233 = vld [vmem:[%s222 + $0x48] sm:$0xff]
        %v234 = vld [vmem:[%s222 + $0x50] sm:$0xff]
        %v235 = vld [vmem:[%s222 + $0x58] sm:$0xff]
        %v236 = vld [vmem:[%s222 + $0x60] sm:$0xff]
        %v237 = vld [vmem:[%s222 + $0x68] sm:$0xff]
        %v238 = vld [vmem:[%s222 + $0x70] sm:$0xff]
        %v239 = vld [vmem:[%s222 + $0x78] sm:$0xff]
        %v240 = vld [vmem:[%s222 + $0x80] sm:$0xff]
        %v241 = vld [vmem:[%s222 + $0x88] sm:$0xff]
        %v242 = vld [vmem:[%s222 + $0x90] sm:$0xff]
        %v243 = vld [vmem:[%s222 + $0x98] sm:$0xff]
        %v244 = vld [vmem:[%s222 + $0xa0] sm:$0xff]
        %v245 = vld [vmem:[%s222 + $0xa8] sm:$0xff]
        %v246 = vld [vmem:[%s222 + $0xb0] sm:$0xff]
        %v247 = vld [vmem:[%s222 + $0xb8] sm:$0xff]
        %v248 = vld [vmem:[%s222 + $0xc0] sm:$0xff]
        %v249 = vld [vmem:[%s222 + $0xc8] sm:$0xff]
        %v250 = vld [vmem:[%s222 + $0xd0] sm:$0xff]
        %v251 = vld [vmem:[%s222 + $0xd8] sm:$0xff]
        %v252 = vld [vmem:[%s222 + $0xe0] sm:$0xff]
        %v253 = vld [vmem:[%s222 + $0xe8] sm:$0xff]
        %v254 = vld [vmem:[%s222 + $0xf0] sm:$0xff]
        %v255 = vld [vmem:[%s222 + $0xf8] sm:$0xff]
        %vm289 = vcmask 1040384
        %v290 = vrot.slane 0.0, 7
        %v291 = vsel %vm289, %v290, %v290
        %v292 = vrot.slane %v224, 7
        %v293 = vrot.slane %v225, 7
        %v294 = vsel %vm289, %v292, %v293
        %v295 = vrot.slane %v226, 7
        %v296 = vrot.slane %v227, 7
        %v297 = vsel %vm289, %v295, %v296
        %v298 = vrot.slane %v228, 7
        %v299 = vrot.slane %v229, 7
        %v300 = vsel %vm289, %v298, %v299
        %v301 = vrot.slane %v230, 7
        %v302 = vrot.slane %v231, 7
        %v303 = vsel %vm289, %v301, %v302
        %v304 = vrot.slane %v232, 7
        %v305 = vrot.slane %v233, 7
        %v306 = vsel %vm289, %v304, %v305
        %v307 = vrot.slane %v234, 7
        %v308 = vrot.slane %v235, 7
        %v309 = vsel %vm289, %v307, %v308
        %v310 = vrot.slane %v236, 7
        %v311 = vrot.slane %v237, 7
        %v312 = vsel %vm289, %v310, %v311
        %v313 = vrot.slane %v238, 7
        %v314 = vrot.slane %v239, 7
        %v315 = vsel %vm289, %v313, %v314
        %v316 = vrot.slane %v240, 7
        %v317 = vrot.slane %v241, 7
        %v318 = vsel %vm289, %v316, %v317
        %v319 = vrot.slane %v242, 7
        %v320 = vrot.slane %v243, 7
        %v321 = vsel %vm289, %v319, %v320
        %v322 = vrot.slane %v244, 7
        %v323 = vrot.slane %v245, 7
        %v324 = vsel %vm289, %v322, %v323
        %v325 = vrot.slane %v246, 7
        %v326 = vrot.slane %v247, 7
        %v327 = vsel %vm289, %v325, %v326
        %v328 = vrot.slane %v248, 7
        %v329 = vrot.slane %v249, 7
        %v330 = vsel %vm289, %v328, %v329
        %v331 = vrot.slane %v250, 7
        %v332 = vrot.slane %v251, 7
        %v333 = vsel %vm289, %v331, %v332
        %v334 = vrot.slane %v252, 7
        %v335 = vrot.slane %v253, 7
        %v336 = vsel %vm289, %v334, %v335
        %v337 = vrot.slane %v254, 7
        %v338 = vrot.slane %v255, 7
        %v339 = vsel %vm289, %v337, %v338
        %v389 = vsel %vm289, 0.0, %v290
        %v390 = vsel %vm289, 0.0, %v292
        %v391 = vsel %vm289, 0.0, %v295
        %v392 = vsel %vm289, 0.0, %v298
        %v393 = vsel %vm289, 0.0, %v301
        %v394 = vsel %vm289, 0.0, %v304
        %v395 = vsel %vm289, 0.0, %v307
        %v396 = vsel %vm289, 0.0, %v310
        %v397 = vsel %vm289, 0.0, %v313
        %v398 = vsel %vm289, 0.0, %v316
        %v399 = vsel %vm289, 0.0, %v319
        %v400 = vsel %vm289, 0.0, %v322
        %v401 = vsel %vm289, 0.0, %v325
        %v402 = vsel %vm289, 0.0, %v328
        %v403 = vsel %vm289, 0.0, %v331
        %v404 = vsel %vm289, 0.0, %v334
        %v405 = vsel %vm289, 0.0, %v337
        %v406 = vsel %vm289, %v290, 0.0
        %v407 = vsel %vm289, %v293, 0.0
        %v408 = vsel %vm289, %v296, 0.0
        %v409 = vsel %vm289, %v299, 0.0
        %v410 = vsel %vm289, %v302, 0.0
        %v411 = vsel %vm289, %v305, 0.0
        %v412 = vsel %vm289, %v308, 0.0
        %v413 = vsel %vm289, %v311, 0.0
        %v414 = vsel %vm289, %v314, 0.0
        %v415 = vsel %vm289, %v317, 0.0
        %v416 = vsel %vm289, %v320, 0.0
        %v417 = vsel %vm289, %v323, 0.0
        %v418 = vsel %vm289, %v326, 0.0
        %v419 = vsel %vm289, %v329, 0.0
        %v420 = vsel %vm289, %v332, 0.0
        %v421 = vsel %vm289, %v335, 0.0
        %v422 = vsel %vm289, %v338, 0.0
        %vm455 = vcmask 1046528
        %v456 = vrot.slane %v389, 1
        %v457 = vrot.slane %v291, 1
        %v458 = vsel %vm455, %v456, %v457
        %v459 = vrot.slane %v406, 1
        %v460 = vsel %vm455, %v457, %v459
        %v461 = vrot.slane %v390, 1
        %v462 = vrot.slane %v294, 1
        %v463 = vsel %vm455, %v461, %v462
        %v464 = vrot.slane %v407, 1
        %v465 = vsel %vm455, %v462, %v464
        %v466 = vrot.slane %v391, 1
        %v467 = vrot.slane %v297, 1
        %v468 = vsel %vm455, %v466, %v467
        %v469 = vrot.slane %v408, 1
        %v470 = vsel %vm455, %v467, %v469
        %v471 = vrot.slane %v392, 1
        %v472 = vrot.slane %v300, 1
        %v473 = vsel %vm455, %v471, %v472
        %v474 = vrot.slane %v409, 1
        %v475 = vsel %vm455, %v472, %v474
        %v476 = vrot.slane %v393, 1
        %v477 = vrot.slane %v303, 1
        %v478 = vsel %vm455, %v476, %v477
        %v479 = vrot.slane %v410, 1
        %v480 = vsel %vm455, %v477, %v479
        %v481 = vrot.slane %v394, 1
        %v482 = vrot.slane %v306, 1
        %v483 = vsel %vm455, %v481, %v482
        %v484 = vrot.slane %v411, 1
        %v485 = vsel %vm455, %v482, %v484
        %v486 = vrot.slane %v395, 1
        %v487 = vrot.slane %v309, 1
        %v488 = vsel %vm455, %v486, %v487
        %v489 = vrot.slane %v412, 1
        %v490 = vsel %vm455, %v487, %v489
        %v491 = vrot.slane %v396, 1
        %v492 = vrot.slane %v312, 1
        %v493 = vsel %vm455, %v491, %v492
        %v494 = vrot.slane %v413, 1
        %v495 = vsel %vm455, %v492, %v494
        %v496 = vrot.slane %v397, 1
        %v497 = vrot.slane %v315, 1
        %v498 = vsel %vm455, %v496, %v497
        %v499 = vrot.slane %v414, 1
        %v500 = vsel %vm455, %v497, %v499
        %v501 = vrot.slane %v398, 1
        %v502 = vrot.slane %v318, 1
        %v503 = vsel %vm455, %v501, %v502
        %v504 = vrot.slane %v415, 1
        %v505 = vsel %vm455, %v502, %v504
        %v506 = vrot.slane %v399, 1
        %v507 = vrot.slane %v321, 1
        %v508 = vsel %vm455, %v506, %v507
        %v509 = vrot.slane %v416, 1
        %v510 = vsel %vm455, %v507, %v509
        %v511 = vrot.slane %v400, 1
        %v512 = vrot.slane %v324, 1
        %v513 = vsel %vm455, %v511, %v512
        %v514 = vrot.slane %v417, 1
        %v515 = vsel %vm455, %v512, %v514
        %v516 = vrot.slane %v401, 1
        %v517 = vrot.slane %v327, 1
        %v518 = vsel %vm455, %v516, %v517
        %v519 = vrot.slane %v418, 1
        %v520 = vsel %vm455, %v517, %v519
        %v521 = vrot.slane %v402, 1
        %v522 = vrot.slane %v330, 1
        %v523 = vsel %vm455, %v521, %v522
        %v524 = vrot.slane %v419, 1
        %v525 = vsel %vm455, %v522, %v524
        %v526 = vrot.slane %v403, 1
        %v527 = vrot.slane %v333, 1
        %v528 = vsel %vm455, %v526, %v527
        %v529 = vrot.slane %v420, 1
        %v530 = vsel %vm455, %v527, %v529
        %v531 = vrot.slane %v404, 1
        %v532 = vrot.slane %v336, 1
        %v533 = vsel %vm455, %v531, %v532
        %v534 = vrot.slane %v421, 1
        %v535 = vsel %vm455, %v532, %v534
        %536 = vrot.lane.b32.xlu0 %v458, 4
        %v537 = vpop.permute.xlu0 %536
        %538 = vrot.lane.b32.xlu0 %v460, 4
        %v539 = vpop.permute.xlu0 %538
        %540 = vrot.lane.b32.xlu0 %v463, 4
        %v541 = vpop.permute.xlu0 %540
        %542 = vrot.lane.b32.xlu0 %v465, 4
        %v543 = vpop.permute.xlu0 %542
        %544 = vrot.lane.b32.xlu0 %v468, 4
        %v545 = vpop.permute.xlu0 %544
        %546 = vrot.lane.b32.xlu0 %v470, 4
        %v547 = vpop.permute.xlu0 %546
        %548 = vrot.lane.b32.xlu0 %v473, 4
        %v549 = vpop.permute.xlu0 %548
        %550 = vrot.lane.b32.xlu0 %v475, 4
        %v551 = vpop.permute.xlu0 %550
        %552 = vrot.lane.b32.xlu0 %v478, 4
        %v553 = vpop.permute.xlu0 %552
        %554 = vrot.lane.b32.xlu0 %v480, 4
        %v555 = vpop.permute.xlu0 %554
        %556 = vrot.lane.b32.xlu0 %v483, 4
        %v557 = vpop.permute.xlu0 %556
        %558 = vrot.lane.b32.xlu0 %v485, 4
        %v559 = vpop.permute.xlu0 %558
        %560 = vrot.lane.b32.xlu0 %v488, 4
        %v561 = vpop.permute.xlu0 %560
        %562 = vrot.lane.b32.xlu0 %v490, 4
        %v563 = vpop.permute.xlu0 %562
        %564 = vrot.lane.b32.xlu0 %v493, 4
        %v565 = vpop.permute.xlu0 %564
        %566 = vrot.lane.b32.xlu0 %v495, 4
        %v567 = vpop.permute.xlu0 %566
        %568 = vrot.lane.b32.xlu0 %v498, 4
        %v569 = vpop.permute.xlu0 %568
        %570 = vrot.lane.b32.xlu0 %v500, 4
        %v571 = vpop.permute.xlu0 %570
        %572 = vrot.lane.b32.xlu0 %v503, 4
        %v573 = vpop.permute.xlu0 %572
        %574 = vrot.lane.b32.xlu0 %v505, 4
        %v575 = vpop.permute.xlu0 %574
        %576 = vrot.lane.b32.xlu0 %v508, 4
        %v577 = vpop.permute.xlu0 %576
        %578 = vrot.lane.b32.xlu0 %v510, 4
        %v579 = vpop.permute.xlu0 %578
        %580 = vrot.lane.b32.xlu0 %v513, 4
        %v581 = vpop.permute.xlu0 %580
        %582 = vrot.lane.b32.xlu0 %v515, 4
        %v583 = vpop.permute.xlu0 %582
        %584 = vrot.lane.b32.xlu0 %v518, 4
        %v585 = vpop.permute.xlu0 %584
        %586 = vrot.lane.b32.xlu0 %v520, 4
        %v587 = vpop.permute.xlu0 %586
        %588 = vrot.lane.b32.xlu0 %v523, 4
        %v589 = vpop.permute.xlu0 %588
        %590 = vrot.lane.b32.xlu0 %v525, 4
        %v591 = vpop.permute.xlu0 %590
        %592 = vrot.lane.b32.xlu0 %v528, 4
        %v593 = vpop.permute.xlu0 %592
        %594 = vrot.lane.b32.xlu0 %v530, 4
        %v595 = vpop.permute.xlu0 %594
        %596 = vrot.lane.b32.xlu0 %v533, 4
        %v597 = vpop.permute.xlu0 %596
        %598 = vrot.lane.b32.xlu0 %v535, 4
        %v599 = vpop.permute.xlu0 %598
        %vm632 = vcmask 1045504
        %v633 = vrot.slane %v389, 2
        %v634 = vrot.slane %v291, 2
        %v635 = vsel %vm632, %v633, %v634
        %v636 = vrot.slane %v406, 2
        %v637 = vsel %vm632, %v634, %v636
        %v638 = vrot.slane %v390, 2
        %v639 = vrot.slane %v294, 2
        %v640 = vsel %vm632, %v638, %v639
        %v641 = vrot.slane %v407, 2
        %v642 = vsel %vm632, %v639, %v641
        %v643 = vrot.slane %v391, 2
        %v644 = vrot.slane %v297, 2
        %v645 = vsel %vm632, %v643, %v644
        %v646 = vrot.slane %v408, 2
        %v647 = vsel %vm632, %v644, %v646
        %v648 = vrot.slane %v392, 2
        %v649 = vrot.slane %v300, 2
        %v650 = vsel %vm632, %v648, %v649
        %v651 = vrot.slane %v409, 2
        %v652 = vsel %vm632, %v649, %v651
        %v653 = vrot.slane %v393, 2
        %v654 = vrot.slane %v303, 2
        %v655 = vsel %vm632, %v653, %v654
        %v656 = vrot.slane %v410, 2
        %v657 = vsel %vm632, %v654, %v656
        %v658 = vrot.slane %v394, 2
        %v659 = vrot.slane %v306, 2
        %v660 = vsel %vm632, %v658, %v659
        %v661 = vrot.slane %v411, 2
        %v662 = vsel %vm632, %v659, %v661
        %v663 = vrot.slane %v395, 2
        %v664 = vrot.slane %v309, 2
        %v665 = vsel %vm632, %v663, %v664
        %v666 = vrot.slane %v412, 2
        %v667 = vsel %vm632, %v664, %v666
        %v668 = vrot.slane %v396, 2
        %v669 = vrot.slane %v312, 2
        %v670 = vsel %vm632, %v668, %v669
        %v671 = vrot.slane %v413, 2
        %v672 = vsel %vm632, %v669, %v671
        %v673 = vrot.slane %v397, 2
        %v674 = vrot.slane %v315, 2
        %v675 = vsel %vm632, %v673, %v674
        %v676 = vrot.slane %v414, 2
        %v677 = vsel %vm632, %v674, %v676
        %v678 = vrot.slane %v398, 2
        %v679 = vrot.slane %v318, 2
        %v680 = vsel %vm632, %v678, %v679
        %v681 = vrot.slane %v415, 2
        %v682 = vsel %vm632, %v679, %v681
        %v683 = vrot.slane %v399, 2
        %v684 = vrot.slane %v321, 2
        %v685 = vsel %vm632, %v683, %v684
        %v686 = vrot.slane %v416, 2
        %v687 = vsel %vm632, %v684, %v686
        %v688 = vrot.slane %v400, 2
        %v689 = vrot.slane %v324, 2
        %v690 = vsel %vm632, %v688, %v689
        %v691 = vrot.slane %v417, 2
        %v692 = vsel %vm632, %v689, %v691
        %v693 = vrot.slane %v401, 2
        %v694 = vrot.slane %v327, 2
        %v695 = vsel %vm632, %v693, %v694
        %v696 = vrot.slane %v418, 2
        %v697 = vsel %vm632, %v694, %v696
        %v698 = vrot.slane %v402, 2
        %v699 = vrot.slane %v330, 2
        %v700 = vsel %vm632, %v698, %v699
        %v701 = vrot.slane %v419, 2
        %v702 = vsel %vm632, %v699, %v701
        %v703 = vrot.slane %v403, 2
        %v704 = vrot.slane %v333, 2
        %v705 = vsel %vm632, %v703, %v704
        %v706 = vrot.slane %v420, 2
        %v707 = vsel %vm632, %v704, %v706
        %v708 = vrot.slane %v404, 2
        %v709 = vrot.slane %v336, 2
        %v710 = vsel %vm632, %v708, %v709
        %v711 = vrot.slane %v421, 2
        %v712 = vsel %vm632, %v709, %v711
        %713 = vrot.lane.b32.xlu0 %v635, 8
        %v714 = vpop.permute.xlu0 %713
        %715 = vrot.lane.b32.xlu0 %v637, 8
        %v716 = vpop.permute.xlu0 %715
        %717 = vrot.lane.b32.xlu0 %v640, 8
        %v718 = vpop.permute.xlu0 %717
        %719 = vrot.lane.b32.xlu0 %v642, 8
        %v720 = vpop.permute.xlu0 %719
        %721 = vrot.lane.b32.xlu0 %v645, 8
        %v722 = vpop.permute.xlu0 %721
        %723 = vrot.lane.b32.xlu0 %v647, 8
        %v724 = vpop.permute.xlu0 %723
        %725 = vrot.lane.b32.xlu0 %v650, 8
        %v726 = vpop.permute.xlu0 %725
        %727 = vrot.lane.b32.xlu0 %v652, 8
        %v728 = vpop.permute.xlu0 %727
        %729 = vrot.lane.b32.xlu0 %v655, 8
        %v730 = vpop.permute.xlu0 %729
        %731 = vrot.lane.b32.xlu0 %v657, 8
        %v732 = vpop.permute.xlu0 %731
        %733 = vrot.lane.b32.xlu0 %v660, 8
        %v734 = vpop.permute.xlu0 %733
        %735 = vrot.lane.b32.xlu0 %v662, 8
        %v736 = vpop.permute.xlu0 %735
        %737 = vrot.lane.b32.xlu0 %v665, 8
        %v738 = vpop.permute.xlu0 %737
        %739 = vrot.lane.b32.xlu0 %v667, 8
        %v740 = vpop.permute.xlu0 %739
        %741 = vrot.lane.b32.xlu0 %v670, 8
        %v742 = vpop.permute.xlu0 %741
        %743 = vrot.lane.b32.xlu0 %v672, 8
        %v744 = vpop.permute.xlu0 %743
        %745 = vrot.lane.b32.xlu0 %v675, 8
        %v746 = vpop.permute.xlu0 %745
        %747 = vrot.lane.b32.xlu0 %v677, 8
        %v748 = vpop.permute.xlu0 %747
        %749 = vrot.lane.b32.xlu0 %v680, 8
        %v750 = vpop.permute.xlu0 %749
        %751 = vrot.lane.b32.xlu0 %v682, 8
        %v752 = vpop.permute.xlu0 %751
        %753 = vrot.lane.b32.xlu0 %v685, 8
        %v754 = vpop.permute.xlu0 %753
        %755 = vrot.lane.b32.xlu0 %v687, 8
        %v756 = vpop.permute.xlu0 %755
        %757 = vrot.lane.b32.xlu0 %v690, 8
        %v758 = vpop.permute.xlu0 %757
        %759 = vrot.lane.b32.xlu0 %v692, 8
        %v760 = vpop.permute.xlu0 %759
        %761 = vrot.lane.b32.xlu0 %v695, 8
        %v762 = vpop.permute.xlu0 %761
        %763 = vrot.lane.b32.xlu0 %v697, 8
        %v764 = vpop.permute.xlu0 %763
        %765 = vrot.lane.b32.xlu0 %v700, 8
        %v766 = vpop.permute.xlu0 %765
        %767 = vrot.lane.b32.xlu0 %v702, 8
        %v768 = vpop.permute.xlu0 %767
        %769 = vrot.lane.b32.xlu0 %v705, 8
        %v770 = vpop.permute.xlu0 %769
        %771 = vrot.lane.b32.xlu0 %v707, 8
        %v772 = vpop.permute.xlu0 %771
        %773 = vrot.lane.b32.xlu0 %v710, 8
        %v774 = vpop.permute.xlu0 %773
        %775 = vrot.lane.b32.xlu0 %v712, 8
        %v776 = vpop.permute.xlu0 %775
        %810 = vrot.lane.b32.xlu0 %v390, 12
        %v811 = vpop.permute.xlu0 %810
        %812 = vrot.lane.b32.xlu0 %v294, 12
        %v813 = vpop.permute.xlu0 %812
        %814 = vrot.lane.b32.xlu0 %v391, 12
        %v815 = vpop.permute.xlu0 %814
        %816 = vrot.lane.b32.xlu0 %v297, 12
        %v817 = vpop.permute.xlu0 %816
        %818 = vrot.lane.b32.xlu0 %v392, 12
        %v819 = vpop.permute.xlu0 %818
        %820 = vrot.lane.b32.xlu0 %v300, 12
        %v821 = vpop.permute.xlu0 %820
        %822 = vrot.lane.b32.xlu0 %v393, 12
        %v823 = vpop.permute.xlu0 %822
        %824 = vrot.lane.b32.xlu0 %v303, 12
        %v825 = vpop.permute.xlu0 %824
        %826 = vrot.lane.b32.xlu0 %v394, 12
        %v827 = vpop.permute.xlu0 %826
        %828 = vrot.lane.b32.xlu0 %v306, 12
        %v829 = vpop.permute.xlu0 %828
        %830 = vrot.lane.b32.xlu0 %v395, 12
        %v831 = vpop.permute.xlu0 %830
        %832 = vrot.lane.b32.xlu0 %v309, 12
        %v833 = vpop.permute.xlu0 %832
        %834 = vrot.lane.b32.xlu0 %v396, 12
        %v835 = vpop.permute.xlu0 %834
        %836 = vrot.lane.b32.xlu0 %v312, 12
        %v837 = vpop.permute.xlu0 %836
        %838 = vrot.lane.b32.xlu0 %v397, 12
        %v839 = vpop.permute.xlu0 %838
        %840 = vrot.lane.b32.xlu0 %v315, 12
        %v841 = vpop.permute.xlu0 %840
        %842 = vrot.lane.b32.xlu0 %v398, 12
        %v843 = vpop.permute.xlu0 %842
        %844 = vrot.lane.b32.xlu0 %v318, 12
        %v845 = vpop.permute.xlu0 %844
        %846 = vrot.lane.b32.xlu0 %v399, 12
        %v847 = vpop.permute.xlu0 %846
        %848 = vrot.lane.b32.xlu0 %v321, 12
        %v849 = vpop.permute.xlu0 %848
        %850 = vrot.lane.b32.xlu0 %v400, 12
        %v851 = vpop.permute.xlu0 %850
        %852 = vrot.lane.b32.xlu0 %v324, 12
        %v853 = vpop.permute.xlu0 %852
        %854 = vrot.lane.b32.xlu0 %v401, 12
        %v855 = vpop.permute.xlu0 %854
        %856 = vrot.lane.b32.xlu0 %v327, 12
        %v857 = vpop.permute.xlu0 %856
        %858 = vrot.lane.b32.xlu0 %v402, 12
        %v859 = vpop.permute.xlu0 %858
        %860 = vrot.lane.b32.xlu0 %v330, 12
        %v861 = vpop.permute.xlu0 %860
        %862 = vrot.lane.b32.xlu0 %v403, 12
        %v863 = vpop.permute.xlu0 %862
        %864 = vrot.lane.b32.xlu0 %v333, 12
        %v865 = vpop.permute.xlu0 %864
        %866 = vrot.lane.b32.xlu0 %v404, 12
        %v867 = vpop.permute.xlu0 %866
        %868 = vrot.lane.b32.xlu0 %v336, 12
        %v869 = vpop.permute.xlu0 %868
        %870 = vrot.lane.b32.xlu0 %v405, 12
        %v871 = vpop.permute.xlu0 %870
        %872 = vrot.lane.b32.xlu0 %v339, 12
        %v873 = vpop.permute.xlu0 %872
        %v907 = vrot.slane %v405, 1
        %v908 = vrot.slane %v339, 1
        %v909 = vsel %vm455, %v907, %v908
        %v910 = vrot.slane %v422, 1
        %v911 = vsel %vm455, %v908, %v910
        %912 = vrot.lane.b32.xlu0 %v463, 16
        %v913 = vpop.permute.xlu0 %912
        %914 = vrot.lane.b32.xlu0 %v465, 16
        %v915 = vpop.permute.xlu0 %914
        %916 = vrot.lane.b32.xlu0 %v468, 16
        %v917 = vpop.permute.xlu0 %916
        %918 = vrot.lane.b32.xlu0 %v470, 16
        %v919 = vpop.permute.xlu0 %918
        %920 = vrot.lane.b32.xlu0 %v473, 16
        %v921 = vpop.permute.xlu0 %920
        %922 = vrot.lane.b32.xlu0 %v475, 16
        %v923 = vpop.permute.xlu0 %922
        %924 = vrot.lane.b32.xlu0 %v478, 16
        %v925 = vpop.permute.xlu0 %924
        %926 = vrot.lane.b32.xlu0 %v480, 16
        %v927 = vpop.permute.xlu0 %926
        %928 = vrot.lane.b32.xlu0 %v483, 16
        %v929 = vpop.permute.xlu0 %928
        %930 = vrot.lane.b32.xlu0 %v485, 16
        %v931 = vpop.permute.xlu0 %930
        %932 = vrot.lane.b32.xlu0 %v488, 16
        %v933 = vpop.permute.xlu0 %932
        %934 = vrot.lane.b32.xlu0 %v490, 16
        %v935 = vpop.permute.xlu0 %934
        %936 = vrot.lane.b32.xlu0 %v493, 16
        %v937 = vpop.permute.xlu0 %936
        %938 = vrot.lane.b32.xlu0 %v495, 16
        %v939 = vpop.permute.xlu0 %938
        %940 = vrot.lane.b32.xlu0 %v498, 16
        %v941 = vpop.permute.xlu0 %940
        %942 = vrot.lane.b32.xlu0 %v500, 16
        %v943 = vpop.permute.xlu0 %942
        %944 = vrot.lane.b32.xlu0 %v503, 16
        %v945 = vpop.permute.xlu0 %944
        %946 = vrot.lane.b32.xlu0 %v505, 16
        %v947 = vpop.permute.xlu0 %946
        %948 = vrot.lane.b32.xlu0 %v508, 16
        %v949 = vpop.permute.xlu0 %948
        %950 = vrot.lane.b32.xlu0 %v510, 16
        %v951 = vpop.permute.xlu0 %950
        %952 = vrot.lane.b32.xlu0 %v513, 16
        %v953 = vpop.permute.xlu0 %952
        %954 = vrot.lane.b32.xlu0 %v515, 16
        %v955 = vpop.permute.xlu0 %954
        %956 = vrot.lane.b32.xlu0 %v518, 16
        %v957 = vpop.permute.xlu0 %956
        %958 = vrot.lane.b32.xlu0 %v520, 16
        %v959 = vpop.permute.xlu0 %958
        %960 = vrot.lane.b32.xlu0 %v523, 16
        %v961 = vpop.permute.xlu0 %960
        %962 = vrot.lane.b32.xlu0 %v525, 16
        %v963 = vpop.permute.xlu0 %962
        %964 = vrot.lane.b32.xlu0 %v528, 16
        %v965 = vpop.permute.xlu0 %964
        %966 = vrot.lane.b32.xlu0 %v530, 16
        %v967 = vpop.permute.xlu0 %966
        %968 = vrot.lane.b32.xlu0 %v533, 16
        %v969 = vpop.permute.xlu0 %968
        %970 = vrot.lane.b32.xlu0 %v535, 16
        %v971 = vpop.permute.xlu0 %970
        %972 = vrot.lane.b32.xlu0 %v909, 16
        %v973 = vpop.permute.xlu0 %972
        %974 = vrot.lane.b32.xlu0 %v911, 16
        %v975 = vpop.permute.xlu0 %974
        %v1008 = vrot.slane %v405, 2
        %v1009 = vrot.slane %v339, 2
        %v1010 = vsel %vm632, %v1008, %v1009
        %v1011 = vrot.slane %v422, 2
        %v1012 = vsel %vm632, %v1009, %v1011
        %1013 = vrot.lane.b32.xlu0 %v640, 20
        %v1014 = vpop.permute.xlu0 %1013
        %1015 = vrot.lane.b32.xlu0 %v642, 20
        %v1016 = vpop.permute.xlu0 %1015
        %1017 = vrot.lane.b32.xlu0 %v645, 20
        %v1018 = vpop.permute.xlu0 %1017
        %1019 = vrot.lane.b32.xlu0 %v647, 20
        %v1020 = vpop.permute.xlu0 %1019
        %1021 = vrot.lane.b32.xlu0 %v650, 20
        %v1022 = vpop.permute.xlu0 %1021
        %1023 = vrot.lane.b32.xlu0 %v652, 20
        %v1024 = vpop.permute.xlu0 %1023
        %1025 = vrot.lane.b32.xlu0 %v655, 20
        %v1026 = vpop.permute.xlu0 %1025
        %1027 = vrot.lane.b32.xlu0 %v657, 20
        %v1028 = vpop.permute.xlu0 %1027
        %1029 = vrot.lane.b32.xlu0 %v660, 20
        %v1030 = vpop.permute.xlu0 %1029
        %1031 = vrot.lane.b32.xlu0 %v662, 20
        %v1032 = vpop.permute.xlu0 %1031
        %1033 = vrot.lane.b32.xlu0 %v665, 20
        %v1034 = vpop.permute.xlu0 %1033
        %1035 = vrot.lane.b32.xlu0 %v667, 20
        %v1036 = vpop.permute.xlu0 %1035
        %1037 = vrot.lane.b32.xlu0 %v670, 20
        %v1038 = vpop.permute.xlu0 %1037
        %1039 = vrot.lane.b32.xlu0 %v672, 20
        %v1040 = vpop.permute.xlu0 %1039
        %1041 = vrot.lane.b32.xlu0 %v675, 20
        %v1042 = vpop.permute.xlu0 %1041
        %1043 = vrot.lane.b32.xlu0 %v677, 20
        %v1044 = vpop.permute.xlu0 %1043
        %1045 = vrot.lane.b32.xlu0 %v680, 20
        %v1046 = vpop.permute.xlu0 %1045
        %1047 = vrot.lane.b32.xlu0 %v682, 20
        %v1048 = vpop.permute.xlu0 %1047
        %1049 = vrot.lane.b32.xlu0 %v685, 20
        %v1050 = vpop.permute.xlu0 %1049
        %1051 = vrot.lane.b32.xlu0 %v687, 20
        %v1052 = vpop.permute.xlu0 %1051
        %1053 = vrot.lane.b32.xlu0 %v690, 20
        %v1054 = vpop.permute.xlu0 %1053
        %1055 = vrot.lane.b32.xlu0 %v692, 20
        %v1056 = vpop.permute.xlu0 %1055
        %1057 = vrot.lane.b32.xlu0 %v695, 20
        %v1058 = vpop.permute.xlu0 %1057
        %1059 = vrot.lane.b32.xlu0 %v697, 20
        %v1060 = vpop.permute.xlu0 %1059
        %1061 = vrot.lane.b32.xlu0 %v700, 20
        %v1062 = vpop.permute.xlu0 %1061
        %1063 = vrot.lane.b32.xlu0 %v702, 20
        %v1064 = vpop.permute.xlu0 %1063
        %1065 = vrot.lane.b32.xlu0 %v705, 20
        %v1066 = vpop.permute.xlu0 %1065
        %1067 = vrot.lane.b32.xlu0 %v707, 20
        %v1068 = vpop.permute.xlu0 %1067
        %1069 = vrot.lane.b32.xlu0 %v710, 20
        %v1070 = vpop.permute.xlu0 %1069
        %1071 = vrot.lane.b32.xlu0 %v712, 20
        %v1072 = vpop.permute.xlu0 %1071
        %1073 = vrot.lane.b32.xlu0 %v1010, 20
        %v1074 = vpop.permute.xlu0 %1073
        %1075 = vrot.lane.b32.xlu0 %v1012, 20
        %v1076 = vpop.permute.xlu0 %1075
        %1109 = vrot.lane.b32.xlu0 %v391, 24
        %v1110 = vpop.permute.xlu0 %1109
        %1111 = vrot.lane.b32.xlu0 %v297, 24
        %v1112 = vpop.permute.xlu0 %1111
        %1113 = vrot.lane.b32.xlu0 %v392, 24
        %v1114 = vpop.permute.xlu0 %1113
        %1115 = vrot.lane.b32.xlu0 %v300, 24
        %v1116 = vpop.permute.xlu0 %1115
        %1117 = vrot.lane.b32.xlu0 %v393, 24
        %v1118 = vpop.permute.xlu0 %1117
        %1119 = vrot.lane.b32.xlu0 %v303, 24
        %v1120 = vpop.permute.xlu0 %1119
        %1121 = vrot.lane.b32.xlu0 %v394, 24
        %v1122 = vpop.permute.xlu0 %1121
        %1123 = vrot.lane.b32.xlu0 %v306, 24
        %v1124 = vpop.permute.xlu0 %1123
        %1125 = vrot.lane.b32.xlu0 %v395, 24
        %v1126 = vpop.permute.xlu0 %1125
        %1127 = vrot.lane.b32.xlu0 %v309, 24
        %v1128 = vpop.permute.xlu0 %1127
        %1129 = vrot.lane.b32.xlu0 %v396, 24
        %v1130 = vpop.permute.xlu0 %1129
        %1131 = vrot.lane.b32.xlu0 %v312, 24
        %v1132 = vpop.permute.xlu0 %1131
        %1133 = vrot.lane.b32.xlu0 %v397, 24
        %v1134 = vpop.permute.xlu0 %1133
        %1135 = vrot.lane.b32.xlu0 %v315, 24
        %v1136 = vpop.permute.xlu0 %1135
        %1137 = vrot.lane.b32.xlu0 %v398, 24
        %v1138 = vpop.permute.xlu0 %1137
        %1139 = vrot.lane.b32.xlu0 %v318, 24
        %v1140 = vpop.permute.xlu0 %1139
        %1141 = vrot.lane.b32.xlu0 %v399, 24
        %v1142 = vpop.permute.xlu0 %1141
        %1143 = vrot.lane.b32.xlu0 %v321, 24
        %v1144 = vpop.permute.xlu0 %1143
        %1145 = vrot.lane.b32.xlu0 %v400, 24
        %v1146 = vpop.permute.xlu0 %1145
        %1147 = vrot.lane.b32.xlu0 %v324, 24
        %v1148 = vpop.permute.xlu0 %1147
        %1149 = vrot.lane.b32.xlu0 %v401, 24
        %v1150 = vpop.permute.xlu0 %1149
        %1151 = vrot.lane.b32.xlu0 %v327, 24
        %v1152 = vpop.permute.xlu0 %1151
        %1153 = vrot.lane.b32.xlu0 %v402, 24
        %v1154 = vpop.permute.xlu0 %1153
        %1155 = vrot.lane.b32.xlu0 %v330, 24
        %v1156 = vpop.permute.xlu0 %1155
        %1157 = vrot.lane.b32.xlu0 %v403, 24
        %v1158 = vpop.permute.xlu0 %1157
        %1159 = vrot.lane.b32.xlu0 %v333, 24
        %v1160 = vpop.permute.xlu0 %1159
        %1161 = vrot.lane.b32.xlu0 %v404, 24
        %v1162 = vpop.permute.xlu0 %1161
        %1163 = vrot.lane.b32.xlu0 %v336, 24
        %v1164 = vpop.permute.xlu0 %1163
        %1165 = vrot.lane.b32.xlu0 %v405, 24
        %v1166 = vpop.permute.xlu0 %1165
        %1167 = vrot.lane.b32.xlu0 %v339, 24
        %v1168 = vpop.permute.xlu0 %1167
        %1169 = vrot.lane.b32.xlu0 %v389, 24
        %v1170 = vpop.permute.xlu0 %1169
        %1171 = vrot.lane.b32.xlu0 %v291, 24
        %v1172 = vpop.permute.xlu0 %1171
        %1205 = vrot.lane.b32.xlu0 %v468, 28
        %v1206 = vpop.permute.xlu0 %1205
        %1207 = vrot.lane.b32.xlu0 %v470, 28
        %v1208 = vpop.permute.xlu0 %1207
        %1209 = vrot.lane.b32.xlu0 %v473, 28
        %v1210 = vpop.permute.xlu0 %1209
        %1211 = vrot.lane.b32.xlu0 %v475, 28
        %v1212 = vpop.permute.xlu0 %1211
        %1213 = vrot.lane.b32.xlu0 %v478, 28
        %v1214 = vpop.permute.xlu0 %1213
        %1215 = vrot.lane.b32.xlu0 %v480, 28
        %v1216 = vpop.permute.xlu0 %1215
        %1217 = vrot.lane.b32.xlu0 %v483, 28
        %v1218 = vpop.permute.xlu0 %1217
        %1219 = vrot.lane.b32.xlu0 %v485, 28
        %v1220 = vpop.permute.xlu0 %1219
        %1221 = vrot.lane.b32.xlu0 %v488, 28
        %v1222 = vpop.permute.xlu0 %1221
        %1223 = vrot.lane.b32.xlu0 %v490, 28
        %v1224 = vpop.permute.xlu0 %1223
        %1225 = vrot.lane.b32.xlu0 %v493, 28
        %v1226 = vpop.permute.xlu0 %1225
        %1227 = vrot.lane.b32.xlu0 %v495, 28
        %v1228 = vpop.permute.xlu0 %1227
        %1229 = vrot.lane.b32.xlu0 %v498, 28
        %v1230 = vpop.permute.xlu0 %1229
        %1231 = vrot.lane.b32.xlu0 %v500, 28
        %v1232 = vpop.permute.xlu0 %1231
        %1233 = vrot.lane.b32.xlu0 %v503, 28
        %v1234 = vpop.permute.xlu0 %1233
        %1235 = vrot.lane.b32.xlu0 %v505, 28
        %v1236 = vpop.permute.xlu0 %1235
        %1237 = vrot.lane.b32.xlu0 %v508, 28
        %v1238 = vpop.permute.xlu0 %1237
        %1239 = vrot.lane.b32.xlu0 %v510, 28
        %v1240 = vpop.permute.xlu0 %1239
        %1241 = vrot.lane.b32.xlu0 %v513, 28
        %v1242 = vpop.permute.xlu0 %1241
        %1243 = vrot.lane.b32.xlu0 %v515, 28
        %v1244 = vpop.permute.xlu0 %1243
        %1245 = vrot.lane.b32.xlu0 %v518, 28
        %v1246 = vpop.permute.xlu0 %1245
        %1247 = vrot.lane.b32.xlu0 %v520, 28
        %v1248 = vpop.permute.xlu0 %1247
        %1249 = vrot.lane.b32.xlu0 %v523, 28
        %v1250 = vpop.permute.xlu0 %1249
        %1251 = vrot.lane.b32.xlu0 %v525, 28
        %v1252 = vpop.permute.xlu0 %1251
        %1253 = vrot.lane.b32.xlu0 %v528, 28
        %v1254 = vpop.permute.xlu0 %1253
        %1255 = vrot.lane.b32.xlu0 %v530, 28
        %v1256 = vpop.permute.xlu0 %1255
        %1257 = vrot.lane.b32.xlu0 %v533, 28
        %v1258 = vpop.permute.xlu0 %1257
        %1259 = vrot.lane.b32.xlu0 %v535, 28
        %v1260 = vpop.permute.xlu0 %1259
        %1261 = vrot.lane.b32.xlu0 %v909, 28
        %v1262 = vpop.permute.xlu0 %1261
        %1263 = vrot.lane.b32.xlu0 %v911, 28
        %v1264 = vpop.permute.xlu0 %1263
        %1265 = vrot.lane.b32.xlu0 %v458, 28
        %v1266 = vpop.permute.xlu0 %1265
        %1267 = vrot.lane.b32.xlu0 %v460, 28
        %v1268 = vpop.permute.xlu0 %1267
        %1301 = vrot.lane.b32.xlu0 %v645, 32
        %v1302 = vpop.permute.xlu0 %1301
        %1303 = vrot.lane.b32.xlu0 %v647, 32
        %v1304 = vpop.permute.xlu0 %1303
        %1305 = vrot.lane.b32.xlu0 %v650, 32
        %v1306 = vpop.permute.xlu0 %1305
        %1307 = vrot.lane.b32.xlu0 %v652, 32
        %v1308 = vpop.permute.xlu0 %1307
        %1309 = vrot.lane.b32.xlu0 %v655, 32
        %v1310 = vpop.permute.xlu0 %1309
        %1311 = vrot.lane.b32.xlu0 %v657, 32
        %v1312 = vpop.permute.xlu0 %1311
        %1313 = vrot.lane.b32.xlu0 %v660, 32
        %v1314 = vpop.permute.xlu0 %1313
        %1315 = vrot.lane.b32.xlu0 %v662, 32
        %v1316 = vpop.permute.xlu0 %1315
        %1317 = vrot.lane.b32.xlu0 %v665, 32
        %v1318 = vpop.permute.xlu0 %1317
        %1319 = vrot.lane.b32.xlu0 %v667, 32
        %v1320 = vpop.permute.xlu0 %1319
        %1321 = vrot.lane.b32.xlu0 %v670, 32
        %v1322 = vpop.permute.xlu0 %1321
        %1323 = vrot.lane.b32.xlu0 %v672, 32
        %v1324 = vpop.permute.xlu0 %1323
        %1325 = vrot.lane.b32.xlu0 %v675, 32
        %v1326 = vpop.permute.xlu0 %1325
        %1327 = vrot.lane.b32.xlu0 %v677, 32
        %v1328 = vpop.permute.xlu0 %1327
        %1329 = vrot.lane.b32.xlu0 %v680, 32
        %v1330 = vpop.permute.xlu0 %1329
        %1331 = vrot.lane.b32.xlu0 %v682, 32
        %v1332 = vpop.permute.xlu0 %1331
        %1333 = vrot.lane.b32.xlu0 %v685, 32
        %v1334 = vpop.permute.xlu0 %1333
        %1335 = vrot.lane.b32.xlu0 %v687, 32
        %v1336 = vpop.permute.xlu0 %1335
        %1337 = vrot.lane.b32.xlu0 %v690, 32
        %v1338 = vpop.permute.xlu0 %1337
        %1339 = vrot.lane.b32.xlu0 %v692, 32
        %v1340 = vpop.permute.xlu0 %1339
        %1341 = vrot.lane.b32.xlu0 %v695, 32
        %v1342 = vpop.permute.xlu0 %1341
        %1343 = vrot.lane.b32.xlu0 %v697, 32
        %v1344 = vpop.permute.xlu0 %1343
        %1345 = vrot.lane.b32.xlu0 %v700, 32
        %v1346 = vpop.permute.xlu0 %1345
        %1347 = vrot.lane.b32.xlu0 %v702, 32
        %v1348 = vpop.permute.xlu0 %1347
        %1349 = vrot.lane.b32.xlu0 %v705, 32
        %v1350 = vpop.permute.xlu0 %1349
        %1351 = vrot.lane.b32.xlu0 %v707, 32
        %v1352 = vpop.permute.xlu0 %1351
        %1353 = vrot.lane.b32.xlu0 %v710, 32
        %v1354 = vpop.permute.xlu0 %1353
        %1355 = vrot.lane.b32.xlu0 %v712, 32
        %v1356 = vpop.permute.xlu0 %1355
        %1357 = vrot.lane.b32.xlu0 %v1010, 32
        %v1358 = vpop.permute.xlu0 %1357
        %1359 = vrot.lane.b32.xlu0 %v1012, 32
        %v1360 = vpop.permute.xlu0 %1359
        %1361 = vrot.lane.b32.xlu0 %v635, 32
        %v1362 = vpop.permute.xlu0 %1361
        %1363 = vrot.lane.b32.xlu0 %v637, 32
        %v1364 = vpop.permute.xlu0 %1363
        %vm1397 = vcmask 31744
        %v1398 = vsel %vm1397, %v389, %v537
        %v1399 = vsel %vm1397, %v291, %v539
        %v1400 = vsel %vm1397, %v390, %v541
        %v1401 = vsel %vm1397, %v294, %v543
        %v1402 = vsel %vm1397, %v391, %v545
        %v1403 = vsel %vm1397, %v297, %v547
        %v1404 = vsel %vm1397, %v392, %v549
        %v1405 = vsel %vm1397, %v300, %v551
        %v1406 = vsel %vm1397, %v393, %v553
        %v1407 = vsel %vm1397, %v303, %v555
        %v1408 = vsel %vm1397, %v394, %v557
        %v1409 = vsel %vm1397, %v306, %v559
        %v1410 = vsel %vm1397, %v395, %v561
        %v1411 = vsel %vm1397, %v309, %v563
        %v1412 = vsel %vm1397, %v396, %v565
        %v1413 = vsel %vm1397, %v312, %v567
        %v1414 = vsel %vm1397, %v397, %v569
        %v1415 = vsel %vm1397, %v315, %v571
        %v1416 = vsel %vm1397, %v398, %v573
        %v1417 = vsel %vm1397, %v318, %v575
        %v1418 = vsel %vm1397, %v399, %v577
        %v1419 = vsel %vm1397, %v321, %v579
        %v1420 = vsel %vm1397, %v400, %v581
        %v1421 = vsel %vm1397, %v324, %v583
        %v1422 = vsel %vm1397, %v401, %v585
        %v1423 = vsel %vm1397, %v327, %v587
        %v1424 = vsel %vm1397, %v402, %v589
        %v1425 = vsel %vm1397, %v330, %v591
        %v1426 = vsel %vm1397, %v403, %v593
        %v1427 = vsel %vm1397, %v333, %v595
        %v1428 = vsel %vm1397, %v404, %v597
        %v1429 = vsel %vm1397, %v336, %v599
        %vm1430 = vcmask 64512
        %v1431 = vsel %vm1430, %v1398, %v714
        %v1432 = vsel %vm1430, %v1399, %v716
        %v1433 = vsel %vm1430, %v1400, %v718
        %v1434 = vsel %vm1430, %v1401, %v720
        %v1435 = vsel %vm1430, %v1402, %v722
        %v1436 = vsel %vm1430, %v1403, %v724
        %v1437 = vsel %vm1430, %v1404, %v726
        %v1438 = vsel %vm1430, %v1405, %v728
        %v1439 = vsel %vm1430, %v1406, %v730
        %v1440 = vsel %vm1430, %v1407, %v732
        %v1441 = vsel %vm1430, %v1408, %v734
        %v1442 = vsel %vm1430, %v1409, %v736
        %v1443 = vsel %vm1430, %v1410, %v738
        %v1444 = vsel %vm1430, %v1411, %v740
        %v1445 = vsel %vm1430, %v1412, %v742
        %v1446 = vsel %vm1430, %v1413, %v744
        %v1447 = vsel %vm1430, %v1414, %v746
        %v1448 = vsel %vm1430, %v1415, %v748
        %v1449 = vsel %vm1430, %v1416, %v750
        %v1450 = vsel %vm1430, %v1417, %v752
        %v1451 = vsel %vm1430, %v1418, %v754
        %v1452 = vsel %vm1430, %v1419, %v756
        %v1453 = vsel %vm1430, %v1420, %v758
        %v1454 = vsel %vm1430, %v1421, %v760
        %v1455 = vsel %vm1430, %v1422, %v762
        %v1456 = vsel %vm1430, %v1423, %v764
        %v1457 = vsel %vm1430, %v1424, %v766
        %v1458 = vsel %vm1430, %v1425, %v768
        %v1459 = vsel %vm1430, %v1426, %v770
        %v1460 = vsel %vm1430, %v1427, %v772
        %v1461 = vsel %vm1430, %v1428, %v774
        %v1462 = vsel %vm1430, %v1429, %v776
        %vm1463 = vcmask 97280
        %v1464 = vsel %vm1463, %v1431, %v811
        %v1465 = vsel %vm1463, %v1432, %v813
        %v1466 = vsel %vm1463, %v1433, %v815
        %v1467 = vsel %vm1463, %v1434, %v817
        %v1468 = vsel %vm1463, %v1435, %v819
        %v1469 = vsel %vm1463, %v1436, %v821
        %v1470 = vsel %vm1463, %v1437, %v823
        %v1471 = vsel %vm1463, %v1438, %v825
        %v1472 = vsel %vm1463, %v1439, %v827
        %v1473 = vsel %vm1463, %v1440, %v829
        %v1474 = vsel %vm1463, %v1441, %v831
        %v1475 = vsel %vm1463, %v1442, %v833
        %v1476 = vsel %vm1463, %v1443, %v835
        %v1477 = vsel %vm1463, %v1444, %v837
        %v1478 = vsel %vm1463, %v1445, %v839
        %v1479 = vsel %vm1463, %v1446, %v841
        %v1480 = vsel %vm1463, %v1447, %v843
        %v1481 = vsel %vm1463, %v1448, %v845
        %v1482 = vsel %vm1463, %v1449, %v847
        %v1483 = vsel %vm1463, %v1450, %v849
        %v1484 = vsel %vm1463, %v1451, %v851
        %v1485 = vsel %vm1463, %v1452, %v853
        %v1486 = vsel %vm1463, %v1453, %v855
        %v1487 = vsel %vm1463, %v1454, %v857
        %v1488 = vsel %vm1463, %v1455, %v859
        %v1489 = vsel %vm1463, %v1456, %v861
        %v1490 = vsel %vm1463, %v1457, %v863
        %v1491 = vsel %vm1463, %v1458, %v865
        %v1492 = vsel %vm1463, %v1459, %v867
        %v1493 = vsel %vm1463, %v1460, %v869
        %v1494 = vsel %vm1463, %v1461, %v871
        %v1495 = vsel %vm1463, %v1462, %v873
        %vm1496 = vcmask 130048
        %v1497 = vsel %vm1496, %v1464, %v913
        %v1498 = vsel %vm1496, %v1465, %v915
        %v1499 = vsel %vm1496, %v1466, %v917
        %v1500 = vsel %vm1496, %v1467, %v919
        %v1501 = vsel %vm1496, %v1468, %v921
        %v1502 = vsel %vm1496, %v1469, %v923
        %v1503 = vsel %vm1496, %v1470, %v925
        %v1504 = vsel %vm1496, %v1471, %v927
        %v1505 = vsel %vm1496, %v1472, %v929
        %v1506 = vsel %vm1496, %v1473, %v931
        %v1507 = vsel %vm1496, %v1474, %v933
        %v1508 = vsel %vm1496, %v1475, %v935
        %v1509 = vsel %vm1496, %v1476, %v937
        %v1510 = vsel %vm1496, %v1477, %v939
        %v1511 = vsel %vm1496, %v1478, %v941
        %v1512 = vsel %vm1496, %v1479, %v943
        %v1513 = vsel %vm1496, %v1480, %v945
        %v1514 = vsel %vm1496, %v1481, %v947
        %v1515 = vsel %vm1496, %v1482, %v949
        %v1516 = vsel %vm1496, %v1483, %v951
        %v1517 = vsel %vm1496, %v1484, %v953
        %v1518 = vsel %vm1496, %v1485, %v955
        %v1519 = vsel %vm1496, %v1486, %v957
        %v1520 = vsel %vm1496, %v1487, %v959
        %v1521 = vsel %vm1496, %v1488, %v961
        %v1522 = vsel %vm1496, %v1489, %v963
        %v1523 = vsel %vm1496, %v1490, %v965
        %v1524 = vsel %vm1496, %v1491, %v967
        %v1525 = vsel %vm1496, %v1492, %v969
        %v1526 = vsel %vm1496, %v1493, %v971
        %v1527 = vsel %vm1496, %v1494, %v973
        %v1528 = vsel %vm1496, %v1495, %v975
        %vm1529 = vcmask 162816
        %v1530 = vsel %vm1529, %v1497, %v1014
        %v1531 = vsel %vm1529, %v1498, %v1016
        %v1532 = vsel %vm1529, %v1499, %v1018
        %v1533 = vsel %vm1529, %v1500, %v1020
        %v1534 = vsel %vm1529, %v1501, %v1022
        %v1535 = vsel %vm1529, %v1502, %v1024
        %v1536 = vsel %vm1529, %v1503, %v1026
        %v1537 = vsel %vm1529, %v1504, %v1028
        %v1538 = vsel %vm1529, %v1505, %v1030
        %v1539 = vsel %vm1529, %v1506, %v1032
        %v1540 = vsel %vm1529, %v1507, %v1034
        %v1541 = vsel %vm1529, %v1508, %v1036
        %v1542 = vsel %vm1529, %v1509, %v1038
        %v1543 = vsel %vm1529, %v1510, %v1040
        %v1544 = vsel %vm1529, %v1511, %v1042
        %v1545 = vsel %vm1529, %v1512, %v1044
        %v1546 = vsel %vm1529, %v1513, %v1046
        %v1547 = vsel %vm1529, %v1514, %v1048
        %v1548 = vsel %vm1529, %v1515, %v1050
        %v1549 = vsel %vm1529, %v1516, %v1052
        %v1550 = vsel %vm1529, %v1517, %v1054
        %v1551 = vsel %vm1529, %v1518, %v1056
        %v1552 = vsel %vm1529, %v1519, %v1058
        %v1553 = vsel %vm1529, %v1520, %v1060
        %v1554 = vsel %vm1529, %v1521, %v1062
        %v1555 = vsel %vm1529, %v1522, %v1064
        %v1556 = vsel %vm1529, %v1523, %v1066
        %v1557 = vsel %vm1529, %v1524, %v1068
        %v1558 = vsel %vm1529, %v1525, %v1070
        %v1559 = vsel %vm1529, %v1526, %v1072
        %v1560 = vsel %vm1529, %v1527, %v1074
        %v1561 = vsel %vm1529, %v1528, %v1076
        %vm1562 = vcmask 195584
        %v1563 = vsel %vm1562, %v1530, %v1110
        %v1564 = vsel %vm1562, %v1531, %v1112
        %v1565 = vsel %vm1562, %v1532, %v1114
        %v1566 = vsel %vm1562, %v1533, %v1116
        %v1567 = vsel %vm1562, %v1534, %v1118
        %v1568 = vsel %vm1562, %v1535, %v1120
        %v1569 = vsel %vm1562, %v1536, %v1122
        %v1570 = vsel %vm1562, %v1537, %v1124
        %v1571 = vsel %vm1562, %v1538, %v1126
        %v1572 = vsel %vm1562, %v1539, %v1128
        %v1573 = vsel %vm1562, %v1540, %v1130
        %v1574 = vsel %vm1562, %v1541, %v1132
        %v1575 = vsel %vm1562, %v1542, %v1134
        %v1576 = vsel %vm1562, %v1543, %v1136
        %v1577 = vsel %vm1562, %v1544, %v1138
        %v1578 = vsel %vm1562, %v1545, %v1140
        %v1579 = vsel %vm1562, %v1546, %v1142
        %v1580 = vsel %vm1562, %v1547, %v1144
        %v1581 = vsel %vm1562, %v1548, %v1146
        %v1582 = vsel %vm1562, %v1549, %v1148
        %v1583 = vsel %vm1562, %v1550, %v1150
        %v1584 = vsel %vm1562, %v1551, %v1152
        %v1585 = vsel %vm1562, %v1552, %v1154
        %v1586 = vsel %vm1562, %v1553, %v1156
        %v1587 = vsel %vm1562, %v1554, %v1158
        %v1588 = vsel %vm1562, %v1555, %v1160
        %v1589 = vsel %vm1562, %v1556, %v1162
        %v1590 = vsel %vm1562, %v1557, %v1164
        %v1591 = vsel %vm1562, %v1558, %v1166
        %v1592 = vsel %vm1562, %v1559, %v1168
        %v1593 = vsel %vm1562, %v1560, %v1170
        %v1594 = vsel %vm1562, %v1561, %v1172
        %vm1595 = vcmask 228352
        %v1596 = vsel %vm1595, %v1563, %v1206
        %v1597 = vsel %vm1595, %v1564, %v1208
        %v1598 = vsel %vm1595, %v1565, %v1210
        %v1599 = vsel %vm1595, %v1566, %v1212
        %v1600 = vsel %vm1595, %v1567, %v1214
        %v1601 = vsel %vm1595, %v1568, %v1216
        %v1602 = vsel %vm1595, %v1569, %v1218
        %v1603 = vsel %vm1595, %v1570, %v1220
        %v1604 = vsel %vm1595, %v1571, %v1222
        %v1605 = vsel %vm1595, %v1572, %v1224
        %v1606 = vsel %vm1595, %v1573, %v1226
        %v1607 = vsel %vm1595, %v1574, %v1228
        %v1608 = vsel %vm1595, %v1575, %v1230
        %v1609 = vsel %vm1595, %v1576, %v1232
        %v1610 = vsel %vm1595, %v1577, %v1234
        %v1611 = vsel %vm1595, %v1578, %v1236
        %v1612 = vsel %vm1595, %v1579, %v1238
        %v1613 = vsel %vm1595, %v1580, %v1240
        %v1614 = vsel %vm1595, %v1581, %v1242
        %v1615 = vsel %vm1595, %v1582, %v1244
        %v1616 = vsel %vm1595, %v1583, %v1246
        %v1617 = vsel %vm1595, %v1584, %v1248
        %v1618 = vsel %vm1595, %v1585, %v1250
        %v1619 = vsel %vm1595, %v1586, %v1252
        %v1620 = vsel %vm1595, %v1587, %v1254
        %v1621 = vsel %vm1595, %v1588, %v1256
        %v1622 = vsel %vm1595, %v1589, %v1258
        %v1623 = vsel %vm1595, %v1590, %v1260
        %v1624 = vsel %vm1595, %v1591, %v1262
        %v1625 = vsel %vm1595, %v1592, %v1264
        %v1626 = vsel %vm1595, %v1593, %v1266
        %v1627 = vsel %vm1595, %v1594, %v1268
        %vm1628 = vcmask 261120
        %v1629 = vsel %vm1628, %v1596, %v1302
        %v1630 = vsel %vm1628, %v1597, %v1304
        %v1631 = vsel %vm1628, %v1598, %v1306
        %v1632 = vsel %vm1628, %v1599, %v1308
        %v1633 = vsel %vm1628, %v1600, %v1310
        %v1634 = vsel %vm1628, %v1601, %v1312
        %v1635 = vsel %vm1628, %v1602, %v1314
        %v1636 = vsel %vm1628, %v1603, %v1316
        %v1637 = vsel %vm1628, %v1604, %v1318
        %v1638 = vsel %vm1628, %v1605, %v1320
        %v1639 = vsel %vm1628, %v1606, %v1322
        %v1640 = vsel %vm1628, %v1607, %v1324
        %v1641 = vsel %vm1628, %v1608, %v1326
        %v1642 = vsel %vm1628, %v1609, %v1328
        %v1643 = vsel %vm1628, %v1610, %v1330
        %v1644 = vsel %vm1628, %v1611, %v1332
        %v1645 = vsel %vm1628, %v1612, %v1334
        %v1646 = vsel %vm1628, %v1613, %v1336
        %v1647 = vsel %vm1628, %v1614, %v1338
        %v1648 = vsel %vm1628, %v1615, %v1340
        %v1649 = vsel %vm1628, %v1616, %v1342
        %v1650 = vsel %vm1628, %v1617, %v1344
        %v1651 = vsel %vm1628, %v1618, %v1346
        %v1652 = vsel %vm1628, %v1619, %v1348
        %v1653 = vsel %vm1628, %v1620, %v1350
        %v1654 = vsel %vm1628, %v1621, %v1352
        %v1655 = vsel %vm1628, %v1622, %v1354
        %v1656 = vsel %vm1628, %v1623, %v1356
        %v1657 = vsel %vm1628, %v1624, %v1358
        %v1658 = vsel %vm1628, %v1625, %v1360
        %v1659 = vsel %vm1628, %v1626, %v1362
        %v1660 = vsel %vm1628, %v1627, %v1364
        %v1661 = vpack.c.bf16 %v1630, %v1629
        %v1662 = vpack.c.bf16 %v1632, %v1631
        %v1663 = vpack.c.bf16 %v1634, %v1633
        %v1664 = vpack.c.bf16 %v1636, %v1635
        %v1665 = vpack.c.bf16 %v1638, %v1637
        %v1666 = vpack.c.bf16 %v1640, %v1639
        %v1667 = vpack.c.bf16 %v1642, %v1641
        %v1668 = vpack.c.bf16 %v1644, %v1643
        %v1669 = vpack.c.bf16 %v1646, %v1645
        %v1670 = vpack.c.bf16 %v1648, %v1647
        %v1671 = vpack.c.bf16 %v1650, %v1649
        %v1672 = vpack.c.bf16 %v1652, %v1651
        %v1673 = vpack.c.bf16 %v1654, %v1653
        %v1674 = vpack.c.bf16 %v1656, %v1655
        %v1675 = vpack.c.bf16 %v1658, %v1657
        %v1676 = vpack.c.bf16 %v1660, %v1659
        %v1677 = vld [vmem:[%s1] sm:$0xf]
        %v1678 = vld [vmem:[%s1 + $0x4] sm:$0xf]
        %v1679 = vld [vmem:[%s1 + $0x8] sm:$0xf]
        %v1680 = vld [vmem:[%s1 + $0xc] sm:$0xf]
        %v1681 = vld [vmem:[%s1 + $0x10] sm:$0x3]
        %v1682 = vld [vmem:[%s2] sm:$0x1]
        %v1684 = vperm.slane %v1682, 0
        %v1691 = vunpack.c.l.b16 %v1677
        %v1692 = vunpack.c.l.b16 %v1678
        %v1693 = vunpack.c.l.b16 %v1679
        %v1694 = vunpack.c.l.b16 %v1680
        %v1695 = vunpack.c.l.b16 %v1681
        %v1696 = vpack.c.b16 %v1692, %v1691
        %v1697 = vpack.c.b16 %v1694, %v1693
        %v1698 = vpack.c.b16 %v1695, %v1695
        %vm1701 = vcmask 293888
        %v1703 = vsel %vm1701, %v1661, 0
        %v1706 = vsel %vm1701, %v1662, 0
        %v1709 = vsel %vm1701, %v1663, 0
        %v1712 = vsel %vm1701, %v1664, 0
        %v1715 = vsel %vm1701, %v1665, 0
        %v1718 = vsel %vm1701, %v1666, 0
        %v1721 = vsel %vm1701, %v1667, 0
        %v1724 = vsel %vm1701, %v1668, 0
        %v1727 = vsel %vm1701, %v1669, 0
        %v1730 = vsel %vm1701, %v1670, 0
        %v1733 = vsel %vm1701, %v1671, 0
        %v1736 = vsel %vm1701, %v1672, 0
        %v1739 = vsel %vm1701, %v1673, 0
        %v1742 = vsel %vm1701, %v1674, 0
        %v1745 = vsel %vm1701, %v1675, 0
        %v1748 = vsel %vm1701, %v1676, 0
        %vm1750 = vcmask 1041408
        %v1752 = vsel %vm1750, %v1698, 0
        %1754 = vmatpush.bf16.msra.mxu0 0
        %1755 = vmatpush.bf16.msra.mxu0 0
        %1756 = vmatpush.bf16.msra.mxu0 0
        %1757 = vmatpush.bf16.msra.mxu0 0
        %1758 = vmatpush.bf16.msra.mxu0 0
        %1759 = vmatpush.bf16.msra.mxu0 %v1752
        %1760 = vmatpush.bf16.msra.mxu0 %v1697
        %1761 = vmatpush.bf16.msra.mxu0 %v1696
        %1762 = vmatmul.bf16.gmra.mxu0 %v1703
        %v1763 = vpop.f32.mrf.mxu0
        %v1764 = vadd.f32 %v1684, %v1763
        %v1765 = vpop.f32.mrf.mxu0
        %v1766 = vadd.f32 %v1684, %v1765
        %1767 = vmatmul.bf16.gmra.mxu0 %v1706
        %v1768 = vpop.f32.mrf.mxu0
        %v1769 = vadd.f32 %v1684, %v1768
        %v1770 = vpop.f32.mrf.mxu0
        %v1771 = vadd.f32 %v1684, %v1770
        %1772 = vmatmul.bf16.gmra.mxu0 %v1709
        %v1773 = vpop.f32.mrf.mxu0
        %v1774 = vadd.f32 %v1684, %v1773
        %v1775 = vpop.f32.mrf.mxu0
        %v1776 = vadd.f32 %v1684, %v1775
        %1777 = vmatmul.bf16.gmra.mxu0 %v1712
        %v1778 = vpop.f32.mrf.mxu0
        %v1779 = vadd.f32 %v1684, %v1778
        %v1780 = vpop.f32.mrf.mxu0
        %v1781 = vadd.f32 %v1684, %v1780
        %1782 = vmatmul.bf16.gmra.mxu0 %v1715
        %v1783 = vpop.f32.mrf.mxu0
        %v1784 = vadd.f32 %v1684, %v1783
        %v1785 = vpop.f32.mrf.mxu0
        %v1786 = vadd.f32 %v1684, %v1785
        %1787 = vmatmul.bf16.gmra.mxu0 %v1718
        %v1788 = vpop.f32.mrf.mxu0
        %v1789 = vadd.f32 %v1684, %v1788
        %v1790 = vpop.f32.mrf.mxu0
        %v1791 = vadd.f32 %v1684, %v1790
        %1792 = vmatmul.bf16.gmra.mxu0 %v1721
        %v1793 = vpop.f32.mrf.mxu0
        %v1794 = vadd.f32 %v1684, %v1793
        %v1795 = vpop.f32.mrf.mxu0
        %v1796 = vadd.f32 %v1684, %v1795
        %1797 = vmatmul.bf16.gmra.mxu0 %v1724
        %v1798 = vpop.f32.mrf.mxu0
        %v1799 = vadd.f32 %v1684, %v1798
        %v1800 = vpop.f32.mrf.mxu0
        %v1801 = vadd.f32 %v1684, %v1800
        %1802 = vmatmul.bf16.gmra.mxu0 %v1727
        %v1803 = vpop.f32.mrf.mxu0
        %v1804 = vadd.f32 %v1684, %v1803
        %v1805 = vpop.f32.mrf.mxu0
        %v1806 = vadd.f32 %v1684, %v1805
        %1807 = vmatmul.bf16.gmra.mxu0 %v1730
        %v1808 = vpop.f32.mrf.mxu0
        %v1809 = vadd.f32 %v1684, %v1808
        %v1810 = vpop.f32.mrf.mxu0
        %v1811 = vadd.f32 %v1684, %v1810
        %1812 = vmatmul.bf16.gmra.mxu0 %v1733
        %v1813 = vpop.f32.mrf.mxu0
        %v1814 = vadd.f32 %v1684, %v1813
        %v1815 = vpop.f32.mrf.mxu0
        %v1816 = vadd.f32 %v1684, %v1815
        %1817 = vmatmul.bf16.gmra.mxu0 %v1736
        %v1818 = vpop.f32.mrf.mxu0
        %v1819 = vadd.f32 %v1684, %v1818
        %v1820 = vpop.f32.mrf.mxu0
        %v1821 = vadd.f32 %v1684, %v1820
        %1822 = vmatmul.bf16.gmra.mxu0 %v1739
        %v1823 = vpop.f32.mrf.mxu0
        %v1824 = vadd.f32 %v1684, %v1823
        %v1825 = vpop.f32.mrf.mxu0
        %v1826 = vadd.f32 %v1684, %v1825
        %1827 = vmatmul.bf16.gmra.mxu0 %v1742
        %v1828 = vpop.f32.mrf.mxu0
        %v1829 = vadd.f32 %v1684, %v1828
        %v1830 = vpop.f32.mrf.mxu0
        %v1831 = vadd.f32 %v1684, %v1830
        %1832 = vmatmul.bf16.gmra.mxu0 %v1745
        %v1833 = vpop.f32.mrf.mxu0
        %v1834 = vadd.f32 %v1684, %v1833
        %v1835 = vpop.f32.mrf.mxu0
        %v1836 = vadd.f32 %v1684, %v1835
        %1837 = vmatmul.bf16.gmra.mxu0 %v1748
        %v1838 = vpop.f32.mrf.mxu0
        %v1839 = vadd.f32 %v1684, %v1838
        %v1840 = vpop.f32.mrf.mxu0
        %v1841 = vadd.f32 %v1684, %v1840
        %1842 = vdwg.mxu0
        %v1843 = vmax.f32 %v1764, 0.0
        %v1844 = vmax.f32 %v1766, 0.0
        %v1845 = vmax.f32 %v1769, 0.0
        %v1846 = vmax.f32 %v1771, 0.0
        %v1847 = vmax.f32 %v1774, 0.0
        %v1848 = vmax.f32 %v1776, 0.0
        %v1849 = vmax.f32 %v1779, 0.0
        %v1850 = vmax.f32 %v1781, 0.0
        %v1851 = vmax.f32 %v1784, 0.0
        %v1852 = vmax.f32 %v1786, 0.0
        %v1853 = vmax.f32 %v1789, 0.0
        %v1854 = vmax.f32 %v1791, 0.0
        %v1855 = vmax.f32 %v1794, 0.0
        %v1856 = vmax.f32 %v1796, 0.0
        %v1857 = vmax.f32 %v1799, 0.0
        %v1858 = vmax.f32 %v1801, 0.0
        %v1859 = vmax.f32 %v1804, 0.0
        %v1860 = vmax.f32 %v1806, 0.0
        %v1861 = vmax.f32 %v1809, 0.0
        %v1862 = vmax.f32 %v1811, 0.0
        %v1863 = vmax.f32 %v1814, 0.0
        %v1864 = vmax.f32 %v1816, 0.0
        %v1865 = vmax.f32 %v1819, 0.0
        %v1866 = vmax.f32 %v1821, 0.0
        %v1867 = vmax.f32 %v1824, 0.0
        %v1868 = vmax.f32 %v1826, 0.0
        %v1869 = vmax.f32 %v1829, 0.0
        %v1870 = vmax.f32 %v1831, 0.0
        %v1871 = vmax.f32 %v1834, 0.0
        %v1872 = vmax.f32 %v1836, 0.0
        %v1873 = vmax.f32 %v1839, 0.0
        %v1874 = vmax.f32 %v1841, 0.0
        %v1907 = vrot.slane %v1843, 7
        %v1908 = vrot.slane %v1844, 7
        %v1909 = vsel %vm289, %v1907, %v1908
        %v1910 = vrot.slane %v1845, 7
        %v1911 = vrot.slane %v1846, 7
        %v1912 = vsel %vm289, %v1910, %v1911
        %v1913 = vrot.slane %v1847, 7
        %v1914 = vrot.slane %v1848, 7
        %v1915 = vsel %vm289, %v1913, %v1914
        %v1916 = vrot.slane %v1849, 7
        %v1917 = vrot.slane %v1850, 7
        %v1918 = vsel %vm289, %v1916, %v1917
        %v1919 = vrot.slane %v1851, 7
        %v1920 = vrot.slane %v1852, 7
        %v1921 = vsel %vm289, %v1919, %v1920
        %v1922 = vrot.slane %v1853, 7
        %v1923 = vrot.slane %v1854, 7
        %v1924 = vsel %vm289, %v1922, %v1923
        %v1925 = vrot.slane %v1855, 7
        %v1926 = vrot.slane %v1856, 7
        %v1927 = vsel %vm289, %v1925, %v1926
        %v1928 = vrot.slane %v1857, 7
        %v1929 = vrot.slane %v1858, 7
        %v1930 = vsel %vm289, %v1928, %v1929
        %v1931 = vrot.slane %v1859, 7
        %v1932 = vrot.slane %v1860, 7
        %v1933 = vsel %vm289, %v1931, %v1932
        %v1934 = vrot.slane %v1861, 7
        %v1935 = vrot.slane %v1862, 7
        %v1936 = vsel %vm289, %v1934, %v1935
        %v1937 = vrot.slane %v1863, 7
        %v1938 = vrot.slane %v1864, 7
        %v1939 = vsel %vm289, %v1937, %v1938
        %v1940 = vrot.slane %v1865, 7
        %v1941 = vrot.slane %v1866, 7
        %v1942 = vsel %vm289, %v1940, %v1941
        %v1943 = vrot.slane %v1867, 7
        %v1944 = vrot.slane %v1868, 7
        %v1945 = vsel %vm289, %v1943, %v1944
        %v1946 = vrot.slane %v1869, 7
        %v1947 = vrot.slane %v1870, 7
        %v1948 = vsel %vm289, %v1946, %v1947
        %v1949 = vrot.slane %v1871, 7
        %v1950 = vrot.slane %v1872, 7
        %v1951 = vsel %vm289, %v1949, %v1950
        %v1952 = vrot.slane %v1873, 7
        %v1953 = vrot.slane %v1874, 7
        %v1954 = vsel %vm289, %v1952, %v1953
        %v2003 = vsel %vm289, 0.0, %v1907
        %v2004 = vsel %vm289, 0.0, %v1910
        %v2005 = vsel %vm289, 0.0, %v1913
        %v2006 = vsel %vm289, 0.0, %v1916
        %v2007 = vsel %vm289, 0.0, %v1919
        %v2008 = vsel %vm289, 0.0, %v1922
        %v2009 = vsel %vm289, 0.0, %v1925
        %v2010 = vsel %vm289, 0.0, %v1928
        %v2011 = vsel %vm289, 0.0, %v1931
        %v2012 = vsel %vm289, 0.0, %v1934
        %v2013 = vsel %vm289, 0.0, %v1937
        %v2014 = vsel %vm289, 0.0, %v1940
        %v2015 = vsel %vm289, 0.0, %v1943
        %v2016 = vsel %vm289, 0.0, %v1946
        %v2017 = vsel %vm289, 0.0, %v1949
        %v2018 = vsel %vm289, 0.0, %v1952
        %v2019 = vsel %vm289, %v1908, 0.0
        %v2020 = vsel %vm289, %v1911, 0.0
        %v2021 = vsel %vm289, %v1914, 0.0
        %v2022 = vsel %vm289, %v1917, 0.0
        %v2023 = vsel %vm289, %v1920, 0.0
        %v2024 = vsel %vm289, %v1923, 0.0
        %v2025 = vsel %vm289, %v1926, 0.0
        %v2026 = vsel %vm289, %v1929, 0.0
        %v2027 = vsel %vm289, %v1932, 0.0
        %v2028 = vsel %vm289, %v1935, 0.0
        %v2029 = vsel %vm289, %v1938, 0.0
        %v2030 = vsel %vm289, %v1941, 0.0
        %v2031 = vsel %vm289, %v1944, 0.0
        %v2032 = vsel %vm289, %v1947, 0.0
        %v2033 = vsel %vm289, %v1950, 0.0
        %v2034 = vsel %vm289, %v1953, 0.0
        %v2050 = vrot.slane %v389, 4
        %v2051 = vrot.slane %v389, 6
        %v2052 = vrot.slane %v291, 4
        %v2053 = vrot.slane %v291, 6
        %v2054 = vrot.slane %v2003, 2
        %v2055 = vrot.slane %v2003, 4
        %v2056 = vrot.slane %v2003, 6
        %v2057 = vrot.slane %v1909, 2
        %v2058 = vrot.slane %v1909, 4
        %v2059 = vrot.slane %v1909, 6
        %v2060 = vrot.slane %v2004, 2
        %v2061 = vrot.slane %v2004, 4
        %v2062 = vrot.slane %v2004, 6
        %v2063 = vrot.slane %v1912, 2
        %v2064 = vrot.slane %v1912, 4
        %v2065 = vrot.slane %v1912, 6
        %v2066 = vrot.slane %v2005, 2
        %v2067 = vrot.slane %v2005, 4
        %v2068 = vrot.slane %v2005, 6
        %v2069 = vrot.slane %v1915, 2
        %v2070 = vrot.slane %v1915, 4
        %v2071 = vrot.slane %v1915, 6
        %v2072 = vrot.slane %v2006, 2
        %v2073 = vrot.slane %v2006, 4
        %v2074 = vrot.slane %v2006, 6
        %v2075 = vrot.slane %v1918, 2
        %v2076 = vrot.slane %v1918, 4
        %v2077 = vrot.slane %v1918, 6
        %v2078 = vrot.slane %v2007, 2
        %v2079 = vrot.slane %v2007, 4
        %v2080 = vrot.slane %v2007, 6
        %v2081 = vrot.slane %v1921, 2
        %v2082 = vrot.slane %v1921, 4
        %v2083 = vrot.slane %v1921, 6
        %v2084 = vrot.slane %v2008, 2
        %v2085 = vrot.slane %v2008, 4
        %v2086 = vrot.slane %v2008, 6
        %v2087 = vrot.slane %v1924, 2
        %v2088 = vrot.slane %v1924, 4
        %v2089 = vrot.slane %v1924, 6
        %v2090 = vrot.slane %v2009, 2
        %v2091 = vrot.slane %v2009, 4
        %v2092 = vrot.slane %v2009, 6
        %v2093 = vrot.slane %v1927, 2
        %v2094 = vrot.slane %v1927, 4
        %v2095 = vrot.slane %v1927, 6
        %v2096 = vrot.slane %v2010, 2
        %v2097 = vrot.slane %v2010, 4
        %v2098 = vrot.slane %v2010, 6
        %v2099 = vrot.slane %v1930, 2
        %v2100 = vrot.slane %v1930, 4
        %v2101 = vrot.slane %v1930, 6
        %v2102 = vrot.slane %v2011, 2
        %v2103 = vrot.slane %v2011, 4
        %v2104 = vrot.slane %v2011, 6
        %v2105 = vrot.slane %v1933, 2
        %v2106 = vrot.slane %v1933, 4
        %v2107 = vrot.slane %v1933, 6
        %v2108 = vrot.slane %v2012, 2
        %v2109 = vrot.slane %v2012, 4
        %v2110 = vrot.slane %v2012, 6
        %v2111 = vrot.slane %v1936, 2
        %v2112 = vrot.slane %v1936, 4
        %v2113 = vrot.slane %v1936, 6
        %v2114 = vrot.slane %v2013, 2
        %v2115 = vrot.slane %v2013, 4
        %v2116 = vrot.slane %v2013, 6
        %v2117 = vrot.slane %v1939, 2
        %v2118 = vrot.slane %v1939, 4
        %v2119 = vrot.slane %v1939, 6
        %v2120 = vrot.slane %v2014, 2
        %v2121 = vrot.slane %v2014, 4
        %v2122 = vrot.slane %v2014, 6
        %v2123 = vrot.slane %v1942, 2
        %v2124 = vrot.slane %v1942, 4
        %v2125 = vrot.slane %v1942, 6
        %v2126 = vrot.slane %v2015, 2
        %v2127 = vrot.slane %v2015, 4
        %v2128 = vrot.slane %v2015, 6
        %v2129 = vrot.slane %v1945, 2
        %v2130 = vrot.slane %v1945, 4
        %v2131 = vrot.slane %v1945, 6
        %v2132 = vrot.slane %v2016, 2
        %v2133 = vrot.slane %v2016, 4
        %v2134 = vrot.slane %v2016, 6
        %v2135 = vrot.slane %v1948, 2
        %v2136 = vrot.slane %v1948, 4
        %v2137 = vrot.slane %v1948, 6
        %v2138 = vrot.slane %v2017, 2
        %v2139 = vrot.slane %v2017, 4
        %v2140 = vrot.slane %v2017, 6
        %v2141 = vrot.slane %v1951, 2
        %v2142 = vrot.slane %v1951, 4
        %v2143 = vrot.slane %v1951, 6
        %v2240 = vrot.slane %v389, 7
        %v2241 = vrot.slane %v2240, 2
        %v2242 = vrot.slane %v633, 7
        %v2243 = vrot.slane %v2242, 2
        %v2244 = vrot.slane %v2050, 7
        %v2245 = vrot.slane %v2244, 2
        %v2246 = vrot.slane %v2051, 7
        %v2247 = vrot.slane %v2246, 2
        %v2248 = vrot.slane %v291, 7
        %v2249 = vrot.slane %v2248, 2
        %v2250 = vrot.slane %v634, 7
        %v2251 = vrot.slane %v2250, 2
        %v2252 = vrot.slane %v2052, 7
        %v2253 = vrot.slane %v2252, 2
        %v2254 = vrot.slane %v2053, 7
        %v2255 = vrot.slane %v2254, 2
        %v2256 = vrot.slane %v2003, 7
        %v2257 = vrot.slane %v2256, 2
        %v2258 = vrot.slane %v2054, 7
        %v2259 = vrot.slane %v2258, 2
        %v2260 = vrot.slane %v2055, 7
        %v2261 = vrot.slane %v2260, 2
        %v2262 = vrot.slane %v2056, 7
        %v2263 = vrot.slane %v2262, 2
        %v2264 = vrot.slane %v1909, 7
        %v2265 = vrot.slane %v2264, 2
        %v2266 = vrot.slane %v2057, 7
        %v2267 = vrot.slane %v2266, 2
        %v2268 = vrot.slane %v2058, 7
        %v2269 = vrot.slane %v2268, 2
        %v2270 = vrot.slane %v2059, 7
        %v2271 = vrot.slane %v2270, 2
        %v2272 = vrot.slane %v2004, 7
        %v2273 = vrot.slane %v2272, 2
        %v2274 = vrot.slane %v2060, 7
        %v2275 = vrot.slane %v2274, 2
        %v2276 = vrot.slane %v2061, 7
        %v2277 = vrot.slane %v2276, 2
        %v2278 = vrot.slane %v2062, 7
        %v2279 = vrot.slane %v2278, 2
        %v2280 = vrot.slane %v1912, 7
        %v2281 = vrot.slane %v2280, 2
        %v2282 = vrot.slane %v2063, 7
        %v2283 = vrot.slane %v2282, 2
        %v2284 = vrot.slane %v2064, 7
        %v2285 = vrot.slane %v2284, 2
        %v2286 = vrot.slane %v2065, 7
        %v2287 = vrot.slane %v2286, 2
        %v2288 = vrot.slane %v2005, 7
        %v2289 = vrot.slane %v2288, 2
        %v2290 = vrot.slane %v2066, 7
        %v2291 = vrot.slane %v2290, 2
        %v2292 = vrot.slane %v2067, 7
        %v2293 = vrot.slane %v2292, 2
        %v2294 = vrot.slane %v2068, 7
        %v2295 = vrot.slane %v2294, 2
        %v2296 = vrot.slane %v1915, 7
        %v2297 = vrot.slane %v2296, 2
        %v2298 = vrot.slane %v2069, 7
        %v2299 = vrot.slane %v2298, 2
        %v2300 = vrot.slane %v2070, 7
        %v2301 = vrot.slane %v2300, 2
        %v2302 = vrot.slane %v2071, 7
        %v2303 = vrot.slane %v2302, 2
        %v2304 = vrot.slane %v2006, 7
        %v2305 = vrot.slane %v2304, 2
        %v2306 = vrot.slane %v2072, 7
        %v2307 = vrot.slane %v2306, 2
        %v2308 = vrot.slane %v2073, 7
        %v2309 = vrot.slane %v2308, 2
        %v2310 = vrot.slane %v2074, 7
        %v2311 = vrot.slane %v2310, 2
        %v2312 = vrot.slane %v1918, 7
        %v2313 = vrot.slane %v2312, 2
        %v2314 = vrot.slane %v2075, 7
        %v2315 = vrot.slane %v2314, 2
        %v2316 = vrot.slane %v2076, 7
        %v2317 = vrot.slane %v2316, 2
        %v2318 = vrot.slane %v2077, 7
        %v2319 = vrot.slane %v2318, 2
        %v2320 = vrot.slane %v2007, 7
        %v2321 = vrot.slane %v2320, 2
        %v2322 = vrot.slane %v2078, 7
        %v2323 = vrot.slane %v2322, 2
        %v2324 = vrot.slane %v2079, 7
        %v2325 = vrot.slane %v2324, 2
        %v2326 = vrot.slane %v2080, 7
        %v2327 = vrot.slane %v2326, 2
        %v2328 = vrot.slane %v1921, 7
        %v2329 = vrot.slane %v2328, 2
        %v2330 = vrot.slane %v2081, 7
        %v2331 = vrot.slane %v2330, 2
        %v2332 = vrot.slane %v2082, 7
        %v2333 = vrot.slane %v2332, 2
        %v2334 = vrot.slane %v2083, 7
        %v2335 = vrot.slane %v2334, 2
        %v2336 = vrot.slane %v2008, 7
        %v2337 = vrot.slane %v2336, 2
        %v2338 = vrot.slane %v2084, 7
        %v2339 = vrot.slane %v2338, 2
        %v2340 = vrot.slane %v2085, 7
        %v2341 = vrot.slane %v2340, 2
        %v2342 = vrot.slane %v2086, 7
        %v2343 = vrot.slane %v2342, 2
        %v2344 = vrot.slane %v1924, 7
        %v2345 = vrot.slane %v2344, 2
        %v2346 = vrot.slane %v2087, 7
        %v2347 = vrot.slane %v2346, 2
        %v2348 = vrot.slane %v2088, 7
        %v2349 = vrot.slane %v2348, 2
        %v2350 = vrot.slane %v2089, 7
        %v2351 = vrot.slane %v2350, 2
        %v2352 = vrot.slane %v2009, 7
        %v2353 = vrot.slane %v2352, 2
        %v2354 = vrot.slane %v2090, 7
        %v2355 = vrot.slane %v2354, 2
        %v2356 = vrot.slane %v2091, 7
        %v2357 = vrot.slane %v2356, 2
        %v2358 = vrot.slane %v2092, 7
        %v2359 = vrot.slane %v2358, 2
        %v2360 = vrot.slane %v1927, 7
        %v2361 = vrot.slane %v2360, 2
        %v2362 = vrot.slane %v2093, 7
        %v2363 = vrot.slane %v2362, 2
        %v2364 = vrot.slane %v2094, 7
        %v2365 = vrot.slane %v2364, 2
        %v2366 = vrot.slane %v2095, 7
        %v2367 = vrot.slane %v2366, 2
        %v2368 = vrot.slane %v2010, 7
        %v2369 = vrot.slane %v2368, 2
        %v2370 = vrot.slane %v2096, 7
        %v2371 = vrot.slane %v2370, 2
        %v2372 = vrot.slane %v2097, 7
        %v2373 = vrot.slane %v2372, 2
        %v2374 = vrot.slane %v2098, 7
        %v2375 = vrot.slane %v2374, 2
        %v2376 = vrot.slane %v1930, 7
        %v2377 = vrot.slane %v2376, 2
        %v2378 = vrot.slane %v2099, 7
        %v2379 = vrot.slane %v2378, 2
        %v2380 = vrot.slane %v2100, 7
        %v2381 = vrot.slane %v2380, 2
        %v2382 = vrot.slane %v2101, 7
        %v2383 = vrot.slane %v2382, 2
        %v2384 = vrot.slane %v2011, 7
        %v2385 = vrot.slane %v2384, 2
        %v2386 = vrot.slane %v2102, 7
        %v2387 = vrot.slane %v2386, 2
        %v2388 = vrot.slane %v2103, 7
        %v2389 = vrot.slane %v2388, 2
        %v2390 = vrot.slane %v2104, 7
        %v2391 = vrot.slane %v2390, 2
        %v2392 = vrot.slane %v1933, 7
        %v2393 = vrot.slane %v2392, 2
        %v2394 = vrot.slane %v2105, 7
        %v2395 = vrot.slane %v2394, 2
        %v2396 = vrot.slane %v2106, 7
        %v2397 = vrot.slane %v2396, 2
        %v2398 = vrot.slane %v2107, 7
        %v2399 = vrot.slane %v2398, 2
        %v2400 = vrot.slane %v2012, 7
        %v2401 = vrot.slane %v2400, 2
        %v2402 = vrot.slane %v2108, 7
        %v2403 = vrot.slane %v2402, 2
        %v2404 = vrot.slane %v2109, 7
        %v2405 = vrot.slane %v2404, 2
        %v2406 = vrot.slane %v2110, 7
        %v2407 = vrot.slane %v2406, 2
        %v2408 = vrot.slane %v1936, 7
        %v2409 = vrot.slane %v2408, 2
        %v2410 = vrot.slane %v2111, 7
        %v2411 = vrot.slane %v2410, 2
        %v2412 = vrot.slane %v2112, 7
        %v2413 = vrot.slane %v2412, 2
        %v2414 = vrot.slane %v2113, 7
        %v2415 = vrot.slane %v2414, 2
        %v2416 = vrot.slane %v2013, 7
        %v2417 = vrot.slane %v2416, 2
        %v2418 = vrot.slane %v2114, 7
        %v2419 = vrot.slane %v2418, 2
        %v2420 = vrot.slane %v2115, 7
        %v2421 = vrot.slane %v2420, 2
        %v2422 = vrot.slane %v2116, 7
        %v2423 = vrot.slane %v2422, 2
        %v2424 = vrot.slane %v1939, 7
        %v2425 = vrot.slane %v2424, 2
        %v2426 = vrot.slane %v2117, 7
        %v2427 = vrot.slane %v2426, 2
        %v2428 = vrot.slane %v2118, 7
        %v2429 = vrot.slane %v2428, 2
        %v2430 = vrot.slane %v2119, 7
        %v2431 = vrot.slane %v2430, 2
        %v2432 = vrot.slane %v2014, 7
        %v2433 = vrot.slane %v2432, 2
        %v2434 = vrot.slane %v2120, 7
        %v2435 = vrot.slane %v2434, 2
        %v2436 = vrot.slane %v2121, 7
        %v2437 = vrot.slane %v2436, 2
        %v2438 = vrot.slane %v2122, 7
        %v2439 = vrot.slane %v2438, 2
        %v2440 = vrot.slane %v1942, 7
        %v2441 = vrot.slane %v2440, 2
        %v2442 = vrot.slane %v2123, 7
        %v2443 = vrot.slane %v2442, 2
        %v2444 = vrot.slane %v2124, 7
        %v2445 = vrot.slane %v2444, 2
        %v2446 = vrot.slane %v2125, 7
        %v2447 = vrot.slane %v2446, 2
        %v2448 = vrot.slane %v2015, 7
        %v2449 = vrot.slane %v2448, 2
        %v2450 = vrot.slane %v2126, 7
        %v2451 = vrot.slane %v2450, 2
        %v2452 = vrot.slane %v2127, 7
        %v2453 = vrot.slane %v2452, 2
        %v2454 = vrot.slane %v2128, 7
        %v2455 = vrot.slane %v2454, 2
        %v2456 = vrot.slane %v1945, 7
        %v2457 = vrot.slane %v2456, 2
        %v2458 = vrot.slane %v2129, 7
        %v2459 = vrot.slane %v2458, 2
        %v2460 = vrot.slane %v2130, 7
        %v2461 = vrot.slane %v2460, 2
        %v2462 = vrot.slane %v2131, 7
        %v2463 = vrot.slane %v2462, 2
        %v2464 = vrot.slane %v2016, 7
        %v2465 = vrot.slane %v2464, 2
        %v2466 = vrot.slane %v2132, 7
        %v2467 = vrot.slane %v2466, 2
        %v2468 = vrot.slane %v2133, 7
        %v2469 = vrot.slane %v2468, 2
        %v2470 = vrot.slane %v2134, 7
        %v2471 = vrot.slane %v2470, 2
        %v2472 = vrot.slane %v1948, 7
        %v2473 = vrot.slane %v2472, 2
        %v2474 = vrot.slane %v2135, 7
        %v2475 = vrot.slane %v2474, 2
        %v2476 = vrot.slane %v2136, 7
        %v2477 = vrot.slane %v2476, 2
        %v2478 = vrot.slane %v2137, 7
        %v2479 = vrot.slane %v2478, 2
        %v2480 = vrot.slane %v2017, 7
        %v2481 = vrot.slane %v2480, 2
        %v2482 = vrot.slane %v2138, 7
        %v2483 = vrot.slane %v2482, 2
        %v2484 = vrot.slane %v2139, 7
        %v2485 = vrot.slane %v2484, 2
        %v2486 = vrot.slane %v2140, 7
        %v2487 = vrot.slane %v2486, 2
        %v2488 = vrot.slane %v1951, 7
        %v2489 = vrot.slane %v2488, 2
        %v2490 = vrot.slane %v2141, 7
        %v2491 = vrot.slane %v2490, 2
        %v2492 = vrot.slane %v2142, 7
        %v2493 = vrot.slane %v2492, 2
        %v2494 = vrot.slane %v2143, 7
        %v2495 = vrot.slane %v2494, 2
        %v2624 = vadd.f32 %v389, %v2241
        %v2625 = vadd.f32 %v633, %v2243
        %v2626 = vadd.f32 %v2050, %v2245
        %v2627 = vadd.f32 %v2051, %v2247
        %v2628 = vadd.f32 %v291, %v2249
        %v2629 = vadd.f32 %v634, %v2251
        %v2630 = vadd.f32 %v2052, %v2253
        %v2631 = vadd.f32 %v2053, %v2255
        %v2632 = vadd.f32 %v2003, %v2257
        %v2633 = vadd.f32 %v2054, %v2259
        %v2634 = vadd.f32 %v2055, %v2261
        %v2635 = vadd.f32 %v2056, %v2263
        %v2636 = vadd.f32 %v1909, %v2265
        %v2637 = vadd.f32 %v2057, %v2267
        %v2638 = vadd.f32 %v2058, %v2269
        %v2639 = vadd.f32 %v2059, %v2271
        %v2640 = vadd.f32 %v2004, %v2273
        %v2641 = vadd.f32 %v2060, %v2275
        %v2642 = vadd.f32 %v2061, %v2277
        %v2643 = vadd.f32 %v2062, %v2279
        %v2644 = vadd.f32 %v1912, %v2281
        %v2645 = vadd.f32 %v2063, %v2283
        %v2646 = vadd.f32 %v2064, %v2285
        %v2647 = vadd.f32 %v2065, %v2287
        %v2648 = vadd.f32 %v2005, %v2289
        %v2649 = vadd.f32 %v2066, %v2291
        %v2650 = vadd.f32 %v2067, %v2293
        %v2651 = vadd.f32 %v2068, %v2295
        %v2652 = vadd.f32 %v1915, %v2297
        %v2653 = vadd.f32 %v2069, %v2299
        %v2654 = vadd.f32 %v2070, %v2301
        %v2655 = vadd.f32 %v2071, %v2303
        %v2656 = vadd.f32 %v2006, %v2305
        %v2657 = vadd.f32 %v2072, %v2307
        %v2658 = vadd.f32 %v2073, %v2309
        %v2659 = vadd.f32 %v2074, %v2311
        %v2660 = vadd.f32 %v1918, %v2313
        %v2661 = vadd.f32 %v2075, %v2315
        %v2662 = vadd.f32 %v2076, %v2317
        %v2663 = vadd.f32 %v2077, %v2319
        %v2664 = vadd.f32 %v2007, %v2321
        %v2665 = vadd.f32 %v2078, %v2323
        %v2666 = vadd.f32 %v2079, %v2325
        %v2667 = vadd.f32 %v2080, %v2327
        %v2668 = vadd.f32 %v1921, %v2329
        %v2669 = vadd.f32 %v2081, %v2331
        %v2670 = vadd.f32 %v2082, %v2333
        %v2671 = vadd.f32 %v2083, %v2335
        %v2672 = vadd.f32 %v2008, %v2337
        %v2673 = vadd.f32 %v2084, %v2339
        %v2674 = vadd.f32 %v2085, %v2341
        %v2675 = vadd.f32 %v2086, %v2343
        %v2676 = vadd.f32 %v1924, %v2345
        %v2677 = vadd.f32 %v2087, %v2347
        %v2678 = vadd.f32 %v2088, %v2349
        %v2679 = vadd.f32 %v2089, %v2351
        %v2680 = vadd.f32 %v2009, %v2353
        %v2681 = vadd.f32 %v2090, %v2355
        %v2682 = vadd.f32 %v2091, %v2357
        %v2683 = vadd.f32 %v2092, %v2359
        %v2684 = vadd.f32 %v1927, %v2361
        %v2685 = vadd.f32 %v2093, %v2363
        %v2686 = vadd.f32 %v2094, %v2365
        %v2687 = vadd.f32 %v2095, %v2367
        %v2688 = vadd.f32 %v2010, %v2369
        %v2689 = vadd.f32 %v2096, %v2371
        %v2690 = vadd.f32 %v2097, %v2373
        %v2691 = vadd.f32 %v2098, %v2375
        %v2692 = vadd.f32 %v1930, %v2377
        %v2693 = vadd.f32 %v2099, %v2379
        %v2694 = vadd.f32 %v2100, %v2381
        %v2695 = vadd.f32 %v2101, %v2383
        %v2696 = vadd.f32 %v2011, %v2385
        %v2697 = vadd.f32 %v2102, %v2387
        %v2698 = vadd.f32 %v2103, %v2389
        %v2699 = vadd.f32 %v2104, %v2391
        %v2700 = vadd.f32 %v1933, %v2393
        %v2701 = vadd.f32 %v2105, %v2395
        %v2702 = vadd.f32 %v2106, %v2397
        %v2703 = vadd.f32 %v2107, %v2399
        %v2704 = vadd.f32 %v2012, %v2401
        %v2705 = vadd.f32 %v2108, %v2403
        %v2706 = vadd.f32 %v2109, %v2405
        %v2707 = vadd.f32 %v2110, %v2407
        %v2708 = vadd.f32 %v1936, %v2409
        %v2709 = vadd.f32 %v2111, %v2411
        %v2710 = vadd.f32 %v2112, %v2413
        %v2711 = vadd.f32 %v2113, %v2415
        %v2712 = vadd.f32 %v2013, %v2417
        %v2713 = vadd.f32 %v2114, %v2419
        %v2714 = vadd.f32 %v2115, %v2421
        %v2715 = vadd.f32 %v2116, %v2423
        %v2716 = vadd.f32 %v1939, %v2425
        %v2717 = vadd.f32 %v2117, %v2427
        %v2718 = vadd.f32 %v2118, %v2429
        %v2719 = vadd.f32 %v2119, %v2431
        %v2720 = vadd.f32 %v2014, %v2433
        %v2721 = vadd.f32 %v2120, %v2435
        %v2722 = vadd.f32 %v2121, %v2437
        %v2723 = vadd.f32 %v2122, %v2439
        %v2724 = vadd.f32 %v1942, %v2441
        %v2725 = vadd.f32 %v2123, %v2443
        %v2726 = vadd.f32 %v2124, %v2445
        %v2727 = vadd.f32 %v2125, %v2447
        %v2728 = vadd.f32 %v2015, %v2449
        %v2729 = vadd.f32 %v2126, %v2451
        %v2730 = vadd.f32 %v2127, %v2453
        %v2731 = vadd.f32 %v2128, %v2455
        %v2732 = vadd.f32 %v1945, %v2457
        %v2733 = vadd.f32 %v2129, %v2459
        %v2734 = vadd.f32 %v2130, %v2461
        %v2735 = vadd.f32 %v2131, %v2463
        %v2736 = vadd.f32 %v2016, %v2465
        %v2737 = vadd.f32 %v2132, %v2467
        %v2738 = vadd.f32 %v2133, %v2469
        %v2739 = vadd.f32 %v2134, %v2471
        %v2740 = vadd.f32 %v1948, %v2473
        %v2741 = vadd.f32 %v2135, %v2475
        %v2742 = vadd.f32 %v2136, %v2477
        %v2743 = vadd.f32 %v2137, %v2479
        %v2744 = vadd.f32 %v2017, %v2481
        %v2745 = vadd.f32 %v2138, %v2483
        %v2746 = vadd.f32 %v2139, %v2485
        %v2747 = vadd.f32 %v2140, %v2487
        %v2748 = vadd.f32 %v1951, %v2489
        %v2749 = vadd.f32 %v2141, %v2491
        %v2750 = vadd.f32 %v2142, %v2493
        %v2751 = vadd.f32 %v2143, %v2495
        %v2752 = vadd.f32 %v2624, %v2632
        %v2753 = vadd.f32 %v2625, %v2633
        %v2754 = vadd.f32 %v2626, %v2634
        %v2755 = vadd.f32 %v2627, %v2635
        %v2756 = vadd.f32 %v2628, %v2636
        %v2757 = vadd.f32 %v2629, %v2637
        %v2758 = vadd.f32 %v2630, %v2638
        %v2759 = vadd.f32 %v2631, %v2639
        %v2760 = vadd.f32 %v2640, %v2648
        %v2761 = vadd.f32 %v2641, %v2649
        %v2762 = vadd.f32 %v2642, %v2650
        %v2763 = vadd.f32 %v2643, %v2651
        %v2764 = vadd.f32 %v2644, %v2652
        %v2765 = vadd.f32 %v2645, %v2653
        %v2766 = vadd.f32 %v2646, %v2654
        %v2767 = vadd.f32 %v2647, %v2655
        %v2768 = vadd.f32 %v2656, %v2664
        %v2769 = vadd.f32 %v2657, %v2665
        %v2770 = vadd.f32 %v2658, %v2666
        %v2771 = vadd.f32 %v2659, %v2667
        %v2772 = vadd.f32 %v2660, %v2668
        %v2773 = vadd.f32 %v2661, %v2669
        %v2774 = vadd.f32 %v2662, %v2670
        %v2775 = vadd.f32 %v2663, %v2671
        %v2776 = vadd.f32 %v2672, %v2680
        %v2777 = vadd.f32 %v2673, %v2681
        %v2778 = vadd.f32 %v2674, %v2682
        %v2779 = vadd.f32 %v2675, %v2683
        %v2780 = vadd.f32 %v2676, %v2684
        %v2781 = vadd.f32 %v2677, %v2685
        %v2782 = vadd.f32 %v2678, %v2686
        %v2783 = vadd.f32 %v2679, %v2687
        %v2784 = vadd.f32 %v2688, %v2696
        %v2785 = vadd.f32 %v2689, %v2697
        %v2786 = vadd.f32 %v2690, %v2698
        %v2787 = vadd.f32 %v2691, %v2699
        %v2788 = vadd.f32 %v2692, %v2700
        %v2789 = vadd.f32 %v2693, %v2701
        %v2790 = vadd.f32 %v2694, %v2702
        %v2791 = vadd.f32 %v2695, %v2703
        %v2792 = vadd.f32 %v2704, %v2712
        %v2793 = vadd.f32 %v2705, %v2713
        %v2794 = vadd.f32 %v2706, %v2714
        %v2795 = vadd.f32 %v2707, %v2715
        %v2796 = vadd.f32 %v2708, %v2716
        %v2797 = vadd.f32 %v2709, %v2717
        %v2798 = vadd.f32 %v2710, %v2718
        %v2799 = vadd.f32 %v2711, %v2719
        %v2800 = vadd.f32 %v2720, %v2728
        %v2801 = vadd.f32 %v2721, %v2729
        %v2802 = vadd.f32 %v2722, %v2730
        %v2803 = vadd.f32 %v2723, %v2731
        %v2804 = vadd.f32 %v2724, %v2732
        %v2805 = vadd.f32 %v2725, %v2733
        %v2806 = vadd.f32 %v2726, %v2734
        %v2807 = vadd.f32 %v2727, %v2735
        %v2808 = vadd.f32 %v2736, %v2744
        %v2809 = vadd.f32 %v2737, %v2745
        %v2810 = vadd.f32 %v2738, %v2746
        %v2811 = vadd.f32 %v2739, %v2747
        %v2812 = vadd.f32 %v2740, %v2748
        %v2813 = vadd.f32 %v2741, %v2749
        %v2814 = vadd.f32 %v2742, %v2750
        %v2815 = vadd.f32 %v2743, %v2751
        %vm2831 = vcmask 1042434
        %vm2832 = vmor %vm289, %vm2831
        %vm2833 = vcmask 1044484
        %vm2834 = vmor %vm2832, %vm2833
        %vm2835 = vcmask 1046534
        %vm2836 = vmor %vm2834, %vm2835
        %v2837 = vsel %vm2836, %v2241, %v2242
        %v2838 = vsel %vm2836, %v2243, %v2244
        %v2839 = vsel %vm2836, %v2245, %v2246
        %v2840 = vsel %vm2836, %v2247, %v2248
        %v2841 = vsel %vm2836, %v2249, %v2250
        %v2842 = vsel %vm2836, %v2251, %v2252
        %v2843 = vsel %vm2836, %v2253, %v2254
        %v2844 = vrot.slane %v406, 7
        %v2845 = vsel %vm2836, %v2255, %v2844
        %v2846 = vsel %vm2836, %v2257, %v2258
        %v2847 = vsel %vm2836, %v2259, %v2260
        %v2848 = vsel %vm2836, %v2261, %v2262
        %v2849 = vsel %vm2836, %v2263, %v2264
        %v2850 = vsel %vm2836, %v2265, %v2266
        %v2851 = vsel %vm2836, %v2267, %v2268
        %v2852 = vsel %vm2836, %v2269, %v2270
        %v2853 = vrot.slane %v2019, 7
        %v2854 = vsel %vm2836, %v2271, %v2853
        %v2855 = vsel %vm2836, %v2273, %v2274
        %v2856 = vsel %vm2836, %v2275, %v2276
        %v2857 = vsel %vm2836, %v2277, %v2278
        %v2858 = vsel %vm2836, %v2279, %v2280
        %v2859 = vsel %vm2836, %v2281, %v2282
        %v2860 = vsel %vm2836, %v2283, %v2284
        %v2861 = vsel %vm2836, %v2285, %v2286
        %v2862 = vrot.slane %v2020, 7
        %v2863 = vsel %vm2836, %v2287, %v2862
        %v2864 = vsel %vm2836, %v2289, %v2290
        %v2865 = vsel %vm2836, %v2291, %v2292
        %v2866 = vsel %vm2836, %v2293, %v2294
        %v2867 = vsel %vm2836, %v2295, %v2296
        %v2868 = vsel %vm2836, %v2297, %v2298
        %v2869 = vsel %vm2836, %v2299, %v2300
        %v2870 = vsel %vm2836, %v2301, %v2302
        %v2871 = vrot.slane %v2021, 7
        %v2872 = vsel %vm2836, %v2303, %v2871
        %v2873 = vsel %vm2836, %v2305, %v2306
        %v2874 = vsel %vm2836, %v2307, %v2308
        %v2875 = vsel %vm2836, %v2309, %v2310
        %v2876 = vsel %vm2836, %v2311, %v2312
        %v2877 = vsel %vm2836, %v2313, %v2314
        %v2878 = vsel %vm2836, %v2315, %v2316
        %v2879 = vsel %vm2836, %v2317, %v2318
        %v2880 = vrot.slane %v2022, 7
        %v2881 = vsel %vm2836, %v2319, %v2880
        %v2882 = vsel %vm2836, %v2321, %v2322
        %v2883 = vsel %vm2836, %v2323, %v2324
        %v2884 = vsel %vm2836, %v2325, %v2326
        %v2885 = vsel %vm2836, %v2327, %v2328
        %v2886 = vsel %vm2836, %v2329, %v2330
        %v2887 = vsel %vm2836, %v2331, %v2332
        %v2888 = vsel %vm2836, %v2333, %v2334
        %v2889 = vrot.slane %v2023, 7
        %v2890 = vsel %vm2836, %v2335, %v2889
        %v2891 = vsel %vm2836, %v2337, %v2338
        %v2892 = vsel %vm2836, %v2339, %v2340
        %v2893 = vsel %vm2836, %v2341, %v2342
        %v2894 = vsel %vm2836, %v2343, %v2344
        %v2895 = vsel %vm2836, %v2345, %v2346
        %v2896 = vsel %vm2836, %v2347, %v2348
        %v2897 = vsel %vm2836, %v2349, %v2350
        %v2898 = vrot.slane %v2024, 7
        %v2899 = vsel %vm2836, %v2351, %v2898
        %v2900 = vsel %vm2836, %v2353, %v2354
        %v2901 = vsel %vm2836, %v2355, %v2356
        %v2902 = vsel %vm2836, %v2357, %v2358
        %v2903 = vsel %vm2836, %v2359, %v2360
        %v2904 = vsel %vm2836, %v2361, %v2362
        %v2905 = vsel %vm2836, %v2363, %v2364
        %v2906 = vsel %vm2836, %v2365, %v2366
        %v2907 = vrot.slane %v2025, 7
        %v2908 = vsel %vm2836, %v2367, %v2907
        %v2909 = vsel %vm2836, %v2369, %v2370
        %v2910 = vsel %vm2836, %v2371, %v2372
        %v2911 = vsel %vm2836, %v2373, %v2374
        %v2912 = vsel %vm2836, %v2375, %v2376
        %v2913 = vsel %vm2836, %v2377, %v2378
        %v2914 = vsel %vm2836, %v2379, %v2380
        %v2915 = vsel %vm2836, %v2381, %v2382
        %v2916 = vrot.slane %v2026, 7
        %v2917 = vsel %vm2836, %v2383, %v2916
        %v2918 = vsel %vm2836, %v2385, %v2386
        %v2919 = vsel %vm2836, %v2387, %v2388
        %v2920 = vsel %vm2836, %v2389, %v2390
        %v2921 = vsel %vm2836, %v2391, %v2392
        %v2922 = vsel %vm2836, %v2393, %v2394
        %v2923 = vsel %vm2836, %v2395, %v2396
        %v2924 = vsel %vm2836, %v2397, %v2398
        %v2925 = vrot.slane %v2027, 7
        %v2926 = vsel %vm2836, %v2399, %v2925
        %v2927 = vsel %vm2836, %v2401, %v2402
        %v2928 = vsel %vm2836, %v2403, %v2404
        %v2929 = vsel %vm2836, %v2405, %v2406
        %v2930 = vsel %vm2836, %v2407, %v2408
        %v2931 = vsel %vm2836, %v2409, %v2410
        %v2932 = vsel %vm2836, %v2411, %v2412
        %v2933 = vsel %vm2836, %v2413, %v2414
        %v2934 = vrot.slane %v2028, 7
        %v2935 = vsel %vm2836, %v2415, %v2934
        %v2936 = vsel %vm2836, %v2417, %v2418
        %v2937 = vsel %vm2836, %v2419, %v2420
        %v2938 = vsel %vm2836, %v2421, %v2422
        %v2939 = vsel %vm2836, %v2423, %v2424
        %v2940 = vsel %vm2836, %v2425, %v2426
        %v2941 = vsel %vm2836, %v2427, %v2428
        %v2942 = vsel %vm2836, %v2429, %v2430
        %v2943 = vrot.slane %v2029, 7
        %v2944 = vsel %vm2836, %v2431, %v2943
        %v2945 = vsel %vm2836, %v2433, %v2434
        %v2946 = vsel %vm2836, %v2435, %v2436
        %v2947 = vsel %vm2836, %v2437, %v2438
        %v2948 = vsel %vm2836, %v2439, %v2440
        %v2949 = vsel %vm2836, %v2441, %v2442
        %v2950 = vsel %vm2836, %v2443, %v2444
        %v2951 = vsel %vm2836, %v2445, %v2446
        %v2952 = vrot.slane %v2030, 7
        %v2953 = vsel %vm2836, %v2447, %v2952
        %v2954 = vsel %vm2836, %v2449, %v2450
        %v2955 = vsel %vm2836, %v2451, %v2452
        %v2956 = vsel %vm2836, %v2453, %v2454
        %v2957 = vsel %vm2836, %v2455, %v2456
        %v2958 = vsel %vm2836, %v2457, %v2458
        %v2959 = vsel %vm2836, %v2459, %v2460
        %v2960 = vsel %vm2836, %v2461, %v2462
        %v2961 = vrot.slane %v2031, 7
        %v2962 = vsel %vm2836, %v2463, %v2961
        %v2963 = vsel %vm2836, %v2465, %v2466
        %v2964 = vsel %vm2836, %v2467, %v2468
        %v2965 = vsel %vm2836, %v2469, %v2470
        %v2966 = vsel %vm2836, %v2471, %v2472
        %v2967 = vsel %vm2836, %v2473, %v2474
        %v2968 = vsel %vm2836, %v2475, %v2476
        %v2969 = vsel %vm2836, %v2477, %v2478
        %v2970 = vrot.slane %v2032, 7
        %v2971 = vsel %vm2836, %v2479, %v2970
        %v2972 = vsel %vm2836, %v2481, %v2482
        %v2973 = vsel %vm2836, %v2483, %v2484
        %v2974 = vsel %vm2836, %v2485, %v2486
        %v2975 = vsel %vm2836, %v2487, %v2488
        %v2976 = vsel %vm2836, %v2489, %v2490
        %v2977 = vsel %vm2836, %v2491, %v2492
        %v2978 = vsel %vm2836, %v2493, %v2494
        %v2979 = vrot.slane %v2033, 7
        %v2980 = vsel %vm2836, %v2495, %v2979
        %v3109 = vrot.slane %v2837, 7
        %v3110 = vrot.slane %v3109, 2
        %v3111 = vrot.slane %v2838, 7
        %v3112 = vrot.slane %v3111, 2
        %v3113 = vrot.slane %v2839, 7
        %v3114 = vrot.slane %v3113, 2
        %v3115 = vrot.slane %v2840, 7
        %v3116 = vrot.slane %v3115, 2
        %v3117 = vrot.slane %v2841, 7
        %v3118 = vrot.slane %v3117, 2
        %v3119 = vrot.slane %v2842, 7
        %v3120 = vrot.slane %v3119, 2
        %v3121 = vrot.slane %v2843, 7
        %v3122 = vrot.slane %v3121, 2
        %v3123 = vrot.slane %v2845, 7
        %v3124 = vrot.slane %v3123, 2
        %v3125 = vrot.slane %v2846, 7
        %v3126 = vrot.slane %v3125, 2
        %v3127 = vrot.slane %v2847, 7
        %v3128 = vrot.slane %v3127, 2
        %v3129 = vrot.slane %v2848, 7
        %v3130 = vrot.slane %v3129, 2
        %v3131 = vrot.slane %v2849, 7
        %v3132 = vrot.slane %v3131, 2
        %v3133 = vrot.slane %v2850, 7
        %v3134 = vrot.slane %v3133, 2
        %v3135 = vrot.slane %v2851, 7
        %v3136 = vrot.slane %v3135, 2
        %v3137 = vrot.slane %v2852, 7
        %v3138 = vrot.slane %v3137, 2
        %v3139 = vrot.slane %v2854, 7
        %v3140 = vrot.slane %v3139, 2
        %v3141 = vrot.slane %v2855, 7
        %v3142 = vrot.slane %v3141, 2
        %v3143 = vrot.slane %v2856, 7
        %v3144 = vrot.slane %v3143, 2
        %v3145 = vrot.slane %v2857, 7
        %v3146 = vrot.slane %v3145, 2
        %v3147 = vrot.slane %v2858, 7
        %v3148 = vrot.slane %v3147, 2
        %v3149 = vrot.slane %v2859, 7
        %v3150 = vrot.slane %v3149, 2
        %v3151 = vrot.slane %v2860, 7
        %v3152 = vrot.slane %v3151, 2
        %v3153 = vrot.slane %v2861, 7
        %v3154 = vrot.slane %v3153, 2
        %v3155 = vrot.slane %v2863, 7
        %v3156 = vrot.slane %v3155, 2
        %v3157 = vrot.slane %v2864, 7
        %v3158 = vrot.slane %v3157, 2
        %v3159 = vrot.slane %v2865, 7
        %v3160 = vrot.slane %v3159, 2
        %v3161 = vrot.slane %v2866, 7
        %v3162 = vrot.slane %v3161, 2
        %v3163 = vrot.slane %v2867, 7
        %v3164 = vrot.slane %v3163, 2
        %v3165 = vrot.slane %v2868, 7
        %v3166 = vrot.slane %v3165, 2
        %v3167 = vrot.slane %v2869, 7
        %v3168 = vrot.slane %v3167, 2
        %v3169 = vrot.slane %v2870, 7
        %v3170 = vrot.slane %v3169, 2
        %v3171 = vrot.slane %v2872, 7
        %v3172 = vrot.slane %v3171, 2
        %v3173 = vrot.slane %v2873, 7
        %v3174 = vrot.slane %v3173, 2
        %v3175 = vrot.slane %v2874, 7
        %v3176 = vrot.slane %v3175, 2
        %v3177 = vrot.slane %v2875, 7
        %v3178 = vrot.slane %v3177, 2
        %v3179 = vrot.slane %v2876, 7
        %v3180 = vrot.slane %v3179, 2
        %v3181 = vrot.slane %v2877, 7
        %v3182 = vrot.slane %v3181, 2
        %v3183 = vrot.slane %v2878, 7
        %v3184 = vrot.slane %v3183, 2
        %v3185 = vrot.slane %v2879, 7
        %v3186 = vrot.slane %v3185, 2
        %v3187 = vrot.slane %v2881, 7
        %v3188 = vrot.slane %v3187, 2
        %v3189 = vrot.slane %v2882, 7
        %v3190 = vrot.slane %v3189, 2
        %v3191 = vrot.slane %v2883, 7
        %v3192 = vrot.slane %v3191, 2
        %v3193 = vrot.slane %v2884, 7
        %v3194 = vrot.slane %v3193, 2
        %v3195 = vrot.slane %v2885, 7
        %v3196 = vrot.slane %v3195, 2
        %v3197 = vrot.slane %v2886, 7
        %v3198 = vrot.slane %v3197, 2
        %v3199 = vrot.slane %v2887, 7
        %v3200 = vrot.slane %v3199, 2
        %v3201 = vrot.slane %v2888, 7
        %v3202 = vrot.slane %v3201, 2
        %v3203 = vrot.slane %v2890, 7
        %v3204 = vrot.slane %v3203, 2
        %v3205 = vrot.slane %v2891, 7
        %v3206 = vrot.slane %v3205, 2
        %v3207 = vrot.slane %v2892, 7
        %v3208 = vrot.slane %v3207, 2
        %v3209 = vrot.slane %v2893, 7
        %v3210 = vrot.slane %v3209, 2
        %v3211 = vrot.slane %v2894, 7
        %v3212 = vrot.slane %v3211, 2
        %v3213 = vrot.slane %v2895, 7
        %v3214 = vrot.slane %v3213, 2
        %v3215 = vrot.slane %v2896, 7
        %v3216 = vrot.slane %v3215, 2
        %v3217 = vrot.slane %v2897, 7
        %v3218 = vrot.slane %v3217, 2
        %v3219 = vrot.slane %v2899, 7
        %v3220 = vrot.slane %v3219, 2
        %v3221 = vrot.slane %v2900, 7
        %v3222 = vrot.slane %v3221, 2
        %v3223 = vrot.slane %v2901, 7
        %v3224 = vrot.slane %v3223, 2
        %v3225 = vrot.slane %v2902, 7
        %v3226 = vrot.slane %v3225, 2
        %v3227 = vrot.slane %v2903, 7
        %v3228 = vrot.slane %v3227, 2
        %v3229 = vrot.slane %v2904, 7
        %v3230 = vrot.slane %v3229, 2
        %v3231 = vrot.slane %v2905, 7
        %v3232 = vrot.slane %v3231, 2
        %v3233 = vrot.slane %v2906, 7
        %v3234 = vrot.slane %v3233, 2
        %v3235 = vrot.slane %v2908, 7
        %v3236 = vrot.slane %v3235, 2
        %v3237 = vrot.slane %v2909, 7
        %v3238 = vrot.slane %v3237, 2
        %v3239 = vrot.slane %v2910, 7
        %v3240 = vrot.slane %v3239, 2
        %v3241 = vrot.slane %v2911, 7
        %v3242 = vrot.slane %v3241, 2
        %v3243 = vrot.slane %v2912, 7
        %v3244 = vrot.slane %v3243, 2
        %v3245 = vrot.slane %v2913, 7
        %v3246 = vrot.slane %v3245, 2
        %v3247 = vrot.slane %v2914, 7
        %v3248 = vrot.slane %v3247, 2
        %v3249 = vrot.slane %v2915, 7
        %v3250 = vrot.slane %v3249, 2
        %v3251 = vrot.slane %v2917, 7
        %v3252 = vrot.slane %v3251, 2
        %v3253 = vrot.slane %v2918, 7
        %v3254 = vrot.slane %v3253, 2
        %v3255 = vrot.slane %v2919, 7
        %v3256 = vrot.slane %v3255, 2
        %v3257 = vrot.slane %v2920, 7
        %v3258 = vrot.slane %v3257, 2
        %v3259 = vrot.slane %v2921, 7
        %v3260 = vrot.slane %v3259, 2
        %v3261 = vrot.slane %v2922, 7
        %v3262 = vrot.slane %v3261, 2
        %v3263 = vrot.slane %v2923, 7
        %v3264 = vrot.slane %v3263, 2
        %v3265 = vrot.slane %v2924, 7
        %v3266 = vrot.slane %v3265, 2
        %v3267 = vrot.slane %v2926, 7
        %v3268 = vrot.slane %v3267, 2
        %v3269 = vrot.slane %v2927, 7
        %v3270 = vrot.slane %v3269, 2
        %v3271 = vrot.slane %v2928, 7
        %v3272 = vrot.slane %v3271, 2
        %v3273 = vrot.slane %v2929, 7
        %v3274 = vrot.slane %v3273, 2
        %v3275 = vrot.slane %v2930, 7
        %v3276 = vrot.slane %v3275, 2
        %v3277 = vrot.slane %v2931, 7
        %v3278 = vrot.slane %v3277, 2
        %v3279 = vrot.slane %v2932, 7
        %v3280 = vrot.slane %v3279, 2
        %v3281 = vrot.slane %v2933, 7
        %v3282 = vrot.slane %v3281, 2
        %v3283 = vrot.slane %v2935, 7
        %v3284 = vrot.slane %v3283, 2
        %v3285 = vrot.slane %v2936, 7
        %v3286 = vrot.slane %v3285, 2
        %v3287 = vrot.slane %v2937, 7
        %v3288 = vrot.slane %v3287, 2
        %v3289 = vrot.slane %v2938, 7
        %v3290 = vrot.slane %v3289, 2
        %v3291 = vrot.slane %v2939, 7
        %v3292 = vrot.slane %v3291, 2
        %v3293 = vrot.slane %v2940, 7
        %v3294 = vrot.slane %v3293, 2
        %v3295 = vrot.slane %v2941, 7
        %v3296 = vrot.slane %v3295, 2
        %v3297 = vrot.slane %v2942, 7
        %v3298 = vrot.slane %v3297, 2
        %v3299 = vrot.slane %v2944, 7
        %v3300 = vrot.slane %v3299, 2
        %v3301 = vrot.slane %v2945, 7
        %v3302 = vrot.slane %v3301, 2
        %v3303 = vrot.slane %v2946, 7
        %v3304 = vrot.slane %v3303, 2
        %v3305 = vrot.slane %v2947, 7
        %v3306 = vrot.slane %v3305, 2
        %v3307 = vrot.slane %v2948, 7
        %v3308 = vrot.slane %v3307, 2
        %v3309 = vrot.slane %v2949, 7
        %v3310 = vrot.slane %v3309, 2
        %v3311 = vrot.slane %v2950, 7
        %v3312 = vrot.slane %v3311, 2
        %v3313 = vrot.slane %v2951, 7
        %v3314 = vrot.slane %v3313, 2
        %v3315 = vrot.slane %v2953, 7
        %v3316 = vrot.slane %v3315, 2
        %v3317 = vrot.slane %v2954, 7
        %v3318 = vrot.slane %v3317, 2
        %v3319 = vrot.slane %v2955, 7
        %v3320 = vrot.slane %v3319, 2
        %v3321 = vrot.slane %v2956, 7
        %v3322 = vrot.slane %v3321, 2
        %v3323 = vrot.slane %v2957, 7
        %v3324 = vrot.slane %v3323, 2
        %v3325 = vrot.slane %v2958, 7
        %v3326 = vrot.slane %v3325, 2
        %v3327 = vrot.slane %v2959, 7
        %v3328 = vrot.slane %v3327, 2
        %v3329 = vrot.slane %v2960, 7
        %v3330 = vrot.slane %v3329, 2
        %v3331 = vrot.slane %v2962, 7
        %v3332 = vrot.slane %v3331, 2
        %v3333 = vrot.slane %v2963, 7
        %v3334 = vrot.slane %v3333, 2
        %v3335 = vrot.slane %v2964, 7
        %v3336 = vrot.slane %v3335, 2
        %v3337 = vrot.slane %v2965, 7
        %v3338 = vrot.slane %v3337, 2
        %v3339 = vrot.slane %v2966, 7
        %v3340 = vrot.slane %v3339, 2
        %v3341 = vrot.slane %v2967, 7
        %v3342 = vrot.slane %v3341, 2
        %v3343 = vrot.slane %v2968, 7
        %v3344 = vrot.slane %v3343, 2
        %v3345 = vrot.slane %v2969, 7
        %v3346 = vrot.slane %v3345, 2
        %v3347 = vrot.slane %v2971, 7
        %v3348 = vrot.slane %v3347, 2
        %v3349 = vrot.slane %v2972, 7
        %v3350 = vrot.slane %v3349, 2
        %v3351 = vrot.slane %v2973, 7
        %v3352 = vrot.slane %v3351, 2
        %v3353 = vrot.slane %v2974, 7
        %v3354 = vrot.slane %v3353, 2
        %v3355 = vrot.slane %v2975, 7
        %v3356 = vrot.slane %v3355, 2
        %v3357 = vrot.slane %v2976, 7
        %v3358 = vrot.slane %v3357, 2
        %v3359 = vrot.slane %v2977, 7
        %v3360 = vrot.slane %v3359, 2
        %v3361 = vrot.slane %v2978, 7
        %v3362 = vrot.slane %v3361, 2
        %v3363 = vrot.slane %v2980, 7
        %v3364 = vrot.slane %v3363, 2
        %v3493 = vadd.f32 %v2837, %v3110
        %v3494 = vadd.f32 %v2838, %v3112
        %v3495 = vadd.f32 %v2839, %v3114
        %v3496 = vadd.f32 %v2840, %v3116
        %v3497 = vadd.f32 %v2841, %v3118
        %v3498 = vadd.f32 %v2842, %v3120
        %v3499 = vadd.f32 %v2843, %v3122
        %v3500 = vadd.f32 %v2845, %v3124
        %v3501 = vadd.f32 %v2846, %v3126
        %v3502 = vadd.f32 %v2847, %v3128
        %v3503 = vadd.f32 %v2848, %v3130
        %v3504 = vadd.f32 %v2849, %v3132
        %v3505 = vadd.f32 %v2850, %v3134
        %v3506 = vadd.f32 %v2851, %v3136
        %v3507 = vadd.f32 %v2852, %v3138
        %v3508 = vadd.f32 %v2854, %v3140
        %v3509 = vadd.f32 %v2855, %v3142
        %v3510 = vadd.f32 %v2856, %v3144
        %v3511 = vadd.f32 %v2857, %v3146
        %v3512 = vadd.f32 %v2858, %v3148
        %v3513 = vadd.f32 %v2859, %v3150
        %v3514 = vadd.f32 %v2860, %v3152
        %v3515 = vadd.f32 %v2861, %v3154
        %v3516 = vadd.f32 %v2863, %v3156
        %v3517 = vadd.f32 %v2864, %v3158
        %v3518 = vadd.f32 %v2865, %v3160
        %v3519 = vadd.f32 %v2866, %v3162
        %v3520 = vadd.f32 %v2867, %v3164
        %v3521 = vadd.f32 %v2868, %v3166
        %v3522 = vadd.f32 %v2869, %v3168
        %v3523 = vadd.f32 %v2870, %v3170
        %v3524 = vadd.f32 %v2872, %v3172
        %v3525 = vadd.f32 %v2873, %v3174
        %v3526 = vadd.f32 %v2874, %v3176
        %v3527 = vadd.f32 %v2875, %v3178
        %v3528 = vadd.f32 %v2876, %v3180
        %v3529 = vadd.f32 %v2877, %v3182
        %v3530 = vadd.f32 %v2878, %v3184
        %v3531 = vadd.f32 %v2879, %v3186
        %v3532 = vadd.f32 %v2881, %v3188
        %v3533 = vadd.f32 %v2882, %v3190
        %v3534 = vadd.f32 %v2883, %v3192
        %v3535 = vadd.f32 %v2884, %v3194
        %v3536 = vadd.f32 %v2885, %v3196
        %v3537 = vadd.f32 %v2886, %v3198
        %v3538 = vadd.f32 %v2887, %v3200
        %v3539 = vadd.f32 %v2888, %v3202
        %v3540 = vadd.f32 %v2890, %v3204
        %v3541 = vadd.f32 %v2891, %v3206
        %v3542 = vadd.f32 %v2892, %v3208
        %v3543 = vadd.f32 %v2893, %v3210
        %v3544 = vadd.f32 %v2894, %v3212
        %v3545 = vadd.f32 %v2895, %v3214
        %v3546 = vadd.f32 %v2896, %v3216
        %v3547 = vadd.f32 %v2897, %v3218
        %v3548 = vadd.f32 %v2899, %v3220
        %v3549 = vadd.f32 %v2900, %v3222
        %v3550 = vadd.f32 %v2901, %v3224
        %v3551 = vadd.f32 %v2902, %v3226
        %v3552 = vadd.f32 %v2903, %v3228
        %v3553 = vadd.f32 %v2904, %v3230
        %v3554 = vadd.f32 %v2905, %v3232
        %v3555 = vadd.f32 %v2906, %v3234
        %v3556 = vadd.f32 %v2908, %v3236
        %v3557 = vadd.f32 %v2909, %v3238
        %v3558 = vadd.f32 %v2910, %v3240
        %v3559 = vadd.f32 %v2911, %v3242
        %v3560 = vadd.f32 %v2912, %v3244
        %v3561 = vadd.f32 %v2913, %v3246
        %v3562 = vadd.f32 %v2914, %v3248
        %v3563 = vadd.f32 %v2915, %v3250
        %v3564 = vadd.f32 %v2917, %v3252
        %v3565 = vadd.f32 %v2918, %v3254
        %v3566 = vadd.f32 %v2919, %v3256
        %v3567 = vadd.f32 %v2920, %v3258
        %v3568 = vadd.f32 %v2921, %v3260
        %v3569 = vadd.f32 %v2922, %v3262
        %v3570 = vadd.f32 %v2923, %v3264
        %v3571 = vadd.f32 %v2924, %v3266
        %v3572 = vadd.f32 %v2926, %v3268
        %v3573 = vadd.f32 %v2927, %v3270
        %v3574 = vadd.f32 %v2928, %v3272
        %v3575 = vadd.f32 %v2929, %v3274
        %v3576 = vadd.f32 %v2930, %v3276
        %v3577 = vadd.f32 %v2931, %v3278
        %v3578 = vadd.f32 %v2932, %v3280
        %v3579 = vadd.f32 %v2933, %v3282
        %v3580 = vadd.f32 %v2935, %v3284
        %v3581 = vadd.f32 %v2936, %v3286
        %v3582 = vadd.f32 %v2937, %v3288
        %v3583 = vadd.f32 %v2938, %v3290
        %v3584 = vadd.f32 %v2939, %v3292
        %v3585 = vadd.f32 %v2940, %v3294
        %v3586 = vadd.f32 %v2941, %v3296
        %v3587 = vadd.f32 %v2942, %v3298
        %v3588 = vadd.f32 %v2944, %v3300
        %v3589 = vadd.f32 %v2945, %v3302
        %v3590 = vadd.f32 %v2946, %v3304
        %v3591 = vadd.f32 %v2947, %v3306
        %v3592 = vadd.f32 %v2948, %v3308
        %v3593 = vadd.f32 %v2949, %v3310
        %v3594 = vadd.f32 %v2950, %v3312
        %v3595 = vadd.f32 %v2951, %v3314
        %v3596 = vadd.f32 %v2953, %v3316
        %v3597 = vadd.f32 %v2954, %v3318
        %v3598 = vadd.f32 %v2955, %v3320
        %v3599 = vadd.f32 %v2956, %v3322
        %v3600 = vadd.f32 %v2957, %v3324
        %v3601 = vadd.f32 %v2958, %v3326
        %v3602 = vadd.f32 %v2959, %v3328
        %v3603 = vadd.f32 %v2960, %v3330
        %v3604 = vadd.f32 %v2962, %v3332
        %v3605 = vadd.f32 %v2963, %v3334
        %v3606 = vadd.f32 %v2964, %v3336
        %v3607 = vadd.f32 %v2965, %v3338
        %v3608 = vadd.f32 %v2966, %v3340
        %v3609 = vadd.f32 %v2967, %v3342
        %v3610 = vadd.f32 %v2968, %v3344
        %v3611 = vadd.f32 %v2969, %v3346
        %v3612 = vadd.f32 %v2971, %v3348
        %v3613 = vadd.f32 %v2972, %v3350
        %v3614 = vadd.f32 %v2973, %v3352
        %v3615 = vadd.f32 %v2974, %v3354
        %v3616 = vadd.f32 %v2975, %v3356
        %v3617 = vadd.f32 %v2976, %v3358
        %v3618 = vadd.f32 %v2977, %v3360
        %v3619 = vadd.f32 %v2978, %v3362
        %v3620 = vadd.f32 %v2980, %v3364
        %v3621 = vadd.f32 %v3493, %v3501
        %v3622 = vadd.f32 %v3494, %v3502
        %v3623 = vadd.f32 %v3495, %v3503
        %v3624 = vadd.f32 %v3496, %v3504
        %v3625 = vadd.f32 %v3497, %v3505
        %v3626 = vadd.f32 %v3498, %v3506
        %v3627 = vadd.f32 %v3499, %v3507
        %v3628 = vadd.f32 %v3500, %v3508
        %v3629 = vadd.f32 %v3509, %v3517
        %v3630 = vadd.f32 %v3510, %v3518
        %v3631 = vadd.f32 %v3511, %v3519
        %v3632 = vadd.f32 %v3512, %v3520
        %v3633 = vadd.f32 %v3513, %v3521
        %v3634 = vadd.f32 %v3514, %v3522
        %v3635 = vadd.f32 %v3515, %v3523
        %v3636 = vadd.f32 %v3516, %v3524
        %v3637 = vadd.f32 %v3525, %v3533
        %v3638 = vadd.f32 %v3526, %v3534
        %v3639 = vadd.f32 %v3527, %v3535
        %v3640 = vadd.f32 %v3528, %v3536
        %v3641 = vadd.f32 %v3529, %v3537
        %v3642 = vadd.f32 %v3530, %v3538
        %v3643 = vadd.f32 %v3531, %v3539
        %v3644 = vadd.f32 %v3532, %v3540
        %v3645 = vadd.f32 %v3541, %v3549
        %v3646 = vadd.f32 %v3542, %v3550
        %v3647 = vadd.f32 %v3543, %v3551
        %v3648 = vadd.f32 %v3544, %v3552
        %v3649 = vadd.f32 %v3545, %v3553
        %v3650 = vadd.f32 %v3546, %v3554
        %v3651 = vadd.f32 %v3547, %v3555
        %v3652 = vadd.f32 %v3548, %v3556
        %v3653 = vadd.f32 %v3557, %v3565
        %v3654 = vadd.f32 %v3558, %v3566
        %v3655 = vadd.f32 %v3559, %v3567
        %v3656 = vadd.f32 %v3560, %v3568
        %v3657 = vadd.f32 %v3561, %v3569
        %v3658 = vadd.f32 %v3562, %v3570
        %v3659 = vadd.f32 %v3563, %v3571
        %v3660 = vadd.f32 %v3564, %v3572
        %v3661 = vadd.f32 %v3573, %v3581
        %v3662 = vadd.f32 %v3574, %v3582
        %v3663 = vadd.f32 %v3575, %v3583
        %v3664 = vadd.f32 %v3576, %v3584
        %v3665 = vadd.f32 %v3577, %v3585
        %v3666 = vadd.f32 %v3578, %v3586
        %v3667 = vadd.f32 %v3579, %v3587
        %v3668 = vadd.f32 %v3580, %v3588
        %v3669 = vadd.f32 %v3589, %v3597
        %v3670 = vadd.f32 %v3590, %v3598
        %v3671 = vadd.f32 %v3591, %v3599
        %v3672 = vadd.f32 %v3592, %v3600
        %v3673 = vadd.f32 %v3593, %v3601
        %v3674 = vadd.f32 %v3594, %v3602
        %v3675 = vadd.f32 %v3595, %v3603
        %v3676 = vadd.f32 %v3596, %v3604
        %v3677 = vadd.f32 %v3605, %v3613
        %v3678 = vadd.f32 %v3606, %v3614
        %v3679 = vadd.f32 %v3607, %v3615
        %v3680 = vadd.f32 %v3608, %v3616
        %v3681 = vadd.f32 %v3609, %v3617
        %v3682 = vadd.f32 %v3610, %v3618
        %v3683 = vadd.f32 %v3611, %v3619
        %v3684 = vadd.f32 %v3612, %v3620
        %3685 = vst.sshfl [vmem:[#allocation1] sm:$0xff pattern:$0x73625140] %v389
        %3686 = vst.sshfl [vmem:[#allocation1 + $0x20] sm:$0xff pattern:$0x73625140] %v291
        %s3687 = scalar_lea.vmem [#allocation1], 1
        %v3688 = vld [vmem:[%s3687] ss:$4 sm:$0xff]
        %s3689 = scalar_lea.vmem [#allocation1], 2
        %v3690 = vld [vmem:[%s3689] ss:$4 sm:$0xff]
        %s3691 = scalar_lea.vmem [#allocation1], 3
        %v3692 = vld [vmem:[%s3691] ss:$4 sm:$0xff]
        %s3693 = scalar_lea.vmem [#allocation1], 32
        %v3694 = vld [vmem:[%s3693] ss:$4 sm:$0xff]
        %s3695 = scalar_lea.vmem [#allocation1], 33
        %v3696 = vld [vmem:[%s3695] ss:$4 sm:$0xff]
        %s3697 = scalar_lea.vmem [#allocation1], 34
        %v3698 = vld [vmem:[%s3697] ss:$4 sm:$0xff]
        %s3699 = scalar_lea.vmem [#allocation1], 35
        %v3700 = vld [vmem:[%s3699] ss:$4 sm:$0xff]
        %3701 = vst.sshfl [vmem:[#allocation1] sm:$0xff pattern:$0x73625140] %v406
        %v3702 = vld [vmem:[#allocation1] ss:$4 sm:$0xff]
        %3703 = vst.sshfl [vmem:[#allocation1 + $0x20] sm:$0xff pattern:$0x73625140] %v2003
        %v3704 = vld [vmem:[%s3695] ss:$4 sm:$0xff]
        %v3705 = vld [vmem:[%s3697] ss:$4 sm:$0xff]
        %v3706 = vld [vmem:[%s3699] ss:$4 sm:$0xff]
        %3707 = vst.sshfl [vmem:[#allocation1] sm:$0xff pattern:$0x73625140] %v1909
        %3708 = vst.sshfl [vmem:[#allocation1 + $0x20] sm:$0xff pattern:$0x73625140] %v2019
        %v3709 = vld [vmem:[#allocation1] ss:$4 sm:$0xff]
        %v3710 = vld [vmem:[%s3687] ss:$4 sm:$0xff]
        %v3711 = vld [vmem:[%s3689] ss:$4 sm:$0xff]
        %v3712 = vld [vmem:[%s3691] ss:$4 sm:$0xff]
        %v3713 = vld [vmem:[%s3693] ss:$4 sm:$0xff]
        %3714 = vst.sshfl [vmem:[#allocation1] sm:$0xff pattern:$0x73625140] %v2004
        %3715 = vst.sshfl [vmem:[#allocation1 + $0x20] sm:$0xff pattern:$0x73625140] %v1912
        %v3716 = vld [vmem:[%s3687] ss:$4 sm:$0xff]
        %v3717 = vld [vmem:[%s3689] ss:$4 sm:$0xff]
        %v3718 = vld [vmem:[%s3691] ss:$4 sm:$0xff]
        %v3719 = vld [vmem:[%s3693] ss:$4 sm:$0xff]
        %v3720 = vld [vmem:[%s3695] ss:$4 sm:$0xff]
        %v3721 = vld [vmem:[%s3697] ss:$4 sm:$0xff]
        %v3722 = vld [vmem:[%s3699] ss:$4 sm:$0xff]
        %3723 = vst.sshfl [vmem:[#allocation1] sm:$0xff pattern:$0x73625140] %v2020
        %v3724 = vld [vmem:[#allocation1] ss:$4 sm:$0xff]
        %3725 = vst.sshfl [vmem:[#allocation1 + $0x20] sm:$0xff pattern:$0x73625140] %v2005
        %v3726 = vld [vmem:[%s3695] ss:$4 sm:$0xff]
        %v3727 = vld [vmem:[%s3697] ss:$4 sm:$0xff]
        %v3728 = vld [vmem:[%s3699] ss:$4 sm:$0xff]
        %3729 = vst.sshfl [vmem:[#allocation1] sm:$0xff pattern:$0x73625140] %v1915
        %3730 = vst.sshfl [vmem:[#allocation1 + $0x20] sm:$0xff pattern:$0x73625140] %v2021
        %v3731 = vld [vmem:[#allocation1] ss:$4 sm:$0xff]
        %v3732 = vld [vmem:[%s3687] ss:$4 sm:$0xff]
        %v3733 = vld [vmem:[%s3689] ss:$4 sm:$0xff]
        %v3734 = vld [vmem:[%s3691] ss:$4 sm:$0xff]
        %v3735 = vld [vmem:[%s3693] ss:$4 sm:$0xff]
        %3736 = vst.sshfl [vmem:[#allocation1] sm:$0xff pattern:$0x73625140] %v2006
        %3737 = vst.sshfl [vmem:[#allocation1 + $0x20] sm:$0xff pattern:$0x73625140] %v1918
        %v3738 = vld [vmem:[%s3687] ss:$4 sm:$0xff]
        %v3739 = vld [vmem:[%s3689] ss:$4 sm:$0xff]
        %v3740 = vld [vmem:[%s3691] ss:$4 sm:$0xff]
        %v3741 = vld [vmem:[%s3693] ss:$4 sm:$0xff]
        %v3742 = vld [vmem:[%s3695] ss:$4 sm:$0xff]
        %v3743 = vld [vmem:[%s3697] ss:$4 sm:$0xff]
        %v3744 = vld [vmem:[%s3699] ss:$4 sm:$0xff]
        %3745 = vst.sshfl [vmem:[#allocation1] sm:$0xff pattern:$0x73625140] %v2022
        %v3746 = vld [vmem:[#allocation1] ss:$4 sm:$0xff]
        %3747 = vst.sshfl [vmem:[#allocation1 + $0x20] sm:$0xff pattern:$0x73625140] %v2007
        %v3748 = vld [vmem:[%s3695] ss:$4 sm:$0xff]
        %v3749 = vld [vmem:[%s3697] ss:$4 sm:$0xff]
        %v3750 = vld [vmem:[%s3699] ss:$4 sm:$0xff]
        %3751 = vst.sshfl [vmem:[#allocation1] sm:$0xff pattern:$0x73625140] %v1921
        %3752 = vst.sshfl [vmem:[#allocation1 + $0x20] sm:$0xff pattern:$0x73625140] %v2023
        %v3753 = vld [vmem:[#allocation1] ss:$4 sm:$0xff]
        %v3754 = vld [vmem:[%s3687] ss:$4 sm:$0xff]
        %v3755 = vld [vmem:[%s3689] ss:$4 sm:$0xff]
        %v3756 = vld [vmem:[%s3691] ss:$4 sm:$0xff]
        %v3757 = vld [vmem:[%s3693] ss:$4 sm:$0xff]
        %3758 = vst.sshfl [vmem:[#allocation1] sm:$0xff pattern:$0x73625140] %v2008
        %3759 = vst.sshfl [vmem:[#allocation1 + $0x20] sm:$0xff pattern:$0x73625140] %v1924
        %v3760 = vld [vmem:[%s3687] ss:$4 sm:$0xff]
        %v3761 = vld [vmem:[%s3689] ss:$4 sm:$0xff]
        %v3762 = vld [vmem:[%s3691] ss:$4 sm:$0xff]
        %v3763 = vld [vmem:[%s3693] ss:$4 sm:$0xff]
        %v3764 = vld [vmem:[%s3695] ss:$4 sm:$0xff]
        %v3765 = vld [vmem:[%s3697] ss:$4 sm:$0xff]
        %v3766 = vld [vmem:[%s3699] ss:$4 sm:$0xff]
        %3767 = vst.sshfl [vmem:[#allocation1] sm:$0xff pattern:$0x73625140] %v2024
        %v3768 = vld [vmem:[#allocation1] ss:$4 sm:$0xff]
        %3769 = vst.sshfl [vmem:[#allocation1 + $0x20] sm:$0xff pattern:$0x73625140] %v2009
        %v3770 = vld [vmem:[%s3695] ss:$4 sm:$0xff]
        %v3771 = vld [vmem:[%s3697] ss:$4 sm:$0xff]
        %v3772 = vld [vmem:[%s3699] ss:$4 sm:$0xff]
        %3773 = vst.sshfl [vmem:[#allocation1] sm:$0xff pattern:$0x73625140] %v1927
        %3774 = vst.sshfl [vmem:[#allocation1 + $0x20] sm:$0xff pattern:$0x73625140] %v2025
        %v3775 = vld [vmem:[#allocation1] ss:$4 sm:$0xff]
        %v3776 = vld [vmem:[%s3687] ss:$4 sm:$0xff]
        %v3777 = vld [vmem:[%s3689] ss:$4 sm:$0xff]
        %v3778 = vld [vmem:[%s3691] ss:$4 sm:$0xff]
        %v3779 = vld [vmem:[%s3693] ss:$4 sm:$0xff]
        %3780 = vst.sshfl [vmem:[#allocation1] sm:$0xff pattern:$0x73625140] %v2010
        %3781 = vst.sshfl [vmem:[#allocation1 + $0x20] sm:$0xff pattern:$0x73625140] %v1930
        %v3782 = vld [vmem:[%s3687] ss:$4 sm:$0xff]
        %v3783 = vld [vmem:[%s3689] ss:$4 sm:$0xff]
        %v3784 = vld [vmem:[%s3691] ss:$4 sm:$0xff]
        %v3785 = vld [vmem:[%s3693] ss:$4 sm:$0xff]
        %v3786 = vld [vmem:[%s3695] ss:$4 sm:$0xff]
        %v3787 = vld [vmem:[%s3697] ss:$4 sm:$0xff]
        %v3788 = vld [vmem:[%s3699] ss:$4 sm:$0xff]
        %3789 = vst.sshfl [vmem:[#allocation1] sm:$0xff pattern:$0x73625140] %v2026
        %v3790 = vld [vmem:[#allocation1] ss:$4 sm:$0xff]
        %3791 = vst.sshfl [vmem:[#allocation1 + $0x20] sm:$0xff pattern:$0x73625140] %v2011
        %v3792 = vld [vmem:[%s3695] ss:$4 sm:$0xff]
        %v3793 = vld [vmem:[%s3697] ss:$4 sm:$0xff]
        %v3794 = vld [vmem:[%s3699] ss:$4 sm:$0xff]
        %3795 = vst.sshfl [vmem:[#allocation1] sm:$0xff pattern:$0x73625140] %v1933
        %3796 = vst.sshfl [vmem:[#allocation1 + $0x20] sm:$0xff pattern:$0x73625140] %v2027
        %v3797 = vld [vmem:[#allocation1] ss:$4 sm:$0xff]
        %v3798 = vld [vmem:[%s3687] ss:$4 sm:$0xff]
        %v3799 = vld [vmem:[%s3689] ss:$4 sm:$0xff]
        %v3800 = vld [vmem:[%s3691] ss:$4 sm:$0xff]
        %v3801 = vld [vmem:[%s3693] ss:$4 sm:$0xff]
        %3802 = vst.sshfl [vmem:[#allocation1] sm:$0xff pattern:$0x73625140] %v2012
        %3803 = vst.sshfl [vmem:[#allocation1 + $0x20] sm:$0xff pattern:$0x73625140] %v1936
        %v3804 = vld [vmem:[%s3687] ss:$4 sm:$0xff]
        %v3805 = vld [vmem:[%s3689] ss:$4 sm:$0xff]
        %v3806 = vld [vmem:[%s3691] ss:$4 sm:$0xff]
        %v3807 = vld [vmem:[%s3693] ss:$4 sm:$0xff]
        %v3808 = vld [vmem:[%s3695] ss:$4 sm:$0xff]
        %v3809 = vld [vmem:[%s3697] ss:$4 sm:$0xff]
        %v3810 = vld [vmem:[%s3699] ss:$4 sm:$0xff]
        %3811 = vst.sshfl [vmem:[#allocation1] sm:$0xff pattern:$0x73625140] %v2028
        %v3812 = vld [vmem:[#allocation1] ss:$4 sm:$0xff]
        %3813 = vst.sshfl [vmem:[#allocation1 + $0x20] sm:$0xff pattern:$0x73625140] %v2013
        %v3814 = vld [vmem:[%s3695] ss:$4 sm:$0xff]
        %v3815 = vld [vmem:[%s3697] ss:$4 sm:$0xff]
        %v3816 = vld [vmem:[%s3699] ss:$4 sm:$0xff]
        %3817 = vst.sshfl [vmem:[#allocation1] sm:$0xff pattern:$0x73625140] %v1939
        %3818 = vst.sshfl [vmem:[#allocation1 + $0x20] sm:$0xff pattern:$0x73625140] %v2029
        %v3819 = vld [vmem:[#allocation1] ss:$4 sm:$0xff]
        %v3820 = vld [vmem:[%s3687] ss:$4 sm:$0xff]
        %v3821 = vld [vmem:[%s3689] ss:$4 sm:$0xff]
        %v3822 = vld [vmem:[%s3691] ss:$4 sm:$0xff]
        %v3823 = vld [vmem:[%s3693] ss:$4 sm:$0xff]
        %3824 = vst.sshfl [vmem:[#allocation1] sm:$0xff pattern:$0x73625140] %v2014
        %3825 = vst.sshfl [vmem:[#allocation1 + $0x20] sm:$0xff pattern:$0x73625140] %v1942
        %v3826 = vld [vmem:[%s3687] ss:$4 sm:$0xff]
        %v3827 = vld [vmem:[%s3689] ss:$4 sm:$0xff]
        %v3828 = vld [vmem:[%s3691] ss:$4 sm:$0xff]
        %v3829 = vld [vmem:[%s3693] ss:$4 sm:$0xff]
        %v3830 = vld [vmem:[%s3695] ss:$4 sm:$0xff]
        %v3831 = vld [vmem:[%s3697] ss:$4 sm:$0xff]
        %v3832 = vld [vmem:[%s3699] ss:$4 sm:$0xff]
        %3833 = vst.sshfl [vmem:[#allocation1] sm:$0xff pattern:$0x73625140] %v2030
        %v3834 = vld [vmem:[#allocation1] ss:$4 sm:$0xff]
        %3835 = vst.sshfl [vmem:[#allocation1 + $0x20] sm:$0xff pattern:$0x73625140] %v2015
        %v3836 = vld [vmem:[%s3695] ss:$4 sm:$0xff]
        %v3837 = vld [vmem:[%s3697] ss:$4 sm:$0xff]
        %v3838 = vld [vmem:[%s3699] ss:$4 sm:$0xff]
        %3839 = vst.sshfl [vmem:[#allocation1] sm:$0xff pattern:$0x73625140] %v1945
        %3840 = vst.sshfl [vmem:[#allocation1 + $0x20] sm:$0xff pattern:$0x73625140] %v2031
        %v3841 = vld [vmem:[#allocation1] ss:$4 sm:$0xff]
        %v3842 = vld [vmem:[%s3687] ss:$4 sm:$0xff]
        %v3843 = vld [vmem:[%s3689] ss:$4 sm:$0xff]
        %v3844 = vld [vmem:[%s3691] ss:$4 sm:$0xff]
        %v3845 = vld [vmem:[%s3693] ss:$4 sm:$0xff]
        %3846 = vst.sshfl [vmem:[#allocation1] sm:$0xff pattern:$0x73625140] %v2016
        %3847 = vst.sshfl [vmem:[#allocation1 + $0x20] sm:$0xff pattern:$0x73625140] %v1948
        %v3848 = vld [vmem:[%s3687] ss:$4 sm:$0xff]
        %v3849 = vld [vmem:[%s3689] ss:$4 sm:$0xff]
        %v3850 = vld [vmem:[%s3691] ss:$4 sm:$0xff]
        %v3851 = vld [vmem:[%s3693] ss:$4 sm:$0xff]
        %v3852 = vld [vmem:[%s3695] ss:$4 sm:$0xff]
        %v3853 = vld [vmem:[%s3697] ss:$4 sm:$0xff]
        %v3854 = vld [vmem:[%s3699] ss:$4 sm:$0xff]
        %3855 = vst.sshfl [vmem:[#allocation1] sm:$0xff pattern:$0x73625140] %v2032
        %v3856 = vld [vmem:[#allocation1] ss:$4 sm:$0xff]
        %3857 = vst.sshfl [vmem:[#allocation1 + $0x20] sm:$0xff pattern:$0x73625140] %v2017
        %v3858 = vld [vmem:[%s3695] ss:$4 sm:$0xff]
        %v3859 = vld [vmem:[%s3697] ss:$4 sm:$0xff]
        %v3860 = vld [vmem:[%s3699] ss:$4 sm:$0xff]
        %3861 = vst.sshfl [vmem:[#allocation1] sm:$0xff pattern:$0x73625140] %v1951
        %3862 = vst.sshfl [vmem:[#allocation1 + $0x20] sm:$0xff pattern:$0x73625140] %v2033
        %v3863 = vld [vmem:[#allocation1] ss:$4 sm:$0xff]
        %v3864 = vld [vmem:[%s3687] ss:$4 sm:$0xff]
        %v3865 = vld [vmem:[%s3689] ss:$4 sm:$0xff]
        %v3866 = vld [vmem:[%s3691] ss:$4 sm:$0xff]
        %v3867 = vld [vmem:[%s3693] ss:$4 sm:$0xff]
        %v3996 = vrot.slane %v3688, 7
        %v3997 = vrot.slane %v3996, 2
        %v3998 = vrot.slane %v3690, 7
        %v3999 = vrot.slane %v3998, 2
        %v4000 = vrot.slane %v3692, 7
        %v4001 = vrot.slane %v4000, 2
        %v4002 = vrot.slane %v3694, 7
        %v4003 = vrot.slane %v4002, 2
        %v4004 = vrot.slane %v3696, 7
        %v4005 = vrot.slane %v4004, 2
        %v4006 = vrot.slane %v3698, 7
        %v4007 = vrot.slane %v4006, 2
        %v4008 = vrot.slane %v3700, 7
        %v4009 = vrot.slane %v4008, 2
        %v4010 = vrot.slane %v3702, 7
        %v4011 = vrot.slane %v4010, 2
        %v4012 = vrot.slane %v3704, 7
        %v4013 = vrot.slane %v4012, 2
        %v4014 = vrot.slane %v3705, 7
        %v4015 = vrot.slane %v4014, 2
        %v4016 = vrot.slane %v3706, 7
        %v4017 = vrot.slane %v4016, 2
        %v4018 = vrot.slane %v3709, 7
        %v4019 = vrot.slane %v4018, 2
        %v4020 = vrot.slane %v3710, 7
        %v4021 = vrot.slane %v4020, 2
        %v4022 = vrot.slane %v3711, 7
        %v4023 = vrot.slane %v4022, 2
        %v4024 = vrot.slane %v3712, 7
        %v4025 = vrot.slane %v4024, 2
        %v4026 = vrot.slane %v3713, 7
        %v4027 = vrot.slane %v4026, 2
        %v4028 = vrot.slane %v3716, 7
        %v4029 = vrot.slane %v4028, 2
        %v4030 = vrot.slane %v3717, 7
        %v4031 = vrot.slane %v4030, 2
        %v4032 = vrot.slane %v3718, 7
        %v4033 = vrot.slane %v4032, 2
        %v4034 = vrot.slane %v3719, 7
        %v4035 = vrot.slane %v4034, 2
        %v4036 = vrot.slane %v3720, 7
        %v4037 = vrot.slane %v4036, 2
        %v4038 = vrot.slane %v3721, 7
        %v4039 = vrot.slane %v4038, 2
        %v4040 = vrot.slane %v3722, 7
        %v4041 = vrot.slane %v4040, 2
        %v4042 = vrot.slane %v3724, 7
        %v4043 = vrot.slane %v4042, 2
        %v4044 = vrot.slane %v3726, 7
        %v4045 = vrot.slane %v4044, 2
        %v4046 = vrot.slane %v3727, 7
        %v4047 = vrot.slane %v4046, 2
        %v4048 = vrot.slane %v3728, 7
        %v4049 = vrot.slane %v4048, 2
        %v4050 = vrot.slane %v3731, 7
        %v4051 = vrot.slane %v4050, 2
        %v4052 = vrot.slane %v3732, 7
        %v4053 = vrot.slane %v4052, 2
        %v4054 = vrot.slane %v3733, 7
        %v4055 = vrot.slane %v4054, 2
        %v4056 = vrot.slane %v3734, 7
        %v4057 = vrot.slane %v4056, 2
        %v4058 = vrot.slane %v3735, 7
        %v4059 = vrot.slane %v4058, 2
        %v4060 = vrot.slane %v3738, 7
        %v4061 = vrot.slane %v4060, 2
        %v4062 = vrot.slane %v3739, 7
        %v4063 = vrot.slane %v4062, 2
        %v4064 = vrot.slane %v3740, 7
        %v4065 = vrot.slane %v4064, 2
        %v4066 = vrot.slane %v3741, 7
        %v4067 = vrot.slane %v4066, 2
        %v4068 = vrot.slane %v3742, 7
        %v4069 = vrot.slane %v4068, 2
        %v4070 = vrot.slane %v3743, 7
        %v4071 = vrot.slane %v4070, 2
        %v4072 = vrot.slane %v3744, 7
        %v4073 = vrot.slane %v4072, 2
        %v4074 = vrot.slane %v3746, 7
        %v4075 = vrot.slane %v4074, 2
        %v4076 = vrot.slane %v3748, 7
        %v4077 = vrot.slane %v4076, 2
        %v4078 = vrot.slane %v3749, 7
        %v4079 = vrot.slane %v4078, 2
        %v4080 = vrot.slane %v3750, 7
        %v4081 = vrot.slane %v4080, 2
        %v4082 = vrot.slane %v3753, 7
        %v4083 = vrot.slane %v4082, 2
        %v4084 = vrot.slane %v3754, 7
        %v4085 = vrot.slane %v4084, 2
        %v4086 = vrot.slane %v3755, 7
        %v4087 = vrot.slane %v4086, 2
        %v4088 = vrot.slane %v3756, 7
        %v4089 = vrot.slane %v4088, 2
        %v4090 = vrot.slane %v3757, 7
        %v4091 = vrot.slane %v4090, 2
        %v4092 = vrot.slane %v3760, 7
        %v4093 = vrot.slane %v4092, 2
        %v4094 = vrot.slane %v3761, 7
        %v4095 = vrot.slane %v4094, 2
        %v4096 = vrot.slane %v3762, 7
        %v4097 = vrot.slane %v4096, 2
        %v4098 = vrot.slane %v3763, 7
        %v4099 = vrot.slane %v4098, 2
        %v4100 = vrot.slane %v3764, 7
        %v4101 = vrot.slane %v4100, 2
        %v4102 = vrot.slane %v3765, 7
        %v4103 = vrot.slane %v4102, 2
        %v4104 = vrot.slane %v3766, 7
        %v4105 = vrot.slane %v4104, 2
        %v4106 = vrot.slane %v3768, 7
        %v4107 = vrot.slane %v4106, 2
        %v4108 = vrot.slane %v3770, 7
        %v4109 = vrot.slane %v4108, 2
        %v4110 = vrot.slane %v3771, 7
        %v4111 = vrot.slane %v4110, 2
        %v4112 = vrot.slane %v3772, 7
        %v4113 = vrot.slane %v4112, 2
        %v4114 = vrot.slane %v3775, 7
        %v4115 = vrot.slane %v4114, 2
        %v4116 = vrot.slane %v3776, 7
        %v4117 = vrot.slane %v4116, 2
        %v4118 = vrot.slane %v3777, 7
        %v4119 = vrot.slane %v4118, 2
        %v4120 = vrot.slane %v3778, 7
        %v4121 = vrot.slane %v4120, 2
        %v4122 = vrot.slane %v3779, 7
        %v4123 = vrot.slane %v4122, 2
        %v4124 = vrot.slane %v3782, 7
        %v4125 = vrot.slane %v4124, 2
        %v4126 = vrot.slane %v3783, 7
        %v4127 = vrot.slane %v4126, 2
        %v4128 = vrot.slane %v3784, 7
        %v4129 = vrot.slane %v4128, 2
        %v4130 = vrot.slane %v3785, 7
        %v4131 = vrot.slane %v4130, 2
        %v4132 = vrot.slane %v3786, 7
        %v4133 = vrot.slane %v4132, 2
        %v4134 = vrot.slane %v3787, 7
        %v4135 = vrot.slane %v4134, 2
        %v4136 = vrot.slane %v3788, 7
        %v4137 = vrot.slane %v4136, 2
        %v4138 = vrot.slane %v3790, 7
        %v4139 = vrot.slane %v4138, 2
        %v4140 = vrot.slane %v3792, 7
        %v4141 = vrot.slane %v4140, 2
        %v4142 = vrot.slane %v3793, 7
        %v4143 = vrot.slane %v4142, 2
        %v4144 = vrot.slane %v3794, 7
        %v4145 = vrot.slane %v4144, 2
        %v4146 = vrot.slane %v3797, 7
        %v4147 = vrot.slane %v4146, 2
        %v4148 = vrot.slane %v3798, 7
        %v4149 = vrot.slane %v4148, 2
        %v4150 = vrot.slane %v3799, 7
        %v4151 = vrot.slane %v4150, 2
        %v4152 = vrot.slane %v3800, 7
        %v4153 = vrot.slane %v4152, 2
        %v4154 = vrot.slane %v3801, 7
        %v4155 = vrot.slane %v4154, 2
        %v4156 = vrot.slane %v3804, 7
        %v4157 = vrot.slane %v4156, 2
        %v4158 = vrot.slane %v3805, 7
        %v4159 = vrot.slane %v4158, 2
        %v4160 = vrot.slane %v3806, 7
        %v4161 = vrot.slane %v4160, 2
        %v4162 = vrot.slane %v3807, 7
        %v4163 = vrot.slane %v4162, 2
        %v4164 = vrot.slane %v3808, 7
        %v4165 = vrot.slane %v4164, 2
        %v4166 = vrot.slane %v3809, 7
        %v4167 = vrot.slane %v4166, 2
        %v4168 = vrot.slane %v3810, 7
        %v4169 = vrot.slane %v4168, 2
        %v4170 = vrot.slane %v3812, 7
        %v4171 = vrot.slane %v4170, 2
        %v4172 = vrot.slane %v3814, 7
        %v4173 = vrot.slane %v4172, 2
        %v4174 = vrot.slane %v3815, 7
        %v4175 = vrot.slane %v4174, 2
        %v4176 = vrot.slane %v3816, 7
        %v4177 = vrot.slane %v4176, 2
        %v4178 = vrot.slane %v3819, 7
        %v4179 = vrot.slane %v4178, 2
        %v4180 = vrot.slane %v3820, 7
        %v4181 = vrot.slane %v4180, 2
        %v4182 = vrot.slane %v3821, 7
        %v4183 = vrot.slane %v4182, 2
        %v4184 = vrot.slane %v3822, 7
        %v4185 = vrot.slane %v4184, 2
        %v4186 = vrot.slane %v3823, 7
        %v4187 = vrot.slane %v4186, 2
        %v4188 = vrot.slane %v3826, 7
        %v4189 = vrot.slane %v4188, 2
        %v4190 = vrot.slane %v3827, 7
        %v4191 = vrot.slane %v4190, 2
        %v4192 = vrot.slane %v3828, 7
        %v4193 = vrot.slane %v4192, 2
        %v4194 = vrot.slane %v3829, 7
        %v4195 = vrot.slane %v4194, 2
        %v4196 = vrot.slane %v3830, 7
        %v4197 = vrot.slane %v4196, 2
        %v4198 = vrot.slane %v3831, 7
        %v4199 = vrot.slane %v4198, 2
        %v4200 = vrot.slane %v3832, 7
        %v4201 = vrot.slane %v4200, 2
        %v4202 = vrot.slane %v3834, 7
        %v4203 = vrot.slane %v4202, 2
        %v4204 = vrot.slane %v3836, 7
        %v4205 = vrot.slane %v4204, 2
        %v4206 = vrot.slane %v3837, 7
        %v4207 = vrot.slane %v4206, 2
        %v4208 = vrot.slane %v3838, 7
        %v4209 = vrot.slane %v4208, 2
        %v4210 = vrot.slane %v3841, 7
        %v4211 = vrot.slane %v4210, 2
        %v4212 = vrot.slane %v3842, 7
        %v4213 = vrot.slane %v4212, 2
        %v4214 = vrot.slane %v3843, 7
        %v4215 = vrot.slane %v4214, 2
        %v4216 = vrot.slane %v3844, 7
        %v4217 = vrot.slane %v4216, 2
        %v4218 = vrot.slane %v3845, 7
        %v4219 = vrot.slane %v4218, 2
        %v4220 = vrot.slane %v3848, 7
        %v4221 = vrot.slane %v4220, 2
        %v4222 = vrot.slane %v3849, 7
        %v4223 = vrot.slane %v4222, 2
        %v4224 = vrot.slane %v3850, 7
        %v4225 = vrot.slane %v4224, 2
        %v4226 = vrot.slane %v3851, 7
        %v4227 = vrot.slane %v4226, 2
        %v4228 = vrot.slane %v3852, 7
        %v4229 = vrot.slane %v4228, 2
        %v4230 = vrot.slane %v3853, 7
        %v4231 = vrot.slane %v4230, 2
        %v4232 = vrot.slane %v3854, 7
        %v4233 = vrot.slane %v4232, 2
        %v4234 = vrot.slane %v3856, 7
        %v4235 = vrot.slane %v4234, 2
        %v4236 = vrot.slane %v3858, 7
        %v4237 = vrot.slane %v4236, 2
        %v4238 = vrot.slane %v3859, 7
        %v4239 = vrot.slane %v4238, 2
        %v4240 = vrot.slane %v3860, 7
        %v4241 = vrot.slane %v4240, 2
        %v4242 = vrot.slane %v3863, 7
        %v4243 = vrot.slane %v4242, 2
        %v4244 = vrot.slane %v3864, 7
        %v4245 = vrot.slane %v4244, 2
        %v4246 = vrot.slane %v3865, 7
        %v4247 = vrot.slane %v4246, 2
        %v4248 = vrot.slane %v3866, 7
        %v4249 = vrot.slane %v4248, 2
        %v4250 = vrot.slane %v3867, 7
        %v4251 = vrot.slane %v4250, 2
        %v4380 = vadd.f32 %v3688, %v3997
        %v4381 = vadd.f32 %v3690, %v3999
        %v4382 = vadd.f32 %v3692, %v4001
        %v4383 = vadd.f32 %v3694, %v4003
        %v4384 = vadd.f32 %v3696, %v4005
        %v4385 = vadd.f32 %v3698, %v4007
        %v4386 = vadd.f32 %v3700, %v4009
        %v4387 = vadd.f32 %v3702, %v4011
        %v4388 = vadd.f32 %v3704, %v4013
        %v4389 = vadd.f32 %v3705, %v4015
        %v4390 = vadd.f32 %v3706, %v4017
        %v4391 = vadd.f32 %v3709, %v4019
        %v4392 = vadd.f32 %v3710, %v4021
        %v4393 = vadd.f32 %v3711, %v4023
        %v4394 = vadd.f32 %v3712, %v4025
        %v4395 = vadd.f32 %v3713, %v4027
        %v4396 = vadd.f32 %v3716, %v4029
        %v4397 = vadd.f32 %v3717, %v4031
        %v4398 = vadd.f32 %v3718, %v4033
        %v4399 = vadd.f32 %v3719, %v4035
        %v4400 = vadd.f32 %v3720, %v4037
        %v4401 = vadd.f32 %v3721, %v4039
        %v4402 = vadd.f32 %v3722, %v4041
        %v4403 = vadd.f32 %v3724, %v4043
        %v4404 = vadd.f32 %v3726, %v4045
        %v4405 = vadd.f32 %v3727, %v4047
        %v4406 = vadd.f32 %v3728, %v4049
        %v4407 = vadd.f32 %v3731, %v4051
        %v4408 = vadd.f32 %v3732, %v4053
        %v4409 = vadd.f32 %v3733, %v4055
        %v4410 = vadd.f32 %v3734, %v4057
        %v4411 = vadd.f32 %v3735, %v4059
        %v4412 = vadd.f32 %v3738, %v4061
        %v4413 = vadd.f32 %v3739, %v4063
        %v4414 = vadd.f32 %v3740, %v4065
        %v4415 = vadd.f32 %v3741, %v4067
        %v4416 = vadd.f32 %v3742, %v4069
        %v4417 = vadd.f32 %v3743, %v4071
        %v4418 = vadd.f32 %v3744, %v4073
        %v4419 = vadd.f32 %v3746, %v4075
        %v4420 = vadd.f32 %v3748, %v4077
        %v4421 = vadd.f32 %v3749, %v4079
        %v4422 = vadd.f32 %v3750, %v4081
        %v4423 = vadd.f32 %v3753, %v4083
        %v4424 = vadd.f32 %v3754, %v4085
        %v4425 = vadd.f32 %v3755, %v4087
        %v4426 = vadd.f32 %v3756, %v4089
        %v4427 = vadd.f32 %v3757, %v4091
        %v4428 = vadd.f32 %v3760, %v4093
        %v4429 = vadd.f32 %v3761, %v4095
        %v4430 = vadd.f32 %v3762, %v4097
        %v4431 = vadd.f32 %v3763, %v4099
        %v4432 = vadd.f32 %v3764, %v4101
        %v4433 = vadd.f32 %v3765, %v4103
        %v4434 = vadd.f32 %v3766, %v4105
        %v4435 = vadd.f32 %v3768, %v4107
        %v4436 = vadd.f32 %v3770, %v4109
        %v4437 = vadd.f32 %v3771, %v4111
        %v4438 = vadd.f32 %v3772, %v4113
        %v4439 = vadd.f32 %v3775, %v4115
        %v4440 = vadd.f32 %v3776, %v4117
        %v4441 = vadd.f32 %v3777, %v4119
        %v4442 = vadd.f32 %v3778, %v4121
        %v4443 = vadd.f32 %v3779, %v4123
        %v4444 = vadd.f32 %v3782, %v4125
        %v4445 = vadd.f32 %v3783, %v4127
        %v4446 = vadd.f32 %v3784, %v4129
        %v4447 = vadd.f32 %v3785, %v4131
        %v4448 = vadd.f32 %v3786, %v4133
        %v4449 = vadd.f32 %v3787, %v4135
        %v4450 = vadd.f32 %v3788, %v4137
        %v4451 = vadd.f32 %v3790, %v4139
        %v4452 = vadd.f32 %v3792, %v4141
        %v4453 = vadd.f32 %v3793, %v4143
        %v4454 = vadd.f32 %v3794, %v4145
        %v4455 = vadd.f32 %v3797, %v4147
        %v4456 = vadd.f32 %v3798, %v4149
        %v4457 = vadd.f32 %v3799, %v4151
        %v4458 = vadd.f32 %v3800, %v4153
        %v4459 = vadd.f32 %v3801, %v4155
        %v4460 = vadd.f32 %v3804, %v4157
        %v4461 = vadd.f32 %v3805, %v4159
        %v4462 = vadd.f32 %v3806, %v4161
        %v4463 = vadd.f32 %v3807, %v4163
        %v4464 = vadd.f32 %v3808, %v4165
        %v4465 = vadd.f32 %v3809, %v4167
        %v4466 = vadd.f32 %v3810, %v4169
        %v4467 = vadd.f32 %v3812, %v4171
        %v4468 = vadd.f32 %v3814, %v4173
        %v4469 = vadd.f32 %v3815, %v4175
        %v4470 = vadd.f32 %v3816, %v4177
        %v4471 = vadd.f32 %v3819, %v4179
        %v4472 = vadd.f32 %v3820, %v4181
        %v4473 = vadd.f32 %v3821, %v4183
        %v4474 = vadd.f32 %v3822, %v4185
        %v4475 = vadd.f32 %v3823, %v4187
        %v4476 = vadd.f32 %v3826, %v4189
        %v4477 = vadd.f32 %v3827, %v4191
        %v4478 = vadd.f32 %v3828, %v4193
        %v4479 = vadd.f32 %v3829, %v4195
        %v4480 = vadd.f32 %v3830, %v4197
        %v4481 = vadd.f32 %v3831, %v4199
        %v4482 = vadd.f32 %v3832, %v4201
        %v4483 = vadd.f32 %v3834, %v4203
        %v4484 = vadd.f32 %v3836, %v4205
        %v4485 = vadd.f32 %v3837, %v4207
        %v4486 = vadd.f32 %v3838, %v4209
        %v4487 = vadd.f32 %v3841, %v4211
        %v4488 = vadd.f32 %v3842, %v4213
        %v4489 = vadd.f32 %v3843, %v4215
        %v4490 = vadd.f32 %v3844, %v4217
        %v4491 = vadd.f32 %v3845, %v4219
        %v4492 = vadd.f32 %v3848, %v4221
        %v4493 = vadd.f32 %v3849, %v4223
        %v4494 = vadd.f32 %v3850, %v4225
        %v4495 = vadd.f32 %v3851, %v4227
        %v4496 = vadd.f32 %v3852, %v4229
        %v4497 = vadd.f32 %v3853, %v4231
        %v4498 = vadd.f32 %v3854, %v4233
        %v4499 = vadd.f32 %v3856, %v4235
        %v4500 = vadd.f32 %v3858, %v4237
        %v4501 = vadd.f32 %v3859, %v4239
        %v4502 = vadd.f32 %v3860, %v4241
        %v4503 = vadd.f32 %v3863, %v4243
        %v4504 = vadd.f32 %v3864, %v4245
        %v4505 = vadd.f32 %v3865, %v4247
        %v4506 = vadd.f32 %v3866, %v4249
        %v4507 = vadd.f32 %v3867, %v4251
        %v4508 = vadd.f32 %v4380, %v4388
        %v4509 = vadd.f32 %v4381, %v4389
        %v4510 = vadd.f32 %v4382, %v4390
        %v4511 = vadd.f32 %v4383, %v4391
        %v4512 = vadd.f32 %v4384, %v4392
        %v4513 = vadd.f32 %v4385, %v4393
        %v4514 = vadd.f32 %v4386, %v4394
        %v4515 = vadd.f32 %v4387, %v4395
        %v4516 = vadd.f32 %v4396, %v4404
        %v4517 = vadd.f32 %v4397, %v4405
        %v4518 = vadd.f32 %v4398, %v4406
        %v4519 = vadd.f32 %v4399, %v4407
        %v4520 = vadd.f32 %v4400, %v4408
        %v4521 = vadd.f32 %v4401, %v4409
        %v4522 = vadd.f32 %v4402, %v4410
        %v4523 = vadd.f32 %v4403, %v4411
        %v4524 = vadd.f32 %v4412, %v4420
        %v4525 = vadd.f32 %v4413, %v4421
        %v4526 = vadd.f32 %v4414, %v4422
        %v4527 = vadd.f32 %v4415, %v4423
        %v4528 = vadd.f32 %v4416, %v4424
        %v4529 = vadd.f32 %v4417, %v4425
        %v4530 = vadd.f32 %v4418, %v4426
        %v4531 = vadd.f32 %v4419, %v4427
        %v4532 = vadd.f32 %v4428, %v4436
        %v4533 = vadd.f32 %v4429, %v4437
        %v4534 = vadd.f32 %v4430, %v4438
        %v4535 = vadd.f32 %v4431, %v4439
        %v4536 = vadd.f32 %v4432, %v4440
        %v4537 = vadd.f32 %v4433, %v4441
        %v4538 = vadd.f32 %v4434, %v4442
        %v4539 = vadd.f32 %v4435, %v4443
        %v4540 = vadd.f32 %v4444, %v4452
        %v4541 = vadd.f32 %v4445, %v4453
        %v4542 = vadd.f32 %v4446, %v4454
        %v4543 = vadd.f32 %v4447, %v4455
        %v4544 = vadd.f32 %v4448, %v4456
        %v4545 = vadd.f32 %v4449, %v4457
        %v4546 = vadd.f32 %v4450, %v4458
        %v4547 = vadd.f32 %v4451, %v4459
        %v4548 = vadd.f32 %v4460, %v4468
        %v4549 = vadd.f32 %v4461, %v4469
        %v4550 = vadd.f32 %v4462, %v4470
        %v4551 = vadd.f32 %v4463, %v4471
        %v4552 = vadd.f32 %v4464, %v4472
        %v4553 = vadd.f32 %v4465, %v4473
        %v4554 = vadd.f32 %v4466, %v4474
        %v4555 = vadd.f32 %v4467, %v4475
        %v4556 = vadd.f32 %v4476, %v4484
        %v4557 = vadd.f32 %v4477, %v4485
        %v4558 = vadd.f32 %v4478, %v4486
        %v4559 = vadd.f32 %v4479, %v4487
        %v4560 = vadd.f32 %v4480, %v4488
        %v4561 = vadd.f32 %v4481, %v4489
        %v4562 = vadd.f32 %v4482, %v4490
        %v4563 = vadd.f32 %v4483, %v4491
        %v4564 = vadd.f32 %v4492, %v4500
        %v4565 = vadd.f32 %v4493, %v4501
        %v4566 = vadd.f32 %v4494, %v4502
        %v4567 = vadd.f32 %v4495, %v4503
        %v4568 = vadd.f32 %v4496, %v4504
        %v4569 = vadd.f32 %v4497, %v4505
        %v4570 = vadd.f32 %v4498, %v4506
        %v4571 = vadd.f32 %v4499, %v4507
        %v4573 = vrot.slane %v2018, 2
        %v4574 = vrot.slane %v2018, 4
        %v4575 = vrot.slane %v2018, 6
        %v4576 = vrot.slane %v1954, 2
        %v4577 = vrot.slane %v1954, 4
        %v4578 = vrot.slane %v1954, 6
        %v4585 = vrot.slane %v2018, 7
        %v4586 = vrot.slane %v4585, 2
        %v4587 = vrot.slane %v4573, 7
        %v4588 = vrot.slane %v4587, 2
        %v4589 = vrot.slane %v4574, 7
        %v4590 = vrot.slane %v4589, 2
        %v4591 = vrot.slane %v4575, 7
        %v4592 = vrot.slane %v4591, 2
        %v4593 = vrot.slane %v1954, 7
        %v4594 = vrot.slane %v4593, 2
        %v4595 = vrot.slane %v4576, 7
        %v4596 = vrot.slane %v4595, 2
        %v4597 = vrot.slane %v4577, 7
        %v4598 = vrot.slane %v4597, 2
        %v4599 = vrot.slane %v4578, 7
        %v4600 = vrot.slane %v4599, 2
        %v4609 = vadd.f32 %v2018, %v4586
        %v4610 = vadd.f32 %v4573, %v4588
        %v4611 = vadd.f32 %v4574, %v4590
        %v4612 = vadd.f32 %v4575, %v4592
        %v4613 = vadd.f32 %v1954, %v4594
        %v4614 = vadd.f32 %v4576, %v4596
        %v4615 = vadd.f32 %v4577, %v4598
        %v4616 = vadd.f32 %v4578, %v4600
        %v4617 = vadd.f32 %v2632, %v2640
        %v4618 = vadd.f32 %v2633, %v2641
        %v4619 = vadd.f32 %v2634, %v2642
        %v4620 = vadd.f32 %v2635, %v2643
        %v4621 = vadd.f32 %v2636, %v2644
        %v4622 = vadd.f32 %v2637, %v2645
        %v4623 = vadd.f32 %v2638, %v2646
        %v4624 = vadd.f32 %v2639, %v2647
        %v4625 = vadd.f32 %v2648, %v2656
        %v4626 = vadd.f32 %v2649, %v2657
        %v4627 = vadd.f32 %v2650, %v2658
        %v4628 = vadd.f32 %v2651, %v2659
        %v4629 = vadd.f32 %v2652, %v2660
        %v4630 = vadd.f32 %v2653, %v2661
        %v4631 = vadd.f32 %v2654, %v2662
        %v4632 = vadd.f32 %v2655, %v2663
        %v4633 = vadd.f32 %v2664, %v2672
        %v4634 = vadd.f32 %v2665, %v2673
        %v4635 = vadd.f32 %v2666, %v2674
        %v4636 = vadd.f32 %v2667, %v2675
        %v4637 = vadd.f32 %v2668, %v2676
        %v4638 = vadd.f32 %v2669, %v2677
        %v4639 = vadd.f32 %v2670, %v2678
        %v4640 = vadd.f32 %v2671, %v2679
        %v4641 = vadd.f32 %v2680, %v2688
        %v4642 = vadd.f32 %v2681, %v2689
        %v4643 = vadd.f32 %v2682, %v2690
        %v4644 = vadd.f32 %v2683, %v2691
        %v4645 = vadd.f32 %v2684, %v2692
        %v4646 = vadd.f32 %v2685, %v2693
        %v4647 = vadd.f32 %v2686, %v2694
        %v4648 = vadd.f32 %v2687, %v2695
        %v4649 = vadd.f32 %v2696, %v2704
        %v4650 = vadd.f32 %v2697, %v2705
        %v4651 = vadd.f32 %v2698, %v2706
        %v4652 = vadd.f32 %v2699, %v2707
        %v4653 = vadd.f32 %v2700, %v2708
        %v4654 = vadd.f32 %v2701, %v2709
        %v4655 = vadd.f32 %v2702, %v2710
        %v4656 = vadd.f32 %v2703, %v2711
        %v4657 = vadd.f32 %v2712, %v2720
        %v4658 = vadd.f32 %v2713, %v2721
        %v4659 = vadd.f32 %v2714, %v2722
        %v4660 = vadd.f32 %v2715, %v2723
        %v4661 = vadd.f32 %v2716, %v2724
        %v4662 = vadd.f32 %v2717, %v2725
        %v4663 = vadd.f32 %v2718, %v2726
        %v4664 = vadd.f32 %v2719, %v2727
        %v4665 = vadd.f32 %v2728, %v2736
        %v4666 = vadd.f32 %v2729, %v2737
        %v4667 = vadd.f32 %v2730, %v2738
        %v4668 = vadd.f32 %v2731, %v2739
        %v4669 = vadd.f32 %v2732, %v2740
        %v4670 = vadd.f32 %v2733, %v2741
        %v4671 = vadd.f32 %v2734, %v2742
        %v4672 = vadd.f32 %v2735, %v2743
        %v4673 = vadd.f32 %v2744, %v4609
        %v4674 = vadd.f32 %v2745, %v4610
        %v4675 = vadd.f32 %v2746, %v4611
        %v4676 = vadd.f32 %v2747, %v4612
        %v4677 = vadd.f32 %v2748, %v4613
        %v4678 = vadd.f32 %v2749, %v4614
        %v4679 = vadd.f32 %v2750, %v4615
        %v4680 = vadd.f32 %v2751, %v4616
        %v4682 = vsel %vm2836, %v4586, %v4587
        %v4683 = vsel %vm2836, %v4588, %v4589
        %v4684 = vsel %vm2836, %v4590, %v4591
        %v4685 = vsel %vm2836, %v4592, %v4593
        %v4686 = vsel %vm2836, %v4594, %v4595
        %v4687 = vsel %vm2836, %v4596, %v4597
        %v4688 = vsel %vm2836, %v4598, %v4599
        %v4689 = vrot.slane %v2034, 7
        %v4690 = vsel %vm2836, %v4600, %v4689
        %v4699 = vrot.slane %v4682, 7
        %v4700 = vrot.slane %v4699, 2
        %v4701 = vrot.slane %v4683, 7
        %v4702 = vrot.slane %v4701, 2
        %v4703 = vrot.slane %v4684, 7
        %v4704 = vrot.slane %v4703, 2
        %v4705 = vrot.slane %v4685, 7
        %v4706 = vrot.slane %v4705, 2
        %v4707 = vrot.slane %v4686, 7
        %v4708 = vrot.slane %v4707, 2
        %v4709 = vrot.slane %v4687, 7
        %v4710 = vrot.slane %v4709, 2
        %v4711 = vrot.slane %v4688, 7
        %v4712 = vrot.slane %v4711, 2
        %v4713 = vrot.slane %v4690, 7
        %v4714 = vrot.slane %v4713, 2
        %v4723 = vadd.f32 %v4682, %v4700
        %v4724 = vadd.f32 %v4683, %v4702
        %v4725 = vadd.f32 %v4684, %v4704
        %v4726 = vadd.f32 %v4685, %v4706
        %v4727 = vadd.f32 %v4686, %v4708
        %v4728 = vadd.f32 %v4687, %v4710
        %v4729 = vadd.f32 %v4688, %v4712
        %v4730 = vadd.f32 %v4690, %v4714
        %v4731 = vadd.f32 %v3501, %v3509
        %v4732 = vadd.f32 %v3502, %v3510
        %v4733 = vadd.f32 %v3503, %v3511
        %v4734 = vadd.f32 %v3504, %v3512
        %v4735 = vadd.f32 %v3505, %v3513
        %v4736 = vadd.f32 %v3506, %v3514
        %v4737 = vadd.f32 %v3507, %v3515
        %v4738 = vadd.f32 %v3508, %v3516
        %v4739 = vadd.f32 %v3517, %v3525
        %v4740 = vadd.f32 %v3518, %v3526
        %v4741 = vadd.f32 %v3519, %v3527
        %v4742 = vadd.f32 %v3520, %v3528
        %v4743 = vadd.f32 %v3521, %v3529
        %v4744 = vadd.f32 %v3522, %v3530
        %v4745 = vadd.f32 %v3523, %v3531
        %v4746 = vadd.f32 %v3524, %v3532
        %v4747 = vadd.f32 %v3533, %v3541
        %v4748 = vadd.f32 %v3534, %v3542
        %v4749 = vadd.f32 %v3535, %v3543
        %v4750 = vadd.f32 %v3536, %v3544
        %v4751 = vadd.f32 %v3537, %v3545
        %v4752 = vadd.f32 %v3538, %v3546
        %v4753 = vadd.f32 %v3539, %v3547
        %v4754 = vadd.f32 %v3540, %v3548
        %v4755 = vadd.f32 %v3549, %v3557
        %v4756 = vadd.f32 %v3550, %v3558
        %v4757 = vadd.f32 %v3551, %v3559
        %v4758 = vadd.f32 %v3552, %v3560
        %v4759 = vadd.f32 %v3553, %v3561
        %v4760 = vadd.f32 %v3554, %v3562
        %v4761 = vadd.f32 %v3555, %v3563
        %v4762 = vadd.f32 %v3556, %v3564
        %v4763 = vadd.f32 %v3565, %v3573
        %v4764 = vadd.f32 %v3566, %v3574
        %v4765 = vadd.f32 %v3567, %v3575
        %v4766 = vadd.f32 %v3568, %v3576
        %v4767 = vadd.f32 %v3569, %v3577
        %v4768 = vadd.f32 %v3570, %v3578
        %v4769 = vadd.f32 %v3571, %v3579
        %v4770 = vadd.f32 %v3572, %v3580
        %v4771 = vadd.f32 %v3581, %v3589
        %v4772 = vadd.f32 %v3582, %v3590
        %v4773 = vadd.f32 %v3583, %v3591
        %v4774 = vadd.f32 %v3584, %v3592
        %v4775 = vadd.f32 %v3585, %v3593
        %v4776 = vadd.f32 %v3586, %v3594
        %v4777 = vadd.f32 %v3587, %v3595
        %v4778 = vadd.f32 %v3588, %v3596
        %v4779 = vadd.f32 %v3597, %v3605
        %v4780 = vadd.f32 %v3598, %v3606
        %v4781 = vadd.f32 %v3599, %v3607
        %v4782 = vadd.f32 %v3600, %v3608
        %v4783 = vadd.f32 %v3601, %v3609
        %v4784 = vadd.f32 %v3602, %v3610
        %v4785 = vadd.f32 %v3603, %v3611
        %v4786 = vadd.f32 %v3604, %v3612
        %v4787 = vadd.f32 %v3613, %v4723
        %v4788 = vadd.f32 %v3614, %v4724
        %v4789 = vadd.f32 %v3615, %v4725
        %v4790 = vadd.f32 %v3616, %v4726
        %v4791 = vadd.f32 %v3617, %v4727
        %v4792 = vadd.f32 %v3618, %v4728
        %v4793 = vadd.f32 %v3619, %v4729
        %v4794 = vadd.f32 %v3620, %v4730
        %4795 = vst.sshfl [vmem:[#allocation1] sm:$0xff pattern:$0x73625140] %v2003
        %4796 = vst.sshfl [vmem:[#allocation1 + $0x20] sm:$0xff pattern:$0x73625140] %v1909
        %s4797 = scalar_lea.vmem [#allocation1], 1
        %v4798 = vld [vmem:[%s4797] ss:$4 sm:$0xff]
        %s4799 = scalar_lea.vmem [#allocation1], 2
        %v4800 = vld [vmem:[%s4799] ss:$4 sm:$0xff]
        %s4801 = scalar_lea.vmem [#allocation1], 3
        %v4802 = vld [vmem:[%s4801] ss:$4 sm:$0xff]
        %s4803 = scalar_lea.vmem [#allocation1], 32
        %v4804 = vld [vmem:[%s4803] ss:$4 sm:$0xff]
        %s4805 = scalar_lea.vmem [#allocation1], 33
        %v4806 = vld [vmem:[%s4805] ss:$4 sm:$0xff]
        %s4807 = scalar_lea.vmem [#allocation1], 34
        %v4808 = vld [vmem:[%s4807] ss:$4 sm:$0xff]
        %s4809 = scalar_lea.vmem [#allocation1], 35
        %v4810 = vld [vmem:[%s4809] ss:$4 sm:$0xff]
        %4811 = vst.sshfl [vmem:[#allocation1] sm:$0xff pattern:$0x73625140] %v2019
        %v4812 = vld [vmem:[#allocation1] ss:$4 sm:$0xff]
        %4813 = vst.sshfl [vmem:[#allocation1 + $0x20] sm:$0xff pattern:$0x73625140] %v2004
        %v4814 = vld [vmem:[%s4805] ss:$4 sm:$0xff]
        %v4815 = vld [vmem:[%s4807] ss:$4 sm:$0xff]
        %v4816 = vld [vmem:[%s4809] ss:$4 sm:$0xff]
        %4817 = vst.sshfl [vmem:[#allocation1] sm:$0xff pattern:$0x73625140] %v1912
        %4818 = vst.sshfl [vmem:[#allocation1 + $0x20] sm:$0xff pattern:$0x73625140] %v2020
        %v4819 = vld [vmem:[#allocation1] ss:$4 sm:$0xff]
        %v4820 = vld [vmem:[%s4797] ss:$4 sm:$0xff]
        %v4821 = vld [vmem:[%s4799] ss:$4 sm:$0xff]
        %v4822 = vld [vmem:[%s4801] ss:$4 sm:$0xff]
        %v4823 = vld [vmem:[%s4803] ss:$4 sm:$0xff]
        %4824 = vst.sshfl [vmem:[#allocation1] sm:$0xff pattern:$0x73625140] %v2005
        %4825 = vst.sshfl [vmem:[#allocation1 + $0x20] sm:$0xff pattern:$0x73625140] %v1915
        %v4826 = vld [vmem:[%s4797] ss:$4 sm:$0xff]
        %v4827 = vld [vmem:[%s4799] ss:$4 sm:$0xff]
        %v4828 = vld [vmem:[%s4801] ss:$4 sm:$0xff]
        %v4829 = vld [vmem:[%s4803] ss:$4 sm:$0xff]
        %v4830 = vld [vmem:[%s4805] ss:$4 sm:$0xff]
        %v4831 = vld [vmem:[%s4807] ss:$4 sm:$0xff]
        %v4832 = vld [vmem:[%s4809] ss:$4 sm:$0xff]
        %4833 = vst.sshfl [vmem:[#allocation1] sm:$0xff pattern:$0x73625140] %v2021
        %v4834 = vld [vmem:[#allocation1] ss:$4 sm:$0xff]
        %4835 = vst.sshfl [vmem:[#allocation1 + $0x20] sm:$0xff pattern:$0x73625140] %v2006
        %v4836 = vld [vmem:[%s4805] ss:$4 sm:$0xff]
        %v4837 = vld [vmem:[%s4807] ss:$4 sm:$0xff]
        %v4838 = vld [vmem:[%s4809] ss:$4 sm:$0xff]
        %4839 = vst.sshfl [vmem:[#allocation1] sm:$0xff pattern:$0x73625140] %v1918
        %4840 = vst.sshfl [vmem:[#allocation1 + $0x20] sm:$0xff pattern:$0x73625140] %v2022
        %v4841 = vld [vmem:[#allocation1] ss:$4 sm:$0xff]
        %v4842 = vld [vmem:[%s4797] ss:$4 sm:$0xff]
        %v4843 = vld [vmem:[%s4799] ss:$4 sm:$0xff]
        %v4844 = vld [vmem:[%s4801] ss:$4 sm:$0xff]
        %v4845 = vld [vmem:[%s4803] ss:$4 sm:$0xff]
        %4846 = vst.sshfl [vmem:[#allocation1] sm:$0xff pattern:$0x73625140] %v2007
        %4847 = vst.sshfl [vmem:[#allocation1 + $0x20] sm:$0xff pattern:$0x73625140] %v1921
        %v4848 = vld [vmem:[%s4797] ss:$4 sm:$0xff]
        %v4849 = vld [vmem:[%s4799] ss:$4 sm:$0xff]
        %v4850 = vld [vmem:[%s4801] ss:$4 sm:$0xff]
        %v4851 = vld [vmem:[%s4803] ss:$4 sm:$0xff]
        %v4852 = vld [vmem:[%s4805] ss:$4 sm:$0xff]
        %v4853 = vld [vmem:[%s4807] ss:$4 sm:$0xff]
        %v4854 = vld [vmem:[%s4809] ss:$4 sm:$0xff]
        %4855 = vst.sshfl [vmem:[#allocation1] sm:$0xff pattern:$0x73625140] %v2023
        %v4856 = vld [vmem:[#allocation1] ss:$4 sm:$0xff]
        %4857 = vst.sshfl [vmem:[#allocation1 + $0x20] sm:$0xff pattern:$0x73625140] %v2008
        %v4858 = vld [vmem:[%s4805] ss:$4 sm:$0xff]
        %v4859 = vld [vmem:[%s4807] ss:$4 sm:$0xff]
        %v4860 = vld [vmem:[%s4809] ss:$4 sm:$0xff]
        %4861 = vst.sshfl [vmem:[#allocation1] sm:$0xff pattern:$0x73625140] %v1924
        %4862 = vst.sshfl [vmem:[#allocation1 + $0x20] sm:$0xff pattern:$0x73625140] %v2024
        %v4863 = vld [vmem:[#allocation1] ss:$4 sm:$0xff]
        %v4864 = vld [vmem:[%s4797] ss:$4 sm:$0xff]
        %v4865 = vld [vmem:[%s4799] ss:$4 sm:$0xff]
        %v4866 = vld [vmem:[%s4801] ss:$4 sm:$0xff]
        %v4867 = vld [vmem:[%s4803] ss:$4 sm:$0xff]
        %4868 = vst.sshfl [vmem:[#allocation1] sm:$0xff pattern:$0x73625140] %v2009
        %4869 = vst.sshfl [vmem:[#allocation1 + $0x20] sm:$0xff pattern:$0x73625140] %v1927
        %v4870 = vld [vmem:[%s4797] ss:$4 sm:$0xff]
        %v4871 = vld [vmem:[%s4799] ss:$4 sm:$0xff]
        %v4872 = vld [vmem:[%s4801] ss:$4 sm:$0xff]
        %v4873 = vld [vmem:[%s4803] ss:$4 sm:$0xff]
        %v4874 = vld [vmem:[%s4805] ss:$4 sm:$0xff]
        %v4875 = vld [vmem:[%s4807] ss:$4 sm:$0xff]
        %v4876 = vld [vmem:[%s4809] ss:$4 sm:$0xff]
        %4877 = vst.sshfl [vmem:[#allocation1] sm:$0xff pattern:$0x73625140] %v2025
        %v4878 = vld [vmem:[#allocation1] ss:$4 sm:$0xff]
        %4879 = vst.sshfl [vmem:[#allocation1 + $0x20] sm:$0xff pattern:$0x73625140] %v2010
        %v4880 = vld [vmem:[%s4805] ss:$4 sm:$0xff]
        %v4881 = vld [vmem:[%s4807] ss:$4 sm:$0xff]
        %v4882 = vld [vmem:[%s4809] ss:$4 sm:$0xff]
        %4883 = vst.sshfl [vmem:[#allocation1] sm:$0xff pattern:$0x73625140] %v1930
        %4884 = vst.sshfl [vmem:[#allocation1 + $0x20] sm:$0xff pattern:$0x73625140] %v2026
        %v4885 = vld [vmem:[#allocation1] ss:$4 sm:$0xff]
        %v4886 = vld [vmem:[%s4797] ss:$4 sm:$0xff]
        %v4887 = vld [vmem:[%s4799] ss:$4 sm:$0xff]
        %v4888 = vld [vmem:[%s4801] ss:$4 sm:$0xff]
        %v4889 = vld [vmem:[%s4803] ss:$4 sm:$0xff]
        %4890 = vst.sshfl [vmem:[#allocation1] sm:$0xff pattern:$0x73625140] %v2011
        %4891 = vst.sshfl [vmem:[#allocation1 + $0x20] sm:$0xff pattern:$0x73625140] %v1933
        %v4892 = vld [vmem:[%s4797] ss:$4 sm:$0xff]
        %v4893 = vld [vmem:[%s4799] ss:$4 sm:$0xff]
        %v4894 = vld [vmem:[%s4801] ss:$4 sm:$0xff]
        %v4895 = vld [vmem:[%s4803] ss:$4 sm:$0xff]
        %v4896 = vld [vmem:[%s4805] ss:$4 sm:$0xff]
        %v4897 = vld [vmem:[%s4807] ss:$4 sm:$0xff]
        %v4898 = vld [vmem:[%s4809] ss:$4 sm:$0xff]
        %4899 = vst.sshfl [vmem:[#allocation1] sm:$0xff pattern:$0x73625140] %v2027
        %v4900 = vld [vmem:[#allocation1] ss:$4 sm:$0xff]
        %4901 = vst.sshfl [vmem:[#allocation1 + $0x20] sm:$0xff pattern:$0x73625140] %v2012
        %v4902 = vld [vmem:[%s4805] ss:$4 sm:$0xff]
        %v4903 = vld [vmem:[%s4807] ss:$4 sm:$0xff]
        %v4904 = vld [vmem:[%s4809] ss:$4 sm:$0xff]
        %4905 = vst.sshfl [vmem:[#allocation1] sm:$0xff pattern:$0x73625140] %v1936
        %4906 = vst.sshfl [vmem:[#allocation1 + $0x20] sm:$0xff pattern:$0x73625140] %v2028
        %v4907 = vld [vmem:[#allocation1] ss:$4 sm:$0xff]
        %v4908 = vld [vmem:[%s4797] ss:$4 sm:$0xff]
        %v4909 = vld [vmem:[%s4799] ss:$4 sm:$0xff]
        %v4910 = vld [vmem:[%s4801] ss:$4 sm:$0xff]
        %v4911 = vld [vmem:[%s4803] ss:$4 sm:$0xff]
        %4912 = vst.sshfl [vmem:[#allocation1] sm:$0xff pattern:$0x73625140] %v2013
        %4913 = vst.sshfl [vmem:[#allocation1 + $0x20] sm:$0xff pattern:$0x73625140] %v1939
        %v4914 = vld [vmem:[%s4797] ss:$4 sm:$0xff]
        %v4915 = vld [vmem:[%s4799] ss:$4 sm:$0xff]
        %v4916 = vld [vmem:[%s4801] ss:$4 sm:$0xff]
        %v4917 = vld [vmem:[%s4803] ss:$4 sm:$0xff]
        %v4918 = vld [vmem:[%s4805] ss:$4 sm:$0xff]
        %v4919 = vld [vmem:[%s4807] ss:$4 sm:$0xff]
        %v4920 = vld [vmem:[%s4809] ss:$4 sm:$0xff]
        %4921 = vst.sshfl [vmem:[#allocation1] sm:$0xff pattern:$0x73625140] %v2029
        %v4922 = vld [vmem:[#allocation1] ss:$4 sm:$0xff]
        %4923 = vst.sshfl [vmem:[#allocation1 + $0x20] sm:$0xff pattern:$0x73625140] %v2014
        %v4924 = vld [vmem:[%s4805] ss:$4 sm:$0xff]
        %v4925 = vld [vmem:[%s4807] ss:$4 sm:$0xff]
        %v4926 = vld [vmem:[%s4809] ss:$4 sm:$0xff]
        %4927 = vst.sshfl [vmem:[#allocation1] sm:$0xff pattern:$0x73625140] %v1942
        %4928 = vst.sshfl [vmem:[#allocation1 + $0x20] sm:$0xff pattern:$0x73625140] %v2030
        %v4929 = vld [vmem:[#allocation1] ss:$4 sm:$0xff]
        %v4930 = vld [vmem:[%s4797] ss:$4 sm:$0xff]
        %v4931 = vld [vmem:[%s4799] ss:$4 sm:$0xff]
        %v4932 = vld [vmem:[%s4801] ss:$4 sm:$0xff]
        %v4933 = vld [vmem:[%s4803] ss:$4 sm:$0xff]
        %4934 = vst.sshfl [vmem:[#allocation1] sm:$0xff pattern:$0x73625140] %v2015
        %4935 = vst.sshfl [vmem:[#allocation1 + $0x20] sm:$0xff pattern:$0x73625140] %v1945
        %v4936 = vld [vmem:[%s4797] ss:$4 sm:$0xff]
        %v4937 = vld [vmem:[%s4799] ss:$4 sm:$0xff]
        %v4938 = vld [vmem:[%s4801] ss:$4 sm:$0xff]
        %v4939 = vld [vmem:[%s4803] ss:$4 sm:$0xff]
        %v4940 = vld [vmem:[%s4805] ss:$4 sm:$0xff]
        %v4941 = vld [vmem:[%s4807] ss:$4 sm:$0xff]
        %v4942 = vld [vmem:[%s4809] ss:$4 sm:$0xff]
        %4943 = vst.sshfl [vmem:[#allocation1] sm:$0xff pattern:$0x73625140] %v2031
        %v4944 = vld [vmem:[#allocation1] ss:$4 sm:$0xff]
        %4945 = vst.sshfl [vmem:[#allocation1 + $0x20] sm:$0xff pattern:$0x73625140] %v2016
        %v4946 = vld [vmem:[%s4805] ss:$4 sm:$0xff]
        %v4947 = vld [vmem:[%s4807] ss:$4 sm:$0xff]
        %v4948 = vld [vmem:[%s4809] ss:$4 sm:$0xff]
        %4949 = vst.sshfl [vmem:[#allocation1] sm:$0xff pattern:$0x73625140] %v1948
        %4950 = vst.sshfl [vmem:[#allocation1 + $0x20] sm:$0xff pattern:$0x73625140] %v2032
        %v4951 = vld [vmem:[#allocation1] ss:$4 sm:$0xff]
        %v4952 = vld [vmem:[%s4797] ss:$4 sm:$0xff]
        %v4953 = vld [vmem:[%s4799] ss:$4 sm:$0xff]
        %v4954 = vld [vmem:[%s4801] ss:$4 sm:$0xff]
        %v4955 = vld [vmem:[%s4803] ss:$4 sm:$0xff]
        %4956 = vst.sshfl [vmem:[#allocation1] sm:$0xff pattern:$0x73625140] %v2017
        %4957 = vst.sshfl [vmem:[#allocation1 + $0x20] sm:$0xff pattern:$0x73625140] %v1951
        %v4958 = vld [vmem:[%s4797] ss:$4 sm:$0xff]
        %v4959 = vld [vmem:[%s4799] ss:$4 sm:$0xff]
        %v4960 = vld [vmem:[%s4801] ss:$4 sm:$0xff]
        %v4961 = vld [vmem:[%s4803] ss:$4 sm:$0xff]
        %v4962 = vld [vmem:[%s4805] ss:$4 sm:$0xff]
        %v4963 = vld [vmem:[%s4807] ss:$4 sm:$0xff]
        %v4964 = vld [vmem:[%s4809] ss:$4 sm:$0xff]
        %4965 = vst.sshfl [vmem:[#allocation1] sm:$0xff pattern:$0x73625140] %v2033
        %v4966 = vld [vmem:[#allocation1] ss:$4 sm:$0xff]
        %4967 = vst.sshfl [vmem:[#allocation1 + $0x20] sm:$0xff pattern:$0x73625140] %v2018
        %v4968 = vld [vmem:[%s4805] ss:$4 sm:$0xff]
        %v4969 = vld [vmem:[%s4807] ss:$4 sm:$0xff]
        %v4970 = vld [vmem:[%s4809] ss:$4 sm:$0xff]
        %4971 = vst.sshfl [vmem:[#allocation1] sm:$0xff pattern:$0x73625140] %v1954
        %4972 = vst.sshfl [vmem:[#allocation1 + $0x20] sm:$0xff pattern:$0x73625140] %v2034
        %v4973 = vld [vmem:[#allocation1] ss:$4 sm:$0xff]
        %v4974 = vld [vmem:[%s4797] ss:$4 sm:$0xff]
        %v4975 = vld [vmem:[%s4799] ss:$4 sm:$0xff]
        %v4976 = vld [vmem:[%s4801] ss:$4 sm:$0xff]
        %v4977 = vld [vmem:[%s4803] ss:$4 sm:$0xff]
        %v5106 = vrot.slane %v4798, 7
        %v5107 = vrot.slane %v5106, 2
        %v5108 = vrot.slane %v4800, 7
        %v5109 = vrot.slane %v5108, 2
        %v5110 = vrot.slane %v4802, 7
        %v5111 = vrot.slane %v5110, 2
        %v5112 = vrot.slane %v4804, 7
        %v5113 = vrot.slane %v5112, 2
        %v5114 = vrot.slane %v4806, 7
        %v5115 = vrot.slane %v5114, 2
        %v5116 = vrot.slane %v4808, 7
        %v5117 = vrot.slane %v5116, 2
        %v5118 = vrot.slane %v4810, 7
        %v5119 = vrot.slane %v5118, 2
        %v5120 = vrot.slane %v4812, 7
        %v5121 = vrot.slane %v5120, 2
        %v5122 = vrot.slane %v4814, 7
        %v5123 = vrot.slane %v5122, 2
        %v5124 = vrot.slane %v4815, 7
        %v5125 = vrot.slane %v5124, 2
        %v5126 = vrot.slane %v4816, 7
        %v5127 = vrot.slane %v5126, 2
        %v5128 = vrot.slane %v4819, 7
        %v5129 = vrot.slane %v5128, 2
        %v5130 = vrot.slane %v4820, 7
        %v5131 = vrot.slane %v5130, 2
        %v5132 = vrot.slane %v4821, 7
        %v5133 = vrot.slane %v5132, 2
        %v5134 = vrot.slane %v4822, 7
        %v5135 = vrot.slane %v5134, 2
        %v5136 = vrot.slane %v4823, 7
        %v5137 = vrot.slane %v5136, 2
        %v5138 = vrot.slane %v4826, 7
        %v5139 = vrot.slane %v5138, 2
        %v5140 = vrot.slane %v4827, 7
        %v5141 = vrot.slane %v5140, 2
        %v5142 = vrot.slane %v4828, 7
        %v5143 = vrot.slane %v5142, 2
        %v5144 = vrot.slane %v4829, 7
        %v5145 = vrot.slane %v5144, 2
        %v5146 = vrot.slane %v4830, 7
        %v5147 = vrot.slane %v5146, 2
        %v5148 = vrot.slane %v4831, 7
        %v5149 = vrot.slane %v5148, 2
        %v5150 = vrot.slane %v4832, 7
        %v5151 = vrot.slane %v5150, 2
        %v5152 = vrot.slane %v4834, 7
        %v5153 = vrot.slane %v5152, 2
        %v5154 = vrot.slane %v4836, 7
        %v5155 = vrot.slane %v5154, 2
        %v5156 = vrot.slane %v4837, 7
        %v5157 = vrot.slane %v5156, 2
        %v5158 = vrot.slane %v4838, 7
        %v5159 = vrot.slane %v5158, 2
        %v5160 = vrot.slane %v4841, 7
        %v5161 = vrot.slane %v5160, 2
        %v5162 = vrot.slane %v4842, 7
        %v5163 = vrot.slane %v5162, 2
        %v5164 = vrot.slane %v4843, 7
        %v5165 = vrot.slane %v5164, 2
        %v5166 = vrot.slane %v4844, 7
        %v5167 = vrot.slane %v5166, 2
        %v5168 = vrot.slane %v4845, 7
        %v5169 = vrot.slane %v5168, 2
        %v5170 = vrot.slane %v4848, 7
        %v5171 = vrot.slane %v5170, 2
        %v5172 = vrot.slane %v4849, 7
        %v5173 = vrot.slane %v5172, 2
        %v5174 = vrot.slane %v4850, 7
        %v5175 = vrot.slane %v5174, 2
        %v5176 = vrot.slane %v4851, 7
        %v5177 = vrot.slane %v5176, 2
        %v5178 = vrot.slane %v4852, 7
        %v5179 = vrot.slane %v5178, 2
        %v5180 = vrot.slane %v4853, 7
        %v5181 = vrot.slane %v5180, 2
        %v5182 = vrot.slane %v4854, 7
        %v5183 = vrot.slane %v5182, 2
        %v5184 = vrot.slane %v4856, 7
        %v5185 = vrot.slane %v5184, 2
        %v5186 = vrot.slane %v4858, 7
        %v5187 = vrot.slane %v5186, 2
        %v5188 = vrot.slane %v4859, 7
        %v5189 = vrot.slane %v5188, 2
        %v5190 = vrot.slane %v4860, 7
        %v5191 = vrot.slane %v5190, 2
        %v5192 = vrot.slane %v4863, 7
        %v5193 = vrot.slane %v5192, 2
        %v5194 = vrot.slane %v4864, 7
        %v5195 = vrot.slane %v5194, 2
        %v5196 = vrot.slane %v4865, 7
        %v5197 = vrot.slane %v5196, 2
        %v5198 = vrot.slane %v4866, 7
        %v5199 = vrot.slane %v5198, 2
        %v5200 = vrot.slane %v4867, 7
        %v5201 = vrot.slane %v5200, 2
        %v5202 = vrot.slane %v4870, 7
        %v5203 = vrot.slane %v5202, 2
        %v5204 = vrot.slane %v4871, 7
        %v5205 = vrot.slane %v5204, 2
        %v5206 = vrot.slane %v4872, 7
        %v5207 = vrot.slane %v5206, 2
        %v5208 = vrot.slane %v4873, 7
        %v5209 = vrot.slane %v5208, 2
        %v5210 = vrot.slane %v4874, 7
        %v5211 = vrot.slane %v5210, 2
        %v5212 = vrot.slane %v4875, 7
        %v5213 = vrot.slane %v5212, 2
        %v5214 = vrot.slane %v4876, 7
        %v5215 = vrot.slane %v5214, 2
        %v5216 = vrot.slane %v4878, 7
        %v5217 = vrot.slane %v5216, 2
        %v5218 = vrot.slane %v4880, 7
        %v5219 = vrot.slane %v5218, 2
        %v5220 = vrot.slane %v4881, 7
        %v5221 = vrot.slane %v5220, 2
        %v5222 = vrot.slane %v4882, 7
        %v5223 = vrot.slane %v5222, 2
        %v5224 = vrot.slane %v4885, 7
        %v5225 = vrot.slane %v5224, 2
        %v5226 = vrot.slane %v4886, 7
        %v5227 = vrot.slane %v5226, 2
        %v5228 = vrot.slane %v4887, 7
        %v5229 = vrot.slane %v5228, 2
        %v5230 = vrot.slane %v4888, 7
        %v5231 = vrot.slane %v5230, 2
        %v5232 = vrot.slane %v4889, 7
        %v5233 = vrot.slane %v5232, 2
        %v5234 = vrot.slane %v4892, 7
        %v5235 = vrot.slane %v5234, 2
        %v5236 = vrot.slane %v4893, 7
        %v5237 = vrot.slane %v5236, 2
        %v5238 = vrot.slane %v4894, 7
        %v5239 = vrot.slane %v5238, 2
        %v5240 = vrot.slane %v4895, 7
        %v5241 = vrot.slane %v5240, 2
        %v5242 = vrot.slane %v4896, 7
        %v5243 = vrot.slane %v5242, 2
        %v5244 = vrot.slane %v4897, 7
        %v5245 = vrot.slane %v5244, 2
        %v5246 = vrot.slane %v4898, 7
        %v5247 = vrot.slane %v5246, 2
        %v5248 = vrot.slane %v4900, 7
        %v5249 = vrot.slane %v5248, 2
        %v5250 = vrot.slane %v4902, 7
        %v5251 = vrot.slane %v5250, 2
        %v5252 = vrot.slane %v4903, 7
        %v5253 = vrot.slane %v5252, 2
        %v5254 = vrot.slane %v4904, 7
        %v5255 = vrot.slane %v5254, 2
        %v5256 = vrot.slane %v4907, 7
        %v5257 = vrot.slane %v5256, 2
        %v5258 = vrot.slane %v4908, 7
        %v5259 = vrot.slane %v5258, 2
        %v5260 = vrot.slane %v4909, 7
        %v5261 = vrot.slane %v5260, 2
        %v5262 = vrot.slane %v4910, 7
        %v5263 = vrot.slane %v5262, 2
        %v5264 = vrot.slane %v4911, 7
        %v5265 = vrot.slane %v5264, 2
        %v5266 = vrot.slane %v4914, 7
        %v5267 = vrot.slane %v5266, 2
        %v5268 = vrot.slane %v4915, 7
        %v5269 = vrot.slane %v5268, 2
        %v5270 = vrot.slane %v4916, 7
        %v5271 = vrot.slane %v5270, 2
        %v5272 = vrot.slane %v4917, 7
        %v5273 = vrot.slane %v5272, 2
        %v5274 = vrot.slane %v4918, 7
        %v5275 = vrot.slane %v5274, 2
        %v5276 = vrot.slane %v4919, 7
        %v5277 = vrot.slane %v5276, 2
        %v5278 = vrot.slane %v4920, 7
        %v5279 = vrot.slane %v5278, 2
        %v5280 = vrot.slane %v4922, 7
        %v5281 = vrot.slane %v5280, 2
        %v5282 = vrot.slane %v4924, 7
        %v5283 = vrot.slane %v5282, 2
        %v5284 = vrot.slane %v4925, 7
        %v5285 = vrot.slane %v5284, 2
        %v5286 = vrot.slane %v4926, 7
        %v5287 = vrot.slane %v5286, 2
        %v5288 = vrot.slane %v4929, 7
        %v5289 = vrot.slane %v5288, 2
        %v5290 = vrot.slane %v4930, 7
        %v5291 = vrot.slane %v5290, 2
        %v5292 = vrot.slane %v4931, 7
        %v5293 = vrot.slane %v5292, 2
        %v5294 = vrot.slane %v4932, 7
        %v5295 = vrot.slane %v5294, 2
        %v5296 = vrot.slane %v4933, 7
        %v5297 = vrot.slane %v5296, 2
        %v5298 = vrot.slane %v4936, 7
        %v5299 = vrot.slane %v5298, 2
        %v5300 = vrot.slane %v4937, 7
        %v5301 = vrot.slane %v5300, 2
        %v5302 = vrot.slane %v4938, 7
        %v5303 = vrot.slane %v5302, 2
        %v5304 = vrot.slane %v4939, 7
        %v5305 = vrot.slane %v5304, 2
        %v5306 = vrot.slane %v4940, 7
        %v5307 = vrot.slane %v5306, 2
        %v5308 = vrot.slane %v4941, 7
        %v5309 = vrot.slane %v5308, 2
        %v5310 = vrot.slane %v4942, 7
        %v5311 = vrot.slane %v5310, 2
        %v5312 = vrot.slane %v4944, 7
        %v5313 = vrot.slane %v5312, 2
        %v5314 = vrot.slane %v4946, 7
        %v5315 = vrot.slane %v5314, 2
        %v5316 = vrot.slane %v4947, 7
        %v5317 = vrot.slane %v5316, 2
        %v5318 = vrot.slane %v4948, 7
        %v5319 = vrot.slane %v5318, 2
        %v5320 = vrot.slane %v4951, 7
        %v5321 = vrot.slane %v5320, 2
        %v5322 = vrot.slane %v4952, 7
        %v5323 = vrot.slane %v5322, 2
        %v5324 = vrot.slane %v4953, 7
        %v5325 = vrot.slane %v5324, 2
        %v5326 = vrot.slane %v4954, 7
        %v5327 = vrot.slane %v5326, 2
        %v5328 = vrot.slane %v4955, 7
        %v5329 = vrot.slane %v5328, 2
        %v5330 = vrot.slane %v4958, 7
        %v5331 = vrot.slane %v5330, 2
        %v5332 = vrot.slane %v4959, 7
        %v5333 = vrot.slane %v5332, 2
        %v5334 = vrot.slane %v4960, 7
        %v5335 = vrot.slane %v5334, 2
        %v5336 = vrot.slane %v4961, 7
        %v5337 = vrot.slane %v5336, 2
        %v5338 = vrot.slane %v4962, 7
        %v5339 = vrot.slane %v5338, 2
        %v5340 = vrot.slane %v4963, 7
        %v5341 = vrot.slane %v5340, 2
        %v5342 = vrot.slane %v4964, 7
        %v5343 = vrot.slane %v5342, 2
        %v5344 = vrot.slane %v4966, 7
        %v5345 = vrot.slane %v5344, 2
        %v5346 = vrot.slane %v4968, 7
        %v5347 = vrot.slane %v5346, 2
        %v5348 = vrot.slane %v4969, 7
        %v5349 = vrot.slane %v5348, 2
        %v5350 = vrot.slane %v4970, 7
        %v5351 = vrot.slane %v5350, 2
        %v5352 = vrot.slane %v4973, 7
        %v5353 = vrot.slane %v5352, 2
        %v5354 = vrot.slane %v4974, 7
        %v5355 = vrot.slane %v5354, 2
        %v5356 = vrot.slane %v4975, 7
        %v5357 = vrot.slane %v5356, 2
        %v5358 = vrot.slane %v4976, 7
        %v5359 = vrot.slane %v5358, 2
        %v5360 = vrot.slane %v4977, 7
        %v5361 = vrot.slane %v5360, 2
        %v5490 = vadd.f32 %v4798, %v5107
        %v5491 = vadd.f32 %v4800, %v5109
        %v5492 = vadd.f32 %v4802, %v5111
        %v5493 = vadd.f32 %v4804, %v5113
        %v5494 = vadd.f32 %v4806, %v5115
        %v5495 = vadd.f32 %v4808, %v5117
        %v5496 = vadd.f32 %v4810, %v5119
        %v5497 = vadd.f32 %v4812, %v5121
        %v5498 = vadd.f32 %v4814, %v5123
        %v5499 = vadd.f32 %v4815, %v5125
        %v5500 = vadd.f32 %v4816, %v5127
        %v5501 = vadd.f32 %v4819, %v5129
        %v5502 = vadd.f32 %v4820, %v5131
        %v5503 = vadd.f32 %v4821, %v5133
        %v5504 = vadd.f32 %v4822, %v5135
        %v5505 = vadd.f32 %v4823, %v5137
        %v5506 = vadd.f32 %v4826, %v5139
        %v5507 = vadd.f32 %v4827, %v5141
        %v5508 = vadd.f32 %v4828, %v5143
        %v5509 = vadd.f32 %v4829, %v5145
        %v5510 = vadd.f32 %v4830, %v5147
        %v5511 = vadd.f32 %v4831, %v5149
        %v5512 = vadd.f32 %v4832, %v5151
        %v5513 = vadd.f32 %v4834, %v5153
        %v5514 = vadd.f32 %v4836, %v5155
        %v5515 = vadd.f32 %v4837, %v5157
        %v5516 = vadd.f32 %v4838, %v5159
        %v5517 = vadd.f32 %v4841, %v5161
        %v5518 = vadd.f32 %v4842, %v5163
        %v5519 = vadd.f32 %v4843, %v5165
        %v5520 = vadd.f32 %v4844, %v5167
        %v5521 = vadd.f32 %v4845, %v5169
        %v5522 = vadd.f32 %v4848, %v5171
        %v5523 = vadd.f32 %v4849, %v5173
        %v5524 = vadd.f32 %v4850, %v5175
        %v5525 = vadd.f32 %v4851, %v5177
        %v5526 = vadd.f32 %v4852, %v5179
        %v5527 = vadd.f32 %v4853, %v5181
        %v5528 = vadd.f32 %v4854, %v5183
        %v5529 = vadd.f32 %v4856, %v5185
        %v5530 = vadd.f32 %v4858, %v5187
        %v5531 = vadd.f32 %v4859, %v5189
        %v5532 = vadd.f32 %v4860, %v5191
        %v5533 = vadd.f32 %v4863, %v5193
        %v5534 = vadd.f32 %v4864, %v5195
        %v5535 = vadd.f32 %v4865, %v5197
        %v5536 = vadd.f32 %v4866, %v5199
        %v5537 = vadd.f32 %v4867, %v5201
        %v5538 = vadd.f32 %v4870, %v5203
        %v5539 = vadd.f32 %v4871, %v5205
        %v5540 = vadd.f32 %v4872, %v5207
        %v5541 = vadd.f32 %v4873, %v5209
        %v5542 = vadd.f32 %v4874, %v5211
        %v5543 = vadd.f32 %v4875, %v5213
        %v5544 = vadd.f32 %v4876, %v5215
        %v5545 = vadd.f32 %v4878, %v5217
        %v5546 = vadd.f32 %v4880, %v5219
        %v5547 = vadd.f32 %v4881, %v5221
        %v5548 = vadd.f32 %v4882, %v5223
        %v5549 = vadd.f32 %v4885, %v5225
        %v5550 = vadd.f32 %v4886, %v5227
        %v5551 = vadd.f32 %v4887, %v5229
        %v5552 = vadd.f32 %v4888, %v5231
        %v5553 = vadd.f32 %v4889, %v5233
        %v5554 = vadd.f32 %v4892, %v5235
        %v5555 = vadd.f32 %v4893, %v5237
        %v5556 = vadd.f32 %v4894, %v5239
        %v5557 = vadd.f32 %v4895, %v5241
        %v5558 = vadd.f32 %v4896, %v5243
        %v5559 = vadd.f32 %v4897, %v5245
        %v5560 = vadd.f32 %v4898, %v5247
        %v5561 = vadd.f32 %v4900, %v5249
        %v5562 = vadd.f32 %v4902, %v5251
        %v5563 = vadd.f32 %v4903, %v5253
        %v5564 = vadd.f32 %v4904, %v5255
        %v5565 = vadd.f32 %v4907, %v5257
        %v5566 = vadd.f32 %v4908, %v5259
        %v5567 = vadd.f32 %v4909, %v5261
        %v5568 = vadd.f32 %v4910, %v5263
        %v5569 = vadd.f32 %v4911, %v5265
        %v5570 = vadd.f32 %v4914, %v5267
        %v5571 = vadd.f32 %v4915, %v5269
        %v5572 = vadd.f32 %v4916, %v5271
        %v5573 = vadd.f32 %v4917, %v5273
        %v5574 = vadd.f32 %v4918, %v5275
        %v5575 = vadd.f32 %v4919, %v5277
        %v5576 = vadd.f32 %v4920, %v5279
        %v5577 = vadd.f32 %v4922, %v5281
        %v5578 = vadd.f32 %v4924, %v5283
        %v5579 = vadd.f32 %v4925, %v5285
        %v5580 = vadd.f32 %v4926, %v5287
        %v5581 = vadd.f32 %v4929, %v5289
        %v5582 = vadd.f32 %v4930, %v5291
        %v5583 = vadd.f32 %v4931, %v5293
        %v5584 = vadd.f32 %v4932, %v5295
        %v5585 = vadd.f32 %v4933, %v5297
        %v5586 = vadd.f32 %v4936, %v5299
        %v5587 = vadd.f32 %v4937, %v5301
        %v5588 = vadd.f32 %v4938, %v5303
        %v5589 = vadd.f32 %v4939, %v5305
        %v5590 = vadd.f32 %v4940, %v5307
        %v5591 = vadd.f32 %v4941, %v5309
        %v5592 = vadd.f32 %v4942, %v5311
        %v5593 = vadd.f32 %v4944, %v5313
        %v5594 = vadd.f32 %v4946, %v5315
        %v5595 = vadd.f32 %v4947, %v5317
        %v5596 = vadd.f32 %v4948, %v5319
        %v5597 = vadd.f32 %v4951, %v5321
        %v5598 = vadd.f32 %v4952, %v5323
        %v5599 = vadd.f32 %v4953, %v5325
        %v5600 = vadd.f32 %v4954, %v5327
        %v5601 = vadd.f32 %v4955, %v5329
        %v5602 = vadd.f32 %v4958, %v5331
        %v5603 = vadd.f32 %v4959, %v5333
        %v5604 = vadd.f32 %v4960, %v5335
        %v5605 = vadd.f32 %v4961, %v5337
        %v5606 = vadd.f32 %v4962, %v5339
        %v5607 = vadd.f32 %v4963, %v5341
        %v5608 = vadd.f32 %v4964, %v5343
        %v5609 = vadd.f32 %v4966, %v5345
        %v5610 = vadd.f32 %v4968, %v5347
        %v5611 = vadd.f32 %v4969, %v5349
        %v5612 = vadd.f32 %v4970, %v5351
        %v5613 = vadd.f32 %v4973, %v5353
        %v5614 = vadd.f32 %v4974, %v5355
        %v5615 = vadd.f32 %v4975, %v5357
        %v5616 = vadd.f32 %v4976, %v5359
        %v5617 = vadd.f32 %v4977, %v5361
        %v5618 = vadd.f32 %v5490, %v5498
        %v5619 = vadd.f32 %v5491, %v5499
        %v5620 = vadd.f32 %v5492, %v5500
        %v5621 = vadd.f32 %v5493, %v5501
        %v5622 = vadd.f32 %v5494, %v5502
        %v5623 = vadd.f32 %v5495, %v5503
        %v5624 = vadd.f32 %v5496, %v5504
        %v5625 = vadd.f32 %v5497, %v5505
        %v5626 = vadd.f32 %v5506, %v5514
        %v5627 = vadd.f32 %v5507, %v5515
        %v5628 = vadd.f32 %v5508, %v5516
        %v5629 = vadd.f32 %v5509, %v5517
        %v5630 = vadd.f32 %v5510, %v5518
        %v5631 = vadd.f32 %v5511, %v5519
        %v5632 = vadd.f32 %v5512, %v5520
        %v5633 = vadd.f32 %v5513, %v5521
        %v5634 = vadd.f32 %v5522, %v5530
        %v5635 = vadd.f32 %v5523, %v5531
        %v5636 = vadd.f32 %v5524, %v5532
        %v5637 = vadd.f32 %v5525, %v5533
        %v5638 = vadd.f32 %v5526, %v5534
        %v5639 = vadd.f32 %v5527, %v5535
        %v5640 = vadd.f32 %v5528, %v5536
        %v5641 = vadd.f32 %v5529, %v5537
        %v5642 = vadd.f32 %v5538, %v5546
        %v5643 = vadd.f32 %v5539, %v5547
        %v5644 = vadd.f32 %v5540, %v5548
        %v5645 = vadd.f32 %v5541, %v5549
        %v5646 = vadd.f32 %v5542, %v5550
        %v5647 = vadd.f32 %v5543, %v5551
        %v5648 = vadd.f32 %v5544, %v5552
        %v5649 = vadd.f32 %v5545, %v5553
        %v5650 = vadd.f32 %v5554, %v5562
        %v5651 = vadd.f32 %v5555, %v5563
        %v5652 = vadd.f32 %v5556, %v5564
        %v5653 = vadd.f32 %v5557, %v5565
        %v5654 = vadd.f32 %v5558, %v5566
        %v5655 = vadd.f32 %v5559, %v5567
        %v5656 = vadd.f32 %v5560, %v5568
        %v5657 = vadd.f32 %v5561, %v5569
        %v5658 = vadd.f32 %v5570, %v5578
        %v5659 = vadd.f32 %v5571, %v5579
        %v5660 = vadd.f32 %v5572, %v5580
        %v5661 = vadd.f32 %v5573, %v5581
        %v5662 = vadd.f32 %v5574, %v5582
        %v5663 = vadd.f32 %v5575, %v5583
        %v5664 = vadd.f32 %v5576, %v5584
        %v5665 = vadd.f32 %v5577, %v5585
        %v5666 = vadd.f32 %v5586, %v5594
        %v5667 = vadd.f32 %v5587, %v5595
        %v5668 = vadd.f32 %v5588, %v5596
        %v5669 = vadd.f32 %v5589, %v5597
        %v5670 = vadd.f32 %v5590, %v5598
        %v5671 = vadd.f32 %v5591, %v5599
        %v5672 = vadd.f32 %v5592, %v5600
        %v5673 = vadd.f32 %v5593, %v5601
        %v5674 = vadd.f32 %v5602, %v5610
        %v5675 = vadd.f32 %v5603, %v5611
        %v5676 = vadd.f32 %v5604, %v5612
        %v5677 = vadd.f32 %v5605, %v5613
        %v5678 = vadd.f32 %v5606, %v5614
        %v5679 = vadd.f32 %v5607, %v5615
        %v5680 = vadd.f32 %v5608, %v5616
        %v5681 = vadd.f32 %v5609, %v5617
        %v5682 = vadd.f32 %v4609, %v2624
        %v5683 = vadd.f32 %v4610, %v2625
        %v5684 = vadd.f32 %v4611, %v2626
        %v5685 = vadd.f32 %v4612, %v2627
        %v5686 = vadd.f32 %v4613, %v2628
        %v5687 = vadd.f32 %v4614, %v2629
        %v5688 = vadd.f32 %v4615, %v2630
        %v5689 = vadd.f32 %v4616, %v2631
        %v5690 = vadd.f32 %v4723, %v3493
        %v5691 = vadd.f32 %v4724, %v3494
        %v5692 = vadd.f32 %v4725, %v3495
        %v5693 = vadd.f32 %v4726, %v3496
        %v5694 = vadd.f32 %v4727, %v3497
        %v5695 = vadd.f32 %v4728, %v3498
        %v5696 = vadd.f32 %v4729, %v3499
        %v5697 = vadd.f32 %v4730, %v3500
        %5698 = vst.sshfl [vmem:[#allocation1] sm:$0xff pattern:$0x73625140] %v2004
        %5699 = vst.sshfl [vmem:[#allocation1 + $0x20] sm:$0xff pattern:$0x73625140] %v1912
        %s5700 = scalar_lea.vmem [#allocation1], 1
        %v5701 = vld [vmem:[%s5700] ss:$4 sm:$0xff]
        %s5702 = scalar_lea.vmem [#allocation1], 2
        %v5703 = vld [vmem:[%s5702] ss:$4 sm:$0xff]
        %s5704 = scalar_lea.vmem [#allocation1], 3
        %v5705 = vld [vmem:[%s5704] ss:$4 sm:$0xff]
        %s5706 = scalar_lea.vmem [#allocation1], 32
        %v5707 = vld [vmem:[%s5706] ss:$4 sm:$0xff]
        %s5708 = scalar_lea.vmem [#allocation1], 33
        %v5709 = vld [vmem:[%s5708] ss:$4 sm:$0xff]
        %s5710 = scalar_lea.vmem [#allocation1], 34
        %v5711 = vld [vmem:[%s5710] ss:$4 sm:$0xff]
        %s5712 = scalar_lea.vmem [#allocation1], 35
        %v5713 = vld [vmem:[%s5712] ss:$4 sm:$0xff]
        %5714 = vst.sshfl [vmem:[#allocation1] sm:$0xff pattern:$0x73625140] %v2020
        %v5715 = vld [vmem:[#allocation1] ss:$4 sm:$0xff]
        %5716 = vst.sshfl [vmem:[#allocation1 + $0x20] sm:$0xff pattern:$0x73625140] %v2005
        %v5717 = vld [vmem:[%s5708] ss:$4 sm:$0xff]
        %v5718 = vld [vmem:[%s5710] ss:$4 sm:$0xff]
        %v5719 = vld [vmem:[%s5712] ss:$4 sm:$0xff]
        %5720 = vst.sshfl [vmem:[#allocation1] sm:$0xff pattern:$0x73625140] %v1915
        %5721 = vst.sshfl [vmem:[#allocation1 + $0x20] sm:$0xff pattern:$0x73625140] %v2021
        %v5722 = vld [vmem:[#allocation1] ss:$4 sm:$0xff]
        %v5723 = vld [vmem:[%s5700] ss:$4 sm:$0xff]
        %v5724 = vld [vmem:[%s5702] ss:$4 sm:$0xff]
        %v5725 = vld [vmem:[%s5704] ss:$4 sm:$0xff]
        %v5726 = vld [vmem:[%s5706] ss:$4 sm:$0xff]
        %5727 = vst.sshfl [vmem:[#allocation1] sm:$0xff pattern:$0x73625140] %v2006
        %5728 = vst.sshfl [vmem:[#allocation1 + $0x20] sm:$0xff pattern:$0x73625140] %v1918
        %v5729 = vld [vmem:[%s5700] ss:$4 sm:$0xff]
        %v5730 = vld [vmem:[%s5702] ss:$4 sm:$0xff]
        %v5731 = vld [vmem:[%s5704] ss:$4 sm:$0xff]
        %v5732 = vld [vmem:[%s5706] ss:$4 sm:$0xff]
        %v5733 = vld [vmem:[%s5708] ss:$4 sm:$0xff]
        %v5734 = vld [vmem:[%s5710] ss:$4 sm:$0xff]
        %v5735 = vld [vmem:[%s5712] ss:$4 sm:$0xff]
        %5736 = vst.sshfl [vmem:[#allocation1] sm:$0xff pattern:$0x73625140] %v2022
        %v5737 = vld [vmem:[#allocation1] ss:$4 sm:$0xff]
        %5738 = vst.sshfl [vmem:[#allocation1 + $0x20] sm:$0xff pattern:$0x73625140] %v2007
        %v5739 = vld [vmem:[%s5708] ss:$4 sm:$0xff]
        %v5740 = vld [vmem:[%s5710] ss:$4 sm:$0xff]
        %v5741 = vld [vmem:[%s5712] ss:$4 sm:$0xff]
        %5742 = vst.sshfl [vmem:[#allocation1] sm:$0xff pattern:$0x73625140] %v1921
        %5743 = vst.sshfl [vmem:[#allocation1 + $0x20] sm:$0xff pattern:$0x73625140] %v2023
        %v5744 = vld [vmem:[#allocation1] ss:$4 sm:$0xff]
        %v5745 = vld [vmem:[%s5700] ss:$4 sm:$0xff]
        %v5746 = vld [vmem:[%s5702] ss:$4 sm:$0xff]
        %v5747 = vld [vmem:[%s5704] ss:$4 sm:$0xff]
        %v5748 = vld [vmem:[%s5706] ss:$4 sm:$0xff]
        %5749 = vst.sshfl [vmem:[#allocation1] sm:$0xff pattern:$0x73625140] %v2008
        %5750 = vst.sshfl [vmem:[#allocation1 + $0x20] sm:$0xff pattern:$0x73625140] %v1924
        %v5751 = vld [vmem:[%s5700] ss:$4 sm:$0xff]
        %v5752 = vld [vmem:[%s5702] ss:$4 sm:$0xff]
        %v5753 = vld [vmem:[%s5704] ss:$4 sm:$0xff]
        %v5754 = vld [vmem:[%s5706] ss:$4 sm:$0xff]
        %v5755 = vld [vmem:[%s5708] ss:$4 sm:$0xff]
        %v5756 = vld [vmem:[%s5710] ss:$4 sm:$0xff]
        %v5757 = vld [vmem:[%s5712] ss:$4 sm:$0xff]
        %5758 = vst.sshfl [vmem:[#allocation1] sm:$0xff pattern:$0x73625140] %v2024
        %v5759 = vld [vmem:[#allocation1] ss:$4 sm:$0xff]
        %5760 = vst.sshfl [vmem:[#allocation1 + $0x20] sm:$0xff pattern:$0x73625140] %v2009
        %v5761 = vld [vmem:[%s5708] ss:$4 sm:$0xff]
        %v5762 = vld [vmem:[%s5710] ss:$4 sm:$0xff]
        %v5763 = vld [vmem:[%s5712] ss:$4 sm:$0xff]
        %5764 = vst.sshfl [vmem:[#allocation1] sm:$0xff pattern:$0x73625140] %v1927
        %5765 = vst.sshfl [vmem:[#allocation1 + $0x20] sm:$0xff pattern:$0x73625140] %v2025
        %v5766 = vld [vmem:[#allocation1] ss:$4 sm:$0xff]
        %v5767 = vld [vmem:[%s5700] ss:$4 sm:$0xff]
        %v5768 = vld [vmem:[%s5702] ss:$4 sm:$0xff]
        %v5769 = vld [vmem:[%s5704] ss:$4 sm:$0xff]
        %v5770 = vld [vmem:[%s5706] ss:$4 sm:$0xff]
        %5771 = vst.sshfl [vmem:[#allocation1] sm:$0xff pattern:$0x73625140] %v2010
        %5772 = vst.sshfl [vmem:[#allocation1 + $0x20] sm:$0xff pattern:$0x73625140] %v1930
        %v5773 = vld [vmem:[%s5700] ss:$4 sm:$0xff]
        %v5774 = vld [vmem:[%s5702] ss:$4 sm:$0xff]
        %v5775 = vld [vmem:[%s5704] ss:$4 sm:$0xff]
        %v5776 = vld [vmem:[%s5706] ss:$4 sm:$0xff]
        %v5777 = vld [vmem:[%s5708] ss:$4 sm:$0xff]
        %v5778 = vld [vmem:[%s5710] ss:$4 sm:$0xff]
        %v5779 = vld [vmem:[%s5712] ss:$4 sm:$0xff]
        %5780 = vst.sshfl [vmem:[#allocation1] sm:$0xff pattern:$0x73625140] %v2026
        %v5781 = vld [vmem:[#allocation1] ss:$4 sm:$0xff]
        %5782 = vst.sshfl [vmem:[#allocation1 + $0x20] sm:$0xff pattern:$0x73625140] %v2011
        %v5783 = vld [vmem:[%s5708] ss:$4 sm:$0xff]
        %v5784 = vld [vmem:[%s5710] ss:$4 sm:$0xff]
        %v5785 = vld [vmem:[%s5712] ss:$4 sm:$0xff]
        %5786 = vst.sshfl [vmem:[#allocation1] sm:$0xff pattern:$0x73625140] %v1933
        %5787 = vst.sshfl [vmem:[#allocation1 + $0x20] sm:$0xff pattern:$0x73625140] %v2027
        %v5788 = vld [vmem:[#allocation1] ss:$4 sm:$0xff]
        %v5789 = vld [vmem:[%s5700] ss:$4 sm:$0xff]
        %v5790 = vld [vmem:[%s5702] ss:$4 sm:$0xff]
        %v5791 = vld [vmem:[%s5704] ss:$4 sm:$0xff]
        %v5792 = vld [vmem:[%s5706] ss:$4 sm:$0xff]
        %5793 = vst.sshfl [vmem:[#allocation1] sm:$0xff pattern:$0x73625140] %v2012
        %5794 = vst.sshfl [vmem:[#allocation1 + $0x20] sm:$0xff pattern:$0x73625140] %v1936
        %v5795 = vld [vmem:[%s5700] ss:$4 sm:$0xff]
        %v5796 = vld [vmem:[%s5702] ss:$4 sm:$0xff]
        %v5797 = vld [vmem:[%s5704] ss:$4 sm:$0xff]
        %v5798 = vld [vmem:[%s5706] ss:$4 sm:$0xff]
        %v5799 = vld [vmem:[%s5708] ss:$4 sm:$0xff]
        %v5800 = vld [vmem:[%s5710] ss:$4 sm:$0xff]
        %v5801 = vld [vmem:[%s5712] ss:$4 sm:$0xff]
        %5802 = vst.sshfl [vmem:[#allocation1] sm:$0xff pattern:$0x73625140] %v2028
        %v5803 = vld [vmem:[#allocation1] ss:$4 sm:$0xff]
        %5804 = vst.sshfl [vmem:[#allocation1 + $0x20] sm:$0xff pattern:$0x73625140] %v2013
        %v5805 = vld [vmem:[%s5708] ss:$4 sm:$0xff]
        %v5806 = vld [vmem:[%s5710] ss:$4 sm:$0xff]
        %v5807 = vld [vmem:[%s5712] ss:$4 sm:$0xff]
        %5808 = vst.sshfl [vmem:[#allocation1] sm:$0xff pattern:$0x73625140] %v1939
        %5809 = vst.sshfl [vmem:[#allocation1 + $0x20] sm:$0xff pattern:$0x73625140] %v2029
        %v5810 = vld [vmem:[#allocation1] ss:$4 sm:$0xff]
        %v5811 = vld [vmem:[%s5700] ss:$4 sm:$0xff]
        %v5812 = vld [vmem:[%s5702] ss:$4 sm:$0xff]
        %v5813 = vld [vmem:[%s5704] ss:$4 sm:$0xff]
        %v5814 = vld [vmem:[%s5706] ss:$4 sm:$0xff]
        %5815 = vst.sshfl [vmem:[#allocation1] sm:$0xff pattern:$0x73625140] %v2014
        %5816 = vst.sshfl [vmem:[#allocation1 + $0x20] sm:$0xff pattern:$0x73625140] %v1942
        %v5817 = vld [vmem:[%s5700] ss:$4 sm:$0xff]
        %v5818 = vld [vmem:[%s5702] ss:$4 sm:$0xff]
        %v5819 = vld [vmem:[%s5704] ss:$4 sm:$0xff]
        %v5820 = vld [vmem:[%s5706] ss:$4 sm:$0xff]
        %v5821 = vld [vmem:[%s5708] ss:$4 sm:$0xff]
        %v5822 = vld [vmem:[%s5710] ss:$4 sm:$0xff]
        %v5823 = vld [vmem:[%s5712] ss:$4 sm:$0xff]
        %5824 = vst.sshfl [vmem:[#allocation1] sm:$0xff pattern:$0x73625140] %v2030
        %v5825 = vld [vmem:[#allocation1] ss:$4 sm:$0xff]
        %5826 = vst.sshfl [vmem:[#allocation1 + $0x20] sm:$0xff pattern:$0x73625140] %v2015
        %v5827 = vld [vmem:[%s5708] ss:$4 sm:$0xff]
        %v5828 = vld [vmem:[%s5710] ss:$4 sm:$0xff]
        %v5829 = vld [vmem:[%s5712] ss:$4 sm:$0xff]
        %5830 = vst.sshfl [vmem:[#allocation1] sm:$0xff pattern:$0x73625140] %v1945
        %5831 = vst.sshfl [vmem:[#allocation1 + $0x20] sm:$0xff pattern:$0x73625140] %v2031
        %v5832 = vld [vmem:[#allocation1] ss:$4 sm:$0xff]
        %v5833 = vld [vmem:[%s5700] ss:$4 sm:$0xff]
        %v5834 = vld [vmem:[%s5702] ss:$4 sm:$0xff]
        %v5835 = vld [vmem:[%s5704] ss:$4 sm:$0xff]
        %v5836 = vld [vmem:[%s5706] ss:$4 sm:$0xff]
        %5837 = vst.sshfl [vmem:[#allocation1] sm:$0xff pattern:$0x73625140] %v2016
        %5838 = vst.sshfl [vmem:[#allocation1 + $0x20] sm:$0xff pattern:$0x73625140] %v1948
        %v5839 = vld [vmem:[%s5700] ss:$4 sm:$0xff]
        %v5840 = vld [vmem:[%s5702] ss:$4 sm:$0xff]
        %v5841 = vld [vmem:[%s5704] ss:$4 sm:$0xff]
        %v5842 = vld [vmem:[%s5706] ss:$4 sm:$0xff]
        %v5843 = vld [vmem:[%s5708] ss:$4 sm:$0xff]
        %v5844 = vld [vmem:[%s5710] ss:$4 sm:$0xff]
        %v5845 = vld [vmem:[%s5712] ss:$4 sm:$0xff]
        %5846 = vst.sshfl [vmem:[#allocation1] sm:$0xff pattern:$0x73625140] %v2032
        %v5847 = vld [vmem:[#allocation1] ss:$4 sm:$0xff]
        %5848 = vst.sshfl [vmem:[#allocation1 + $0x20] sm:$0xff pattern:$0x73625140] %v2017
        %v5849 = vld [vmem:[%s5708] ss:$4 sm:$0xff]
        %v5850 = vld [vmem:[%s5710] ss:$4 sm:$0xff]
        %v5851 = vld [vmem:[%s5712] ss:$4 sm:$0xff]
        %5852 = vst.sshfl [vmem:[#allocation1] sm:$0xff pattern:$0x73625140] %v1951
        %5853 = vst.sshfl [vmem:[#allocation1 + $0x20] sm:$0xff pattern:$0x73625140] %v2033
        %v5854 = vld [vmem:[#allocation1] ss:$4 sm:$0xff]
        %v5855 = vld [vmem:[%s5700] ss:$4 sm:$0xff]
        %v5856 = vld [vmem:[%s5702] ss:$4 sm:$0xff]
        %v5857 = vld [vmem:[%s5704] ss:$4 sm:$0xff]
        %v5858 = vld [vmem:[%s5706] ss:$4 sm:$0xff]
        %5859 = vst.sshfl [vmem:[#allocation1] sm:$0xff pattern:$0x73625140] %v2018
        %5860 = vst.sshfl [vmem:[#allocation1 + $0x20] sm:$0xff pattern:$0x73625140] %v1954
        %v5861 = vld [vmem:[%s5700] ss:$4 sm:$0xff]
        %v5862 = vld [vmem:[%s5702] ss:$4 sm:$0xff]
        %v5863 = vld [vmem:[%s5704] ss:$4 sm:$0xff]
        %v5864 = vld [vmem:[%s5706] ss:$4 sm:$0xff]
        %v5865 = vld [vmem:[%s5708] ss:$4 sm:$0xff]
        %v5866 = vld [vmem:[%s5710] ss:$4 sm:$0xff]
        %v5867 = vld [vmem:[%s5712] ss:$4 sm:$0xff]
        %5868 = vst.sshfl [vmem:[#allocation1] sm:$0xff pattern:$0x73625140] %v2034
        %v5869 = vld [vmem:[#allocation1] ss:$4 sm:$0xff]
        %5870 = vst.sshfl [vmem:[#allocation1 + $0x20] sm:$0xff pattern:$0x73625140] %v389
        %v5871 = vld [vmem:[%s5708] ss:$4 sm:$0xff]
        %v5872 = vld [vmem:[%s5710] ss:$4 sm:$0xff]
        %v5873 = vld [vmem:[%s5712] ss:$4 sm:$0xff]
        %5874 = vst.sshfl [vmem:[#allocation1] sm:$0xff pattern:$0x73625140] %v291
        %5875 = vst.sshfl [vmem:[#allocation1 + $0x20] sm:$0xff pattern:$0x73625140] %v406
        %v5876 = vld [vmem:[#allocation1] ss:$4 sm:$0xff]
        %v5877 = vld [vmem:[%s5700] ss:$4 sm:$0xff]
        %v5878 = vld [vmem:[%s5702] ss:$4 sm:$0xff]
        %v5879 = vld [vmem:[%s5704] ss:$4 sm:$0xff]
        %v5880 = vld [vmem:[%s5706] ss:$4 sm:$0xff]
        %v6009 = vrot.slane %v5701, 7
        %v6010 = vrot.slane %v6009, 2
        %v6011 = vrot.slane %v5703, 7
        %v6012 = vrot.slane %v6011, 2
        %v6013 = vrot.slane %v5705, 7
        %v6014 = vrot.slane %v6013, 2
        %v6015 = vrot.slane %v5707, 7
        %v6016 = vrot.slane %v6015, 2
        %v6017 = vrot.slane %v5709, 7
        %v6018 = vrot.slane %v6017, 2
        %v6019 = vrot.slane %v5711, 7
        %v6020 = vrot.slane %v6019, 2
        %v6021 = vrot.slane %v5713, 7
        %v6022 = vrot.slane %v6021, 2
        %v6023 = vrot.slane %v5715, 7
        %v6024 = vrot.slane %v6023, 2
        %v6025 = vrot.slane %v5717, 7
        %v6026 = vrot.slane %v6025, 2
        %v6027 = vrot.slane %v5718, 7
        %v6028 = vrot.slane %v6027, 2
        %v6029 = vrot.slane %v5719, 7
        %v6030 = vrot.slane %v6029, 2
        %v6031 = vrot.slane %v5722, 7
        %v6032 = vrot.slane %v6031, 2
        %v6033 = vrot.slane %v5723, 7
        %v6034 = vrot.slane %v6033, 2
        %v6035 = vrot.slane %v5724, 7
        %v6036 = vrot.slane %v6035, 2
        %v6037 = vrot.slane %v5725, 7
        %v6038 = vrot.slane %v6037, 2
        %v6039 = vrot.slane %v5726, 7
        %v6040 = vrot.slane %v6039, 2
        %v6041 = vrot.slane %v5729, 7
        %v6042 = vrot.slane %v6041, 2
        %v6043 = vrot.slane %v5730, 7
        %v6044 = vrot.slane %v6043, 2
        %v6045 = vrot.slane %v5731, 7
        %v6046 = vrot.slane %v6045, 2
        %v6047 = vrot.slane %v5732, 7
        %v6048 = vrot.slane %v6047, 2
        %v6049 = vrot.slane %v5733, 7
        %v6050 = vrot.slane %v6049, 2
        %v6051 = vrot.slane %v5734, 7
        %v6052 = vrot.slane %v6051, 2
        %v6053 = vrot.slane %v5735, 7
        %v6054 = vrot.slane %v6053, 2
        %v6055 = vrot.slane %v5737, 7
        %v6056 = vrot.slane %v6055, 2
        %v6057 = vrot.slane %v5739, 7
        %v6058 = vrot.slane %v6057, 2
        %v6059 = vrot.slane %v5740, 7
        %v6060 = vrot.slane %v6059, 2
        %v6061 = vrot.slane %v5741, 7
        %v6062 = vrot.slane %v6061, 2
        %v6063 = vrot.slane %v5744, 7
        %v6064 = vrot.slane %v6063, 2
        %v6065 = vrot.slane %v5745, 7
        %v6066 = vrot.slane %v6065, 2
        %v6067 = vrot.slane %v5746, 7
        %v6068 = vrot.slane %v6067, 2
        %v6069 = vrot.slane %v5747, 7
        %v6070 = vrot.slane %v6069, 2
        %v6071 = vrot.slane %v5748, 7
        %v6072 = vrot.slane %v6071, 2
        %v6073 = vrot.slane %v5751, 7
        %v6074 = vrot.slane %v6073, 2
        %v6075 = vrot.slane %v5752, 7
        %v6076 = vrot.slane %v6075, 2
        %v6077 = vrot.slane %v5753, 7
        %v6078 = vrot.slane %v6077, 2
        %v6079 = vrot.slane %v5754, 7
        %v6080 = vrot.slane %v6079, 2
        %v6081 = vrot.slane %v5755, 7
        %v6082 = vrot.slane %v6081, 2
        %v6083 = vrot.slane %v5756, 7
        %v6084 = vrot.slane %v6083, 2
        %v6085 = vrot.slane %v5757, 7
        %v6086 = vrot.slane %v6085, 2
        %v6087 = vrot.slane %v5759, 7
        %v6088 = vrot.slane %v6087, 2
        %v6089 = vrot.slane %v5761, 7
        %v6090 = vrot.slane %v6089, 2
        %v6091 = vrot.slane %v5762, 7
        %v6092 = vrot.slane %v6091, 2
        %v6093 = vrot.slane %v5763, 7
        %v6094 = vrot.slane %v6093, 2
        %v6095 = vrot.slane %v5766, 7
        %v6096 = vrot.slane %v6095, 2
        %v6097 = vrot.slane %v5767, 7
        %v6098 = vrot.slane %v6097, 2
        %v6099 = vrot.slane %v5768, 7
        %v6100 = vrot.slane %v6099, 2
        %v6101 = vrot.slane %v5769, 7
        %v6102 = vrot.slane %v6101, 2
        %v6103 = vrot.slane %v5770, 7
        %v6104 = vrot.slane %v6103, 2
        %v6105 = vrot.slane %v5773, 7
        %v6106 = vrot.slane %v6105, 2
        %v6107 = vrot.slane %v5774, 7
        %v6108 = vrot.slane %v6107, 2
        %v6109 = vrot.slane %v5775, 7
        %v6110 = vrot.slane %v6109, 2
        %v6111 = vrot.slane %v5776, 7
        %v6112 = vrot.slane %v6111, 2
        %v6113 = vrot.slane %v5777, 7
        %v6114 = vrot.slane %v6113, 2
        %v6115 = vrot.slane %v5778, 7
        %v6116 = vrot.slane %v6115, 2
        %v6117 = vrot.slane %v5779, 7
        %v6118 = vrot.slane %v6117, 2
        %v6119 = vrot.slane %v5781, 7
        %v6120 = vrot.slane %v6119, 2
        %v6121 = vrot.slane %v5783, 7
        %v6122 = vrot.slane %v6121, 2
        %v6123 = vrot.slane %v5784, 7
        %v6124 = vrot.slane %v6123, 2
        %v6125 = vrot.slane %v5785, 7
        %v6126 = vrot.slane %v6125, 2
        %v6127 = vrot.slane %v5788, 7
        %v6128 = vrot.slane %v6127, 2
        %v6129 = vrot.slane %v5789, 7
        %v6130 = vrot.slane %v6129, 2
        %v6131 = vrot.slane %v5790, 7
        %v6132 = vrot.slane %v6131, 2
        %v6133 = vrot.slane %v5791, 7
        %v6134 = vrot.slane %v6133, 2
        %v6135 = vrot.slane %v5792, 7
        %v6136 = vrot.slane %v6135, 2
        %v6137 = vrot.slane %v5795, 7
        %v6138 = vrot.slane %v6137, 2
        %v6139 = vrot.slane %v5796, 7
        %v6140 = vrot.slane %v6139, 2
        %v6141 = vrot.slane %v5797, 7
        %v6142 = vrot.slane %v6141, 2
        %v6143 = vrot.slane %v5798, 7
        %v6144 = vrot.slane %v6143, 2
        %v6145 = vrot.slane %v5799, 7
        %v6146 = vrot.slane %v6145, 2
        %v6147 = vrot.slane %v5800, 7
        %v6148 = vrot.slane %v6147, 2
        %v6149 = vrot.slane %v5801, 7
        %v6150 = vrot.slane %v6149, 2
        %v6151 = vrot.slane %v5803, 7
        %v6152 = vrot.slane %v6151, 2
        %v6153 = vrot.slane %v5805, 7
        %v6154 = vrot.slane %v6153, 2
        %v6155 = vrot.slane %v5806, 7
        %v6156 = vrot.slane %v6155, 2
        %v6157 = vrot.slane %v5807, 7
        %v6158 = vrot.slane %v6157, 2
        %v6159 = vrot.slane %v5810, 7
        %v6160 = vrot.slane %v6159, 2
        %v6161 = vrot.slane %v5811, 7
        %v6162 = vrot.slane %v6161, 2
        %v6163 = vrot.slane %v5812, 7
        %v6164 = vrot.slane %v6163, 2
        %v6165 = vrot.slane %v5813, 7
        %v6166 = vrot.slane %v6165, 2
        %v6167 = vrot.slane %v5814, 7
        %v6168 = vrot.slane %v6167, 2
        %v6169 = vrot.slane %v5817, 7
        %v6170 = vrot.slane %v6169, 2
        %v6171 = vrot.slane %v5818, 7
        %v6172 = vrot.slane %v6171, 2
        %v6173 = vrot.slane %v5819, 7
        %v6174 = vrot.slane %v6173, 2
        %v6175 = vrot.slane %v5820, 7
        %v6176 = vrot.slane %v6175, 2
        %v6177 = vrot.slane %v5821, 7
        %v6178 = vrot.slane %v6177, 2
        %v6179 = vrot.slane %v5822, 7
        %v6180 = vrot.slane %v6179, 2
        %v6181 = vrot.slane %v5823, 7
        %v6182 = vrot.slane %v6181, 2
        %v6183 = vrot.slane %v5825, 7
        %v6184 = vrot.slane %v6183, 2
        %v6185 = vrot.slane %v5827, 7
        %v6186 = vrot.slane %v6185, 2
        %v6187 = vrot.slane %v5828, 7
        %v6188 = vrot.slane %v6187, 2
        %v6189 = vrot.slane %v5829, 7
        %v6190 = vrot.slane %v6189, 2
        %v6191 = vrot.slane %v5832, 7
        %v6192 = vrot.slane %v6191, 2
        %v6193 = vrot.slane %v5833, 7
        %v6194 = vrot.slane %v6193, 2
        %v6195 = vrot.slane %v5834, 7
        %v6196 = vrot.slane %v6195, 2
        %v6197 = vrot.slane %v5835, 7
        %v6198 = vrot.slane %v6197, 2
        %v6199 = vrot.slane %v5836, 7
        %v6200 = vrot.slane %v6199, 2
        %v6201 = vrot.slane %v5839, 7
        %v6202 = vrot.slane %v6201, 2
        %v6203 = vrot.slane %v5840, 7
        %v6204 = vrot.slane %v6203, 2
        %v6205 = vrot.slane %v5841, 7
        %v6206 = vrot.slane %v6205, 2
        %v6207 = vrot.slane %v5842, 7
        %v6208 = vrot.slane %v6207, 2
        %v6209 = vrot.slane %v5843, 7
        %v6210 = vrot.slane %v6209, 2
        %v6211 = vrot.slane %v5844, 7
        %v6212 = vrot.slane %v6211, 2
        %v6213 = vrot.slane %v5845, 7
        %v6214 = vrot.slane %v6213, 2
        %v6215 = vrot.slane %v5847, 7
        %v6216 = vrot.slane %v6215, 2
        %v6217 = vrot.slane %v5849, 7
        %v6218 = vrot.slane %v6217, 2
        %v6219 = vrot.slane %v5850, 7
        %v6220 = vrot.slane %v6219, 2
        %v6221 = vrot.slane %v5851, 7
        %v6222 = vrot.slane %v6221, 2
        %v6223 = vrot.slane %v5854, 7
        %v6224 = vrot.slane %v6223, 2
        %v6225 = vrot.slane %v5855, 7
        %v6226 = vrot.slane %v6225, 2
        %v6227 = vrot.slane %v5856, 7
        %v6228 = vrot.slane %v6227, 2
        %v6229 = vrot.slane %v5857, 7
        %v6230 = vrot.slane %v6229, 2
        %v6231 = vrot.slane %v5858, 7
        %v6232 = vrot.slane %v6231, 2
        %v6233 = vrot.slane %v5861, 7
        %v6234 = vrot.slane %v6233, 2
        %v6235 = vrot.slane %v5862, 7
        %v6236 = vrot.slane %v6235, 2
        %v6237 = vrot.slane %v5863, 7
        %v6238 = vrot.slane %v6237, 2
        %v6239 = vrot.slane %v5864, 7
        %v6240 = vrot.slane %v6239, 2
        %v6241 = vrot.slane %v5865, 7
        %v6242 = vrot.slane %v6241, 2
        %v6243 = vrot.slane %v5866, 7
        %v6244 = vrot.slane %v6243, 2
        %v6245 = vrot.slane %v5867, 7
        %v6246 = vrot.slane %v6245, 2
        %v6247 = vrot.slane %v5869, 7
        %v6248 = vrot.slane %v6247, 2
        %v6249 = vrot.slane %v5871, 7
        %v6250 = vrot.slane %v6249, 2
        %v6251 = vrot.slane %v5872, 7
        %v6252 = vrot.slane %v6251, 2
        %v6253 = vrot.slane %v5873, 7
        %v6254 = vrot.slane %v6253, 2
        %v6255 = vrot.slane %v5876, 7
        %v6256 = vrot.slane %v6255, 2
        %v6257 = vrot.slane %v5877, 7
        %v6258 = vrot.slane %v6257, 2
        %v6259 = vrot.slane %v5878, 7
        %v6260 = vrot.slane %v6259, 2
        %v6261 = vrot.slane %v5879, 7
        %v6262 = vrot.slane %v6261, 2
        %v6263 = vrot.slane %v5880, 7
        %v6264 = vrot.slane %v6263, 2
        %v6393 = vadd.f32 %v5701, %v6010
        %v6394 = vadd.f32 %v5703, %v6012
        %v6395 = vadd.f32 %v5705, %v6014
        %v6396 = vadd.f32 %v5707, %v6016
        %v6397 = vadd.f32 %v5709, %v6018
        %v6398 = vadd.f32 %v5711, %v6020
        %v6399 = vadd.f32 %v5713, %v6022
        %v6400 = vadd.f32 %v5715, %v6024
        %v6401 = vadd.f32 %v5717, %v6026
        %v6402 = vadd.f32 %v5718, %v6028
        %v6403 = vadd.f32 %v5719, %v6030
        %v6404 = vadd.f32 %v5722, %v6032
        %v6405 = vadd.f32 %v5723, %v6034
        %v6406 = vadd.f32 %v5724, %v6036
        %v6407 = vadd.f32 %v5725, %v6038
        %v6408 = vadd.f32 %v5726, %v6040
        %v6409 = vadd.f32 %v5729, %v6042
        %v6410 = vadd.f32 %v5730, %v6044
        %v6411 = vadd.f32 %v5731, %v6046
        %v6412 = vadd.f32 %v5732, %v6048
        %v6413 = vadd.f32 %v5733, %v6050
        %v6414 = vadd.f32 %v5734, %v6052
        %v6415 = vadd.f32 %v5735, %v6054
        %v6416 = vadd.f32 %v5737, %v6056
        %v6417 = vadd.f32 %v5739, %v6058
        %v6418 = vadd.f32 %v5740, %v6060
        %v6419 = vadd.f32 %v5741, %v6062
        %v6420 = vadd.f32 %v5744, %v6064
        %v6421 = vadd.f32 %v5745, %v6066
        %v6422 = vadd.f32 %v5746, %v6068
        %v6423 = vadd.f32 %v5747, %v6070
        %v6424 = vadd.f32 %v5748, %v6072
        %v6425 = vadd.f32 %v5751, %v6074
        %v6426 = vadd.f32 %v5752, %v6076
        %v6427 = vadd.f32 %v5753, %v6078
        %v6428 = vadd.f32 %v5754, %v6080
        %v6429 = vadd.f32 %v5755, %v6082
        %v6430 = vadd.f32 %v5756, %v6084
        %v6431 = vadd.f32 %v5757, %v6086
        %v6432 = vadd.f32 %v5759, %v6088
        %v6433 = vadd.f32 %v5761, %v6090
        %v6434 = vadd.f32 %v5762, %v6092
        %v6435 = vadd.f32 %v5763, %v6094
        %v6436 = vadd.f32 %v5766, %v6096
        %v6437 = vadd.f32 %v5767, %v6098
        %v6438 = vadd.f32 %v5768, %v6100
        %v6439 = vadd.f32 %v5769, %v6102
        %v6440 = vadd.f32 %v5770, %v6104
        %v6441 = vadd.f32 %v5773, %v6106
        %v6442 = vadd.f32 %v5774, %v6108
        %v6443 = vadd.f32 %v5775, %v6110
        %v6444 = vadd.f32 %v5776, %v6112
        %v6445 = vadd.f32 %v5777, %v6114
        %v6446 = vadd.f32 %v5778, %v6116
        %v6447 = vadd.f32 %v5779, %v6118
        %v6448 = vadd.f32 %v5781, %v6120
        %v6449 = vadd.f32 %v5783, %v6122
        %v6450 = vadd.f32 %v5784, %v6124
        %v6451 = vadd.f32 %v5785, %v6126
        %v6452 = vadd.f32 %v5788, %v6128
        %v6453 = vadd.f32 %v5789, %v6130
        %v6454 = vadd.f32 %v5790, %v6132
        %v6455 = vadd.f32 %v5791, %v6134
        %v6456 = vadd.f32 %v5792, %v6136
        %v6457 = vadd.f32 %v5795, %v6138
        %v6458 = vadd.f32 %v5796, %v6140
        %v6459 = vadd.f32 %v5797, %v6142
        %v6460 = vadd.f32 %v5798, %v6144
        %v6461 = vadd.f32 %v5799, %v6146
        %v6462 = vadd.f32 %v5800, %v6148
        %v6463 = vadd.f32 %v5801, %v6150
        %v6464 = vadd.f32 %v5803, %v6152
        %v6465 = vadd.f32 %v5805, %v6154
        %v6466 = vadd.f32 %v5806, %v6156
        %v6467 = vadd.f32 %v5807, %v6158
        %v6468 = vadd.f32 %v5810, %v6160
        %v6469 = vadd.f32 %v5811, %v6162
        %v6470 = vadd.f32 %v5812, %v6164
        %v6471 = vadd.f32 %v5813, %v6166
        %v6472 = vadd.f32 %v5814, %v6168
        %v6473 = vadd.f32 %v5817, %v6170
        %v6474 = vadd.f32 %v5818, %v6172
        %v6475 = vadd.f32 %v5819, %v6174
        %v6476 = vadd.f32 %v5820, %v6176
        %v6477 = vadd.f32 %v5821, %v6178
        %v6478 = vadd.f32 %v5822, %v6180
        %v6479 = vadd.f32 %v5823, %v6182
        %v6480 = vadd.f32 %v5825, %v6184
        %v6481 = vadd.f32 %v5827, %v6186
        %v6482 = vadd.f32 %v5828, %v6188
        %v6483 = vadd.f32 %v5829, %v6190
        %v6484 = vadd.f32 %v5832, %v6192
        %v6485 = vadd.f32 %v5833, %v6194
        %v6486 = vadd.f32 %v5834, %v6196
        %v6487 = vadd.f32 %v5835, %v6198
        %v6488 = vadd.f32 %v5836, %v6200
        %v6489 = vadd.f32 %v5839, %v6202
        %v6490 = vadd.f32 %v5840, %v6204
        %v6491 = vadd.f32 %v5841, %v6206
        %v6492 = vadd.f32 %v5842, %v6208
        %v6493 = vadd.f32 %v5843, %v6210
        %v6494 = vadd.f32 %v5844, %v6212
        %v6495 = vadd.f32 %v5845, %v6214
        %v6496 = vadd.f32 %v5847, %v6216
        %v6497 = vadd.f32 %v5849, %v6218
        %v6498 = vadd.f32 %v5850, %v6220
        %v6499 = vadd.f32 %v5851, %v6222
        %v6500 = vadd.f32 %v5854, %v6224
        %v6501 = vadd.f32 %v5855, %v6226
        %v6502 = vadd.f32 %v5856, %v6228
        %v6503 = vadd.f32 %v5857, %v6230
        %v6504 = vadd.f32 %v5858, %v6232
        %v6505 = vadd.f32 %v5861, %v6234
        %v6506 = vadd.f32 %v5862, %v6236
        %v6507 = vadd.f32 %v5863, %v6238
        %v6508 = vadd.f32 %v5864, %v6240
        %v6509 = vadd.f32 %v5865, %v6242
        %v6510 = vadd.f32 %v5866, %v6244
        %v6511 = vadd.f32 %v5867, %v6246
        %v6512 = vadd.f32 %v5869, %v6248
        %v6513 = vadd.f32 %v5871, %v6250
        %v6514 = vadd.f32 %v5872, %v6252
        %v6515 = vadd.f32 %v5873, %v6254
        %v6516 = vadd.f32 %v5876, %v6256
        %v6517 = vadd.f32 %v5877, %v6258
        %v6518 = vadd.f32 %v5878, %v6260
        %v6519 = vadd.f32 %v5879, %v6262
        %v6520 = vadd.f32 %v5880, %v6264
        %v6521 = vadd.f32 %v6393, %v6401
        %v6522 = vadd.f32 %v6394, %v6402
        %v6523 = vadd.f32 %v6395, %v6403
        %v6524 = vadd.f32 %v6396, %v6404
        %v6525 = vadd.f32 %v6397, %v6405
        %v6526 = vadd.f32 %v6398, %v6406
        %v6527 = vadd.f32 %v6399, %v6407
        %v6528 = vadd.f32 %v6400, %v6408
        %v6529 = vadd.f32 %v6409, %v6417
        %v6530 = vadd.f32 %v6410, %v6418
        %v6531 = vadd.f32 %v6411, %v6419
        %v6532 = vadd.f32 %v6412, %v6420
        %v6533 = vadd.f32 %v6413, %v6421
        %v6534 = vadd.f32 %v6414, %v6422
        %v6535 = vadd.f32 %v6415, %v6423
        %v6536 = vadd.f32 %v6416, %v6424
        %v6537 = vadd.f32 %v6425, %v6433
        %v6538 = vadd.f32 %v6426, %v6434
        %v6539 = vadd.f32 %v6427, %v6435
        %v6540 = vadd.f32 %v6428, %v6436
        %v6541 = vadd.f32 %v6429, %v6437
        %v6542 = vadd.f32 %v6430, %v6438
        %v6543 = vadd.f32 %v6431, %v6439
        %v6544 = vadd.f32 %v6432, %v6440
        %v6545 = vadd.f32 %v6441, %v6449
        %v6546 = vadd.f32 %v6442, %v6450
        %v6547 = vadd.f32 %v6443, %v6451
        %v6548 = vadd.f32 %v6444, %v6452
        %v6549 = vadd.f32 %v6445, %v6453
        %v6550 = vadd.f32 %v6446, %v6454
        %v6551 = vadd.f32 %v6447, %v6455
        %v6552 = vadd.f32 %v6448, %v6456
        %v6553 = vadd.f32 %v6457, %v6465
        %v6554 = vadd.f32 %v6458, %v6466
        %v6555 = vadd.f32 %v6459, %v6467
        %v6556 = vadd.f32 %v6460, %v6468
        %v6557 = vadd.f32 %v6461, %v6469
        %v6558 = vadd.f32 %v6462, %v6470
        %v6559 = vadd.f32 %v6463, %v6471
        %v6560 = vadd.f32 %v6464, %v6472
        %v6561 = vadd.f32 %v6473, %v6481
        %v6562 = vadd.f32 %v6474, %v6482
        %v6563 = vadd.f32 %v6475, %v6483
        %v6564 = vadd.f32 %v6476, %v6484
        %v6565 = vadd.f32 %v6477, %v6485
        %v6566 = vadd.f32 %v6478, %v6486
        %v6567 = vadd.f32 %v6479, %v6487
        %v6568 = vadd.f32 %v6480, %v6488
        %v6569 = vadd.f32 %v6489, %v6497
        %v6570 = vadd.f32 %v6490, %v6498
        %v6571 = vadd.f32 %v6491, %v6499
        %v6572 = vadd.f32 %v6492, %v6500
        %v6573 = vadd.f32 %v6493, %v6501
        %v6574 = vadd.f32 %v6494, %v6502
        %v6575 = vadd.f32 %v6495, %v6503
        %v6576 = vadd.f32 %v6496, %v6504
        %v6577 = vadd.f32 %v6505, %v6513
        %v6578 = vadd.f32 %v6506, %v6514
        %v6579 = vadd.f32 %v6507, %v6515
        %v6580 = vadd.f32 %v6508, %v6516
        %v6581 = vadd.f32 %v6509, %v6517
        %v6582 = vadd.f32 %v6510, %v6518
        %v6583 = vadd.f32 %v6511, %v6519
        %v6584 = vadd.f32 %v6512, %v6520
        %v6585 = vrot.slane %v224, 2
        %v6586 = vrot.slane %v224, 4
        %v6587 = vrot.slane %v224, 6
        %v6588 = vrot.slane %v225, 2
        %v6589 = vrot.slane %v225, 4
        %v6590 = vrot.slane %v225, 6
        %v6591 = vrot.slane %v226, 2
        %v6592 = vrot.slane %v226, 4
        %v6593 = vrot.slane %v226, 6
        %v6594 = vrot.slane %v227, 2
        %v6595 = vrot.slane %v227, 4
        %v6596 = vrot.slane %v227, 6
        %v6597 = vrot.slane %v228, 2
        %v6598 = vrot.slane %v228, 4
        %v6599 = vrot.slane %v228, 6
        %v6600 = vrot.slane %v229, 2
        %v6601 = vrot.slane %v229, 4
        %v6602 = vrot.slane %v229, 6
        %v6603 = vrot.slane %v230, 2
        %v6604 = vrot.slane %v230, 4
        %v6605 = vrot.slane %v230, 6
        %v6606 = vrot.slane %v231, 2
        %v6607 = vrot.slane %v231, 4
        %v6608 = vrot.slane %v231, 6
        %v6609 = vrot.slane %v232, 2
        %v6610 = vrot.slane %v232, 4
        %v6611 = vrot.slane %v232, 6
        %v6612 = vrot.slane %v233, 2
        %v6613 = vrot.slane %v233, 4
        %v6614 = vrot.slane %v233, 6
        %v6615 = vrot.slane %v234, 2
        %v6616 = vrot.slane %v234, 4
        %v6617 = vrot.slane %v234, 6
        %v6618 = vrot.slane %v235, 2
        %v6619 = vrot.slane %v235, 4
        %v6620 = vrot.slane %v235, 6
        %v6621 = vrot.slane %v236, 2
        %v6622 = vrot.slane %v236, 4
        %v6623 = vrot.slane %v236, 6
        %v6624 = vrot.slane %v237, 2
        %v6625 = vrot.slane %v237, 4
        %v6626 = vrot.slane %v237, 6
        %v6627 = vrot.slane %v238, 2
        %v6628 = vrot.slane %v238, 4
        %v6629 = vrot.slane %v238, 6
        %v6630 = vrot.slane %v239, 2
        %v6631 = vrot.slane %v239, 4
        %v6632 = vrot.slane %v239, 6
        %v6633 = vrot.slane %v240, 2
        %v6634 = vrot.slane %v240, 4
        %v6635 = vrot.slane %v240, 6
        %v6636 = vrot.slane %v241, 2
        %v6637 = vrot.slane %v241, 4
        %v6638 = vrot.slane %v241, 6
        %v6639 = vrot.slane %v242, 2
        %v6640 = vrot.slane %v242, 4
        %v6641 = vrot.slane %v242, 6
        %v6642 = vrot.slane %v243, 2
        %v6643 = vrot.slane %v243, 4
        %v6644 = vrot.slane %v243, 6
        %v6645 = vrot.slane %v244, 2
        %v6646 = vrot.slane %v244, 4
        %v6647 = vrot.slane %v244, 6
        %v6648 = vrot.slane %v245, 2
        %v6649 = vrot.slane %v245, 4
        %v6650 = vrot.slane %v245, 6
        %v6651 = vrot.slane %v246, 2
        %v6652 = vrot.slane %v246, 4
        %v6653 = vrot.slane %v246, 6
        %v6654 = vrot.slane %v247, 2
        %v6655 = vrot.slane %v247, 4
        %v6656 = vrot.slane %v247, 6
        %v6657 = vrot.slane %v248, 2
        %v6658 = vrot.slane %v248, 4
        %v6659 = vrot.slane %v248, 6
        %v6660 = vrot.slane %v249, 2
        %v6661 = vrot.slane %v249, 4
        %v6662 = vrot.slane %v249, 6
        %v6663 = vrot.slane %v250, 2
        %v6664 = vrot.slane %v250, 4
        %v6665 = vrot.slane %v250, 6
        %v6666 = vrot.slane %v251, 2
        %v6667 = vrot.slane %v251, 4
        %v6668 = vrot.slane %v251, 6
        %v6669 = vrot.slane %v252, 2
        %v6670 = vrot.slane %v252, 4
        %v6671 = vrot.slane %v252, 6
        %v6672 = vrot.slane %v253, 2
        %v6673 = vrot.slane %v253, 4
        %v6674 = vrot.slane %v253, 6
        %v6675 = vrot.slane %v254, 2
        %v6676 = vrot.slane %v254, 4
        %v6677 = vrot.slane %v254, 6
        %v6678 = vrot.slane %v255, 2
        %v6679 = vrot.slane %v255, 4
        %v6680 = vrot.slane %v255, 6
        %v6777 = vrot.slane %v292, 2
        %v6778 = vrot.slane %v6585, 7
        %v6779 = vrot.slane %v6778, 2
        %v6780 = vrot.slane %v6586, 7
        %v6781 = vrot.slane %v6780, 2
        %v6782 = vrot.slane %v6587, 7
        %v6783 = vrot.slane %v6782, 2
        %v6784 = vrot.slane %v293, 2
        %v6785 = vrot.slane %v6588, 7
        %v6786 = vrot.slane %v6785, 2
        %v6787 = vrot.slane %v6589, 7
        %v6788 = vrot.slane %v6787, 2
        %v6789 = vrot.slane %v6590, 7
        %v6790 = vrot.slane %v6789, 2
        %v6791 = vrot.slane %v295, 2
        %v6792 = vrot.slane %v6591, 7
        %v6793 = vrot.slane %v6792, 2
        %v6794 = vrot.slane %v6592, 7
        %v6795 = vrot.slane %v6794, 2
        %v6796 = vrot.slane %v6593, 7
        %v6797 = vrot.slane %v6796, 2
        %v6798 = vrot.slane %v296, 2
        %v6799 = vrot.slane %v6594, 7
        %v6800 = vrot.slane %v6799, 2
        %v6801 = vrot.slane %v6595, 7
        %v6802 = vrot.slane %v6801, 2
        %v6803 = vrot.slane %v6596, 7
        %v6804 = vrot.slane %v6803, 2
        %v6805 = vrot.slane %v298, 2
        %v6806 = vrot.slane %v6597, 7
        %v6807 = vrot.slane %v6806, 2
        %v6808 = vrot.slane %v6598, 7
        %v6809 = vrot.slane %v6808, 2
        %v6810 = vrot.slane %v6599, 7
        %v6811 = vrot.slane %v6810, 2
        %v6812 = vrot.slane %v299, 2
        %v6813 = vrot.slane %v6600, 7
        %v6814 = vrot.slane %v6813, 2
        %v6815 = vrot.slane %v6601, 7
        %v6816 = vrot.slane %v6815, 2
        %v6817 = vrot.slane %v6602, 7
        %v6818 = vrot.slane %v6817, 2
        %v6819 = vrot.slane %v301, 2
        %v6820 = vrot.slane %v6603, 7
        %v6821 = vrot.slane %v6820, 2
        %v6822 = vrot.slane %v6604, 7
        %v6823 = vrot.slane %v6822, 2
        %v6824 = vrot.slane %v6605, 7
        %v6825 = vrot.slane %v6824, 2
        %v6826 = vrot.slane %v302, 2
        %v6827 = vrot.slane %v6606, 7
        %v6828 = vrot.slane %v6827, 2
        %v6829 = vrot.slane %v6607, 7
        %v6830 = vrot.slane %v6829, 2
        %v6831 = vrot.slane %v6608, 7
        %v6832 = vrot.slane %v6831, 2
        %v6833 = vrot.slane %v304, 2
        %v6834 = vrot.slane %v6609, 7
        %v6835 = vrot.slane %v6834, 2
        %v6836 = vrot.slane %v6610, 7
        %v6837 = vrot.slane %v6836, 2
        %v6838 = vrot.slane %v6611, 7
        %v6839 = vrot.slane %v6838, 2
        %v6840 = vrot.slane %v305, 2
        %v6841 = vrot.slane %v6612, 7
        %v6842 = vrot.slane %v6841, 2
        %v6843 = vrot.slane %v6613, 7
        %v6844 = vrot.slane %v6843, 2
        %v6845 = vrot.slane %v6614, 7
        %v6846 = vrot.slane %v6845, 2
        %v6847 = vrot.slane %v307, 2
        %v6848 = vrot.slane %v6615, 7
        %v6849 = vrot.slane %v6848, 2
        %v6850 = vrot.slane %v6616, 7
        %v6851 = vrot.slane %v6850, 2
        %v6852 = vrot.slane %v6617, 7
        %v6853 = vrot.slane %v6852, 2
        %v6854 = vrot.slane %v308, 2
        %v6855 = vrot.slane %v6618, 7
        %v6856 = vrot.slane %v6855, 2
        %v6857 = vrot.slane %v6619, 7
        %v6858 = vrot.slane %v6857, 2
        %v6859 = vrot.slane %v6620, 7
        %v6860 = vrot.slane %v6859, 2
        %v6861 = vrot.slane %v310, 2
        %v6862 = vrot.slane %v6621, 7
        %v6863 = vrot.slane %v6862, 2
        %v6864 = vrot.slane %v6622, 7
        %v6865 = vrot.slane %v6864, 2
        %v6866 = vrot.slane %v6623, 7
        %v6867 = vrot.slane %v6866, 2
        %v6868 = vrot.slane %v311, 2
        %v6869 = vrot.slane %v6624, 7
        %v6870 = vrot.slane %v6869, 2
        %v6871 = vrot.slane %v6625, 7
        %v6872 = vrot.slane %v6871, 2
        %v6873 = vrot.slane %v6626, 7
        %v6874 = vrot.slane %v6873, 2
        %v6875 = vrot.slane %v313, 2
        %v6876 = vrot.slane %v6627, 7
        %v6877 = vrot.slane %v6876, 2
        %v6878 = vrot.slane %v6628, 7
        %v6879 = vrot.slane %v6878, 2
        %v6880 = vrot.slane %v6629, 7
        %v6881 = vrot.slane %v6880, 2
        %v6882 = vrot.slane %v314, 2
        %v6883 = vrot.slane %v6630, 7
        %v6884 = vrot.slane %v6883, 2
        %v6885 = vrot.slane %v6631, 7
        %v6886 = vrot.slane %v6885, 2
        %v6887 = vrot.slane %v6632, 7
        %v6888 = vrot.slane %v6887, 2
        %v6889 = vrot.slane %v316, 2
        %v6890 = vrot.slane %v6633, 7
        %v6891 = vrot.slane %v6890, 2
        %v6892 = vrot.slane %v6634, 7
        %v6893 = vrot.slane %v6892, 2
        %v6894 = vrot.slane %v6635, 7
        %v6895 = vrot.slane %v6894, 2
        %v6896 = vrot.slane %v317, 2
        %v6897 = vrot.slane %v6636, 7
        %v6898 = vrot.slane %v6897, 2
        %v6899 = vrot.slane %v6637, 7
        %v6900 = vrot.slane %v6899, 2
        %v6901 = vrot.slane %v6638, 7
        %v6902 = vrot.slane %v6901, 2
        %v6903 = vrot.slane %v319, 2
        %v6904 = vrot.slane %v6639, 7
        %v6905 = vrot.slane %v6904, 2
        %v6906 = vrot.slane %v6640, 7
        %v6907 = vrot.slane %v6906, 2
        %v6908 = vrot.slane %v6641, 7
        %v6909 = vrot.slane %v6908, 2
        %v6910 = vrot.slane %v320, 2
        %v6911 = vrot.slane %v6642, 7
        %v6912 = vrot.slane %v6911, 2
        %v6913 = vrot.slane %v6643, 7
        %v6914 = vrot.slane %v6913, 2
        %v6915 = vrot.slane %v6644, 7
        %v6916 = vrot.slane %v6915, 2
        %v6917 = vrot.slane %v322, 2
        %v6918 = vrot.slane %v6645, 7
        %v6919 = vrot.slane %v6918, 2
        %v6920 = vrot.slane %v6646, 7
        %v6921 = vrot.slane %v6920, 2
        %v6922 = vrot.slane %v6647, 7
        %v6923 = vrot.slane %v6922, 2
        %v6924 = vrot.slane %v323, 2
        %v6925 = vrot.slane %v6648, 7
        %v6926 = vrot.slane %v6925, 2
        %v6927 = vrot.slane %v6649, 7
        %v6928 = vrot.slane %v6927, 2
        %v6929 = vrot.slane %v6650, 7
        %v6930 = vrot.slane %v6929, 2
        %v6931 = vrot.slane %v325, 2
        %v6932 = vrot.slane %v6651, 7
        %v6933 = vrot.slane %v6932, 2
        %v6934 = vrot.slane %v6652, 7
        %v6935 = vrot.slane %v6934, 2
        %v6936 = vrot.slane %v6653, 7
        %v6937 = vrot.slane %v6936, 2
        %v6938 = vrot.slane %v326, 2
        %v6939 = vrot.slane %v6654, 7
        %v6940 = vrot.slane %v6939, 2
        %v6941 = vrot.slane %v6655, 7
        %v6942 = vrot.slane %v6941, 2
        %v6943 = vrot.slane %v6656, 7
        %v6944 = vrot.slane %v6943, 2
        %v6945 = vrot.slane %v328, 2
        %v6946 = vrot.slane %v6657, 7
        %v6947 = vrot.slane %v6946, 2
        %v6948 = vrot.slane %v6658, 7
        %v6949 = vrot.slane %v6948, 2
        %v6950 = vrot.slane %v6659, 7
        %v6951 = vrot.slane %v6950, 2
        %v6952 = vrot.slane %v329, 2
        %v6953 = vrot.slane %v6660, 7
        %v6954 = vrot.slane %v6953, 2
        %v6955 = vrot.slane %v6661, 7
        %v6956 = vrot.slane %v6955, 2
        %v6957 = vrot.slane %v6662, 7
        %v6958 = vrot.slane %v6957, 2
        %v6959 = vrot.slane %v331, 2
        %v6960 = vrot.slane %v6663, 7
        %v6961 = vrot.slane %v6960, 2
        %v6962 = vrot.slane %v6664, 7
        %v6963 = vrot.slane %v6962, 2
        %v6964 = vrot.slane %v6665, 7
        %v6965 = vrot.slane %v6964, 2
        %v6966 = vrot.slane %v332, 2
        %v6967 = vrot.slane %v6666, 7
        %v6968 = vrot.slane %v6967, 2
        %v6969 = vrot.slane %v6667, 7
        %v6970 = vrot.slane %v6969, 2
        %v6971 = vrot.slane %v6668, 7
        %v6972 = vrot.slane %v6971, 2
        %v6973 = vrot.slane %v334, 2
        %v6974 = vrot.slane %v6669, 7
        %v6975 = vrot.slane %v6974, 2
        %v6976 = vrot.slane %v6670, 7
        %v6977 = vrot.slane %v6976, 2
        %v6978 = vrot.slane %v6671, 7
        %v6979 = vrot.slane %v6978, 2
        %v6980 = vrot.slane %v335, 2
        %v6981 = vrot.slane %v6672, 7
        %v6982 = vrot.slane %v6981, 2
        %v6983 = vrot.slane %v6673, 7
        %v6984 = vrot.slane %v6983, 2
        %v6985 = vrot.slane %v6674, 7
        %v6986 = vrot.slane %v6985, 2
        %v6987 = vrot.slane %v337, 2
        %v6988 = vrot.slane %v6675, 7
        %v6989 = vrot.slane %v6988, 2
        %v6990 = vrot.slane %v6676, 7
        %v6991 = vrot.slane %v6990, 2
        %v6992 = vrot.slane %v6677, 7
        %v6993 = vrot.slane %v6992, 2
        %v6994 = vrot.slane %v338, 2
        %v6995 = vrot.slane %v6678, 7
        %v6996 = vrot.slane %v6995, 2
        %v6997 = vrot.slane %v6679, 7
        %v6998 = vrot.slane %v6997, 2
        %v6999 = vrot.slane %v6680, 7
        %v7000 = vrot.slane %v6999, 2
        %v7129 = vadd.f32 %v224, %v6777
        %v7130 = vadd.f32 %v6585, %v6779
        %v7131 = vadd.f32 %v6586, %v6781
        %v7132 = vadd.f32 %v6587, %v6783
        %v7133 = vadd.f32 %v225, %v6784
        %v7134 = vadd.f32 %v6588, %v6786
        %v7135 = vadd.f32 %v6589, %v6788
        %v7136 = vadd.f32 %v6590, %v6790
        %v7137 = vadd.f32 %v226, %v6791
        %v7138 = vadd.f32 %v6591, %v6793
        %v7139 = vadd.f32 %v6592, %v6795
        %v7140 = vadd.f32 %v6593, %v6797
        %v7141 = vadd.f32 %v227, %v6798
        %v7142 = vadd.f32 %v6594, %v6800
        %v7143 = vadd.f32 %v6595, %v6802
        %v7144 = vadd.f32 %v6596, %v6804
        %v7145 = vadd.f32 %v228, %v6805
        %v7146 = vadd.f32 %v6597, %v6807
        %v7147 = vadd.f32 %v6598, %v6809
        %v7148 = vadd.f32 %v6599, %v6811
        %v7149 = vadd.f32 %v229, %v6812
        %v7150 = vadd.f32 %v6600, %v6814
        %v7151 = vadd.f32 %v6601, %v6816
        %v7152 = vadd.f32 %v6602, %v6818
        %v7153 = vadd.f32 %v230, %v6819
        %v7154 = vadd.f32 %v6603, %v6821
        %v7155 = vadd.f32 %v6604, %v6823
        %v7156 = vadd.f32 %v6605, %v6825
        %v7157 = vadd.f32 %v231, %v6826
        %v7158 = vadd.f32 %v6606, %v6828
        %v7159 = vadd.f32 %v6607, %v6830
        %v7160 = vadd.f32 %v6608, %v6832
        %v7161 = vadd.f32 %v232, %v6833
        %v7162 = vadd.f32 %v6609, %v6835
        %v7163 = vadd.f32 %v6610, %v6837
        %v7164 = vadd.f32 %v6611, %v6839
        %v7165 = vadd.f32 %v233, %v6840
        %v7166 = vadd.f32 %v6612, %v6842
        %v7167 = vadd.f32 %v6613, %v6844
        %v7168 = vadd.f32 %v6614, %v6846
        %v7169 = vadd.f32 %v234, %v6847
        %v7170 = vadd.f32 %v6615, %v6849
        %v7171 = vadd.f32 %v6616, %v6851
        %v7172 = vadd.f32 %v6617, %v6853
        %v7173 = vadd.f32 %v235, %v6854
        %v7174 = vadd.f32 %v6618, %v6856
        %v7175 = vadd.f32 %v6619, %v6858
        %v7176 = vadd.f32 %v6620, %v6860
        %v7177 = vadd.f32 %v236, %v6861
        %v7178 = vadd.f32 %v6621, %v6863
        %v7179 = vadd.f32 %v6622, %v6865
        %v7180 = vadd.f32 %v6623, %v6867
        %v7181 = vadd.f32 %v237, %v6868
        %v7182 = vadd.f32 %v6624, %v6870
        %v7183 = vadd.f32 %v6625, %v6872
        %v7184 = vadd.f32 %v6626, %v6874
        %v7185 = vadd.f32 %v238, %v6875
        %v7186 = vadd.f32 %v6627, %v6877
        %v7187 = vadd.f32 %v6628, %v6879
        %v7188 = vadd.f32 %v6629, %v6881
        %v7189 = vadd.f32 %v239, %v6882
        %v7190 = vadd.f32 %v6630, %v6884
        %v7191 = vadd.f32 %v6631, %v6886
        %v7192 = vadd.f32 %v6632, %v6888
        %v7193 = vadd.f32 %v240, %v6889
        %v7194 = vadd.f32 %v6633, %v6891
        %v7195 = vadd.f32 %v6634, %v6893
        %v7196 = vadd.f32 %v6635, %v6895
        %v7197 = vadd.f32 %v241, %v6896
        %v7198 = vadd.f32 %v6636, %v6898
        %v7199 = vadd.f32 %v6637, %v6900
        %v7200 = vadd.f32 %v6638, %v6902
        %v7201 = vadd.f32 %v242, %v6903
        %v7202 = vadd.f32 %v6639, %v6905
        %v7203 = vadd.f32 %v6640, %v6907
        %v7204 = vadd.f32 %v6641, %v6909
        %v7205 = vadd.f32 %v243, %v6910
        %v7206 = vadd.f32 %v6642, %v6912
        %v7207 = vadd.f32 %v6643, %v6914
        %v7208 = vadd.f32 %v6644, %v6916
        %v7209 = vadd.f32 %v244, %v6917
        %v7210 = vadd.f32 %v6645, %v6919
        %v7211 = vadd.f32 %v6646, %v6921
        %v7212 = vadd.f32 %v6647, %v6923
        %v7213 = vadd.f32 %v245, %v6924
        %v7214 = vadd.f32 %v6648, %v6926
        %v7215 = vadd.f32 %v6649, %v6928
        %v7216 = vadd.f32 %v6650, %v6930
        %v7217 = vadd.f32 %v246, %v6931
        %v7218 = vadd.f32 %v6651, %v6933
        %v7219 = vadd.f32 %v6652, %v6935
        %v7220 = vadd.f32 %v6653, %v6937
        %v7221 = vadd.f32 %v247, %v6938
        %v7222 = vadd.f32 %v6654, %v6940
        %v7223 = vadd.f32 %v6655, %v6942
        %v7224 = vadd.f32 %v6656, %v6944
        %v7225 = vadd.f32 %v248, %v6945
        %v7226 = vadd.f32 %v6657, %v6947
        %v7227 = vadd.f32 %v6658, %v6949
        %v7228 = vadd.f32 %v6659, %v6951
        %v7229 = vadd.f32 %v249, %v6952
        %v7230 = vadd.f32 %v6660, %v6954
        %v7231 = vadd.f32 %v6661, %v6956
        %v7232 = vadd.f32 %v6662, %v6958
        %v7233 = vadd.f32 %v250, %v6959
        %v7234 = vadd.f32 %v6663, %v6961
        %v7235 = vadd.f32 %v6664, %v6963
        %v7236 = vadd.f32 %v6665, %v6965
        %v7237 = vadd.f32 %v251, %v6966
        %v7238 = vadd.f32 %v6666, %v6968
        %v7239 = vadd.f32 %v6667, %v6970
        %v7240 = vadd.f32 %v6668, %v6972
        %v7241 = vadd.f32 %v252, %v6973
        %v7242 = vadd.f32 %v6669, %v6975
        %v7243 = vadd.f32 %v6670, %v6977
        %v7244 = vadd.f32 %v6671, %v6979
        %v7245 = vadd.f32 %v253, %v6980
        %v7246 = vadd.f32 %v6672, %v6982
        %v7247 = vadd.f32 %v6673, %v6984
        %v7248 = vadd.f32 %v6674, %v6986
        %v7249 = vadd.f32 %v254, %v6987
        %v7250 = vadd.f32 %v6675, %v6989
        %v7251 = vadd.f32 %v6676, %v6991
        %v7252 = vadd.f32 %v6677, %v6993
        %v7253 = vadd.f32 %v255, %v6994
        %v7254 = vadd.f32 %v6678, %v6996
        %v7255 = vadd.f32 %v6679, %v6998
        %v7256 = vadd.f32 %v6680, %v7000
        %v7257 = vadd.f32 %v7129, %v7137
        %v7258 = vadd.f32 %v7130, %v7138
        %v7259 = vadd.f32 %v7131, %v7139
        %v7260 = vadd.f32 %v7132, %v7140
        %v7261 = vadd.f32 %v7133, %v7141
        %v7262 = vadd.f32 %v7134, %v7142
        %v7263 = vadd.f32 %v7135, %v7143
        %v7264 = vadd.f32 %v7136, %v7144
        %v7265 = vadd.f32 %v7145, %v7153
        %v7266 = vadd.f32 %v7146, %v7154
        %v7267 = vadd.f32 %v7147, %v7155
        %v7268 = vadd.f32 %v7148, %v7156
        %v7269 = vadd.f32 %v7149, %v7157
        %v7270 = vadd.f32 %v7150, %v7158
        %v7271 = vadd.f32 %v7151, %v7159
        %v7272 = vadd.f32 %v7152, %v7160
        %v7273 = vadd.f32 %v7161, %v7169
        %v7274 = vadd.f32 %v7162, %v7170
        %v7275 = vadd.f32 %v7163, %v7171
        %v7276 = vadd.f32 %v7164, %v7172
        %v7277 = vadd.f32 %v7165, %v7173
        %v7278 = vadd.f32 %v7166, %v7174
        %v7279 = vadd.f32 %v7167, %v7175
        %v7280 = vadd.f32 %v7168, %v7176
        %v7281 = vadd.f32 %v7177, %v7185
        %v7282 = vadd.f32 %v7178, %v7186
        %v7283 = vadd.f32 %v7179, %v7187
        %v7284 = vadd.f32 %v7180, %v7188
        %v7285 = vadd.f32 %v7181, %v7189
        %v7286 = vadd.f32 %v7182, %v7190
        %v7287 = vadd.f32 %v7183, %v7191
        %v7288 = vadd.f32 %v7184, %v7192
        %v7289 = vadd.f32 %v7193, %v7201
        %v7290 = vadd.f32 %v7194, %v7202
        %v7291 = vadd.f32 %v7195, %v7203
        %v7292 = vadd.f32 %v7196, %v7204
        %v7293 = vadd.f32 %v7197, %v7205
        %v7294 = vadd.f32 %v7198, %v7206
        %v7295 = vadd.f32 %v7199, %v7207
        %v7296 = vadd.f32 %v7200, %v7208
        %v7297 = vadd.f32 %v7209, %v7217
        %v7298 = vadd.f32 %v7210, %v7218
        %v7299 = vadd.f32 %v7211, %v7219
        %v7300 = vadd.f32 %v7212, %v7220
        %v7301 = vadd.f32 %v7213, %v7221
        %v7302 = vadd.f32 %v7214, %v7222
        %v7303 = vadd.f32 %v7215, %v7223
        %v7304 = vadd.f32 %v7216, %v7224
        %v7305 = vadd.f32 %v7225, %v7233
        %v7306 = vadd.f32 %v7226, %v7234
        %v7307 = vadd.f32 %v7227, %v7235
        %v7308 = vadd.f32 %v7228, %v7236
        %v7309 = vadd.f32 %v7229, %v7237
        %v7310 = vadd.f32 %v7230, %v7238
        %v7311 = vadd.f32 %v7231, %v7239
        %v7312 = vadd.f32 %v7232, %v7240
        %v7313 = vadd.f32 %v7241, %v7249
        %v7314 = vadd.f32 %v7242, %v7250
        %v7315 = vadd.f32 %v7243, %v7251
        %v7316 = vadd.f32 %v7244, %v7252
        %v7317 = vadd.f32 %v7245, %v7253
        %v7318 = vadd.f32 %v7246, %v7254
        %v7319 = vadd.f32 %v7247, %v7255
        %v7320 = vadd.f32 %v7248, %v7256
        %v7385 = vperm.slane %v2752, 0
        %v7386 = vperm.slane %v2753, 0
        %v7387 = vperm.slane %v2754, 0
        %v7388 = vperm.slane %v2755, 0
        %v7389 = vperm.slane %v2756, 0
        %v7390 = vperm.slane %v2757, 0
        %v7391 = vperm.slane %v2758, 0
        %v7392 = vperm.slane %v2759, 0
        %v7393 = vperm.slane %v2760, 0
        %v7394 = vperm.slane %v2761, 0
        %v7395 = vperm.slane %v2762, 0
        %v7396 = vperm.slane %v2763, 0
        %v7397 = vperm.slane %v2764, 0
        %v7398 = vperm.slane %v2765, 0
        %v7399 = vperm.slane %v2766, 0
        %v7400 = vperm.slane %v2767, 0
        %v7401 = vperm.slane %v2768, 0
        %v7402 = vperm.slane %v2769, 0
        %v7403 = vperm.slane %v2770, 0
        %v7404 = vperm.slane %v2771, 0
        %v7405 = vperm.slane %v2772, 0
        %v7406 = vperm.slane %v2773, 0
        %v7407 = vperm.slane %v2774, 0
        %v7408 = vperm.slane %v2775, 0
        %v7409 = vperm.slane %v2776, 0
        %v7410 = vperm.slane %v2777, 0
        %v7411 = vperm.slane %v2778, 0
        %v7412 = vperm.slane %v2779, 0
        %v7413 = vperm.slane %v2780, 0
        %v7414 = vperm.slane %v2781, 0
        %v7415 = vperm.slane %v2782, 0
        %v7416 = vperm.slane %v2783, 0
        %v7417 = vperm.slane %v2784, 0
        %v7418 = vperm.slane %v2785, 0
        %v7419 = vperm.slane %v2786, 0
        %v7420 = vperm.slane %v2787, 0
        %v7421 = vperm.slane %v2788, 0
        %v7422 = vperm.slane %v2789, 0
        %v7423 = vperm.slane %v2790, 0
        %v7424 = vperm.slane %v2791, 0
        %v7425 = vperm.slane %v2792, 0
        %v7426 = vperm.slane %v2793, 0
        %v7427 = vperm.slane %v2794, 0
        %v7428 = vperm.slane %v2795, 0
        %v7429 = vperm.slane %v2796, 0
        %v7430 = vperm.slane %v2797, 0
        %v7431 = vperm.slane %v2798, 0
        %v7432 = vperm.slane %v2799, 0
        %v7433 = vperm.slane %v2800, 0
        %v7434 = vperm.slane %v2801, 0
        %v7435 = vperm.slane %v2802, 0
        %v7436 = vperm.slane %v2803, 0
        %v7437 = vperm.slane %v2804, 0
        %v7438 = vperm.slane %v2805, 0
        %v7439 = vperm.slane %v2806, 0
        %v7440 = vperm.slane %v2807, 0
        %v7441 = vperm.slane %v2808, 0
        %v7442 = vperm.slane %v2809, 0
        %v7443 = vperm.slane %v2810, 0
        %v7444 = vperm.slane %v2811, 0
        %v7445 = vperm.slane %v2812, 0
        %v7446 = vperm.slane %v2813, 0
        %v7447 = vperm.slane %v2814, 0
        %v7448 = vperm.slane %v2815, 0
        %vm7449 = vcmask 1041409
        %v7450 = vsel %vm7449, %v7386, %v7385
        %v7451 = vsel %vm2831, %v7387, %v7450
        %vm7452 = vcmask 1043459
        %v7453 = vsel %vm7452, %v7388, %v7451
        %v7454 = vsel %vm2833, %v7389, %v7453
        %vm7455 = vcmask 1045509
        %v7456 = vsel %vm7455, %v7390, %v7454
        %v7457 = vsel %vm2835, %v7391, %v7456
        %vm7458 = vcmask 1047559
        %v7459 = vsel %vm7458, %v7392, %v7457
        %v7460 = vsel %vm7449, %v7394, %v7393
        %v7461 = vsel %vm2831, %v7395, %v7460
        %v7462 = vsel %vm7452, %v7396, %v7461
        %v7463 = vsel %vm2833, %v7397, %v7462
        %v7464 = vsel %vm7455, %v7398, %v7463
        %v7465 = vsel %vm2835, %v7399, %v7464
        %v7466 = vsel %vm7458, %v7400, %v7465
        %v7467 = vsel %vm7449, %v7402, %v7401
        %v7468 = vsel %vm2831, %v7403, %v7467
        %v7469 = vsel %vm7452, %v7404, %v7468
        %v7470 = vsel %vm2833, %v7405, %v7469
        %v7471 = vsel %vm7455, %v7406, %v7470
        %v7472 = vsel %vm2835, %v7407, %v7471
        %v7473 = vsel %vm7458, %v7408, %v7472
        %v7474 = vsel %vm7449, %v7410, %v7409
        %v7475 = vsel %vm2831, %v7411, %v7474
        %v7476 = vsel %vm7452, %v7412, %v7475
        %v7477 = vsel %vm2833, %v7413, %v7476
        %v7478 = vsel %vm7455, %v7414, %v7477
        %v7479 = vsel %vm2835, %v7415, %v7478
        %v7480 = vsel %vm7458, %v7416, %v7479
        %v7481 = vsel %vm7449, %v7418, %v7417
        %v7482 = vsel %vm2831, %v7419, %v7481
        %v7483 = vsel %vm7452, %v7420, %v7482
        %v7484 = vsel %vm2833, %v7421, %v7483
        %v7485 = vsel %vm7455, %v7422, %v7484
        %v7486 = vsel %vm2835, %v7423, %v7485
        %v7487 = vsel %vm7458, %v7424, %v7486
        %v7488 = vsel %vm7449, %v7426, %v7425
        %v7489 = vsel %vm2831, %v7427, %v7488
        %v7490 = vsel %vm7452, %v7428, %v7489
        %v7491 = vsel %vm2833, %v7429, %v7490
        %v7492 = vsel %vm7455, %v7430, %v7491
        %v7493 = vsel %vm2835, %v7431, %v7492
        %v7494 = vsel %vm7458, %v7432, %v7493
        %v7495 = vsel %vm7449, %v7434, %v7433
        %v7496 = vsel %vm2831, %v7435, %v7495
        %v7497 = vsel %vm7452, %v7436, %v7496
        %v7498 = vsel %vm2833, %v7437, %v7497
        %v7499 = vsel %vm7455, %v7438, %v7498
        %v7500 = vsel %vm2835, %v7439, %v7499
        %v7501 = vsel %vm7458, %v7440, %v7500
        %v7502 = vsel %vm7449, %v7442, %v7441
        %v7503 = vsel %vm2831, %v7443, %v7502
        %v7504 = vsel %vm7452, %v7444, %v7503
        %v7505 = vsel %vm2833, %v7445, %v7504
        %v7506 = vsel %vm7455, %v7446, %v7505
        %v7507 = vsel %vm2835, %v7447, %v7506
        %v7508 = vsel %vm7458, %v7448, %v7507
        %v7581 = vperm.slane %v3621, 0
        %v7582 = vperm.slane %v3622, 0
        %v7583 = vperm.slane %v3623, 0
        %v7584 = vperm.slane %v3624, 0
        %v7585 = vperm.slane %v3625, 0
        %v7586 = vperm.slane %v3626, 0
        %v7587 = vperm.slane %v3627, 0
        %v7588 = vperm.slane %v3628, 0
        %v7589 = vperm.slane %v3629, 0
        %v7590 = vperm.slane %v3630, 0
        %v7591 = vperm.slane %v3631, 0
        %v7592 = vperm.slane %v3632, 0
        %v7593 = vperm.slane %v3633, 0
        %v7594 = vperm.slane %v3634, 0
        %v7595 = vperm.slane %v3635, 0
        %v7596 = vperm.slane %v3636, 0
        %v7597 = vperm.slane %v3637, 0
        %v7598 = vperm.slane %v3638, 0
        %v7599 = vperm.slane %v3639, 0
        %v7600 = vperm.slane %v3640, 0
        %v7601 = vperm.slane %v3641, 0
        %v7602 = vperm.slane %v3642, 0
        %v7603 = vperm.slane %v3643, 0
        %v7604 = vperm.slane %v3644, 0
        %v7605 = vperm.slane %v3645, 0
        %v7606 = vperm.slane %v3646, 0
        %v7607 = vperm.slane %v3647, 0
        %v7608 = vperm.slane %v3648, 0
        %v7609 = vperm.slane %v3649, 0
        %v7610 = vperm.slane %v3650, 0
        %v7611 = vperm.slane %v3651, 0
        %v7612 = vperm.slane %v3652, 0
        %v7613 = vperm.slane %v3653, 0
        %v7614 = vperm.slane %v3654, 0
        %v7615 = vperm.slane %v3655, 0
        %v7616 = vperm.slane %v3656, 0
        %v7617 = vperm.slane %v3657, 0
        %v7618 = vperm.slane %v3658, 0
        %v7619 = vperm.slane %v3659, 0
        %v7620 = vperm.slane %v3660, 0
        %v7621 = vperm.slane %v3661, 0
        %v7622 = vperm.slane %v3662, 0
        %v7623 = vperm.slane %v3663, 0
        %v7624 = vperm.slane %v3664, 0
        %v7625 = vperm.slane %v3665, 0
        %v7626 = vperm.slane %v3666, 0
        %v7627 = vperm.slane %v3667, 0
        %v7628 = vperm.slane %v3668, 0
        %v7629 = vperm.slane %v3669, 0
        %v7630 = vperm.slane %v3670, 0
        %v7631 = vperm.slane %v3671, 0
        %v7632 = vperm.slane %v3672, 0
        %v7633 = vperm.slane %v3673, 0
        %v7634 = vperm.slane %v3674, 0
        %v7635 = vperm.slane %v3675, 0
        %v7636 = vperm.slane %v3676, 0
        %v7637 = vperm.slane %v3677, 0
        %v7638 = vperm.slane %v3678, 0
        %v7639 = vperm.slane %v3679, 0
        %v7640 = vperm.slane %v3680, 0
        %v7641 = vperm.slane %v3681, 0
        %v7642 = vperm.slane %v3682, 0
        %v7643 = vperm.slane %v3683, 0
        %v7644 = vperm.slane %v3684, 0
        %v7645 = vsel %vm7449, %v7582, %v7581
        %v7646 = vsel %vm2831, %v7583, %v7645
        %v7647 = vsel %vm7452, %v7584, %v7646
        %v7648 = vsel %vm2833, %v7585, %v7647
        %v7649 = vsel %vm7455, %v7586, %v7648
        %v7650 = vsel %vm2835, %v7587, %v7649
        %v7651 = vsel %vm7458, %v7588, %v7650
        %v7652 = vsel %vm7449, %v7590, %v7589
        %v7653 = vsel %vm2831, %v7591, %v7652
        %v7654 = vsel %vm7452, %v7592, %v7653
        %v7655 = vsel %vm2833, %v7593, %v7654
        %v7656 = vsel %vm7455, %v7594, %v7655
        %v7657 = vsel %vm2835, %v7595, %v7656
        %v7658 = vsel %vm7458, %v7596, %v7657
        %v7659 = vsel %vm7449, %v7598, %v7597
        %v7660 = vsel %vm2831, %v7599, %v7659
        %v7661 = vsel %vm7452, %v7600, %v7660
        %v7662 = vsel %vm2833, %v7601, %v7661
        %v7663 = vsel %vm7455, %v7602, %v7662
        %v7664 = vsel %vm2835, %v7603, %v7663
        %v7665 = vsel %vm7458, %v7604, %v7664
        %v7666 = vsel %vm7449, %v7606, %v7605
        %v7667 = vsel %vm2831, %v7607, %v7666
        %v7668 = vsel %vm7452, %v7608, %v7667
        %v7669 = vsel %vm2833, %v7609, %v7668
        %v7670 = vsel %vm7455, %v7610, %v7669
        %v7671 = vsel %vm2835, %v7611, %v7670
        %v7672 = vsel %vm7458, %v7612, %v7671
        %v7673 = vsel %vm7449, %v7614, %v7613
        %v7674 = vsel %vm2831, %v7615, %v7673
        %v7675 = vsel %vm7452, %v7616, %v7674
        %v7676 = vsel %vm2833, %v7617, %v7675
        %v7677 = vsel %vm7455, %v7618, %v7676
        %v7678 = vsel %vm2835, %v7619, %v7677
        %v7679 = vsel %vm7458, %v7620, %v7678
        %v7680 = vsel %vm7449, %v7622, %v7621
        %v7681 = vsel %vm2831, %v7623, %v7680
        %v7682 = vsel %vm7452, %v7624, %v7681
        %v7683 = vsel %vm2833, %v7625, %v7682
        %v7684 = vsel %vm7455, %v7626, %v7683
        %v7685 = vsel %vm2835, %v7627, %v7684
        %v7686 = vsel %vm7458, %v7628, %v7685
        %v7687 = vsel %vm7449, %v7630, %v7629
        %v7688 = vsel %vm2831, %v7631, %v7687
        %v7689 = vsel %vm7452, %v7632, %v7688
        %v7690 = vsel %vm2833, %v7633, %v7689
        %v7691 = vsel %vm7455, %v7634, %v7690
        %v7692 = vsel %vm2835, %v7635, %v7691
        %v7693 = vsel %vm7458, %v7636, %v7692
        %v7694 = vsel %vm7449, %v7638, %v7637
        %v7695 = vsel %vm2831, %v7639, %v7694
        %v7696 = vsel %vm7452, %v7640, %v7695
        %v7697 = vsel %vm2833, %v7641, %v7696
        %v7698 = vsel %vm7455, %v7642, %v7697
        %v7699 = vsel %vm2835, %v7643, %v7698
        %v7700 = vsel %vm7458, %v7644, %v7699
        %7701 = vrot.lane.b32.xlu0 %v7651, 8
        %v7702 = vpop.permute.xlu0 %7701
        %7703 = vrot.lane.b32.xlu0 %v7658, 8
        %v7704 = vpop.permute.xlu0 %7703
        %7705 = vrot.lane.b32.xlu0 %v7665, 8
        %v7706 = vpop.permute.xlu0 %7705
        %7707 = vrot.lane.b32.xlu0 %v7672, 8
        %v7708 = vpop.permute.xlu0 %7707
        %7709 = vrot.lane.b32.xlu0 %v7679, 8
        %v7710 = vpop.permute.xlu0 %7709
        %7711 = vrot.lane.b32.xlu0 %v7686, 8
        %v7712 = vpop.permute.xlu0 %7711
        %7713 = vrot.lane.b32.xlu0 %v7693, 8
        %v7714 = vpop.permute.xlu0 %7713
        %7715 = vrot.lane.b32.xlu0 %v7700, 8
        %v7716 = vpop.permute.xlu0 %7715
        %v7789 = vperm.slane %v4508, 0
        %v7790 = vperm.slane %v4509, 0
        %v7791 = vperm.slane %v4510, 0
        %v7792 = vperm.slane %v4511, 0
        %v7793 = vperm.slane %v4512, 0
        %v7794 = vperm.slane %v4513, 0
        %v7795 = vperm.slane %v4514, 0
        %v7796 = vperm.slane %v4515, 0
        %v7797 = vperm.slane %v4516, 0
        %v7798 = vperm.slane %v4517, 0
        %v7799 = vperm.slane %v4518, 0
        %v7800 = vperm.slane %v4519, 0
        %v7801 = vperm.slane %v4520, 0
        %v7802 = vperm.slane %v4521, 0
        %v7803 = vperm.slane %v4522, 0
        %v7804 = vperm.slane %v4523, 0
        %v7805 = vperm.slane %v4524, 0
        %v7806 = vperm.slane %v4525, 0
        %v7807 = vperm.slane %v4526, 0
        %v7808 = vperm.slane %v4527, 0
        %v7809 = vperm.slane %v4528, 0
        %v7810 = vperm.slane %v4529, 0
        %v7811 = vperm.slane %v4530, 0
        %v7812 = vperm.slane %v4531, 0
        %v7813 = vperm.slane %v4532, 0
        %v7814 = vperm.slane %v4533, 0
        %v7815 = vperm.slane %v4534, 0
        %v7816 = vperm.slane %v4535, 0
        %v7817 = vperm.slane %v4536, 0
        %v7818 = vperm.slane %v4537, 0
        %v7819 = vperm.slane %v4538, 0
        %v7820 = vperm.slane %v4539, 0
        %v7821 = vperm.slane %v4540, 0
        %v7822 = vperm.slane %v4541, 0
        %v7823 = vperm.slane %v4542, 0
        %v7824 = vperm.slane %v4543, 0
        %v7825 = vperm.slane %v4544, 0
        %v7826 = vperm.slane %v4545, 0
        %v7827 = vperm.slane %v4546, 0
        %v7828 = vperm.slane %v4547, 0
        %v7829 = vperm.slane %v4548, 0
        %v7830 = vperm.slane %v4549, 0
        %v7831 = vperm.slane %v4550, 0
        %v7832 = vperm.slane %v4551, 0
        %v7833 = vperm.slane %v4552, 0
        %v7834 = vperm.slane %v4553, 0
        %v7835 = vperm.slane %v4554, 0
        %v7836 = vperm.slane %v4555, 0
        %v7837 = vperm.slane %v4556, 0
        %v7838 = vperm.slane %v4557, 0
        %v7839 = vperm.slane %v4558, 0
        %v7840 = vperm.slane %v4559, 0
        %v7841 = vperm.slane %v4560, 0
        %v7842 = vperm.slane %v4561, 0
        %v7843 = vperm.slane %v4562, 0
        %v7844 = vperm.slane %v4563, 0
        %v7845 = vperm.slane %v4564, 0
        %v7846 = vperm.slane %v4565, 0
        %v7847 = vperm.slane %v4566, 0
        %v7848 = vperm.slane %v4567, 0
        %v7849 = vperm.slane %v4568, 0
        %v7850 = vperm.slane %v4569, 0
        %v7851 = vperm.slane %v4570, 0
        %v7852 = vperm.slane %v4571, 0
        %v7853 = vsel %vm7449, %v7790, %v7789
        %v7854 = vsel %vm2831, %v7791, %v7853
        %v7855 = vsel %vm7452, %v7792, %v7854
        %v7856 = vsel %vm2833, %v7793, %v7855
        %v7857 = vsel %vm7455, %v7794, %v7856
        %v7858 = vsel %vm2835, %v7795, %v7857
        %v7859 = vsel %vm7458, %v7796, %v7858
        %v7860 = vsel %vm7449, %v7798, %v7797
        %v7861 = vsel %vm2831, %v7799, %v7860
        %v7862 = vsel %vm7452, %v7800, %v7861
        %v7863 = vsel %vm2833, %v7801, %v7862
        %v7864 = vsel %vm7455, %v7802, %v7863
        %v7865 = vsel %vm2835, %v7803, %v7864
        %v7866 = vsel %vm7458, %v7804, %v7865
        %v7867 = vsel %vm7449, %v7806, %v7805
        %v7868 = vsel %vm2831, %v7807, %v7867
        %v7869 = vsel %vm7452, %v7808, %v7868
        %v7870 = vsel %vm2833, %v7809, %v7869
        %v7871 = vsel %vm7455, %v7810, %v7870
        %v7872 = vsel %vm2835, %v7811, %v7871
        %v7873 = vsel %vm7458, %v7812, %v7872
        %v7874 = vsel %vm7449, %v7814, %v7813
        %v7875 = vsel %vm2831, %v7815, %v7874
        %v7876 = vsel %vm7452, %v7816, %v7875
        %v7877 = vsel %vm2833, %v7817, %v7876
        %v7878 = vsel %vm7455, %v7818, %v7877
        %v7879 = vsel %vm2835, %v7819, %v7878
        %v7880 = vsel %vm7458, %v7820, %v7879
        %v7881 = vsel %vm7449, %v7822, %v7821
        %v7882 = vsel %vm2831, %v7823, %v7881
        %v7883 = vsel %vm7452, %v7824, %v7882
        %v7884 = vsel %vm2833, %v7825, %v7883
        %v7885 = vsel %vm7455, %v7826, %v7884
        %v7886 = vsel %vm2835, %v7827, %v7885
        %v7887 = vsel %vm7458, %v7828, %v7886
        %v7888 = vsel %vm7449, %v7830, %v7829
        %v7889 = vsel %vm2831, %v7831, %v7888
        %v7890 = vsel %vm7452, %v7832, %v7889
        %v7891 = vsel %vm2833, %v7833, %v7890
        %v7892 = vsel %vm7455, %v7834, %v7891
        %v7893 = vsel %vm2835, %v7835, %v7892
        %v7894 = vsel %vm7458, %v7836, %v7893
        %v7895 = vsel %vm7449, %v7838, %v7837
        %v7896 = vsel %vm2831, %v7839, %v7895
        %v7897 = vsel %vm7452, %v7840, %v7896
        %v7898 = vsel %vm2833, %v7841, %v7897
        %v7899 = vsel %vm7455, %v7842, %v7898
        %v7900 = vsel %vm2835, %v7843, %v7899
        %v7901 = vsel %vm7458, %v7844, %v7900
        %v7902 = vsel %vm7449, %v7846, %v7845
        %v7903 = vsel %vm2831, %v7847, %v7902
        %v7904 = vsel %vm7452, %v7848, %v7903
        %v7905 = vsel %vm2833, %v7849, %v7904
        %v7906 = vsel %vm7455, %v7850, %v7905
        %v7907 = vsel %vm2835, %v7851, %v7906
        %v7908 = vsel %vm7458, %v7852, %v7907
        %7909 = vrot.lane.b32.xlu0 %v7859, 16
        %v7910 = vpop.permute.xlu0 %7909
        %7911 = vrot.lane.b32.xlu0 %v7866, 16
        %v7912 = vpop.permute.xlu0 %7911
        %7913 = vrot.lane.b32.xlu0 %v7873, 16
        %v7914 = vpop.permute.xlu0 %7913
        %7915 = vrot.lane.b32.xlu0 %v7880, 16
        %v7916 = vpop.permute.xlu0 %7915
        %7917 = vrot.lane.b32.xlu0 %v7887, 16
        %v7918 = vpop.permute.xlu0 %7917
        %7919 = vrot.lane.b32.xlu0 %v7894, 16
        %v7920 = vpop.permute.xlu0 %7919
        %7921 = vrot.lane.b32.xlu0 %v7901, 16
        %v7922 = vpop.permute.xlu0 %7921
        %7923 = vrot.lane.b32.xlu0 %v7908, 16
        %v7924 = vpop.permute.xlu0 %7923
        %v7997 = vperm.slane %v4617, 0
        %v7998 = vperm.slane %v4618, 0
        %v7999 = vperm.slane %v4619, 0
        %v8000 = vperm.slane %v4620, 0
        %v8001 = vperm.slane %v4621, 0
        %v8002 = vperm.slane %v4622, 0
        %v8003 = vperm.slane %v4623, 0
        %v8004 = vperm.slane %v4624, 0
        %v8005 = vperm.slane %v4625, 0
        %v8006 = vperm.slane %v4626, 0
        %v8007 = vperm.slane %v4627, 0
        %v8008 = vperm.slane %v4628, 0
        %v8009 = vperm.slane %v4629, 0
        %v8010 = vperm.slane %v4630, 0
        %v8011 = vperm.slane %v4631, 0
        %v8012 = vperm.slane %v4632, 0
        %v8013 = vperm.slane %v4633, 0
        %v8014 = vperm.slane %v4634, 0
        %v8015 = vperm.slane %v4635, 0
        %v8016 = vperm.slane %v4636, 0
        %v8017 = vperm.slane %v4637, 0
        %v8018 = vperm.slane %v4638, 0
        %v8019 = vperm.slane %v4639, 0
        %v8020 = vperm.slane %v4640, 0
        %v8021 = vperm.slane %v4641, 0
        %v8022 = vperm.slane %v4642, 0
        %v8023 = vperm.slane %v4643, 0
        %v8024 = vperm.slane %v4644, 0
        %v8025 = vperm.slane %v4645, 0
        %v8026 = vperm.slane %v4646, 0
        %v8027 = vperm.slane %v4647, 0
        %v8028 = vperm.slane %v4648, 0
        %v8029 = vperm.slane %v4649, 0
        %v8030 = vperm.slane %v4650, 0
        %v8031 = vperm.slane %v4651, 0
        %v8032 = vperm.slane %v4652, 0
        %v8033 = vperm.slane %v4653, 0
        %v8034 = vperm.slane %v4654, 0
        %v8035 = vperm.slane %v4655, 0
        %v8036 = vperm.slane %v4656, 0
        %v8037 = vperm.slane %v4657, 0
        %v8038 = vperm.slane %v4658, 0
        %v8039 = vperm.slane %v4659, 0
        %v8040 = vperm.slane %v4660, 0
        %v8041 = vperm.slane %v4661, 0
        %v8042 = vperm.slane %v4662, 0
        %v8043 = vperm.slane %v4663, 0
        %v8044 = vperm.slane %v4664, 0
        %v8045 = vperm.slane %v4665, 0
        %v8046 = vperm.slane %v4666, 0
        %v8047 = vperm.slane %v4667, 0
        %v8048 = vperm.slane %v4668, 0
        %v8049 = vperm.slane %v4669, 0
        %v8050 = vperm.slane %v4670, 0
        %v8051 = vperm.slane %v4671, 0
        %v8052 = vperm.slane %v4672, 0
        %v8053 = vperm.slane %v4673, 0
        %v8054 = vperm.slane %v4674, 0
        %v8055 = vperm.slane %v4675, 0
        %v8056 = vperm.slane %v4676, 0
        %v8057 = vperm.slane %v4677, 0
        %v8058 = vperm.slane %v4678, 0
        %v8059 = vperm.slane %v4679, 0
        %v8060 = vperm.slane %v4680, 0
        %v8061 = vsel %vm7449, %v7998, %v7997
        %v8062 = vsel %vm2831, %v7999, %v8061
        %v8063 = vsel %vm7452, %v8000, %v8062
        %v8064 = vsel %vm2833, %v8001, %v8063
        %v8065 = vsel %vm7455, %v8002, %v8064
        %v8066 = vsel %vm2835, %v8003, %v8065
        %v8067 = vsel %vm7458, %v8004, %v8066
        %v8068 = vsel %vm7449, %v8006, %v8005
        %v8069 = vsel %vm2831, %v8007, %v8068
        %v8070 = vsel %vm7452, %v8008, %v8069
        %v8071 = vsel %vm2833, %v8009, %v8070
        %v8072 = vsel %vm7455, %v8010, %v8071
        %v8073 = vsel %vm2835, %v8011, %v8072
        %v8074 = vsel %vm7458, %v8012, %v8073
        %v8075 = vsel %vm7449, %v8014, %v8013
        %v8076 = vsel %vm2831, %v8015, %v8075
        %v8077 = vsel %vm7452, %v8016, %v8076
        %v8078 = vsel %vm2833, %v8017, %v8077
        %v8079 = vsel %vm7455, %v8018, %v8078
        %v8080 = vsel %vm2835, %v8019, %v8079
        %v8081 = vsel %vm7458, %v8020, %v8080
        %v8082 = vsel %vm7449, %v8022, %v8021
        %v8083 = vsel %vm2831, %v8023, %v8082
        %v8084 = vsel %vm7452, %v8024, %v8083
        %v8085 = vsel %vm2833, %v8025, %v8084
        %v8086 = vsel %vm7455, %v8026, %v8085
        %v8087 = vsel %vm2835, %v8027, %v8086
        %v8088 = vsel %vm7458, %v8028, %v8087
        %v8089 = vsel %vm7449, %v8030, %v8029
        %v8090 = vsel %vm2831, %v8031, %v8089
        %v8091 = vsel %vm7452, %v8032, %v8090
        %v8092 = vsel %vm2833, %v8033, %v8091
        %v8093 = vsel %vm7455, %v8034, %v8092
        %v8094 = vsel %vm2835, %v8035, %v8093
        %v8095 = vsel %vm7458, %v8036, %v8094
        %v8096 = vsel %vm7449, %v8038, %v8037
        %v8097 = vsel %vm2831, %v8039, %v8096
        %v8098 = vsel %vm7452, %v8040, %v8097
        %v8099 = vsel %vm2833, %v8041, %v8098
        %v8100 = vsel %vm7455, %v8042, %v8099
        %v8101 = vsel %vm2835, %v8043, %v8100
        %v8102 = vsel %vm7458, %v8044, %v8101
        %v8103 = vsel %vm7449, %v8046, %v8045
        %v8104 = vsel %vm2831, %v8047, %v8103
        %v8105 = vsel %vm7452, %v8048, %v8104
        %v8106 = vsel %vm2833, %v8049, %v8105
        %v8107 = vsel %vm7455, %v8050, %v8106
        %v8108 = vsel %vm2835, %v8051, %v8107
        %v8109 = vsel %vm7458, %v8052, %v8108
        %v8110 = vsel %vm7449, %v8054, %v8053
        %v8111 = vsel %vm2831, %v8055, %v8110
        %v8112 = vsel %vm7452, %v8056, %v8111
        %v8113 = vsel %vm2833, %v8057, %v8112
        %v8114 = vsel %vm7455, %v8058, %v8113
        %v8115 = vsel %vm2835, %v8059, %v8114
        %v8116 = vsel %vm7458, %v8060, %v8115
        %8117 = vrot.lane.b32.xlu0 %v8067, 24
        %v8118 = vpop.permute.xlu0 %8117
        %8119 = vrot.lane.b32.xlu0 %v8074, 24
        %v8120 = vpop.permute.xlu0 %8119
        %8121 = vrot.lane.b32.xlu0 %v8081, 24
        %v8122 = vpop.permute.xlu0 %8121
        %8123 = vrot.lane.b32.xlu0 %v8088, 24
        %v8124 = vpop.permute.xlu0 %8123
        %8125 = vrot.lane.b32.xlu0 %v8095, 24
        %v8126 = vpop.permute.xlu0 %8125
        %8127 = vrot.lane.b32.xlu0 %v8102, 24
        %v8128 = vpop.permute.xlu0 %8127
        %8129 = vrot.lane.b32.xlu0 %v8109, 24
        %v8130 = vpop.permute.xlu0 %8129
        %8131 = vrot.lane.b32.xlu0 %v8116, 24
        %v8132 = vpop.permute.xlu0 %8131
        %v8205 = vperm.slane %v4731, 0
        %v8206 = vperm.slane %v4732, 0
        %v8207 = vperm.slane %v4733, 0
        %v8208 = vperm.slane %v4734, 0
        %v8209 = vperm.slane %v4735, 0
        %v8210 = vperm.slane %v4736, 0
        %v8211 = vperm.slane %v4737, 0
        %v8212 = vperm.slane %v4738, 0
        %v8213 = vperm.slane %v4739, 0
        %v8214 = vperm.slane %v4740, 0
        %v8215 = vperm.slane %v4741, 0
        %v8216 = vperm.slane %v4742, 0
        %v8217 = vperm.slane %v4743, 0
        %v8218 = vperm.slane %v4744, 0
        %v8219 = vperm.slane %v4745, 0
        %v8220 = vperm.slane %v4746, 0
        %v8221 = vperm.slane %v4747, 0
        %v8222 = vperm.slane %v4748, 0
        %v8223 = vperm.slane %v4749, 0
        %v8224 = vperm.slane %v4750, 0
        %v8225 = vperm.slane %v4751, 0
        %v8226 = vperm.slane %v4752, 0
        %v8227 = vperm.slane %v4753, 0
        %v8228 = vperm.slane %v4754, 0
        %v8229 = vperm.slane %v4755, 0
        %v8230 = vperm.slane %v4756, 0
        %v8231 = vperm.slane %v4757, 0
        %v8232 = vperm.slane %v4758, 0
        %v8233 = vperm.slane %v4759, 0
        %v8234 = vperm.slane %v4760, 0
        %v8235 = vperm.slane %v4761, 0
        %v8236 = vperm.slane %v4762, 0
        %v8237 = vperm.slane %v4763, 0
        %v8238 = vperm.slane %v4764, 0
        %v8239 = vperm.slane %v4765, 0
        %v8240 = vperm.slane %v4766, 0
        %v8241 = vperm.slane %v4767, 0
        %v8242 = vperm.slane %v4768, 0
        %v8243 = vperm.slane %v4769, 0
        %v8244 = vperm.slane %v4770, 0
        %v8245 = vperm.slane %v4771, 0
        %v8246 = vperm.slane %v4772, 0
        %v8247 = vperm.slane %v4773, 0
        %v8248 = vperm.slane %v4774, 0
        %v8249 = vperm.slane %v4775, 0
        %v8250 = vperm.slane %v4776, 0
        %v8251 = vperm.slane %v4777, 0
        %v8252 = vperm.slane %v4778, 0
        %v8253 = vperm.slane %v4779, 0
        %v8254 = vperm.slane %v4780, 0
        %v8255 = vperm.slane %v4781, 0
        %v8256 = vperm.slane %v4782, 0
        %v8257 = vperm.slane %v4783, 0
        %v8258 = vperm.slane %v4784, 0
        %v8259 = vperm.slane %v4785, 0
        %v8260 = vperm.slane %v4786, 0
        %v8261 = vperm.slane %v4787, 0
        %v8262 = vperm.slane %v4788, 0
        %v8263 = vperm.slane %v4789, 0
        %v8264 = vperm.slane %v4790, 0
        %v8265 = vperm.slane %v4791, 0
        %v8266 = vperm.slane %v4792, 0
        %v8267 = vperm.slane %v4793, 0
        %v8268 = vperm.slane %v4794, 0
        %v8269 = vsel %vm7449, %v8206, %v8205
        %v8270 = vsel %vm2831, %v8207, %v8269
        %v8271 = vsel %vm7452, %v8208, %v8270
        %v8272 = vsel %vm2833, %v8209, %v8271
        %v8273 = vsel %vm7455, %v8210, %v8272
        %v8274 = vsel %vm2835, %v8211, %v8273
        %v8275 = vsel %vm7458, %v8212, %v8274
        %v8276 = vsel %vm7449, %v8214, %v8213
        %v8277 = vsel %vm2831, %v8215, %v8276
        %v8278 = vsel %vm7452, %v8216, %v8277
        %v8279 = vsel %vm2833, %v8217, %v8278
        %v8280 = vsel %vm7455, %v8218, %v8279
        %v8281 = vsel %vm2835, %v8219, %v8280
        %v8282 = vsel %vm7458, %v8220, %v8281
        %v8283 = vsel %vm7449, %v8222, %v8221
        %v8284 = vsel %vm2831, %v8223, %v8283
        %v8285 = vsel %vm7452, %v8224, %v8284
        %v8286 = vsel %vm2833, %v8225, %v8285
        %v8287 = vsel %vm7455, %v8226, %v8286
        %v8288 = vsel %vm2835, %v8227, %v8287
        %v8289 = vsel %vm7458, %v8228, %v8288
        %v8290 = vsel %vm7449, %v8230, %v8229
        %v8291 = vsel %vm2831, %v8231, %v8290
        %v8292 = vsel %vm7452, %v8232, %v8291
        %v8293 = vsel %vm2833, %v8233, %v8292
        %v8294 = vsel %vm7455, %v8234, %v8293
        %v8295 = vsel %vm2835, %v8235, %v8294
        %v8296 = vsel %vm7458, %v8236, %v8295
        %v8297 = vsel %vm7449, %v8238, %v8237
        %v8298 = vsel %vm2831, %v8239, %v8297
        %v8299 = vsel %vm7452, %v8240, %v8298
        %v8300 = vsel %vm2833, %v8241, %v8299
        %v8301 = vsel %vm7455, %v8242, %v8300
        %v8302 = vsel %vm2835, %v8243, %v8301
        %v8303 = vsel %vm7458, %v8244, %v8302
        %v8304 = vsel %vm7449, %v8246, %v8245
        %v8305 = vsel %vm2831, %v8247, %v8304
        %v8306 = vsel %vm7452, %v8248, %v8305
        %v8307 = vsel %vm2833, %v8249, %v8306
        %v8308 = vsel %vm7455, %v8250, %v8307
        %v8309 = vsel %vm2835, %v8251, %v8308
        %v8310 = vsel %vm7458, %v8252, %v8309
        %v8311 = vsel %vm7449, %v8254, %v8253
        %v8312 = vsel %vm2831, %v8255, %v8311
        %v8313 = vsel %vm7452, %v8256, %v8312
        %v8314 = vsel %vm2833, %v8257, %v8313
        %v8315 = vsel %vm7455, %v8258, %v8314
        %v8316 = vsel %vm2835, %v8259, %v8315
        %v8317 = vsel %vm7458, %v8260, %v8316
        %v8318 = vsel %vm7449, %v8262, %v8261
        %v8319 = vsel %vm2831, %v8263, %v8318
        %v8320 = vsel %vm7452, %v8264, %v8319
        %v8321 = vsel %vm2833, %v8265, %v8320
        %v8322 = vsel %vm7455, %v8266, %v8321
        %v8323 = vsel %vm2835, %v8267, %v8322
        %v8324 = vsel %vm7458, %v8268, %v8323
        %8325 = vrot.lane.b32.xlu0 %v8275, 32
        %v8326 = vpop.permute.xlu0 %8325
        %8327 = vrot.lane.b32.xlu0 %v8282, 32
        %v8328 = vpop.permute.xlu0 %8327
        %8329 = vrot.lane.b32.xlu0 %v8289, 32
        %v8330 = vpop.permute.xlu0 %8329
        %8331 = vrot.lane.b32.xlu0 %v8296, 32
        %v8332 = vpop.permute.xlu0 %8331
        %8333 = vrot.lane.b32.xlu0 %v8303, 32
        %v8334 = vpop.permute.xlu0 %8333
        %8335 = vrot.lane.b32.xlu0 %v8310, 32
        %v8336 = vpop.permute.xlu0 %8335
        %8337 = vrot.lane.b32.xlu0 %v8317, 32
        %v8338 = vpop.permute.xlu0 %8337
        %8339 = vrot.lane.b32.xlu0 %v8324, 32
        %v8340 = vpop.permute.xlu0 %8339
        %v8413 = vperm.slane %v5618, 0
        %v8414 = vperm.slane %v5619, 0
        %v8415 = vperm.slane %v5620, 0
        %v8416 = vperm.slane %v5621, 0
        %v8417 = vperm.slane %v5622, 0
        %v8418 = vperm.slane %v5623, 0
        %v8419 = vperm.slane %v5624, 0
        %v8420 = vperm.slane %v5625, 0
        %v8421 = vperm.slane %v5626, 0
        %v8422 = vperm.slane %v5627, 0
        %v8423 = vperm.slane %v5628, 0
        %v8424 = vperm.slane %v5629, 0
        %v8425 = vperm.slane %v5630, 0
        %v8426 = vperm.slane %v5631, 0
        %v8427 = vperm.slane %v5632, 0
        %v8428 = vperm.slane %v5633, 0
        %v8429 = vperm.slane %v5634, 0
        %v8430 = vperm.slane %v5635, 0
        %v8431 = vperm.slane %v5636, 0
        %v8432 = vperm.slane %v5637, 0
        %v8433 = vperm.slane %v5638, 0
        %v8434 = vperm.slane %v5639, 0
        %v8435 = vperm.slane %v5640, 0
        %v8436 = vperm.slane %v5641, 0
        %v8437 = vperm.slane %v5642, 0
        %v8438 = vperm.slane %v5643, 0
        %v8439 = vperm.slane %v5644, 0
        %v8440 = vperm.slane %v5645, 0
        %v8441 = vperm.slane %v5646, 0
        %v8442 = vperm.slane %v5647, 0
        %v8443 = vperm.slane %v5648, 0
        %v8444 = vperm.slane %v5649, 0
        %v8445 = vperm.slane %v5650, 0
        %v8446 = vperm.slane %v5651, 0
        %v8447 = vperm.slane %v5652, 0
        %v8448 = vperm.slane %v5653, 0
        %v8449 = vperm.slane %v5654, 0
        %v8450 = vperm.slane %v5655, 0
        %v8451 = vperm.slane %v5656, 0
        %v8452 = vperm.slane %v5657, 0
        %v8453 = vperm.slane %v5658, 0
        %v8454 = vperm.slane %v5659, 0
        %v8455 = vperm.slane %v5660, 0
        %v8456 = vperm.slane %v5661, 0
        %v8457 = vperm.slane %v5662, 0
        %v8458 = vperm.slane %v5663, 0
        %v8459 = vperm.slane %v5664, 0
        %v8460 = vperm.slane %v5665, 0
        %v8461 = vperm.slane %v5666, 0
        %v8462 = vperm.slane %v5667, 0
        %v8463 = vperm.slane %v5668, 0
        %v8464 = vperm.slane %v5669, 0
        %v8465 = vperm.slane %v5670, 0
        %v8466 = vperm.slane %v5671, 0
        %v8467 = vperm.slane %v5672, 0
        %v8468 = vperm.slane %v5673, 0
        %v8469 = vperm.slane %v5674, 0
        %v8470 = vperm.slane %v5675, 0
        %v8471 = vperm.slane %v5676, 0
        %v8472 = vperm.slane %v5677, 0
        %v8473 = vperm.slane %v5678, 0
        %v8474 = vperm.slane %v5679, 0
        %v8475 = vperm.slane %v5680, 0
        %v8476 = vperm.slane %v5681, 0
        %v8477 = vsel %vm7449, %v8414, %v8413
        %v8478 = vsel %vm2831, %v8415, %v8477
        %v8479 = vsel %vm7452, %v8416, %v8478
        %v8480 = vsel %vm2833, %v8417, %v8479
        %v8481 = vsel %vm7455, %v8418, %v8480
        %v8482 = vsel %vm2835, %v8419, %v8481
        %v8483 = vsel %vm7458, %v8420, %v8482
        %v8484 = vsel %vm7449, %v8422, %v8421
        %v8485 = vsel %vm2831, %v8423, %v8484
        %v8486 = vsel %vm7452, %v8424, %v8485
        %v8487 = vsel %vm2833, %v8425, %v8486
        %v8488 = vsel %vm7455, %v8426, %v8487
        %v8489 = vsel %vm2835, %v8427, %v8488
        %v8490 = vsel %vm7458, %v8428, %v8489
        %v8491 = vsel %vm7449, %v8430, %v8429
        %v8492 = vsel %vm2831, %v8431, %v8491
        %v8493 = vsel %vm7452, %v8432, %v8492
        %v8494 = vsel %vm2833, %v8433, %v8493
        %v8495 = vsel %vm7455, %v8434, %v8494
        %v8496 = vsel %vm2835, %v8435, %v8495
        %v8497 = vsel %vm7458, %v8436, %v8496
        %v8498 = vsel %vm7449, %v8438, %v8437
        %v8499 = vsel %vm2831, %v8439, %v8498
        %v8500 = vsel %vm7452, %v8440, %v8499
        %v8501 = vsel %vm2833, %v8441, %v8500
        %v8502 = vsel %vm7455, %v8442, %v8501
        %v8503 = vsel %vm2835, %v8443, %v8502
        %v8504 = vsel %vm7458, %v8444, %v8503
        %v8505 = vsel %vm7449, %v8446, %v8445
        %v8506 = vsel %vm2831, %v8447, %v8505
        %v8507 = vsel %vm7452, %v8448, %v8506
        %v8508 = vsel %vm2833, %v8449, %v8507
        %v8509 = vsel %vm7455, %v8450, %v8508
        %v8510 = vsel %vm2835, %v8451, %v8509
        %v8511 = vsel %vm7458, %v8452, %v8510
        %v8512 = vsel %vm7449, %v8454, %v8453
        %v8513 = vsel %vm2831, %v8455, %v8512
        %v8514 = vsel %vm7452, %v8456, %v8513
        %v8515 = vsel %vm2833, %v8457, %v8514
        %v8516 = vsel %vm7455, %v8458, %v8515
        %v8517 = vsel %vm2835, %v8459, %v8516
        %v8518 = vsel %vm7458, %v8460, %v8517
        %v8519 = vsel %vm7449, %v8462, %v8461
        %v8520 = vsel %vm2831, %v8463, %v8519
        %v8521 = vsel %vm7452, %v8464, %v8520
        %v8522 = vsel %vm2833, %v8465, %v8521
        %v8523 = vsel %vm7455, %v8466, %v8522
        %v8524 = vsel %vm2835, %v8467, %v8523
        %v8525 = vsel %vm7458, %v8468, %v8524
        %v8526 = vsel %vm7449, %v8470, %v8469
        %v8527 = vsel %vm2831, %v8471, %v8526
        %v8528 = vsel %vm7452, %v8472, %v8527
        %v8529 = vsel %vm2833, %v8473, %v8528
        %v8530 = vsel %vm7455, %v8474, %v8529
        %v8531 = vsel %vm2835, %v8475, %v8530
        %v8532 = vsel %vm7458, %v8476, %v8531
        %8533 = vrot.lane.b32.xlu0 %v8483, 40
        %v8534 = vpop.permute.xlu0 %8533
        %8535 = vrot.lane.b32.xlu0 %v8490, 40
        %v8536 = vpop.permute.xlu0 %8535
        %8537 = vrot.lane.b32.xlu0 %v8497, 40
        %v8538 = vpop.permute.xlu0 %8537
        %8539 = vrot.lane.b32.xlu0 %v8504, 40
        %v8540 = vpop.permute.xlu0 %8539
        %8541 = vrot.lane.b32.xlu0 %v8511, 40
        %v8542 = vpop.permute.xlu0 %8541
        %8543 = vrot.lane.b32.xlu0 %v8518, 40
        %v8544 = vpop.permute.xlu0 %8543
        %8545 = vrot.lane.b32.xlu0 %v8525, 40
        %v8546 = vpop.permute.xlu0 %8545
        %8547 = vrot.lane.b32.xlu0 %v8532, 40
        %v8548 = vpop.permute.xlu0 %8547
        %v8565 = vperm.slane %v5682, 0
        %v8566 = vperm.slane %v5683, 0
        %v8567 = vperm.slane %v5684, 0
        %v8568 = vperm.slane %v5685, 0
        %v8569 = vperm.slane %v5686, 0
        %v8570 = vperm.slane %v5687, 0
        %v8571 = vperm.slane %v5688, 0
        %v8572 = vperm.slane %v5689, 0
        %v8573 = vsel %vm7449, %v8566, %v8565
        %v8574 = vsel %vm2831, %v8567, %v8573
        %v8575 = vsel %vm7452, %v8568, %v8574
        %v8576 = vsel %vm2833, %v8569, %v8575
        %v8577 = vsel %vm7455, %v8570, %v8576
        %v8578 = vsel %vm2835, %v8571, %v8577
        %v8579 = vsel %vm7458, %v8572, %v8578
        %8580 = vrot.lane.b32.xlu0 %v7466, 48
        %v8581 = vpop.permute.xlu0 %8580
        %8582 = vrot.lane.b32.xlu0 %v7473, 48
        %v8583 = vpop.permute.xlu0 %8582
        %8584 = vrot.lane.b32.xlu0 %v7480, 48
        %v8585 = vpop.permute.xlu0 %8584
        %8586 = vrot.lane.b32.xlu0 %v7487, 48
        %v8587 = vpop.permute.xlu0 %8586
        %8588 = vrot.lane.b32.xlu0 %v7494, 48
        %v8589 = vpop.permute.xlu0 %8588
        %8590 = vrot.lane.b32.xlu0 %v7501, 48
        %v8591 = vpop.permute.xlu0 %8590
        %8592 = vrot.lane.b32.xlu0 %v7508, 48
        %v8593 = vpop.permute.xlu0 %8592
        %8594 = vrot.lane.b32.xlu0 %v8579, 48
        %v8595 = vpop.permute.xlu0 %8594
        %v8612 = vperm.slane %v5690, 0
        %v8613 = vperm.slane %v5691, 0
        %v8614 = vperm.slane %v5692, 0
        %v8615 = vperm.slane %v5693, 0
        %v8616 = vperm.slane %v5694, 0
        %v8617 = vperm.slane %v5695, 0
        %v8618 = vperm.slane %v5696, 0
        %v8619 = vperm.slane %v5697, 0
        %v8620 = vsel %vm7449, %v8613, %v8612
        %v8621 = vsel %vm2831, %v8614, %v8620
        %v8622 = vsel %vm7452, %v8615, %v8621
        %v8623 = vsel %vm2833, %v8616, %v8622
        %v8624 = vsel %vm7455, %v8617, %v8623
        %v8625 = vsel %vm2835, %v8618, %v8624
        %v8626 = vsel %vm7458, %v8619, %v8625
        %8627 = vrot.lane.b32.xlu0 %v7658, 56
        %v8628 = vpop.permute.xlu0 %8627
        %8629 = vrot.lane.b32.xlu0 %v7665, 56
        %v8630 = vpop.permute.xlu0 %8629
        %8631 = vrot.lane.b32.xlu0 %v7672, 56
        %v8632 = vpop.permute.xlu0 %8631
        %8633 = vrot.lane.b32.xlu0 %v7679, 56
        %v8634 = vpop.permute.xlu0 %8633
        %8635 = vrot.lane.b32.xlu0 %v7686, 56
        %v8636 = vpop.permute.xlu0 %8635
        %8637 = vrot.lane.b32.xlu0 %v7693, 56
        %v8638 = vpop.permute.xlu0 %8637
        %8639 = vrot.lane.b32.xlu0 %v7700, 56
        %v8640 = vpop.permute.xlu0 %8639
        %8641 = vrot.lane.b32.xlu0 %v8626, 56
        %v8642 = vpop.permute.xlu0 %8641
        %v8715 = vperm.slane %v6521, 0
        %v8716 = vperm.slane %v6522, 0
        %v8717 = vperm.slane %v6523, 0
        %v8718 = vperm.slane %v6524, 0
        %v8719 = vperm.slane %v6525, 0
        %v8720 = vperm.slane %v6526, 0
        %v8721 = vperm.slane %v6527, 0
        %v8722 = vperm.slane %v6528, 0
        %v8723 = vperm.slane %v6529, 0
        %v8724 = vperm.slane %v6530, 0
        %v8725 = vperm.slane %v6531, 0
        %v8726 = vperm.slane %v6532, 0
        %v8727 = vperm.slane %v6533, 0
        %v8728 = vperm.slane %v6534, 0
        %v8729 = vperm.slane %v6535, 0
        %v8730 = vperm.slane %v6536, 0
        %v8731 = vperm.slane %v6537, 0
        %v8732 = vperm.slane %v6538, 0
        %v8733 = vperm.slane %v6539, 0
        %v8734 = vperm.slane %v6540, 0
        %v8735 = vperm.slane %v6541, 0
        %v8736 = vperm.slane %v6542, 0
        %v8737 = vperm.slane %v6543, 0
        %v8738 = vperm.slane %v6544, 0
        %v8739 = vperm.slane %v6545, 0
        %v8740 = vperm.slane %v6546, 0
        %v8741 = vperm.slane %v6547, 0
        %v8742 = vperm.slane %v6548, 0
        %v8743 = vperm.slane %v6549, 0
        %v8744 = vperm.slane %v6550, 0
        %v8745 = vperm.slane %v6551, 0
        %v8746 = vperm.slane %v6552, 0
        %v8747 = vperm.slane %v6553, 0
        %v8748 = vperm.slane %v6554, 0
        %v8749 = vperm.slane %v6555, 0
        %v8750 = vperm.slane %v6556, 0
        %v8751 = vperm.slane %v6557, 0
        %v8752 = vperm.slane %v6558, 0
        %v8753 = vperm.slane %v6559, 0
        %v8754 = vperm.slane %v6560, 0
        %v8755 = vperm.slane %v6561, 0
        %v8756 = vperm.slane %v6562, 0
        %v8757 = vperm.slane %v6563, 0
        %v8758 = vperm.slane %v6564, 0
        %v8759 = vperm.slane %v6565, 0
        %v8760 = vperm.slane %v6566, 0
        %v8761 = vperm.slane %v6567, 0
        %v8762 = vperm.slane %v6568, 0
        %v8763 = vperm.slane %v6569, 0
        %v8764 = vperm.slane %v6570, 0
        %v8765 = vperm.slane %v6571, 0
        %v8766 = vperm.slane %v6572, 0
        %v8767 = vperm.slane %v6573, 0
        %v8768 = vperm.slane %v6574, 0
        %v8769 = vperm.slane %v6575, 0
        %v8770 = vperm.slane %v6576, 0
        %v8771 = vperm.slane %v6577, 0
        %v8772 = vperm.slane %v6578, 0
        %v8773 = vperm.slane %v6579, 0
        %v8774 = vperm.slane %v6580, 0
        %v8775 = vperm.slane %v6581, 0
        %v8776 = vperm.slane %v6582, 0
        %v8777 = vperm.slane %v6583, 0
        %v8778 = vperm.slane %v6584, 0
        %v8779 = vsel %vm7449, %v8716, %v8715
        %v8780 = vsel %vm2831, %v8717, %v8779
        %v8781 = vsel %vm7452, %v8718, %v8780
        %v8782 = vsel %vm2833, %v8719, %v8781
        %v8783 = vsel %vm7455, %v8720, %v8782
        %v8784 = vsel %vm2835, %v8721, %v8783
        %v8785 = vsel %vm7458, %v8722, %v8784
        %v8786 = vsel %vm7449, %v8724, %v8723
        %v8787 = vsel %vm2831, %v8725, %v8786
        %v8788 = vsel %vm7452, %v8726, %v8787
        %v8789 = vsel %vm2833, %v8727, %v8788
        %v8790 = vsel %vm7455, %v8728, %v8789
        %v8791 = vsel %vm2835, %v8729, %v8790
        %v8792 = vsel %vm7458, %v8730, %v8791
        %v8793 = vsel %vm7449, %v8732, %v8731
        %v8794 = vsel %vm2831, %v8733, %v8793
        %v8795 = vsel %vm7452, %v8734, %v8794
        %v8796 = vsel %vm2833, %v8735, %v8795
        %v8797 = vsel %vm7455, %v8736, %v8796
        %v8798 = vsel %vm2835, %v8737, %v8797
        %v8799 = vsel %vm7458, %v8738, %v8798
        %v8800 = vsel %vm7449, %v8740, %v8739
        %v8801 = vsel %vm2831, %v8741, %v8800
        %v8802 = vsel %vm7452, %v8742, %v8801
        %v8803 = vsel %vm2833, %v8743, %v8802
        %v8804 = vsel %vm7455, %v8744, %v8803
        %v8805 = vsel %vm2835, %v8745, %v8804
        %v8806 = vsel %vm7458, %v8746, %v8805
        %v8807 = vsel %vm7449, %v8748, %v8747
        %v8808 = vsel %vm2831, %v8749, %v8807
        %v8809 = vsel %vm7452, %v8750, %v8808
        %v8810 = vsel %vm2833, %v8751, %v8809
        %v8811 = vsel %vm7455, %v8752, %v8810
        %v8812 = vsel %vm2835, %v8753, %v8811
        %v8813 = vsel %vm7458, %v8754, %v8812
        %v8814 = vsel %vm7449, %v8756, %v8755
        %v8815 = vsel %vm2831, %v8757, %v8814
        %v8816 = vsel %vm7452, %v8758, %v8815
        %v8817 = vsel %vm2833, %v8759, %v8816
        %v8818 = vsel %vm7455, %v8760, %v8817
        %v8819 = vsel %vm2835, %v8761, %v8818
        %v8820 = vsel %vm7458, %v8762, %v8819
        %v8821 = vsel %vm7449, %v8764, %v8763
        %v8822 = vsel %vm2831, %v8765, %v8821
        %v8823 = vsel %vm7452, %v8766, %v8822
        %v8824 = vsel %vm2833, %v8767, %v8823
        %v8825 = vsel %vm7455, %v8768, %v8824
        %v8826 = vsel %vm2835, %v8769, %v8825
        %v8827 = vsel %vm7458, %v8770, %v8826
        %v8828 = vsel %vm7449, %v8772, %v8771
        %v8829 = vsel %vm2831, %v8773, %v8828
        %v8830 = vsel %vm7452, %v8774, %v8829
        %v8831 = vsel %vm2833, %v8775, %v8830
        %v8832 = vsel %vm7455, %v8776, %v8831
        %v8833 = vsel %vm2835, %v8777, %v8832
        %v8834 = vsel %vm7458, %v8778, %v8833
        %8835 = vrot.lane.b32.xlu0 %v8785, 64
        %v8836 = vpop.permute.xlu0 %8835
        %8837 = vrot.lane.b32.xlu0 %v8792, 64
        %v8838 = vpop.permute.xlu0 %8837
        %8839 = vrot.lane.b32.xlu0 %v8799, 64
        %v8840 = vpop.permute.xlu0 %8839
        %8841 = vrot.lane.b32.xlu0 %v8806, 64
        %v8842 = vpop.permute.xlu0 %8841
        %8843 = vrot.lane.b32.xlu0 %v8813, 64
        %v8844 = vpop.permute.xlu0 %8843
        %8845 = vrot.lane.b32.xlu0 %v8820, 64
        %v8846 = vpop.permute.xlu0 %8845
        %8847 = vrot.lane.b32.xlu0 %v8827, 64
        %v8848 = vpop.permute.xlu0 %8847
        %8849 = vrot.lane.b32.xlu0 %v8834, 64
        %v8850 = vpop.permute.xlu0 %8849
        %v8923 = vperm.slane %v7257, 0
        %v8924 = vperm.slane %v7258, 0
        %v8925 = vperm.slane %v7259, 0
        %v8926 = vperm.slane %v7260, 0
        %v8927 = vperm.slane %v7261, 0
        %v8928 = vperm.slane %v7262, 0
        %v8929 = vperm.slane %v7263, 0
        %v8930 = vperm.slane %v7264, 0
        %v8931 = vperm.slane %v7265, 0
        %v8932 = vperm.slane %v7266, 0
        %v8933 = vperm.slane %v7267, 0
        %v8934 = vperm.slane %v7268, 0
        %v8935 = vperm.slane %v7269, 0
        %v8936 = vperm.slane %v7270, 0
        %v8937 = vperm.slane %v7271, 0
        %v8938 = vperm.slane %v7272, 0
        %v8939 = vperm.slane %v7273, 0
        %v8940 = vperm.slane %v7274, 0
        %v8941 = vperm.slane %v7275, 0
        %v8942 = vperm.slane %v7276, 0
        %v8943 = vperm.slane %v7277, 0
        %v8944 = vperm.slane %v7278, 0
        %v8945 = vperm.slane %v7279, 0
        %v8946 = vperm.slane %v7280, 0
        %v8947 = vperm.slane %v7281, 0
        %v8948 = vperm.slane %v7282, 0
        %v8949 = vperm.slane %v7283, 0
        %v8950 = vperm.slane %v7284, 0
        %v8951 = vperm.slane %v7285, 0
        %v8952 = vperm.slane %v7286, 0
        %v8953 = vperm.slane %v7287, 0
        %v8954 = vperm.slane %v7288, 0
        %v8955 = vperm.slane %v7289, 0
        %v8956 = vperm.slane %v7290, 0
        %v8957 = vperm.slane %v7291, 0
        %v8958 = vperm.slane %v7292, 0
        %v8959 = vperm.slane %v7293, 0
        %v8960 = vperm.slane %v7294, 0
        %v8961 = vperm.slane %v7295, 0
        %v8962 = vperm.slane %v7296, 0
        %v8963 = vperm.slane %v7297, 0
        %v8964 = vperm.slane %v7298, 0
        %v8965 = vperm.slane %v7299, 0
        %v8966 = vperm.slane %v7300, 0
        %v8967 = vperm.slane %v7301, 0
        %v8968 = vperm.slane %v7302, 0
        %v8969 = vperm.slane %v7303, 0
        %v8970 = vperm.slane %v7304, 0
        %v8971 = vperm.slane %v7305, 0
        %v8972 = vperm.slane %v7306, 0
        %v8973 = vperm.slane %v7307, 0
        %v8974 = vperm.slane %v7308, 0
        %v8975 = vperm.slane %v7309, 0
        %v8976 = vperm.slane %v7310, 0
        %v8977 = vperm.slane %v7311, 0
        %v8978 = vperm.slane %v7312, 0
        %v8979 = vperm.slane %v7313, 0
        %v8980 = vperm.slane %v7314, 0
        %v8981 = vperm.slane %v7315, 0
        %v8982 = vperm.slane %v7316, 0
        %v8983 = vperm.slane %v7317, 0
        %v8984 = vperm.slane %v7318, 0
        %v8985 = vperm.slane %v7319, 0
        %v8986 = vperm.slane %v7320, 0
        %v8987 = vsel %vm7449, %v8924, %v8923
        %v8988 = vsel %vm2831, %v8925, %v8987
        %v8989 = vsel %vm7452, %v8926, %v8988
        %v8990 = vsel %vm2833, %v8927, %v8989
        %v8991 = vsel %vm7455, %v8928, %v8990
        %v8992 = vsel %vm2835, %v8929, %v8991
        %v8993 = vsel %vm7458, %v8930, %v8992
        %v8994 = vsel %vm7449, %v8932, %v8931
        %v8995 = vsel %vm2831, %v8933, %v8994
        %v8996 = vsel %vm7452, %v8934, %v8995
        %v8997 = vsel %vm2833, %v8935, %v8996
        %v8998 = vsel %vm7455, %v8936, %v8997
        %v8999 = vsel %vm2835, %v8937, %v8998
        %v9000 = vsel %vm7458, %v8938, %v8999
        %v9001 = vsel %vm7449, %v8940, %v8939
        %v9002 = vsel %vm2831, %v8941, %v9001
        %v9003 = vsel %vm7452, %v8942, %v9002
        %v9004 = vsel %vm2833, %v8943, %v9003
        %v9005 = vsel %vm7455, %v8944, %v9004
        %v9006 = vsel %vm2835, %v8945, %v9005
        %v9007 = vsel %vm7458, %v8946, %v9006
        %v9008 = vsel %vm7449, %v8948, %v8947
        %v9009 = vsel %vm2831, %v8949, %v9008
        %v9010 = vsel %vm7452, %v8950, %v9009
        %v9011 = vsel %vm2833, %v8951, %v9010
        %v9012 = vsel %vm7455, %v8952, %v9011
        %v9013 = vsel %vm2835, %v8953, %v9012
        %v9014 = vsel %vm7458, %v8954, %v9013
        %v9015 = vsel %vm7449, %v8956, %v8955
        %v9016 = vsel %vm2831, %v8957, %v9015
        %v9017 = vsel %vm7452, %v8958, %v9016
        %v9018 = vsel %vm2833, %v8959, %v9017
        %v9019 = vsel %vm7455, %v8960, %v9018
        %v9020 = vsel %vm2835, %v8961, %v9019
        %v9021 = vsel %vm7458, %v8962, %v9020
        %v9022 = vsel %vm7449, %v8964, %v8963
        %v9023 = vsel %vm2831, %v8965, %v9022
        %v9024 = vsel %vm7452, %v8966, %v9023
        %v9025 = vsel %vm2833, %v8967, %v9024
        %v9026 = vsel %vm7455, %v8968, %v9025
        %v9027 = vsel %vm2835, %v8969, %v9026
        %v9028 = vsel %vm7458, %v8970, %v9027
        %v9029 = vsel %vm7449, %v8972, %v8971
        %v9030 = vsel %vm2831, %v8973, %v9029
        %v9031 = vsel %vm7452, %v8974, %v9030
        %v9032 = vsel %vm2833, %v8975, %v9031
        %v9033 = vsel %vm7455, %v8976, %v9032
        %v9034 = vsel %vm2835, %v8977, %v9033
        %v9035 = vsel %vm7458, %v8978, %v9034
        %v9036 = vsel %vm7449, %v8980, %v8979
        %v9037 = vsel %vm2831, %v8981, %v9036
        %v9038 = vsel %vm7452, %v8982, %v9037
        %v9039 = vsel %vm2833, %v8983, %v9038
        %v9040 = vsel %vm7455, %v8984, %v9039
        %v9041 = vsel %vm2835, %v8985, %v9040
        %v9042 = vsel %vm7458, %v8986, %v9041
        %9043 = vrot.lane.b32.xlu0 %v8993, 72
        %v9044 = vpop.permute.xlu0 %9043
        %9045 = vrot.lane.b32.xlu0 %v9000, 72
        %v9046 = vpop.permute.xlu0 %9045
        %9047 = vrot.lane.b32.xlu0 %v9007, 72
        %v9048 = vpop.permute.xlu0 %9047
        %9049 = vrot.lane.b32.xlu0 %v9014, 72
        %v9050 = vpop.permute.xlu0 %9049
        %9051 = vrot.lane.b32.xlu0 %v9021, 72
        %v9052 = vpop.permute.xlu0 %9051
        %9053 = vrot.lane.b32.xlu0 %v9028, 72
        %v9054 = vpop.permute.xlu0 %9053
        %9055 = vrot.lane.b32.xlu0 %v9035, 72
        %v9056 = vpop.permute.xlu0 %9055
        %9057 = vrot.lane.b32.xlu0 %v9042, 72
        %v9058 = vpop.permute.xlu0 %9057
        %v9067 = vsel %vm1430, %v7459, %v7702
        %v9068 = vsel %vm1430, %v7466, %v7704
        %v9069 = vsel %vm1430, %v7473, %v7706
        %v9070 = vsel %vm1430, %v7480, %v7708
        %v9071 = vsel %vm1430, %v7487, %v7710
        %v9072 = vsel %vm1430, %v7494, %v7712
        %v9073 = vsel %vm1430, %v7501, %v7714
        %v9074 = vsel %vm1430, %v7508, %v7716
        %v9075 = vsel %vm1496, %v9067, %v7910
        %v9076 = vsel %vm1496, %v9068, %v7912
        %v9077 = vsel %vm1496, %v9069, %v7914
        %v9078 = vsel %vm1496, %v9070, %v7916
        %v9079 = vsel %vm1496, %v9071, %v7918
        %v9080 = vsel %vm1496, %v9072, %v7920
        %v9081 = vsel %vm1496, %v9073, %v7922
        %v9082 = vsel %vm1496, %v9074, %v7924
        %v9083 = vsel %vm1562, %v9075, %v8118
        %v9084 = vsel %vm1562, %v9076, %v8120
        %v9085 = vsel %vm1562, %v9077, %v8122
        %v9086 = vsel %vm1562, %v9078, %v8124
        %v9087 = vsel %vm1562, %v9079, %v8126
        %v9088 = vsel %vm1562, %v9080, %v8128
        %v9089 = vsel %vm1562, %v9081, %v8130
        %v9090 = vsel %vm1562, %v9082, %v8132
        %v9091 = vsel %vm1628, %v9083, %v8326
        %v9092 = vsel %vm1628, %v9084, %v8328
        %v9093 = vsel %vm1628, %v9085, %v8330
        %v9094 = vsel %vm1628, %v9086, %v8332
        %v9095 = vsel %vm1628, %v9087, %v8334
        %v9096 = vsel %vm1628, %v9088, %v8336
        %v9097 = vsel %vm1628, %v9089, %v8338
        %v9098 = vsel %vm1628, %v9090, %v8340
        %vm9099 = vcmask 326656
        %v9100 = vsel %vm9099, %v9091, %v8534
        %v9101 = vsel %vm9099, %v9092, %v8536
        %v9102 = vsel %vm9099, %v9093, %v8538
        %v9103 = vsel %vm9099, %v9094, %v8540
        %v9104 = vsel %vm9099, %v9095, %v8542
        %v9105 = vsel %vm9099, %v9096, %v8544
        %v9106 = vsel %vm9099, %v9097, %v8546
        %v9107 = vsel %vm9099, %v9098, %v8548
        %vm9108 = vcmask 392192
        %v9109 = vsel %vm9108, %v9100, %v8581
        %v9110 = vsel %vm9108, %v9101, %v8583
        %v9111 = vsel %vm9108, %v9102, %v8585
        %v9112 = vsel %vm9108, %v9103, %v8587
        %v9113 = vsel %vm9108, %v9104, %v8589
        %v9114 = vsel %vm9108, %v9105, %v8591
        %v9115 = vsel %vm9108, %v9106, %v8593
        %v9116 = vsel %vm9108, %v9107, %v8595
        %vm9117 = vcmask 457728
        %v9118 = vsel %vm9117, %v9109, %v8628
        %v9119 = vsel %vm9117, %v9110, %v8630
        %v9120 = vsel %vm9117, %v9111, %v8632
        %v9121 = vsel %vm9117, %v9112, %v8634
        %v9122 = vsel %vm9117, %v9113, %v8636
        %v9123 = vsel %vm9117, %v9114, %v8638
        %v9124 = vsel %vm9117, %v9115, %v8640
        %v9125 = vsel %vm9117, %v9116, %v8642
        %vm9126 = vcmask 523264
        %v9127 = vsel %vm9126, %v9118, %v8836
        %v9128 = vsel %vm9126, %v9119, %v8838
        %v9129 = vsel %vm9126, %v9120, %v8840
        %v9130 = vsel %vm9126, %v9121, %v8842
        %v9131 = vsel %vm9126, %v9122, %v8844
        %v9132 = vsel %vm9126, %v9123, %v8846
        %v9133 = vsel %vm9126, %v9124, %v8848
        %v9134 = vsel %vm9126, %v9125, %v8850
        %vm9135 = vcmask 588800
        %v9136 = vsel %vm9135, %v9127, %v9044
        %v9137 = vsel %vm9135, %v9128, %v9046
        %v9138 = vsel %vm9135, %v9129, %v9048
        %v9139 = vsel %vm9135, %v9130, %v9050
        %v9140 = vsel %vm9135, %v9131, %v9052
        %v9141 = vsel %vm9135, %v9132, %v9054
        %v9142 = vsel %vm9135, %v9133, %v9056
        %v9143 = vsel %vm9135, %v9134, %v9058
        %v9144 = vpack.c.bf16 %v9137, %v9136
        %v9145 = vpack.c.bf16 %v9139, %v9138
        %v9146 = vpack.c.bf16 %v9141, %v9140
        %v9147 = vpack.c.bf16 %v9143, %v9142
        %v9148 = vld [vmem:[%s3] sm:$0xf]
        %v9149 = vld [vmem:[%s3 + $0x4] sm:$0xf]
        %v9150 = vld [vmem:[%s3 + $0x8] sm:$0xf]
        %v9151 = vld [vmem:[%s3 + $0xc] sm:$0xf]
        %v9152 = vld [vmem:[%s3 + $0x10] sm:$0xf]
        %v9153 = vld [vmem:[%s3 + $0x14] sm:$0xf]
        %v9154 = vld [vmem:[%s3 + $0x18] sm:$0xf]
        %v9155 = vld [vmem:[%s3 + $0x1c] sm:$0xf]
        %v9156 = vld [vmem:[%s3 + $0x20] sm:$0xf]
        %v9157 = vld [vmem:[%s3 + $0x24] sm:$0x3]
        %v9158 = vld [vmem:[%s4] sm:$0x1]
        %v9160 = vperm.slane %v9158, 0
        %v9172 = vunpack.c.l.b16 %v9148
        %v9173 = vunpack.c.l.b16 %v9149
        %v9174 = vunpack.c.l.b16 %v9150
        %v9175 = vunpack.c.l.b16 %v9151
        %v9176 = vunpack.c.l.b16 %v9152
        %v9177 = vunpack.c.l.b16 %v9153
        %v9178 = vunpack.c.l.b16 %v9154
        %v9179 = vunpack.c.l.b16 %v9155
        %v9180 = vunpack.c.l.b16 %v9156
        %v9181 = vunpack.c.l.b16 %v9157
        %v9182 = vpack.c.b16 %v9173, %v9172
        %v9183 = vpack.c.b16 %v9175, %v9174
        %v9184 = vpack.c.b16 %v9177, %v9176
        %v9185 = vpack.c.b16 %v9179, %v9178
        %v9186 = vpack.c.b16 %v9181, %v9180
        %vm9191 = vcmask 621568
        %v9193 = vsel %vm9191, %v9144, 0
        %v9196 = vsel %vm9191, %v9145, 0
        %v9199 = vsel %vm9191, %v9146, 0
        %v9202 = vsel %vm9191, %v9147, 0
        %v9205 = vsel %vm632, %v9186, 0
        %9207 = vmatpush.bf16.msra.mxu0 0
        %9208 = vmatpush.bf16.msra.mxu0 0
        %9209 = vmatpush.bf16.msra.mxu0 0
        %9210 = vmatpush.bf16.msra.mxu0 %v9205
        %9211 = vmatpush.bf16.msra.mxu0 %v9185
        %9212 = vmatpush.bf16.msra.mxu0 %v9184
        %9213 = vmatpush.bf16.msra.mxu0 %v9183
        %9214 = vmatpush.bf16.msra.mxu0 %v9182
        %9215 = vmatmul.bf16.gmra.mxu0 %v9193
        %v9216 = vpop.f32.mrf.mxu0
        %v9217 = vadd.f32 %v9160, %v9216
        %v9218 = vpop.f32.mrf.mxu0
        %v9219 = vadd.f32 %v9160, %v9218
        %9220 = vmatmul.bf16.gmra.mxu0 %v9196
        %v9221 = vpop.f32.mrf.mxu0
        %v9222 = vadd.f32 %v9160, %v9221
        %v9223 = vpop.f32.mrf.mxu0
        %v9224 = vadd.f32 %v9160, %v9223
        %9225 = vmatmul.bf16.gmra.mxu0 %v9199
        %v9226 = vpop.f32.mrf.mxu0
        %v9227 = vadd.f32 %v9160, %v9226
        %v9228 = vpop.f32.mrf.mxu0
        %v9229 = vadd.f32 %v9160, %v9228
        %9230 = vmatmul.bf16.gmra.mxu0 %v9202
        %v9231 = vpop.f32.mrf.mxu0
        %v9232 = vadd.f32 %v9160, %v9231
        %v9233 = vpop.f32.mrf.mxu0
        %v9234 = vadd.f32 %v9160, %v9233
        %9235 = vdwg.mxu0
        %9236 = vst.msk [vmem:[%s217] sm:$0xff] %vm1430, %v9217
        %9237 = vst.msk [vmem:[%s217 + $0x8] sm:$0xff] %vm1430, %v9219
        %9238 = vst.msk [vmem:[%s217 + $0x10] sm:$0xff] %vm1430, %v9222
        %9239 = vst.msk [vmem:[%s217 + $0x18] sm:$0xff] %vm1430, %v9224
        %9240 = vst.msk [vmem:[%s217 + $0x20] sm:$0xff] %vm1430, %v9227
        %9241 = vst.msk [vmem:[%s217 + $0x28] sm:$0xff] %vm1430, %v9229
        %9242 = vst.msk [vmem:[%s217 + $0x30] sm:$0xff] %vm1430, %v9232
        %9243 = vst.msk [vmem:[%s217 + $0x38] sm:$0xff] %vm1430, %v9234
        %s9244 = sand.u32 %s137, 1
        %s9245 = scalar_lea.sflag [#allocation3], %s9244
        %s9246 = sand.u32 %s137, 1
        %s9247 = smul.addr %s9246, 64
        %s9248 = scalar_lea.vmem [#allocation2], %s9247
        // Predicated region
        $region41: #{tpu_custom_call.1} parent=39 // pred_check
          %p9249 = pneg %p147
        $region42: #{tpu_custom_call.1} parent=39 // pred_check_branch
          %9251 = sbr.rel (%p9249) target = $region44
        $region43: #{tpu_custom_call.1} parent=39 // pred_region
          %9253 = vsyncadd %s9245, 0
          %s9254 = smul.addr %s19, 8
          %s9255 = smul.addr %s9254, 8
          %s9256 = scalar_lea.hbm %s5, %s9255
          %s9257 = sshll.u32 %s9248, 4
          %s9258 = int_to_ptr.vmem [resolvable:$true] %s9257
          %s9259 = sshll.u32 %s9256, 4
          %s9260 = int_to_ptr.hbm [resolvable:$true] %s9259
          %9265 = dma.vmem_to_hbm [thread:$0]  %s9258, 1024, %s9260, %s9245, 128, 128, 8
        $region44: #{tpu_custom_call.1} parent=39 // pred_fallthru
          _
      $region40: #{tpu_custom_call.1} parent=5 // pred_fallthru
        _
      %p9266 = scmp.le.s32.totalorder 2, %s14
      // Predicated region
      $region45: #{tpu_custom_call.1} parent=5 // pred_check
        %p9267 = pneg %p9266
      $region46: #{tpu_custom_call.1} parent=5 // pred_check_branch
        %9269 = sbr.rel (%p9267) target = $region48
      $region47: #{tpu_custom_call.1} parent=5 // pred_region
        %s9270 = ssub.s32 %s14, 2
        // Predicated region
        $region49: #{tpu_custom_call.1} parent=47 // pred_check
          %p9271 = pneg %p153
        $region50: #{tpu_custom_call.1} parent=47 // pred_check_branch
          %9273 = sbr.rel (%p9271) target = $region52
        $region51: #{tpu_custom_call.1} parent=47 // pred_region
          %s9274 = sand.u32 %s138, 1
          %s9275 = scalar_lea.sflag [#allocation3], %s9274
          %s9276 = sand.u32 %s138, 1
          %s9277 = smul.addr %s9276, 64
          %s9278 = scalar_lea.vmem [#allocation2], %s9277
          %9280 = dma.done %s9275, 1024
        $region52: #{tpu_custom_call.1} parent=47 // pred_fallthru
          _
      $region48: #{tpu_custom_call.1} parent=5 // pred_fallthru
        _
    $region6: #{tpu_custom_call.1} parent=1 // loop_footer
      %s18 = sadd.s32 1, %s14
    $region7: #{tpu_custom_call.1} parent=1 // loop_footer_branch
      %13 = sbr.rel target = $region3
    $region8: #{tpu_custom_call.1} parent=1 // loop_exit
      _
    %9281 = vsyncpa [#allocation3], 1
    %s9282 = scalar_lea.sflag [#allocation3], 1
    %9283 = vsyncpa %s9282, 1

</llo_original>
